<compile_context>
chip_gen: v6e
topology: v6e:2x2x1
jax: 0.10.0
libtpu: 0.0.40
codegen_flags: <defaults>
</compile_context>

<pallas_src>
import functools

import jax
import jax.numpy as jnp
from jax.experimental import pallas as pl
from jax.experimental.pallas import tpu as pltpu


def _round_up(x, m):
    return (x + m - 1) // m * m


def _pick_tile(dim, candidates=(512, 384, 256, 128)):
    """Pick a tile size (multiple of 128) minimizing padding; prefer larger."""
    best_t, best_pad = None, None
    for t in candidates:
        pad = _round_up(dim, t) - dim
        if best_pad is None or pad < best_pad:
            best_t, best_pad = t, pad
    return best_t


# ----------------------------------------------------------------------------
# Pallas kernel: fused  out = act( A @ W + bias ), bf16 MXU, f32 accumulate
# ----------------------------------------------------------------------------
def _mm_bias_act_kernel(a_ref, w_ref, b_ref, o_ref, acc_ref, *, relu):
    k = pl.program_id(2)

    @pl.when(k == 0)
    def _():
        acc_ref[...] = jnp.zeros_like(acc_ref)

    acc_ref[...] += jnp.dot(a_ref[...], w_ref[...],
                            preferred_element_type=jnp.float32)

    @pl.when(k == pl.num_programs(2) - 1)
    def _():
        y = acc_ref[...] + b_ref[...]
        if relu:
            y = jnp.maximum(y, 0.0)
        o_ref[...] = y


def matmul_bias_act(a, w, bias, relu=True):
    """a: [M, K], w: [K, N] (bf16 preferred), bias: [N] f32 -> [M, N] f32."""
    M, K = a.shape
    K2, N = w.shape
    assert K == K2

    # Adaptive tiles: single M block for small M, otherwise tile at <=512.
    if M <= 1024:
        tm = _round_up(max(M, 16), 16)
        M_pad = tm
    else:
        tm = _pick_tile(M)
        M_pad = _round_up(M, tm)
    if N <= 512:
        tn = _round_up(N, 128)
        N_pad = tn
    else:
        tn = _pick_tile(N, (512, 256, 128))
        N_pad = _round_up(N, tn)
    if K <= 512:
        tk = _round_up(K, 128)
        K_pad = tk
    else:
        tk = _pick_tile(K)
        K_pad = _round_up(K, tk)

    a_p = jnp.pad(a.astype(jnp.bfloat16), ((0, M_pad - M), (0, K_pad - K)))
    w_p = jnp.pad(w.astype(jnp.bfloat16), ((0, K_pad - K), (0, N_pad - N)))
    b_p = jnp.pad(bias.astype(jnp.float32), ((0, N_pad - N),)).reshape(1, N_pad)

    grid = (M_pad // tm, N_pad // tn, K_pad // tk)
    kernel = functools.partial(_mm_bias_act_kernel, relu=relu)
    out = pl.pallas_call(
        kernel,
        out_shape=jax.ShapeDtypeStruct((M_pad, N_pad), jnp.float32),
        grid_spec=pltpu.PrefetchScalarGridSpec(
            num_scalar_prefetch=0,
            grid=grid,
            in_specs=[
                pl.BlockSpec((tm, tk), lambda i, j, k: (i, k)),   # A tile (bf16)
                pl.BlockSpec((tk, tn), lambda i, j, k: (k, j)),   # W tile (bf16)
                pl.BlockSpec((1, tn), lambda i, j, k: (0, j)),    # bias (f32)
            ],
            out_specs=pl.BlockSpec((tm, tn), lambda i, j, k: (i, j)),
            scratch_shapes=[pltpu.VMEM((tm, tn), jnp.float32)],
        ),
        compiler_params=pltpu.CompilerParams(
            dimension_semantics=("parallel", "parallel", "arbitrary"),
        ),
    )(a_p, w_p, b_p)
    return out[:M, :N]


# ----------------------------------------------------------------------------
# Glue: NHWC reflect-pad + patch extraction + max-pool
# ----------------------------------------------------------------------------
def conv_bn_relu_nhwc(x, p, ksize, pad):
    """x: [N, H, W, C] NHWC. Conv2d(reflect pad) + folded BN + ReLU."""
    if pad > 0:
        x = jnp.pad(x, ((0, 0), (pad, pad), (pad, pad), (0, 0)), mode="reflect")
    N, Hp, Wp, C = x.shape
    Ho, Wo = Hp - ksize + 1, Wp - ksize + 1
    # TODO(synk): patch extraction materializes kh*kw duplicated columns in HBM;
    # could be fused into the matmul kernel as a K tap loop.
    cols = jnp.concatenate(
        [x[:, i:i + Ho, j:j + Wo, :] for i in range(ksize) for j in range(ksize)],
        axis=-1)
    cols = cols.reshape(N * Ho * Wo, ksize * ksize * C)
    y = matmul_bias_act(cols, p["w"], p["b"], relu=True)
    return y.reshape(N, Ho, Wo, -1)


def maxpool2x2_nhwc(x):
    """MaxPool2d(kernel=2, stride=2), floor mode (PyTorch default), NHWC."""
    N, H, W, C = x.shape
    H2, W2 = (H // 2) * 2, (W // 2) * 2
    x = x[:, :H2, :W2, :].reshape(N, H2 // 2, 2, W2 // 2, 2, C)
    return x.max(axis=(2, 4))


# ----------------------------------------------------------------------------
# Parameter init (deterministic, synthetic) + one-time inference prep
# ----------------------------------------------------------------------------
def init_params(key, channel_size, label_size, img_size):
    conv_size = img_size // 8 - 2
    params = {}
    conv_defs = [
        ("conv1", channel_size, 64, 3),
        ("conv2", 64, 128, 2),
        ("conv3", 128, 256, 3),
        ("conv4", 256, 512, 3),
    ]
    lin_defs = [
        ("fc1", conv_size * conv_size * 512, 1024),
        ("fc2", 1024, 512),
        ("fc3", 512, 128),
        ("fc4", 128, label_size),
    ]
    keys = iter(jax.random.split(key, 64))
    for name, cin, cout, k in conv_defs:
        params[name] = {
            "w": 0.05 * jax.random.normal(next(keys), (cout, cin, k, k), jnp.float32),
            "b": 0.05 * jax.random.normal(next(keys), (cout,), jnp.float32),
            "gamma": 1.0 + 0.05 * jax.random.normal(next(keys), (cout,), jnp.float32),
            "beta": 0.05 * jax.random.normal(next(keys), (cout,), jnp.float32),
            "mean": 0.05 * jax.random.normal(next(keys), (cout,), jnp.float32),
            "var": 1.0 + jnp.abs(0.05 * jax.random.normal(next(keys), (cout,), jnp.float32)),
        }
    for name, fin, fout in lin_defs:
        params[name] = {
            "w": 0.02 * jax.random.normal(next(keys), (fout, fin), jnp.float32),
            "b": 0.02 * jax.random.normal(next(keys), (fout,), jnp.float32),
        }
    return params, conv_size


def prepare_inference_params(params, conv_size):
    """One-time: fold BN into conv weights, reorder for NHWC, cast W to bf16."""
    prep = {}
    eps = 1e-5
    for name in ("conv1", "conv2", "conv3", "conv4"):
        p = params[name]
        cout = p["w"].shape[0]
        scale = p["gamma"] / jnp.sqrt(p["var"] + eps)               # [Cout]
        # NHWC im2col K-ordering is (kh, kw, Cin); fold BN scale into weights.
        w2d = p["w"].transpose(2, 3, 1, 0).reshape(-1, cout) * scale[None, :]
        bias = (p["b"] - p["mean"]) * scale + p["beta"]
        prep[name] = {"w": w2d.astype(jnp.bfloat16),
                      "b": bias.astype(jnp.float32)}
    # fc1: permute input features from PyTorch's NCHW flatten ordering (C,H,W)
    # to our NHWC flatten ordering (H,W,C) -> no runtime transpose needed.
    cs = conv_size
    w = params["fc1"]["w"]
    fout = w.shape[0]
    w = w.reshape(fout, 512, cs, cs).transpose(0, 2, 3, 1).reshape(fout, cs * cs * 512)
    prep["fc1"] = {"w": w.T.astype(jnp.bfloat16),
                   "b": params["fc1"]["b"].astype(jnp.float32)}
    for name in ("fc2", "fc3", "fc4"):
        prep[name] = {"w": params[name]["w"].T.astype(jnp.bfloat16),
                      "b": params[name]["b"].astype(jnp.float32)}
    return prep


# ----------------------------------------------------------------------------
# Forward pass (matches CNN_Model.forward, inference mode; Dropout = identity)
# ----------------------------------------------------------------------------
@functools.partial(jax.jit, static_argnums=(2,))
def cnn_model_forward(prep, x_nchw, conv_size):
    x = jnp.transpose(x_nchw, (0, 2, 3, 1))        # NCHW -> NHWC, once
    # Block 1: Conv(k3,p1,reflect) -> BN -> ReLU -> [Dropout] -> MaxPool
    x = conv_bn_relu_nhwc(x, prep["conv1"], ksize=3, pad=1)
    x = maxpool2x2_nhwc(x)
    # Block 2: Conv(k2,p1,reflect) -> BN -> [Dropout] -> ReLU -> MaxPool
    x = conv_bn_relu_nhwc(x, prep["conv2"], ksize=2, pad=1)
    x = maxpool2x2_nhwc(x)
    # Block 3: Conv(k3,p1,reflect) -> BN -> [Dropout] -> ReLU -> MaxPool
    x = conv_bn_relu_nhwc(x, prep["conv3"], ksize=3, pad=1)
    x = maxpool2x2_nhwc(x)
    # Block 4: Conv(k3, no pad) -> BN -> [Dropout] -> ReLU
    x = conv_bn_relu_nhwc(x, prep["conv4"], ksize=3, pad=0)
    # Flatten (NHWC; fc1 weight was pre-permuted to match PyTorch's view order)
    x = x.reshape(-1, conv_size * conv_size * 512)
    # Linear block
    x = matmul_bias_act(x, prep["fc1"]["w"], prep["fc1"]["b"], relu=True)
    x = matmul_bias_act(x, prep["fc2"]["w"], prep["fc2"]["b"], relu=True)
    x = matmul_bias_act(x, prep["fc3"]["w"], prep["fc3"]["b"], relu=True)
    x = matmul_bias_act(x, prep["fc4"]["w"], prep["fc4"]["b"], relu=False)
    return x


if __name__ == "__main__":
    # img_size must be >= 32 so conv_size = img_size/8 - 2 > 0.
    batch, channel_size, img_size, label_size = 2, 3, 32, 10

    key = jax.random.PRNGKey(0)
    data_key, param_key = jax.random.split(key)
    x = jax.random.normal(data_key, (batch, channel_size, img_size, img_size),
                          jnp.float32)

    params, conv_size = init_params(param_key, channel_size, label_size, img_size)
    prep = prepare_inference_params(params, conv_size)

    out = cnn_model_forward(prep, x, conv_size)
    out = jax.block_until_ready(out)
    assert out.shape == (batch, label_size), out.shape
    assert jnp.all(jnp.isfinite(out))
    print("KERNEL_OK")
</pallas_src>

<mosaic_0001>
module attributes {stable_mosaic.version = 11 : i64} {
  func.func @_mm_bias_act_kernel(%arg0: i32, %arg1: i32, %arg2: i32, %arg3: memref<512x128xbf16, #tpu.memory_space<vmem>>, %arg4: memref<128x128xbf16, #tpu.memory_space<vmem>>, %arg5: memref<1x128xf32, #tpu.memory_space<vmem>>, %arg6: memref<512x128xf32, #tpu.memory_space<vmem>>, %arg7: memref<512x128xf32, #tpu.memory_space<vmem>>) attributes {dimension_semantics = [#tpu.dimension_semantics<parallel>, #tpu.dimension_semantics<parallel>, #tpu.dimension_semantics<arbitrary>], iteration_bounds = array<i64: 4, 1, 1>, scalar_prefetch = 0 : i64, scratch_operands = 1 : i64, tpu.core_type = #tpu.core_type<tc>, window_params = [{transform_indices = @transform_0, window_bounds = array<i64: 512, 128>}, {transform_indices = @transform_1, window_bounds = array<i64: 128, 128>}, {transform_indices = @transform_2, window_bounds = array<i64: 1, 128>}, {transform_indices = @transform_3, window_bounds = array<i64: 512, 128>}]} {
    %c0_i32 = arith.constant 0 : i32
    %0 = arith.cmpi eq, %arg2, %c0_i32 : i32
    %1 = arith.extui %0 : i1 to i32
    %c0_i32_0 = arith.constant 0 : i32
    %2 = arith.cmpi ne, %1, %c0_i32_0 : i32
    scf.if %2 {
      %cst_10 = arith.constant 0.000000e+00 : f32
      %12 = vector.broadcast %cst_10 : f32 to vector<512x128xf32>
      %c0_11 = arith.constant 0 : index
      %c0_12 = arith.constant 0 : index
      %13 = vector.load %arg7[%c0_11, %c0_12] : memref<512x128xf32, #tpu.memory_space<vmem>>, vector<512x128xf32>
      tpu.vector_store %arg7[%c0_11, %c0_12], %12 {strides = array<i32>} : memref<512x128xf32, #tpu.memory_space<vmem>>, vector<512x128xf32>,
    } else {
    }
    %c0 = arith.constant 0 : index
    %c0_1 = arith.constant 0 : index
    %3 = vector.load %arg7[%c0, %c0_1] : memref<512x128xf32, #tpu.memory_space<vmem>>, vector<512x128xf32>
    %c0_2 = arith.constant 0 : index
    %c0_3 = arith.constant 0 : index
    %4 = vector.load %arg3[%c0_2, %c0_3] : memref<512x128xbf16, #tpu.memory_space<vmem>>, vector<512x128xbf16>
    %c0_4 = arith.constant 0 : index
    %c0_5 = arith.constant 0 : index
    %5 = vector.load %arg4[%c0_4, %c0_5] : memref<128x128xbf16, #tpu.memory_space<vmem>>, vector<128x128xbf16>
    %cst = arith.constant dense<0.000000e+00> : vector<512x128xf32>
    %6 = tpu.matmul %4, %5, %cst {dimension_numbers = #tpu.dot_dimension_numbers<[1], [0], [0], [1], [0, 0, 1, 1], [], []>} : vector<512x128xbf16>, vector<128x128xbf16>, vector<512x128xf32> -> vector<512x128xf32>
    %7 = arith.addf %3, %6 : vector<512x128xf32>
    %c0_6 = arith.constant 0 : index
    %c0_7 = arith.constant 0 : index
    %8 = vector.load %arg7[%c0_6, %c0_7] : memref<512x128xf32, #tpu.memory_space<vmem>>, vector<512x128xf32>
    tpu.vector_store %arg7[%c0_6, %c0_7], %7 {strides = array<i32>} : memref<512x128xf32, #tpu.memory_space<vmem>>, vector<512x128xf32>,
    %c0_i32_8 = arith.constant 0 : i32
    %9 = arith.cmpi eq, %arg2, %c0_i32_8 : i32
    %10 = arith.extui %9 : i1 to i32
    %c0_i32_9 = arith.constant 0 : i32
    %11 = arith.cmpi ne, %10, %c0_i32_9 : i32
    scf.if %11 {
      %c0_10 = arith.constant 0 : index
      %c0_11 = arith.constant 0 : index
      %12 = vector.load %arg7[%c0_10, %c0_11] : memref<512x128xf32, #tpu.memory_space<vmem>>, vector<512x128xf32>
      %c0_12 = arith.constant 0 : index
      %c0_13 = arith.constant 0 : index
      %13 = vector.load %arg5[%c0_12, %c0_13] : memref<1x128xf32, #tpu.memory_space<vmem>>, vector<1x128xf32>
      %14 = vector.broadcast %13 : vector<1x128xf32> to vector<512x128xf32>
      %15 = arith.addf %12, %14 : vector<512x128xf32>
      %cst_14 = arith.constant 0.000000e+00 : f32
      %16 = vector.broadcast %cst_14 : f32 to vector<512x128xf32>
      %17 = arith.maximumf %15, %16 : vector<512x128xf32>
      %c0_15 = arith.constant 0 : index
      %c0_16 = arith.constant 0 : index
      %18 = vector.load %arg6[%c0_15, %c0_16] : memref<512x128xf32, #tpu.memory_space<vmem>>, vector<512x128xf32>
      tpu.vector_store %arg6[%c0_15, %c0_16], %17 {strides = array<i32>} : memref<512x128xf32, #tpu.memory_space<vmem>>, vector<512x128xf32>,
    } else {
    }
    return
  }
  func.func @transform_0(%arg0: i32, %arg1: i32, %arg2: i32) -> (i32, i32) {
    %c0_i32 = arith.constant 0 : i32
    return %arg0, %arg2 : i32, i32
  }
  func.func @transform_1(%arg0: i32, %arg1: i32, %arg2: i32) -> (i32, i32) {
    %c0_i32 = arith.constant 0 : i32
    return %arg2, %arg1 : i32, i32
  }
  func.func @transform_2(%arg0: i32, %arg1: i32, %arg2: i32) -> (i32, i32) {
    %c0_i32 = arith.constant 0 : i32
    %c0_i32_0 = arith.constant 0 : i32
    return %c0_i32, %arg1 : i32, i32
  }
  func.func @transform_3(%arg0: i32, %arg1: i32, %arg2: i32) -> (i32, i32) {
    %c0_i32 = arith.constant 0 : i32
    return %arg0, %arg1 : i32, i32
  }
}

module attributes {stable_mosaic.version = 11 : i64} {
  func.func @_mm_bias_act_kernel(%arg0: i32, %arg1: i32, %arg2: i32, %arg3: memref<592x256xbf16, #tpu.memory_space<vmem>>, %arg4: memref<256x128xbf16, #tpu.memory_space<vmem>>, %arg5: memref<1x128xf32, #tpu.memory_space<vmem>>, %arg6: memref<592x128xf32, #tpu.memory_space<vmem>>, %arg7: memref<592x128xf32, #tpu.memory_space<vmem>>) attributes {dimension_semantics = [#tpu.dimension_semantics<parallel>, #tpu.dimension_semantics<parallel>, #tpu.dimension_semantics<arbitrary>], iteration_bounds = array<i64: 1, 1, 1>, scalar_prefetch = 0 : i64, scratch_operands = 1 : i64, tpu.core_type = #tpu.core_type<tc>, window_params = [{transform_indices = @transform_0, window_bounds = array<i64: 592, 256>}, {transform_indices = @transform_1, window_bounds = array<i64: 256, 128>}, {transform_indices = @transform_2, window_bounds = array<i64: 1, 128>}, {transform_indices = @transform_3, window_bounds = array<i64: 592, 128>}]} {
    %c0_i32 = arith.constant 0 : i32
    %0 = arith.cmpi eq, %arg2, %c0_i32 : i32
    %1 = arith.extui %0 : i1 to i32
    %c0_i32_0 = arith.constant 0 : i32
    %2 = arith.cmpi ne, %1, %c0_i32_0 : i32
    scf.if %2 {
      %cst_10 = arith.constant 0.000000e+00 : f32
      %12 = vector.broadcast %cst_10 : f32 to vector<592x128xf32>
      %c0_11 = arith.constant 0 : index
      %c0_12 = arith.constant 0 : index
      %13 = vector.load %arg7[%c0_11, %c0_12] : memref<592x128xf32, #tpu.memory_space<vmem>>, vector<592x128xf32>
      tpu.vector_store %arg7[%c0_11, %c0_12], %12 {strides = array<i32>} : memref<592x128xf32, #tpu.memory_space<vmem>>, vector<592x128xf32>,
    } else {
    }
    %c0 = arith.constant 0 : index
    %c0_1 = arith.constant 0 : index
    %3 = vector.load %arg7[%c0, %c0_1] : memref<592x128xf32, #tpu.memory_space<vmem>>, vector<592x128xf32>
    %c0_2 = arith.constant 0 : index
    %c0_3 = arith.constant 0 : index
    %4 = vector.load %arg3[%c0_2, %c0_3] : memref<592x256xbf16, #tpu.memory_space<vmem>>, vector<592x256xbf16>
    %c0_4 = arith.constant 0 : index
    %c0_5 = arith.constant 0 : index
    %5 = vector.load %arg4[%c0_4, %c0_5] : memref<256x128xbf16, #tpu.memory_space<vmem>>, vector<256x128xbf16>
    %cst = arith.constant dense<0.000000e+00> : vector<592x128xf32>
    %6 = tpu.matmul %4, %5, %cst {dimension_numbers = #tpu.dot_dimension_numbers<[1], [0], [0], [1], [0, 0, 1, 1], [], []>} : vector<592x256xbf16>, vector<256x128xbf16>, vector<592x128xf32> -> vector<592x128xf32>
    %7 = arith.addf %3, %6 : vector<592x128xf32>
    %c0_6 = arith.constant 0 : index
    %c0_7 = arith.constant 0 : index
    %8 = vector.load %arg7[%c0_6, %c0_7] : memref<592x128xf32, #tpu.memory_space<vmem>>, vector<592x128xf32>
    tpu.vector_store %arg7[%c0_6, %c0_7], %7 {strides = array<i32>} : memref<592x128xf32, #tpu.memory_space<vmem>>, vector<592x128xf32>,
    %c0_i32_8 = arith.constant 0 : i32
    %9 = arith.cmpi eq, %arg2, %c0_i32_8 : i32
    %10 = arith.extui %9 : i1 to i32
    %c0_i32_9 = arith.constant 0 : i32
    %11 = arith.cmpi ne, %10, %c0_i32_9 : i32
    scf.if %11 {
      %c0_10 = arith.constant 0 : index
      %c0_11 = arith.constant 0 : index
      %12 = vector.load %arg7[%c0_10, %c0_11] : memref<592x128xf32, #tpu.memory_space<vmem>>, vector<592x128xf32>
      %c0_12 = arith.constant 0 : index
      %c0_13 = arith.constant 0 : index
      %13 = vector.load %arg5[%c0_12, %c0_13] : memref<1x128xf32, #tpu.memory_space<vmem>>, vector<1x128xf32>
      %14 = vector.broadcast %13 : vector<1x128xf32> to vector<592x128xf32>
      %15 = arith.addf %12, %14 : vector<592x128xf32>
      %cst_14 = arith.constant 0.000000e+00 : f32
      %16 = vector.broadcast %cst_14 : f32 to vector<592x128xf32>
      %17 = arith.maximumf %15, %16 : vector<592x128xf32>
      %c0_15 = arith.constant 0 : index
      %c0_16 = arith.constant 0 : index
      %18 = vector.load %arg6[%c0_15, %c0_16] : memref<592x128xf32, #tpu.memory_space<vmem>>, vector<592x128xf32>
      tpu.vector_store %arg6[%c0_15, %c0_16], %17 {strides = array<i32>} : memref<592x128xf32, #tpu.memory_space<vmem>>, vector<592x128xf32>,
    } else {
    }
    return
  }
  func.func @transform_0(%arg0: i32, %arg1: i32, %arg2: i32) -> (i32, i32) {
    %c0_i32 = arith.constant 0 : i32
    return %arg0, %arg2 : i32, i32
  }
  func.func @transform_1(%arg0: i32, %arg1: i32, %arg2: i32) -> (i32, i32) {
    %c0_i32 = arith.constant 0 : i32
    return %arg2, %arg1 : i32, i32
  }
  func.func @transform_2(%arg0: i32, %arg1: i32, %arg2: i32) -> (i32, i32) {
    %c0_i32 = arith.constant 0 : i32
    %c0_i32_0 = arith.constant 0 : i32
    return %c0_i32, %arg1 : i32, i32
  }
  func.func @transform_3(%arg0: i32, %arg1: i32, %arg2: i32) -> (i32, i32) {
    %c0_i32 = arith.constant 0 : i32
    return %arg0, %arg1 : i32, i32
  }
}

module attributes {stable_mosaic.version = 11 : i64} {
  func.func @_mm_bias_act_kernel(%arg0: i32, %arg1: i32, %arg2: i32, %arg3: memref<128x384xbf16, #tpu.memory_space<vmem>>, %arg4: memref<384x256xbf16, #tpu.memory_space<vmem>>, %arg5: memref<1x256xf32, #tpu.memory_space<vmem>>, %arg6: memref<128x256xf32, #tpu.memory_space<vmem>>, %arg7: memref<128x256xf32, #tpu.memory_space<vmem>>) attributes {dimension_semantics = [#tpu.dimension_semantics<parallel>, #tpu.dimension_semantics<parallel>, #tpu.dimension_semantics<arbitrary>], iteration_bounds = array<i64: 1, 1, 3>, scalar_prefetch = 0 : i64, scratch_operands = 1 : i64, tpu.core_type = #tpu.core_type<tc>, window_params = [{transform_indices = @transform_0, window_bounds = array<i64: 128, 384>}, {transform_indices = @transform_1, window_bounds = array<i64: 384, 256>}, {transform_indices = @transform_2, window_bounds = array<i64: 1, 256>}, {transform_indices = @transform_3, window_bounds = array<i64: 128, 256>}]} {
    %c0_i32 = arith.constant 0 : i32
    %0 = arith.cmpi eq, %arg2, %c0_i32 : i32
    %1 = arith.extui %0 : i1 to i32
    %c0_i32_0 = arith.constant 0 : i32
    %2 = arith.cmpi ne, %1, %c0_i32_0 : i32
    scf.if %2 {
      %cst_9 = arith.constant 0.000000e+00 : f32
      %12 = vector.broadcast %cst_9 : f32 to vector<128x256xf32>
      %c0_10 = arith.constant 0 : index
      %c0_11 = arith.constant 0 : index
      %13 = vector.load %arg7[%c0_10, %c0_11] : memref<128x256xf32, #tpu.memory_space<vmem>>, vector<128x256xf32>
      tpu.vector_store %arg7[%c0_10, %c0_11], %12 {strides = array<i32>} : memref<128x256xf32, #tpu.memory_space<vmem>>, vector<128x256xf32>,
    } else {
    }
    %c0 = arith.constant 0 : index
    %c0_1 = arith.constant 0 : index
    %3 = vector.load %arg7[%c0, %c0_1] : memref<128x256xf32, #tpu.memory_space<vmem>>, vector<128x256xf32>
    %c0_2 = arith.constant 0 : index
    %c0_3 = arith.constant 0 : index
    %4 = vector.load %arg3[%c0_2, %c0_3] : memref<128x384xbf16, #tpu.memory_space<vmem>>, vector<128x384xbf16>
    %c0_4 = arith.constant 0 : index
    %c0_5 = arith.constant 0 : index
    %5 = vector.load %arg4[%c0_4, %c0_5] : memref<384x256xbf16, #tpu.memory_space<vmem>>, vector<384x256xbf16>
    %cst = arith.constant dense<0.000000e+00> : vector<128x256xf32>
    %6 = tpu.matmul %4, %5, %cst {dimension_numbers = #tpu.dot_dimension_numbers<[1], [0], [0], [1], [0, 0, 1, 1], [], []>} : vector<128x384xbf16>, vector<384x256xbf16>, vector<128x256xf32> -> vector<128x256xf32>
    %7 = arith.addf %3, %6 : vector<128x256xf32>
    %c0_6 = arith.constant 0 : index
    %c0_7 = arith.constant 0 : index
    %8 = vector.load %arg7[%c0_6, %c0_7] : memref<128x256xf32, #tpu.memory_space<vmem>>, vector<128x256xf32>
    tpu.vector_store %arg7[%c0_6, %c0_7], %7 {strides = array<i32>} : memref<128x256xf32, #tpu.memory_space<vmem>>, vector<128x256xf32>,
    %c2_i32 = arith.constant 2 : i32
    %9 = arith.cmpi eq, %arg2, %c2_i32 : i32
    %10 = arith.extui %9 : i1 to i32
    %c0_i32_8 = arith.constant 0 : i32
    %11 = arith.cmpi ne, %10, %c0_i32_8 : i32
    scf.if %11 {
      %c0_9 = arith.constant 0 : index
      %c0_10 = arith.constant 0 : index
      %12 = vector.load %arg7[%c0_9, %c0_10] : memref<128x256xf32, #tpu.memory_space<vmem>>, vector<128x256xf32>
      %c0_11 = arith.constant 0 : index
      %c0_12 = arith.constant 0 : index
      %13 = vector.load %arg5[%c0_11, %c0_12] : memref<1x256xf32, #tpu.memory_space<vmem>>, vector<1x256xf32>
      %14 = vector.broadcast %13 : vector<1x256xf32> to vector<128x256xf32>
      %15 = arith.addf %12, %14 : vector<128x256xf32>
      %cst_13 = arith.constant 0.000000e+00 : f32
      %16 = vector.broadcast %cst_13 : f32 to vector<128x256xf32>
      %17 = arith.maximumf %15, %16 : vector<128x256xf32>
      %c0_14 = arith.constant 0 : index
      %c0_15 = arith.constant 0 : index
      %18 = vector.load %arg6[%c0_14, %c0_15] : memref<128x256xf32, #tpu.memory_space<vmem>>, vector<128x256xf32>
      tpu.vector_store %arg6[%c0_14, %c0_15], %17 {strides = array<i32>} : memref<128x256xf32, #tpu.memory_space<vmem>>, vector<128x256xf32>,
    } else {
    }
    return
  }
  func.func @transform_0(%arg0: i32, %arg1: i32, %arg2: i32) -> (i32, i32) {
    %c0_i32 = arith.constant 0 : i32
    return %arg0, %arg2 : i32, i32
  }
  func.func @transform_1(%arg0: i32, %arg1: i32, %arg2: i32) -> (i32, i32) {
    %c0_i32 = arith.constant 0 : i32
    return %arg2, %arg1 : i32, i32
  }
  func.func @transform_2(%arg0: i32, %arg1: i32, %arg2: i32) -> (i32, i32) {
    %c0_i32 = arith.constant 0 : i32
    %c0_i32_0 = arith.constant 0 : i32
    return %c0_i32, %arg1 : i32, i32
  }
  func.func @transform_3(%arg0: i32, %arg1: i32, %arg2: i32) -> (i32, i32) {
    %c0_i32 = arith.constant 0 : i32
    return %arg0, %arg1 : i32, i32
  }
}

module attributes {stable_mosaic.version = 11 : i64} {
  func.func @_mm_bias_act_kernel(%arg0: i32, %arg1: i32, %arg2: i32, %arg3: memref<16x384xbf16, #tpu.memory_space<vmem>>, %arg4: memref<384x512xbf16, #tpu.memory_space<vmem>>, %arg5: memref<1x512xf32, #tpu.memory_space<vmem>>, %arg6: memref<16x512xf32, #tpu.memory_space<vmem>>, %arg7: memref<16x512xf32, #tpu.memory_space<vmem>>) attributes {dimension_semantics = [#tpu.dimension_semantics<parallel>, #tpu.dimension_semantics<parallel>, #tpu.dimension_semantics<arbitrary>], iteration_bounds = array<i64: 1, 1, 6>, scalar_prefetch = 0 : i64, scratch_operands = 1 : i64, tpu.core_type = #tpu.core_type<tc>, window_params = [{transform_indices = @transform_0, window_bounds = array<i64: 16, 384>}, {transform_indices = @transform_1, window_bounds = array<i64: 384, 512>}, {transform_indices = @transform_2, window_bounds = array<i64: 1, 512>}, {transform_indices = @transform_3, window_bounds = array<i64: 16, 512>}]} {
    %c0_i32 = arith.constant 0 : i32
    %0 = arith.cmpi eq, %arg2, %c0_i32 : i32
    %1 = arith.extui %0 : i1 to i32
    %c0_i32_0 = arith.constant 0 : i32
    %2 = arith.cmpi ne, %1, %c0_i32_0 : i32
    scf.if %2 {
      %cst_9 = arith.constant 0.000000e+00 : f32
      %12 = vector.broadcast %cst_9 : f32 to vector<16x512xf32>
      %c0_10 = arith.constant 0 : index
      %c0_11 = arith.constant 0 : index
      %13 = vector.load %arg7[%c0_10, %c0_11] : memref<16x512xf32, #tpu.memory_space<vmem>>, vector<16x512xf32>
      tpu.vector_store %arg7[%c0_10, %c0_11], %12 {strides = array<i32>} : memref<16x512xf32, #tpu.memory_space<vmem>>, vector<16x512xf32>,
    } else {
    }
    %c0 = arith.constant 0 : index
    %c0_1 = arith.constant 0 : index
    %3 = vector.load %arg7[%c0, %c0_1] : memref<16x512xf32, #tpu.memory_space<vmem>>, vector<16x512xf32>
    %c0_2 = arith.constant 0 : index
    %c0_3 = arith.constant 0 : index
    %4 = vector.load %arg3[%c0_2, %c0_3] : memref<16x384xbf16, #tpu.memory_space<vmem>>, vector<16x384xbf16>
    %c0_4 = arith.constant 0 : index
    %c0_5 = arith.constant 0 : index
    %5 = vector.load %arg4[%c0_4, %c0_5] : memref<384x512xbf16, #tpu.memory_space<vmem>>, vector<384x512xbf16>
    %cst = arith.constant dense<0.000000e+00> : vector<16x512xf32>
    %6 = tpu.matmul %4, %5, %cst {dimension_numbers = #tpu.dot_dimension_numbers<[1], [0], [0], [1], [0, 0, 1, 1], [], []>} : vector<16x384xbf16>, vector<384x512xbf16>, vector<16x512xf32> -> vector<16x512xf32>
    %7 = arith.addf %3, %6 : vector<16x512xf32>
    %c0_6 = arith.constant 0 : index
    %c0_7 = arith.constant 0 : index
    %8 = vector.load %arg7[%c0_6, %c0_7] : memref<16x512xf32, #tpu.memory_space<vmem>>, vector<16x512xf32>
    tpu.vector_store %arg7[%c0_6, %c0_7], %7 {strides = array<i32>} : memref<16x512xf32, #tpu.memory_space<vmem>>, vector<16x512xf32>,
    %c5_i32 = arith.constant 5 : i32
    %9 = arith.cmpi eq, %arg2, %c5_i32 : i32
    %10 = arith.extui %9 : i1 to i32
    %c0_i32_8 = arith.constant 0 : i32
    %11 = arith.cmpi ne, %10, %c0_i32_8 : i32
    scf.if %11 {
      %c0_9 = arith.constant 0 : index
      %c0_10 = arith.constant 0 : index
      %12 = vector.load %arg7[%c0_9, %c0_10] : memref<16x512xf32, #tpu.memory_space<vmem>>, vector<16x512xf32>
      %c0_11 = arith.constant 0 : index
      %c0_12 = arith.constant 0 : index
      %13 = vector.load %arg5[%c0_11, %c0_12] : memref<1x512xf32, #tpu.memory_space<vmem>>, vector<1x512xf32>
      %14 = vector.broadcast %13 : vector<1x512xf32> to vector<16x512xf32>
      %15 = arith.addf %12, %14 : vector<16x512xf32>
      %cst_13 = arith.constant 0.000000e+00 : f32
      %16 = vector.broadcast %cst_13 : f32 to vector<16x512xf32>
      %17 = arith.maximumf %15, %16 : vector<16x512xf32>
      %c0_14 = arith.constant 0 : index
      %c0_15 = arith.constant 0 : index
      %18 = vector.load %arg6[%c0_14, %c0_15] : memref<16x512xf32, #tpu.memory_space<vmem>>, vector<16x512xf32>
      tpu.vector_store %arg6[%c0_14, %c0_15], %17 {strides = array<i32>} : memref<16x512xf32, #tpu.memory_space<vmem>>, vector<16x512xf32>,
    } else {
    }
    return
  }
  func.func @transform_0(%arg0: i32, %arg1: i32, %arg2: i32) -> (i32, i32) {
    %c0_i32 = arith.constant 0 : i32
    return %arg0, %arg2 : i32, i32
  }
  func.func @transform_1(%arg0: i32, %arg1: i32, %arg2: i32) -> (i32, i32) {
    %c0_i32 = arith.constant 0 : i32
    return %arg2, %arg1 : i32, i32
  }
  func.func @transform_2(%arg0: i32, %arg1: i32, %arg2: i32) -> (i32, i32) {
    %c0_i32 = arith.constant 0 : i32
    %c0_i32_0 = arith.constant 0 : i32
    return %c0_i32, %arg1 : i32, i32
  }
  func.func @transform_3(%arg0: i32, %arg1: i32, %arg2: i32) -> (i32, i32) {
    %c0_i32 = arith.constant 0 : i32
    return %arg0, %arg1 : i32, i32
  }
}

module attributes {stable_mosaic.version = 11 : i64} {
  func.func @_mm_bias_act_kernel(%arg0: i32, %arg1: i32, %arg2: i32, %arg3: memref<16x512xbf16, #tpu.memory_space<vmem>>, %arg4: memref<512x512xbf16, #tpu.memory_space<vmem>>, %arg5: memref<1x512xf32, #tpu.memory_space<vmem>>, %arg6: memref<16x512xf32, #tpu.memory_space<vmem>>, %arg7: memref<16x512xf32, #tpu.memory_space<vmem>>) attributes {dimension_semantics = [#tpu.dimension_semantics<parallel>, #tpu.dimension_semantics<parallel>, #tpu.dimension_semantics<arbitrary>], iteration_bounds = array<i64: 1, 2, 4>, scalar_prefetch = 0 : i64, scratch_operands = 1 : i64, tpu.core_type = #tpu.core_type<tc>, window_params = [{transform_indices = @transform_0, window_bounds = array<i64: 16, 512>}, {transform_indices = @transform_1, window_bounds = array<i64: 512, 512>}, {transform_indices = @transform_2, window_bounds = array<i64: 1, 512>}, {transform_indices = @transform_3, window_bounds = array<i64: 16, 512>}]} {
    %c0_i32 = arith.constant 0 : i32
    %0 = arith.cmpi eq, %arg2, %c0_i32 : i32
    %1 = arith.extui %0 : i1 to i32
    %c0_i32_0 = arith.constant 0 : i32
    %2 = arith.cmpi ne, %1, %c0_i32_0 : i32
    scf.if %2 {
      %cst_9 = arith.constant 0.000000e+00 : f32
      %12 = vector.broadcast %cst_9 : f32 to vector<16x512xf32>
      %c0_10 = arith.constant 0 : index
      %c0_11 = arith.constant 0 : index
      %13 = vector.load %arg7[%c0_10, %c0_11] : memref<16x512xf32, #tpu.memory_space<vmem>>, vector<16x512xf32>
      tpu.vector_store %arg7[%c0_10, %c0_11], %12 {strides = array<i32>} : memref<16x512xf32, #tpu.memory_space<vmem>>, vector<16x512xf32>,
    } else {
    }
    %c0 = arith.constant 0 : index
    %c0_1 = arith.constant 0 : index
    %3 = vector.load %arg7[%c0, %c0_1] : memref<16x512xf32, #tpu.memory_space<vmem>>, vector<16x512xf32>
    %c0_2 = arith.constant 0 : index
    %c0_3 = arith.constant 0 : index
    %4 = vector.load %arg3[%c0_2, %c0_3] : memref<16x512xbf16, #tpu.memory_space<vmem>>, vector<16x512xbf16>
    %c0_4 = arith.constant 0 : index
    %c0_5 = arith.constant 0 : index
    %5 = vector.load %arg4[%c0_4, %c0_5] : memref<512x512xbf16, #tpu.memory_space<vmem>>, vector<512x512xbf16>
    %cst = arith.constant dense<0.000000e+00> : vector<16x512xf32>
    %6 = tpu.matmul %4, %5, %cst {dimension_numbers = #tpu.dot_dimension_numbers<[1], [0], [0], [1], [0, 0, 1, 1], [], []>} : vector<16x512xbf16>, vector<512x512xbf16>, vector<16x512xf32> -> vector<16x512xf32>
    %7 = arith.addf %3, %6 : vector<16x512xf32>
    %c0_6 = arith.constant 0 : index
    %c0_7 = arith.constant 0 : index
    %8 = vector.load %arg7[%c0_6, %c0_7] : memref<16x512xf32, #tpu.memory_space<vmem>>, vector<16x512xf32>
    tpu.vector_store %arg7[%c0_6, %c0_7], %7 {strides = array<i32>} : memref<16x512xf32, #tpu.memory_space<vmem>>, vector<16x512xf32>,
    %c3_i32 = arith.constant 3 : i32
    %9 = arith.cmpi eq, %arg2, %c3_i32 : i32
    %10 = arith.extui %9 : i1 to i32
    %c0_i32_8 = arith.constant 0 : i32
    %11 = arith.cmpi ne, %10, %c0_i32_8 : i32
    scf.if %11 {
      %c0_9 = arith.constant 0 : index
      %c0_10 = arith.constant 0 : index
      %12 = vector.load %arg7[%c0_9, %c0_10] : memref<16x512xf32, #tpu.memory_space<vmem>>, vector<16x512xf32>
      %c0_11 = arith.constant 0 : index
      %c0_12 = arith.constant 0 : index
      %13 = vector.load %arg5[%c0_11, %c0_12] : memref<1x512xf32, #tpu.memory_space<vmem>>, vector<1x512xf32>
      %14 = vector.broadcast %13 : vector<1x512xf32> to vector<16x512xf32>
      %15 = arith.addf %12, %14 : vector<16x512xf32>
      %cst_13 = arith.constant 0.000000e+00 : f32
      %16 = vector.broadcast %cst_13 : f32 to vector<16x512xf32>
      %17 = arith.maximumf %15, %16 : vector<16x512xf32>
      %c0_14 = arith.constant 0 : index
      %c0_15 = arith.constant 0 : index
      %18 = vector.load %arg6[%c0_14, %c0_15] : memref<16x512xf32, #tpu.memory_space<vmem>>, vector<16x512xf32>
      tpu.vector_store %arg6[%c0_14, %c0_15], %17 {strides = array<i32>} : memref<16x512xf32, #tpu.memory_space<vmem>>, vector<16x512xf32>,
    } else {
    }
    return
  }
  func.func @transform_0(%arg0: i32, %arg1: i32, %arg2: i32) -> (i32, i32) {
    %c0_i32 = arith.constant 0 : i32
    return %arg0, %arg2 : i32, i32
  }
  func.func @transform_1(%arg0: i32, %arg1: i32, %arg2: i32) -> (i32, i32) {
    %c0_i32 = arith.constant 0 : i32
    return %arg2, %arg1 : i32, i32
  }
  func.func @transform_2(%arg0: i32, %arg1: i32, %arg2: i32) -> (i32, i32) {
    %c0_i32 = arith.constant 0 : i32
    %c0_i32_0 = arith.constant 0 : i32
    return %c0_i32, %arg1 : i32, i32
  }
  func.func @transform_3(%arg0: i32, %arg1: i32, %arg2: i32) -> (i32, i32) {
    %c0_i32 = arith.constant 0 : i32
    return %arg0, %arg1 : i32, i32
  }
}

module attributes {stable_mosaic.version = 11 : i64} {
  func.func @_mm_bias_act_kernel(%arg0: i32, %arg1: i32, %arg2: i32, %arg3: memref<16x512xbf16, #tpu.memory_space<vmem>>, %arg4: memref<512x512xbf16, #tpu.memory_space<vmem>>, %arg5: memref<1x512xf32, #tpu.memory_space<vmem>>, %arg6: memref<16x512xf32, #tpu.memory_space<vmem>>, %arg7: memref<16x512xf32, #tpu.memory_space<vmem>>) attributes {dimension_semantics = [#tpu.dimension_semantics<parallel>, #tpu.dimension_semantics<parallel>, #tpu.dimension_semantics<arbitrary>], iteration_bounds = array<i64: 1, 1, 2>, scalar_prefetch = 0 : i64, scratch_operands = 1 : i64, tpu.core_type = #tpu.core_type<tc>, window_params = [{transform_indices = @transform_0, window_bounds = array<i64: 16, 512>}, {transform_indices = @transform_1, window_bounds = array<i64: 512, 512>}, {transform_indices = @transform_2, window_bounds = array<i64: 1, 512>}, {transform_indices = @transform_3, window_bounds = array<i64: 16, 512>}]} {
    %c0_i32 = arith.constant 0 : i32
    %0 = arith.cmpi eq, %arg2, %c0_i32 : i32
    %1 = arith.extui %0 : i1 to i32
    %c0_i32_0 = arith.constant 0 : i32
    %2 = arith.cmpi ne, %1, %c0_i32_0 : i32
    scf.if %2 {
      %cst_9 = arith.constant 0.000000e+00 : f32
      %12 = vector.broadcast %cst_9 : f32 to vector<16x512xf32>
      %c0_10 = arith.constant 0 : index
      %c0_11 = arith.constant 0 : index
      %13 = vector.load %arg7[%c0_10, %c0_11] : memref<16x512xf32, #tpu.memory_space<vmem>>, vector<16x512xf32>
      tpu.vector_store %arg7[%c0_10, %c0_11], %12 {strides = array<i32>} : memref<16x512xf32, #tpu.memory_space<vmem>>, vector<16x512xf32>,
    } else {
    }
    %c0 = arith.constant 0 : index
    %c0_1 = arith.constant 0 : index
    %3 = vector.load %arg7[%c0, %c0_1] : memref<16x512xf32, #tpu.memory_space<vmem>>, vector<16x512xf32>
    %c0_2 = arith.constant 0 : index
    %c0_3 = arith.constant 0 : index
    %4 = vector.load %arg3[%c0_2, %c0_3] : memref<16x512xbf16, #tpu.memory_space<vmem>>, vector<16x512xbf16>
    %c0_4 = arith.constant 0 : index
    %c0_5 = arith.constant 0 : index
    %5 = vector.load %arg4[%c0_4, %c0_5] : memref<512x512xbf16, #tpu.memory_space<vmem>>, vector<512x512xbf16>
    %cst = arith.constant dense<0.000000e+00> : vector<16x512xf32>
    %6 = tpu.matmul %4, %5, %cst {dimension_numbers = #tpu.dot_dimension_numbers<[1], [0], [0], [1], [0, 0, 1, 1], [], []>} : vector<16x512xbf16>, vector<512x512xbf16>, vector<16x512xf32> -> vector<16x512xf32>
    %7 = arith.addf %3, %6 : vector<16x512xf32>
    %c0_6 = arith.constant 0 : index
    %c0_7 = arith.constant 0 : index
    %8 = vector.load %arg7[%c0_6, %c0_7] : memref<16x512xf32, #tpu.memory_space<vmem>>, vector<16x512xf32>
    tpu.vector_store %arg7[%c0_6, %c0_7], %7 {strides = array<i32>} : memref<16x512xf32, #tpu.memory_space<vmem>>, vector<16x512xf32>,
    %c1_i32 = arith.constant 1 : i32
    %9 = arith.cmpi eq, %arg2, %c1_i32 : i32
    %10 = arith.extui %9 : i1 to i32
    %c0_i32_8 = arith.constant 0 : i32
    %11 = arith.cmpi ne, %10, %c0_i32_8 : i32
    scf.if %11 {
      %c0_9 = arith.constant 0 : index
      %c0_10 = arith.constant 0 : index
      %12 = vector.load %arg7[%c0_9, %c0_10] : memref<16x512xf32, #tpu.memory_space<vmem>>, vector<16x512xf32>
      %c0_11 = arith.constant 0 : index
      %c0_12 = arith.constant 0 : index
      %13 = vector.load %arg5[%c0_11, %c0_12] : memref<1x512xf32, #tpu.memory_space<vmem>>, vector<1x512xf32>
      %14 = vector.broadcast %13 : vector<1x512xf32> to vector<16x512xf32>
      %15 = arith.addf %12, %14 : vector<16x512xf32>
      %cst_13 = arith.constant 0.000000e+00 : f32
      %16 = vector.broadcast %cst_13 : f32 to vector<16x512xf32>
      %17 = arith.maximumf %15, %16 : vector<16x512xf32>
      %c0_14 = arith.constant 0 : index
      %c0_15 = arith.constant 0 : index
      %18 = vector.load %arg6[%c0_14, %c0_15] : memref<16x512xf32, #tpu.memory_space<vmem>>, vector<16x512xf32>
      tpu.vector_store %arg6[%c0_14, %c0_15], %17 {strides = array<i32>} : memref<16x512xf32, #tpu.memory_space<vmem>>, vector<16x512xf32>,
    } else {
    }
    return
  }
  func.func @transform_0(%arg0: i32, %arg1: i32, %arg2: i32) -> (i32, i32) {
    %c0_i32 = arith.constant 0 : i32
    return %arg0, %arg2 : i32, i32
  }
  func.func @transform_1(%arg0: i32, %arg1: i32, %arg2: i32) -> (i32, i32) {
    %c0_i32 = arith.constant 0 : i32
    return %arg2, %arg1 : i32, i32
  }
  func.func @transform_2(%arg0: i32, %arg1: i32, %arg2: i32) -> (i32, i32) {
    %c0_i32 = arith.constant 0 : i32
    %c0_i32_0 = arith.constant 0 : i32
    return %c0_i32, %arg1 : i32, i32
  }
  func.func @transform_3(%arg0: i32, %arg1: i32, %arg2: i32) -> (i32, i32) {
    %c0_i32 = arith.constant 0 : i32
    return %arg0, %arg1 : i32, i32
  }
}

module attributes {stable_mosaic.version = 11 : i64} {
  func.func @_mm_bias_act_kernel(%arg0: i32, %arg1: i32, %arg2: i32, %arg3: memref<16x512xbf16, #tpu.memory_space<vmem>>, %arg4: memref<512x128xbf16, #tpu.memory_space<vmem>>, %arg5: memref<1x128xf32, #tpu.memory_space<vmem>>, %arg6: memref<16x128xf32, #tpu.memory_space<vmem>>, %arg7: memref<16x128xf32, #tpu.memory_space<vmem>>) attributes {dimension_semantics = [#tpu.dimension_semantics<parallel>, #tpu.dimension_semantics<parallel>, #tpu.dimension_semantics<arbitrary>], iteration_bounds = array<i64: 1, 1, 1>, scalar_prefetch = 0 : i64, scratch_operands = 1 : i64, tpu.core_type = #tpu.core_type<tc>, window_params = [{transform_indices = @transform_0, window_bounds = array<i64: 16, 512>}, {transform_indices = @transform_1, window_bounds = array<i64: 512, 128>}, {transform_indices = @transform_2, window_bounds = array<i64: 1, 128>}, {transform_indices = @transform_3, window_bounds = array<i64: 16, 128>}]} {
    %c0_i32 = arith.constant 0 : i32
    %0 = arith.cmpi eq, %arg2, %c0_i32 : i32
    %1 = arith.extui %0 : i1 to i32
    %c0_i32_0 = arith.constant 0 : i32
    %2 = arith.cmpi ne, %1, %c0_i32_0 : i32
    scf.if %2 {
      %cst_10 = arith.constant 0.000000e+00 : f32
      %12 = vector.broadcast %cst_10 : f32 to vector<16x128xf32>
      %c0_11 = arith.constant 0 : index
      %c0_12 = arith.constant 0 : index
      %13 = vector.load %arg7[%c0_11, %c0_12] : memref<16x128xf32, #tpu.memory_space<vmem>>, vector<16x128xf32>
      tpu.vector_store %arg7[%c0_11, %c0_12], %12 {strides = array<i32>} : memref<16x128xf32, #tpu.memory_space<vmem>>, vector<16x128xf32>,
    } else {
    }
    %c0 = arith.constant 0 : index
    %c0_1 = arith.constant 0 : index
    %3 = vector.load %arg7[%c0, %c0_1] : memref<16x128xf32, #tpu.memory_space<vmem>>, vector<16x128xf32>
    %c0_2 = arith.constant 0 : index
    %c0_3 = arith.constant 0 : index
    %4 = vector.load %arg3[%c0_2, %c0_3] : memref<16x512xbf16, #tpu.memory_space<vmem>>, vector<16x512xbf16>
    %c0_4 = arith.constant 0 : index
    %c0_5 = arith.constant 0 : index
    %5 = vector.load %arg4[%c0_4, %c0_5] : memref<512x128xbf16, #tpu.memory_space<vmem>>, vector<512x128xbf16>
    %cst = arith.constant dense<0.000000e+00> : vector<16x128xf32>
    %6 = tpu.matmul %4, %5, %cst {dimension_numbers = #tpu.dot_dimension_numbers<[1], [0], [0], [1], [0, 0, 1, 1], [], []>} : vector<16x512xbf16>, vector<512x128xbf16>, vector<16x128xf32> -> vector<16x128xf32>
    %7 = arith.addf %3, %6 : vector<16x128xf32>
    %c0_6 = arith.constant 0 : index
    %c0_7 = arith.constant 0 : index
    %8 = vector.load %arg7[%c0_6, %c0_7] : memref<16x128xf32, #tpu.memory_space<vmem>>, vector<16x128xf32>
    tpu.vector_store %arg7[%c0_6, %c0_7], %7 {strides = array<i32>} : memref<16x128xf32, #tpu.memory_space<vmem>>, vector<16x128xf32>,
    %c0_i32_8 = arith.constant 0 : i32
    %9 = arith.cmpi eq, %arg2, %c0_i32_8 : i32
    %10 = arith.extui %9 : i1 to i32
    %c0_i32_9 = arith.constant 0 : i32
    %11 = arith.cmpi ne, %10, %c0_i32_9 : i32
    scf.if %11 {
      %c0_10 = arith.constant 0 : index
      %c0_11 = arith.constant 0 : index
      %12 = vector.load %arg7[%c0_10, %c0_11] : memref<16x128xf32, #tpu.memory_space<vmem>>, vector<16x128xf32>
      %c0_12 = arith.constant 0 : index
      %c0_13 = arith.constant 0 : index
      %13 = vector.load %arg5[%c0_12, %c0_13] : memref<1x128xf32, #tpu.memory_space<vmem>>, vector<1x128xf32>
      %14 = vector.broadcast %13 : vector<1x128xf32> to vector<16x128xf32>
      %15 = arith.addf %12, %14 : vector<16x128xf32>
      %cst_14 = arith.constant 0.000000e+00 : f32
      %16 = vector.broadcast %cst_14 : f32 to vector<16x128xf32>
      %17 = arith.maximumf %15, %16 : vector<16x128xf32>
      %c0_15 = arith.constant 0 : index
      %c0_16 = arith.constant 0 : index
      %18 = vector.load %arg6[%c0_15, %c0_16] : memref<16x128xf32, #tpu.memory_space<vmem>>, vector<16x128xf32>
      tpu.vector_store %arg6[%c0_15, %c0_16], %17 {strides = array<i32>} : memref<16x128xf32, #tpu.memory_space<vmem>>, vector<16x128xf32>,
    } else {
    }
    return
  }
  func.func @transform_0(%arg0: i32, %arg1: i32, %arg2: i32) -> (i32, i32) {
    %c0_i32 = arith.constant 0 : i32
    return %arg0, %arg2 : i32, i32
  }
  func.func @transform_1(%arg0: i32, %arg1: i32, %arg2: i32) -> (i32, i32) {
    %c0_i32 = arith.constant 0 : i32
    return %arg2, %arg1 : i32, i32
  }
  func.func @transform_2(%arg0: i32, %arg1: i32, %arg2: i32) -> (i32, i32) {
    %c0_i32 = arith.constant 0 : i32
    %c0_i32_0 = arith.constant 0 : i32
    return %c0_i32, %arg1 : i32, i32
  }
  func.func @transform_3(%arg0: i32, %arg1: i32, %arg2: i32) -> (i32, i32) {
    %c0_i32 = arith.constant 0 : i32
    return %arg0, %arg1 : i32, i32
  }
}

module attributes {stable_mosaic.version = 11 : i64} {
  func.func @_mm_bias_act_kernel(%arg0: i32, %arg1: i32, %arg2: i32, %arg3: memref<16x128xbf16, #tpu.memory_space<vmem>>, %arg4: memref<128x128xbf16, #tpu.memory_space<vmem>>, %arg5: memref<1x128xf32, #tpu.memory_space<vmem>>, %arg6: memref<16x128xf32, #tpu.memory_space<vmem>>, %arg7: memref<16x128xf32, #tpu.memory_space<vmem>>) attributes {dimension_semantics = [#tpu.dimension_semantics<parallel>, #tpu.dimension_semantics<parallel>, #tpu.dimension_semantics<arbitrary>], iteration_bounds = array<i64: 1, 1, 1>, scalar_prefetch = 0 : i64, scratch_operands = 1 : i64, tpu.core_type = #tpu.core_type<tc>, window_params = [{transform_indices = @transform_0, window_bounds = array<i64: 16, 128>}, {transform_indices = @transform_1, window_bounds = array<i64: 128, 128>}, {transform_indices = @transform_2, window_bounds = array<i64: 1, 128>}, {transform_indices = @transform_3, window_bounds = array<i64: 16, 128>}]} {
    %c0_i32 = arith.constant 0 : i32
    %0 = arith.cmpi eq, %arg2, %c0_i32 : i32
    %1 = arith.extui %0 : i1 to i32
    %c0_i32_0 = arith.constant 0 : i32
    %2 = arith.cmpi ne, %1, %c0_i32_0 : i32
    scf.if %2 {
      %cst_10 = arith.constant 0.000000e+00 : f32
      %12 = vector.broadcast %cst_10 : f32 to vector<16x128xf32>
      %c0_11 = arith.constant 0 : index
      %c0_12 = arith.constant 0 : index
      %13 = vector.load %arg7[%c0_11, %c0_12] : memref<16x128xf32, #tpu.memory_space<vmem>>, vector<16x128xf32>
      tpu.vector_store %arg7[%c0_11, %c0_12], %12 {strides = array<i32>} : memref<16x128xf32, #tpu.memory_space<vmem>>, vector<16x128xf32>,
    } else {
    }
    %c0 = arith.constant 0 : index
    %c0_1 = arith.constant 0 : index
    %3 = vector.load %arg7[%c0, %c0_1] : memref<16x128xf32, #tpu.memory_space<vmem>>, vector<16x128xf32>
    %c0_2 = arith.constant 0 : index
    %c0_3 = arith.constant 0 : index
    %4 = vector.load %arg3[%c0_2, %c0_3] : memref<16x128xbf16, #tpu.memory_space<vmem>>, vector<16x128xbf16>
    %c0_4 = arith.constant 0 : index
    %c0_5 = arith.constant 0 : index
    %5 = vector.load %arg4[%c0_4, %c0_5] : memref<128x128xbf16, #tpu.memory_space<vmem>>, vector<128x128xbf16>
    %cst = arith.constant dense<0.000000e+00> : vector<16x128xf32>
    %6 = tpu.matmul %4, %5, %cst {dimension_numbers = #tpu.dot_dimension_numbers<[1], [0], [0], [1], [0, 0, 1, 1], [], []>} : vector<16x128xbf16>, vector<128x128xbf16>, vector<16x128xf32> -> vector<16x128xf32>
    %7 = arith.addf %3, %6 : vector<16x128xf32>
    %c0_6 = arith.constant 0 : index
    %c0_7 = arith.constant 0 : index
    %8 = vector.load %arg7[%c0_6, %c0_7] : memref<16x128xf32, #tpu.memory_space<vmem>>, vector<16x128xf32>
    tpu.vector_store %arg7[%c0_6, %c0_7], %7 {strides = array<i32>} : memref<16x128xf32, #tpu.memory_space<vmem>>, vector<16x128xf32>,
    %c0_i32_8 = arith.constant 0 : i32
    %9 = arith.cmpi eq, %arg2, %c0_i32_8 : i32
    %10 = arith.extui %9 : i1 to i32
    %c0_i32_9 = arith.constant 0 : i32
    %11 = arith.cmpi ne, %10, %c0_i32_9 : i32
    scf.if %11 {
      %c0_10 = arith.constant 0 : index
      %c0_11 = arith.constant 0 : index
      %12 = vector.load %arg7[%c0_10, %c0_11] : memref<16x128xf32, #tpu.memory_space<vmem>>, vector<16x128xf32>
      %c0_12 = arith.constant 0 : index
      %c0_13 = arith.constant 0 : index
      %13 = vector.load %arg5[%c0_12, %c0_13] : memref<1x128xf32, #tpu.memory_space<vmem>>, vector<1x128xf32>
      %14 = vector.broadcast %13 : vector<1x128xf32> to vector<16x128xf32>
      %15 = arith.addf %12, %14 : vector<16x128xf32>
      %c0_14 = arith.constant 0 : index
      %c0_15 = arith.constant 0 : index
      %16 = vector.load %arg6[%c0_14, %c0_15] : memref<16x128xf32, #tpu.memory_space<vmem>>, vector<16x128xf32>
      tpu.vector_store %arg6[%c0_14, %c0_15], %15 {strides = array<i32>} : memref<16x128xf32, #tpu.memory_space<vmem>>, vector<16x128xf32>,
    } else {
    }
    return
  }
  func.func @transform_0(%arg0: i32, %arg1: i32, %arg2: i32) -> (i32, i32) {
    %c0_i32 = arith.constant 0 : i32
    return %arg0, %arg2 : i32, i32
  }
  func.func @transform_1(%arg0: i32, %arg1: i32, %arg2: i32) -> (i32, i32) {
    %c0_i32 = arith.constant 0 : i32
    return %arg2, %arg1 : i32, i32
  }
  func.func @transform_2(%arg0: i32, %arg1: i32, %arg2: i32) -> (i32, i32) {
    %c0_i32 = arith.constant 0 : i32
    %c0_i32_0 = arith.constant 0 : i32
    return %c0_i32, %arg1 : i32, i32
  }
  func.func @transform_3(%arg0: i32, %arg1: i32, %arg2: i32) -> (i32, i32) {
    %c0_i32 = arith.constant 0 : i32
    return %arg0, %arg1 : i32, i32
  }
}

</mosaic_0001>

<llo_original>
// kernel: cnn_model_forward.8
$region0: #{cnn_model_forward.8}
  #allocation0 [shape = 'u32[]', space=smem, size = 0x4, offset = 0x4, fixed_abs, tag = 'smem constant byte address 0x4 - core index']
  #allocation1 [shape = 'u32[144,128]{1,0:T(1,128)}', space=vmem, size = 0x12000, scoped, tag = 'internal scratch']
  #allocation2 [shape = 'f32[512,128]{1,0:T(8,128)}', space=vmem, size = 0x40000, scoped, tag = 'scratch operand']
  %s0 = inlined_call_operand.vmem [shape: bf16[2048,128], index: 0, kind: input, shape index: {}]
  %s1 = inlined_call_operand.vmem [shape: bf16[128,128], index: 1, kind: input, shape index: {}]
  %s2 = inlined_call_operand.vmem [shape: f32[1,128], index: 2, kind: input, shape index: {}]
  %s3 = inlined_call_operand.vmem [shape: f32[2048,128], index: 3, kind: output, shape index: {}]
  %s4 = sld [smem:[#allocation0]]
  $region53: #{cnn_model_forward.8} parent=0
    _
  %s6 = ssub.s32 1, %s4
  %s7 = scalar_select 0, %s6, %s4
  loop: start=0, step=1, limit=6
  $region2: #{cnn_model_forward.8} parent=0 // loop_pre_header
    _
  $region3: #{cnn_model_forward.8} parent=0 // loop_header
    %s9 = sphi 0, %s13
    %p10 = scmp.ge.s32.totalorder %s9, 6
    %s16 = sphi 0, %s35
    %s17 = sphi 0, %s31
    %s18 = sphi 0, %s27
    %s19 = sphi 0, %s16
    %s20 = sphi 0, %s17
    %s21 = sphi 0, %s18
    %s22 = sphi 0, %s19
    %s23 = sphi 0, %s20
    %s24 = sphi 0, %s21
    %s40 = sphi 0, %s42
    %s43 = sphi 0, %s40
    %s44 = sphi 0, %s43
    %s60 = sphi 0, %s44
    %s68 = sphi 0, %s70
    %s71 = sphi 0, %s68
    %s72 = sphi 0, %s71
    %s88 = sphi 0, %s72
    %s94 = sphi 0, %s96
    %s97 = sphi 0, %s94
    %s98 = sphi 0, %s97
    %s114 = sphi 0, %s98
    %s122 = sphi 0, %s124
    %s125 = sphi 0, %s122
    %s126 = sphi 0, %s125
    %s142 = sphi 0, %s126
  $region4: #{cnn_model_forward.8} parent=0 // loop_header_branch
    %12 = sbr.rel (%p10) target = $region8
  $region5: #{cnn_model_forward.8} parent=0 // loop_body
    %s14 = ssub.s32 %s9, 1
    %s15 = ssub.s32 %s9, 2
    %s25 = sadd.s32 1, %s18
    %p26 = scmp.ge.s32.totalorder %s25, 1
    %s27 = scalar_select %p26, 0, %s25
    %s28 = sadd.s32 1, %s17
    %s29 = scalar_select %p26, %s28, %s17
    %p30 = scmp.ge.s32.totalorder %s29, 1
    %s31 = scalar_select %p30, 0, %s29
    %s32 = sadd.s32 1, %s16
    %s33 = scalar_select %p30, %s32, %s16
    %p34 = scmp.ge.s32.totalorder %s33, 4
    %s35 = scalar_select %p34, 0, %s33
    %s36 = ssub.s32 %s16, %s35
    %s37 = ssub.s32 %s18, %s27
    %s38 = sor.u32 %s36, %s37
    %p39 = scmp.eq.s32.totalorder %s38, 0
    %s41 = sadd.s32 %s40, 1
    %s42 = scalar_select %p39, %s40, %s41
    %p45 = pneg %p39
    %p46 = scmp.eq.s32.totalorder %s9, 3
    %p47 = por %p45, %p46
    %p48 = scmp.ne.s32.totalorder %s40, %s43
    %p49 = scmp.eq.s32.totalorder %s9, 0
    %p50 = por %p48, %p49
    %p51 = scmp.ne.s32.totalorder %s40, %s43
    %p52 = scmp.eq.s32.totalorder %s14, 3
    %p53 = por %p51, %p52
    %p54 = scmp.ne.s32.totalorder %s43, %s44
    %p55 = scmp.eq.s32.totalorder %s14, 0
    %p56 = por %p54, %p55
    %p57 = scmp.ne.s32.totalorder %s43, %s44
    %p58 = scmp.eq.s32.totalorder %s15, 3
    %p59 = por %p57, %p58
    %p61 = scmp.ne.s32.totalorder %s44, %s60
    %p62 = scmp.eq.s32.totalorder %s15, 0
    %p63 = por %p61, %p62
    %s64 = ssub.s32 %s18, %s27
    %s65 = ssub.s32 %s17, %s31
    %s66 = sor.u32 %s64, %s65
    %p67 = scmp.eq.s32.totalorder %s66, 0
    %s69 = sadd.s32 %s68, 1
    %s70 = scalar_select %p67, %s68, %s69
    %p73 = pneg %p67
    %p74 = scmp.eq.s32.totalorder %s9, 3
    %p75 = por %p73, %p74
    %p76 = scmp.ne.s32.totalorder %s68, %s71
    %p77 = scmp.eq.s32.totalorder %s9, 0
    %p78 = por %p76, %p77
    %p79 = scmp.ne.s32.totalorder %s68, %s71
    %p80 = scmp.eq.s32.totalorder %s14, 3
    %p81 = por %p79, %p80
    %p82 = scmp.ne.s32.totalorder %s71, %s72
    %p83 = scmp.eq.s32.totalorder %s14, 0
    %p84 = por %p82, %p83
    %p85 = scmp.ne.s32.totalorder %s71, %s72
    %p86 = scmp.eq.s32.totalorder %s15, 3
    %p87 = por %p85, %p86
    %p89 = scmp.ne.s32.totalorder %s72, %s88
    %p90 = scmp.eq.s32.totalorder %s15, 0
    %p91 = por %p89, %p90
    %s92 = ssub.s32 %s17, %s31
    %p93 = scmp.eq.s32.totalorder %s92, 0
    %s95 = sadd.s32 %s94, 1
    %s96 = scalar_select %p93, %s94, %s95
    %p99 = pneg %p93
    %p100 = scmp.eq.s32.totalorder %s9, 3
    %p101 = por %p99, %p100
    %p102 = scmp.ne.s32.totalorder %s94, %s97
    %p103 = scmp.eq.s32.totalorder %s9, 0
    %p104 = por %p102, %p103
    %p105 = scmp.ne.s32.totalorder %s94, %s97
    %p106 = scmp.eq.s32.totalorder %s14, 3
    %p107 = por %p105, %p106
    %p108 = scmp.ne.s32.totalorder %s97, %s98
    %p109 = scmp.eq.s32.totalorder %s14, 0
    %p110 = por %p108, %p109
    %p111 = scmp.ne.s32.totalorder %s97, %s98
    %p112 = scmp.eq.s32.totalorder %s15, 3
    %p113 = por %p111, %p112
    %p115 = scmp.ne.s32.totalorder %s98, %s114
    %p116 = scmp.eq.s32.totalorder %s15, 0
    %p117 = por %p115, %p116
    %s118 = ssub.s32 %s16, %s35
    %s119 = ssub.s32 %s17, %s31
    %s120 = sor.u32 %s118, %s119
    %p121 = scmp.eq.s32.totalorder %s120, 0
    %s123 = sadd.s32 %s122, 1
    %s124 = scalar_select %p121, %s122, %s123
    %p127 = pneg %p121
    %p128 = scmp.eq.s32.totalorder %s9, 3
    %p129 = por %p127, %p128
    %p130 = scmp.ne.s32.totalorder %s122, %s125
    %p131 = scmp.eq.s32.totalorder %s9, 0
    %p132 = por %p130, %p131
    %p133 = scmp.ne.s32.totalorder %s122, %s125
    %p134 = scmp.eq.s32.totalorder %s14, 3
    %p135 = por %p133, %p134
    %p136 = scmp.ne.s32.totalorder %s125, %s126
    %p137 = scmp.eq.s32.totalorder %s14, 0
    %p138 = por %p136, %p137
    %p139 = scmp.ne.s32.totalorder %s125, %s126
    %p140 = scmp.eq.s32.totalorder %s15, 3
    %p141 = por %p139, %p140
    %p143 = scmp.ne.s32.totalorder %s126, %s142
    %p144 = scmp.eq.s32.totalorder %s15, 0
    %p145 = por %p143, %p144
    %p146 = scmp.le.s32.totalorder 1, %s9
    %p147 = scmp.lt.s32.totalorder %s9, 5
    %p148 = pnand %p146, %p147
    %p149 = pneg %p148
    // Predicated region
    $region9: #{cnn_model_forward.8} parent=5 // pred_check
      _
    $region10: #{cnn_model_forward.8} parent=5 // pred_check_branch
      %151 = sbr.rel (%p148) target = $region12
    $region11: #{cnn_model_forward.8} parent=5 // pred_region
      %s152 = ssub.s32 %s9, 1
      // Predicated region
      $region13: #{cnn_model_forward.8} parent=11 // pred_check
        %p153 = pneg %p84
      $region14: #{cnn_model_forward.8} parent=11 // pred_check_branch
        %155 = sbr.rel (%p153) target = $region16
      $region15: #{cnn_model_forward.8} parent=11 // pred_region
        %s156 = smul.u32 16, %s21
        %p157 = scmp.lt.s32.totalorder %s156, 15
        %s158 = scalar_select %p157, %s156, 15
        %p159 = scmp.lt.s32.totalorder %s20, 0
        %s160 = scalar_select %p159, %s20, 0
        %s161 = sadd.s32 %s160, %s158
        %s162 = smul.addr %s161, 4
        %s163 = scalar_lea.vmem %s1, %s162
        %s164 = smul.u32 16, %s21
      $region16: #{cnn_model_forward.8} parent=11 // pred_fallthru
        _
      // Predicated region
      $region17: #{cnn_model_forward.8} parent=11 // pred_check
        %p165 = pneg %p110
      $region18: #{cnn_model_forward.8} parent=11 // pred_check_branch
        %167 = sbr.rel (%p165) target = $region20
      $region19: #{cnn_model_forward.8} parent=11 // pred_region
        %p168 = scmp.lt.s32.totalorder %s20, 0
        %s169 = scalar_select %p168, %s20, 0
        %s170 = scalar_lea.vmem %s2, %s169
      $region20: #{cnn_model_forward.8} parent=11 // pred_fallthru
        _
    $region12: #{cnn_model_forward.8} parent=5 // pred_fallthru
      _
    %p171 = scmp.lt.s32.totalorder %s9, 4
    // Predicated region
    $region21: #{cnn_model_forward.8} parent=5 // pred_check
      %p172 = pneg %p171
    $region22: #{cnn_model_forward.8} parent=5 // pred_check_branch
      %174 = sbr.rel (%p172) target = $region24
    $region23: #{cnn_model_forward.8} parent=5 // pred_region
      // Predicated region
      $region25: #{cnn_model_forward.8} parent=23 // pred_check
        %p175 = pneg %p50
      $region26: #{cnn_model_forward.8} parent=23 // pred_check_branch
        %177 = sbr.rel (%p175) target = $region28
      $region27: #{cnn_model_forward.8} parent=23 // pred_region
        %s178 = smul.u32 64, %s16
        %p179 = scmp.lt.s32.totalorder %s178, 255
        %s180 = scalar_select %p179, %s178, 255
        %p181 = scmp.lt.s32.totalorder %s18, 0
        %s182 = scalar_select %p181, %s18, 0
        %s183 = sadd.s32 %s182, %s180
        %s184 = smul.addr %s183, 4
        %s185 = scalar_lea.vmem %s0, %s184
        %s186 = smul.u32 64, %s16
      $region28: #{cnn_model_forward.8} parent=23 // pred_fallthru
        _
    $region24: #{cnn_model_forward.8} parent=5 // pred_fallthru
      _
    %p187 = scmp.le.s32.totalorder 1, %s9
    %p188 = scmp.lt.s32.totalorder %s9, 5
    %p189 = pnand %p187, %p188
    %p190 = pneg %p189
    // Predicated region
    $region29: #{cnn_model_forward.8} parent=5 // pred_check
      _
    $region30: #{cnn_model_forward.8} parent=5 // pred_check_branch
      %192 = sbr.rel (%p189) target = $region32
    $region31: #{cnn_model_forward.8} parent=5 // pred_region
      %s193 = ssub.s32 %s9, 1
      %s194 = smul.u32 64, %s19
      %p195 = scmp.lt.s32.totalorder %s194, 255
      %s196 = scalar_select %p195, %s194, 255
      %p197 = scmp.lt.s32.totalorder %s21, 0
      %s198 = scalar_select %p197, %s21, 0
      %s199 = sadd.s32 %s198, %s196
      %s200 = smul.addr %s199, 4
      %s201 = scalar_lea.vmem %s0, %s200
      %p202 = pneg %p56
      %p203 = pneg %p53
      %s204 = smul.u32 16, %s21
      %p205 = scmp.lt.s32.totalorder %s204, 15
      %s206 = scalar_select %p205, %s204, 15
      %p207 = scmp.lt.s32.totalorder %s20, 0
      %s208 = scalar_select %p207, %s20, 0
      %s209 = sadd.s32 %s208, %s206
      %s210 = smul.addr %s209, 4
      %s211 = scalar_lea.vmem %s1, %s210
      %p212 = pneg %p84
      %p213 = pneg %p81
      %p214 = scmp.lt.s32.totalorder %s20, 0
      %s215 = scalar_select %p214, %s20, 0
      %s216 = scalar_lea.vmem %s2, %s215
      %p217 = pneg %p110
      %p218 = pneg %p107
      %p219 = pneg %p138
      %p220 = pneg %p135
      %s221 = smul.u32 64, %s19
      %p222 = scmp.lt.s32.totalorder %s221, 255
      %s223 = scalar_select %p222, %s221, 255
      %p224 = scmp.lt.s32.totalorder %s20, 0
      %s225 = scalar_select %p224, %s20, 0
      %s226 = sadd.s32 %s225, %s223
      %s227 = smul.addr %s226, 8
      %s228 = scalar_lea.vmem %s3, %s227
      %s229 = smul.u32 64, %s19
      %p230 = scmp.lt.s32.totalorder %s229, 255
      %s231 = scalar_select %p230, %s229, 255
      %p232 = scmp.lt.s32.totalorder %s21, 0
      %s233 = scalar_select %p232, %s21, 0
      %s234 = sadd.s32 %s233, %s231
      %s235 = smul.addr %s234, 4
      %s236 = scalar_lea.vmem %s0, %s235
      %s237 = smul.u32 64, %s19
      %s238 = smul.u32 16, %s21
      %p239 = scmp.lt.s32.totalorder %s238, 15
      %s240 = scalar_select %p239, %s238, 15
      %p241 = scmp.lt.s32.totalorder %s20, 0
      %s242 = scalar_select %p241, %s20, 0
      %s243 = sadd.s32 %s242, %s240
      %s244 = smul.addr %s243, 4
      %s245 = scalar_lea.vmem %s1, %s244
      %s246 = smul.u32 16, %s21
      %p247 = scmp.lt.s32.totalorder %s20, 0
      %s248 = scalar_select %p247, %s20, 0
      %s249 = scalar_lea.vmem %s2, %s248
      %s250 = smul.u32 64, %s19
      %p251 = scmp.lt.s32.totalorder %s250, 255
      %s252 = scalar_select %p251, %s250, 255
      %p253 = scmp.lt.s32.totalorder %s20, 0
      %s254 = scalar_select %p253, %s20, 0
      %s255 = sadd.s32 %s254, %s252
      %s256 = smul.addr %s255, 8
      %s257 = scalar_lea.vmem %s3, %s256
      %s258 = smul.u32 64, %s19
      %p260 = scmp.eq.s32.totalorder %s21, 0
      // Predicated region
      $region33: #{cnn_model_forward.8} parent=31 // pred_check
        %p261 = pneg %p260
      $region34: #{cnn_model_forward.8} parent=31 // pred_check_branch
        %263 = sbr.rel (%p261) target = $region36
      $region35: #{cnn_model_forward.8} parent=31 // pred_region
        %264 = vst [vmem:[#allocation2] sm:$0xff] 0.0
        %265 = vst [vmem:[#allocation2 + $0x8] sm:$0xff] 0.0
        %266 = vst [vmem:[#allocation2 + $0x10] sm:$0xff] 0.0
        %267 = vst [vmem:[#allocation2 + $0x18] sm:$0xff] 0.0
        %268 = vst [vmem:[#allocation2 + $0x20] sm:$0xff] 0.0
        %269 = vst [vmem:[#allocation2 + $0x28] sm:$0xff] 0.0
        %270 = vst [vmem:[#allocation2 + $0x30] sm:$0xff] 0.0
        %271 = vst [vmem:[#allocation2 + $0x38] sm:$0xff] 0.0
        %272 = vst [vmem:[#allocation2 + $0x40] sm:$0xff] 0.0
        %273 = vst [vmem:[#allocation2 + $0x48] sm:$0xff] 0.0
        %274 = vst [vmem:[#allocation2 + $0x50] sm:$0xff] 0.0
        %275 = vst [vmem:[#allocation2 + $0x58] sm:$0xff] 0.0
        %276 = vst [vmem:[#allocation2 + $0x60] sm:$0xff] 0.0
        %277 = vst [vmem:[#allocation2 + $0x68] sm:$0xff] 0.0
        %278 = vst [vmem:[#allocation2 + $0x70] sm:$0xff] 0.0
        %279 = vst [vmem:[#allocation2 + $0x78] sm:$0xff] 0.0
        %280 = vst [vmem:[#allocation2 + $0x80] sm:$0xff] 0.0
        %281 = vst [vmem:[#allocation2 + $0x88] sm:$0xff] 0.0
        %282 = vst [vmem:[#allocation2 + $0x90] sm:$0xff] 0.0
        %283 = vst [vmem:[#allocation2 + $0x98] sm:$0xff] 0.0
        %284 = vst [vmem:[#allocation2 + $0xa0] sm:$0xff] 0.0
        %285 = vst [vmem:[#allocation2 + $0xa8] sm:$0xff] 0.0
        %286 = vst [vmem:[#allocation2 + $0xb0] sm:$0xff] 0.0
        %287 = vst [vmem:[#allocation2 + $0xb8] sm:$0xff] 0.0
        %288 = vst [vmem:[#allocation2 + $0xc0] sm:$0xff] 0.0
        %289 = vst [vmem:[#allocation2 + $0xc8] sm:$0xff] 0.0
        %290 = vst [vmem:[#allocation2 + $0xd0] sm:$0xff] 0.0
        %291 = vst [vmem:[#allocation2 + $0xd8] sm:$0xff] 0.0
        %292 = vst [vmem:[#allocation2 + $0xe0] sm:$0xff] 0.0
        %293 = vst [vmem:[#allocation2 + $0xe8] sm:$0xff] 0.0
        %294 = vst [vmem:[#allocation2 + $0xf0] sm:$0xff] 0.0
        %295 = vst [vmem:[#allocation2 + $0xf8] sm:$0xff] 0.0
        %296 = vst [vmem:[#allocation2 + $0x100] sm:$0xff] 0.0
        %297 = vst [vmem:[#allocation2 + $0x108] sm:$0xff] 0.0
        %298 = vst [vmem:[#allocation2 + $0x110] sm:$0xff] 0.0
        %299 = vst [vmem:[#allocation2 + $0x118] sm:$0xff] 0.0
        %300 = vst [vmem:[#allocation2 + $0x120] sm:$0xff] 0.0
        %301 = vst [vmem:[#allocation2 + $0x128] sm:$0xff] 0.0
        %302 = vst [vmem:[#allocation2 + $0x130] sm:$0xff] 0.0
        %303 = vst [vmem:[#allocation2 + $0x138] sm:$0xff] 0.0
        %304 = vst [vmem:[#allocation2 + $0x140] sm:$0xff] 0.0
        %305 = vst [vmem:[#allocation2 + $0x148] sm:$0xff] 0.0
        %306 = vst [vmem:[#allocation2 + $0x150] sm:$0xff] 0.0
        %307 = vst [vmem:[#allocation2 + $0x158] sm:$0xff] 0.0
        %308 = vst [vmem:[#allocation2 + $0x160] sm:$0xff] 0.0
        %309 = vst [vmem:[#allocation2 + $0x168] sm:$0xff] 0.0
        %310 = vst [vmem:[#allocation2 + $0x170] sm:$0xff] 0.0
        %311 = vst [vmem:[#allocation2 + $0x178] sm:$0xff] 0.0
        %312 = vst [vmem:[#allocation2 + $0x180] sm:$0xff] 0.0
        %313 = vst [vmem:[#allocation2 + $0x188] sm:$0xff] 0.0
        %314 = vst [vmem:[#allocation2 + $0x190] sm:$0xff] 0.0
        %315 = vst [vmem:[#allocation2 + $0x198] sm:$0xff] 0.0
        %316 = vst [vmem:[#allocation2 + $0x1a0] sm:$0xff] 0.0
        %317 = vst [vmem:[#allocation2 + $0x1a8] sm:$0xff] 0.0
        %318 = vst [vmem:[#allocation2 + $0x1b0] sm:$0xff] 0.0
        %319 = vst [vmem:[#allocation2 + $0x1b8] sm:$0xff] 0.0
        %320 = vst [vmem:[#allocation2 + $0x1c0] sm:$0xff] 0.0
        %321 = vst [vmem:[#allocation2 + $0x1c8] sm:$0xff] 0.0
        %322 = vst [vmem:[#allocation2 + $0x1d0] sm:$0xff] 0.0
        %323 = vst [vmem:[#allocation2 + $0x1d8] sm:$0xff] 0.0
        %324 = vst [vmem:[#allocation2 + $0x1e0] sm:$0xff] 0.0
        %325 = vst [vmem:[#allocation2 + $0x1e8] sm:$0xff] 0.0
        %326 = vst [vmem:[#allocation2 + $0x1f0] sm:$0xff] 0.0
        %327 = vst [vmem:[#allocation2 + $0x1f8] sm:$0xff] 0.0
      $region36: #{cnn_model_forward.8} parent=31 // pred_fallthru
        _
      %v328 = vld [vmem:[#allocation2] sm:$0xff]
      %v329 = vld [vmem:[#allocation2 + $0x8] sm:$0xff]
      %v330 = vld [vmem:[#allocation2 + $0x10] sm:$0xff]
      %v331 = vld [vmem:[#allocation2 + $0x18] sm:$0xff]
      %v332 = vld [vmem:[#allocation2 + $0x20] sm:$0xff]
      %v333 = vld [vmem:[#allocation2 + $0x28] sm:$0xff]
      %v334 = vld [vmem:[#allocation2 + $0x30] sm:$0xff]
      %v335 = vld [vmem:[#allocation2 + $0x38] sm:$0xff]
      %v336 = vld [vmem:[#allocation2 + $0x40] sm:$0xff]
      %v337 = vld [vmem:[#allocation2 + $0x48] sm:$0xff]
      %v338 = vld [vmem:[#allocation2 + $0x50] sm:$0xff]
      %v339 = vld [vmem:[#allocation2 + $0x58] sm:$0xff]
      %v340 = vld [vmem:[#allocation2 + $0x60] sm:$0xff]
      %v341 = vld [vmem:[#allocation2 + $0x68] sm:$0xff]
      %v342 = vld [vmem:[#allocation2 + $0x70] sm:$0xff]
      %v343 = vld [vmem:[#allocation2 + $0x78] sm:$0xff]
      %v344 = vld [vmem:[#allocation2 + $0x80] sm:$0xff]
      %v345 = vld [vmem:[#allocation2 + $0x88] sm:$0xff]
      %v346 = vld [vmem:[#allocation2 + $0x90] sm:$0xff]
      %v347 = vld [vmem:[#allocation2 + $0x98] sm:$0xff]
      %v348 = vld [vmem:[#allocation2 + $0xa0] sm:$0xff]
      %v349 = vld [vmem:[#allocation2 + $0xa8] sm:$0xff]
      %v350 = vld [vmem:[#allocation2 + $0xb0] sm:$0xff]
      %v351 = vld [vmem:[#allocation2 + $0xb8] sm:$0xff]
      %v352 = vld [vmem:[#allocation2 + $0xc0] sm:$0xff]
      %v353 = vld [vmem:[#allocation2 + $0xc8] sm:$0xff]
      %v354 = vld [vmem:[#allocation2 + $0xd0] sm:$0xff]
      %v355 = vld [vmem:[#allocation2 + $0xd8] sm:$0xff]
      %v356 = vld [vmem:[#allocation2 + $0xe0] sm:$0xff]
      %v357 = vld [vmem:[#allocation2 + $0xe8] sm:$0xff]
      %v358 = vld [vmem:[#allocation2 + $0xf0] sm:$0xff]
      %v359 = vld [vmem:[#allocation2 + $0xf8] sm:$0xff]
      %v360 = vld [vmem:[#allocation2 + $0x100] sm:$0xff]
      %v361 = vld [vmem:[#allocation2 + $0x108] sm:$0xff]
      %v362 = vld [vmem:[#allocation2 + $0x110] sm:$0xff]
      %v363 = vld [vmem:[#allocation2 + $0x118] sm:$0xff]
      %v364 = vld [vmem:[#allocation2 + $0x120] sm:$0xff]
      %v365 = vld [vmem:[#allocation2 + $0x128] sm:$0xff]
      %v366 = vld [vmem:[#allocation2 + $0x130] sm:$0xff]
      %v367 = vld [vmem:[#allocation2 + $0x138] sm:$0xff]
      %v368 = vld [vmem:[#allocation2 + $0x140] sm:$0xff]
      %v369 = vld [vmem:[#allocation2 + $0x148] sm:$0xff]
      %v370 = vld [vmem:[#allocation2 + $0x150] sm:$0xff]
      %v371 = vld [vmem:[#allocation2 + $0x158] sm:$0xff]
      %v372 = vld [vmem:[#allocation2 + $0x160] sm:$0xff]
      %v373 = vld [vmem:[#allocation2 + $0x168] sm:$0xff]
      %v374 = vld [vmem:[#allocation2 + $0x170] sm:$0xff]
      %v375 = vld [vmem:[#allocation2 + $0x178] sm:$0xff]
      %v376 = vld [vmem:[#allocation2 + $0x180] sm:$0xff]
      %v377 = vld [vmem:[#allocation2 + $0x188] sm:$0xff]
      %v378 = vld [vmem:[#allocation2 + $0x190] sm:$0xff]
      %v379 = vld [vmem:[#allocation2 + $0x198] sm:$0xff]
      %v380 = vld [vmem:[#allocation2 + $0x1a0] sm:$0xff]
      %v381 = vld [vmem:[#allocation2 + $0x1a8] sm:$0xff]
      %v382 = vld [vmem:[#allocation2 + $0x1b0] sm:$0xff]
      %v383 = vld [vmem:[#allocation2 + $0x1b8] sm:$0xff]
      %v384 = vld [vmem:[#allocation2 + $0x1c0] sm:$0xff]
      %v385 = vld [vmem:[#allocation2 + $0x1c8] sm:$0xff]
      %v386 = vld [vmem:[#allocation2 + $0x1d0] sm:$0xff]
      %v387 = vld [vmem:[#allocation2 + $0x1d8] sm:$0xff]
      %v388 = vld [vmem:[#allocation2 + $0x1e0] sm:$0xff]
      %v389 = vld [vmem:[#allocation2 + $0x1e8] sm:$0xff]
      %v390 = vld [vmem:[#allocation2 + $0x1f0] sm:$0xff]
      %v391 = vld [vmem:[#allocation2 + $0x1f8] sm:$0xff]
      %v392 = vld [vmem:[%s236] sm:$0xf]
      %v393 = vld [vmem:[%s236 + $0x4] sm:$0xf]
      %v394 = vld [vmem:[%s236 + $0x8] sm:$0xf]
      %v395 = vld [vmem:[%s236 + $0xc] sm:$0xf]
      %v396 = vld [vmem:[%s236 + $0x10] sm:$0xf]
      %v397 = vld [vmem:[%s236 + $0x14] sm:$0xf]
      %v398 = vld [vmem:[%s236 + $0x18] sm:$0xf]
      %v399 = vld [vmem:[%s236 + $0x1c] sm:$0xf]
      %v400 = vld [vmem:[%s236 + $0x20] sm:$0xf]
      %v401 = vld [vmem:[%s236 + $0x24] sm:$0xf]
      %v402 = vld [vmem:[%s236 + $0x28] sm:$0xf]
      %v403 = vld [vmem:[%s236 + $0x2c] sm:$0xf]
      %v404 = vld [vmem:[%s236 + $0x30] sm:$0xf]
      %v405 = vld [vmem:[%s236 + $0x34] sm:$0xf]
      %v406 = vld [vmem:[%s236 + $0x38] sm:$0xf]
      %v407 = vld [vmem:[%s236 + $0x3c] sm:$0xf]
      %v408 = vld [vmem:[%s236 + $0x40] sm:$0xf]
      %v409 = vld [vmem:[%s236 + $0x44] sm:$0xf]
      %v410 = vld [vmem:[%s236 + $0x48] sm:$0xf]
      %v411 = vld [vmem:[%s236 + $0x4c] sm:$0xf]
      %v412 = vld [vmem:[%s236 + $0x50] sm:$0xf]
      %v413 = vld [vmem:[%s236 + $0x54] sm:$0xf]
      %v414 = vld [vmem:[%s236 + $0x58] sm:$0xf]
      %v415 = vld [vmem:[%s236 + $0x5c] sm:$0xf]
      %v416 = vld [vmem:[%s236 + $0x60] sm:$0xf]
      %v417 = vld [vmem:[%s236 + $0x64] sm:$0xf]
      %v418 = vld [vmem:[%s236 + $0x68] sm:$0xf]
      %v419 = vld [vmem:[%s236 + $0x6c] sm:$0xf]
      %v420 = vld [vmem:[%s236 + $0x70] sm:$0xf]
      %v421 = vld [vmem:[%s236 + $0x74] sm:$0xf]
      %v422 = vld [vmem:[%s236 + $0x78] sm:$0xf]
      %v423 = vld [vmem:[%s236 + $0x7c] sm:$0xf]
      %v424 = vld [vmem:[%s236 + $0x80] sm:$0xf]
      %v425 = vld [vmem:[%s236 + $0x84] sm:$0xf]
      %v426 = vld [vmem:[%s236 + $0x88] sm:$0xf]
      %v427 = vld [vmem:[%s236 + $0x8c] sm:$0xf]
      %v428 = vld [vmem:[%s236 + $0x90] sm:$0xf]
      %v429 = vld [vmem:[%s236 + $0x94] sm:$0xf]
      %v430 = vld [vmem:[%s236 + $0x98] sm:$0xf]
      %v431 = vld [vmem:[%s236 + $0x9c] sm:$0xf]
      %v432 = vld [vmem:[%s236 + $0xa0] sm:$0xf]
      %v433 = vld [vmem:[%s236 + $0xa4] sm:$0xf]
      %v434 = vld [vmem:[%s236 + $0xa8] sm:$0xf]
      %v435 = vld [vmem:[%s236 + $0xac] sm:$0xf]
      %v436 = vld [vmem:[%s236 + $0xb0] sm:$0xf]
      %v437 = vld [vmem:[%s236 + $0xb4] sm:$0xf]
      %v438 = vld [vmem:[%s236 + $0xb8] sm:$0xf]
      %v439 = vld [vmem:[%s236 + $0xbc] sm:$0xf]
      %v440 = vld [vmem:[%s236 + $0xc0] sm:$0xf]
      %v441 = vld [vmem:[%s236 + $0xc4] sm:$0xf]
      %v442 = vld [vmem:[%s236 + $0xc8] sm:$0xf]
      %v443 = vld [vmem:[%s236 + $0xcc] sm:$0xf]
      %v444 = vld [vmem:[%s236 + $0xd0] sm:$0xf]
      %v445 = vld [vmem:[%s236 + $0xd4] sm:$0xf]
      %v446 = vld [vmem:[%s236 + $0xd8] sm:$0xf]
      %v447 = vld [vmem:[%s236 + $0xdc] sm:$0xf]
      %v448 = vld [vmem:[%s236 + $0xe0] sm:$0xf]
      %v449 = vld [vmem:[%s236 + $0xe4] sm:$0xf]
      %v450 = vld [vmem:[%s236 + $0xe8] sm:$0xf]
      %v451 = vld [vmem:[%s236 + $0xec] sm:$0xf]
      %v452 = vld [vmem:[%s236 + $0xf0] sm:$0xf]
      %v453 = vld [vmem:[%s236 + $0xf4] sm:$0xf]
      %v454 = vld [vmem:[%s236 + $0xf8] sm:$0xf]
      %v455 = vld [vmem:[%s236 + $0xfc] sm:$0xf]
      %v456 = vld [vmem:[%s245] sm:$0xf]
      %v457 = vld [vmem:[%s245 + $0x4] sm:$0xf]
      %v458 = vld [vmem:[%s245 + $0x8] sm:$0xf]
      %v459 = vld [vmem:[%s245 + $0xc] sm:$0xf]
      %v460 = vld [vmem:[%s245 + $0x10] sm:$0xf]
      %v461 = vld [vmem:[%s245 + $0x14] sm:$0xf]
      %v462 = vld [vmem:[%s245 + $0x18] sm:$0xf]
      %v463 = vld [vmem:[%s245 + $0x1c] sm:$0xf]
      %v464 = vld [vmem:[%s245 + $0x20] sm:$0xf]
      %v465 = vld [vmem:[%s245 + $0x24] sm:$0xf]
      %v466 = vld [vmem:[%s245 + $0x28] sm:$0xf]
      %v467 = vld [vmem:[%s245 + $0x2c] sm:$0xf]
      %v468 = vld [vmem:[%s245 + $0x30] sm:$0xf]
      %v469 = vld [vmem:[%s245 + $0x34] sm:$0xf]
      %v470 = vld [vmem:[%s245 + $0x38] sm:$0xf]
      %v471 = vld [vmem:[%s245 + $0x3c] sm:$0xf]
      %v536 = vunpack.c.l.b16 %v392
      %v537 = vunpack.c.l.b16 %v393
      %v538 = vunpack.c.l.b16 %v394
      %v539 = vunpack.c.l.b16 %v395
      %v540 = vunpack.c.l.b16 %v396
      %v541 = vunpack.c.l.b16 %v397
      %v542 = vunpack.c.l.b16 %v398
      %v543 = vunpack.c.l.b16 %v399
      %v544 = vunpack.c.l.b16 %v400
      %v545 = vunpack.c.l.b16 %v401
      %v546 = vunpack.c.l.b16 %v402
      %v547 = vunpack.c.l.b16 %v403
      %v548 = vunpack.c.l.b16 %v404
      %v549 = vunpack.c.l.b16 %v405
      %v550 = vunpack.c.l.b16 %v406
      %v551 = vunpack.c.l.b16 %v407
      %v552 = vunpack.c.l.b16 %v408
      %v553 = vunpack.c.l.b16 %v409
      %v554 = vunpack.c.l.b16 %v410
      %v555 = vunpack.c.l.b16 %v411
      %v556 = vunpack.c.l.b16 %v412
      %v557 = vunpack.c.l.b16 %v413
      %v558 = vunpack.c.l.b16 %v414
      %v559 = vunpack.c.l.b16 %v415
      %v560 = vunpack.c.l.b16 %v416
      %v561 = vunpack.c.l.b16 %v417
      %v562 = vunpack.c.l.b16 %v418
      %v563 = vunpack.c.l.b16 %v419
      %v564 = vunpack.c.l.b16 %v420
      %v565 = vunpack.c.l.b16 %v421
      %v566 = vunpack.c.l.b16 %v422
      %v567 = vunpack.c.l.b16 %v423
      %v568 = vunpack.c.l.b16 %v424
      %v569 = vunpack.c.l.b16 %v425
      %v570 = vunpack.c.l.b16 %v426
      %v571 = vunpack.c.l.b16 %v427
      %v572 = vunpack.c.l.b16 %v428
      %v573 = vunpack.c.l.b16 %v429
      %v574 = vunpack.c.l.b16 %v430
      %v575 = vunpack.c.l.b16 %v431
      %v576 = vunpack.c.l.b16 %v432
      %v577 = vunpack.c.l.b16 %v433
      %v578 = vunpack.c.l.b16 %v434
      %v579 = vunpack.c.l.b16 %v435
      %v580 = vunpack.c.l.b16 %v436
      %v581 = vunpack.c.l.b16 %v437
      %v582 = vunpack.c.l.b16 %v438
      %v583 = vunpack.c.l.b16 %v439
      %v584 = vunpack.c.l.b16 %v440
      %v585 = vunpack.c.l.b16 %v441
      %v586 = vunpack.c.l.b16 %v442
      %v587 = vunpack.c.l.b16 %v443
      %v588 = vunpack.c.l.b16 %v444
      %v589 = vunpack.c.l.b16 %v445
      %v590 = vunpack.c.l.b16 %v446
      %v591 = vunpack.c.l.b16 %v447
      %v592 = vunpack.c.l.b16 %v448
      %v593 = vunpack.c.l.b16 %v449
      %v594 = vunpack.c.l.b16 %v450
      %v595 = vunpack.c.l.b16 %v451
      %v596 = vunpack.c.l.b16 %v452
      %v597 = vunpack.c.l.b16 %v453
      %v598 = vunpack.c.l.b16 %v454
      %v599 = vunpack.c.l.b16 %v455
      %v600 = vpack.c.b16 %v537, %v536
      %v601 = vpack.c.b16 %v539, %v538
      %v602 = vpack.c.b16 %v541, %v540
      %v603 = vpack.c.b16 %v543, %v542
      %v604 = vpack.c.b16 %v545, %v544
      %v605 = vpack.c.b16 %v547, %v546
      %v606 = vpack.c.b16 %v549, %v548
      %v607 = vpack.c.b16 %v551, %v550
      %v608 = vpack.c.b16 %v553, %v552
      %v609 = vpack.c.b16 %v555, %v554
      %v610 = vpack.c.b16 %v557, %v556
      %v611 = vpack.c.b16 %v559, %v558
      %v612 = vpack.c.b16 %v561, %v560
      %v613 = vpack.c.b16 %v563, %v562
      %v614 = vpack.c.b16 %v565, %v564
      %v615 = vpack.c.b16 %v567, %v566
      %v616 = vpack.c.b16 %v569, %v568
      %v617 = vpack.c.b16 %v571, %v570
      %v618 = vpack.c.b16 %v573, %v572
      %v619 = vpack.c.b16 %v575, %v574
      %v620 = vpack.c.b16 %v577, %v576
      %v621 = vpack.c.b16 %v579, %v578
      %v622 = vpack.c.b16 %v581, %v580
      %v623 = vpack.c.b16 %v583, %v582
      %v624 = vpack.c.b16 %v585, %v584
      %v625 = vpack.c.b16 %v587, %v586
      %v626 = vpack.c.b16 %v589, %v588
      %v627 = vpack.c.b16 %v591, %v590
      %v628 = vpack.c.b16 %v593, %v592
      %v629 = vpack.c.b16 %v595, %v594
      %v630 = vpack.c.b16 %v597, %v596
      %v631 = vpack.c.b16 %v599, %v598
      %v680 = vunpack.c.l.b16 %v456
      %v681 = vunpack.c.l.b16 %v457
      %v682 = vunpack.c.l.b16 %v458
      %v683 = vunpack.c.l.b16 %v459
      %v684 = vunpack.c.l.b16 %v460
      %v685 = vunpack.c.l.b16 %v461
      %v686 = vunpack.c.l.b16 %v462
      %v687 = vunpack.c.l.b16 %v463
      %v688 = vunpack.c.l.b16 %v464
      %v689 = vunpack.c.l.b16 %v465
      %v690 = vunpack.c.l.b16 %v466
      %v691 = vunpack.c.l.b16 %v467
      %v692 = vunpack.c.l.b16 %v468
      %v693 = vunpack.c.l.b16 %v469
      %v694 = vunpack.c.l.b16 %v470
      %v695 = vunpack.c.l.b16 %v471
      %v696 = vpack.c.b16 %v681, %v680
      %v697 = vpack.c.b16 %v683, %v682
      %v698 = vpack.c.b16 %v685, %v684
      %v699 = vpack.c.b16 %v687, %v686
      %v700 = vpack.c.b16 %v689, %v688
      %v701 = vpack.c.b16 %v691, %v690
      %v702 = vpack.c.b16 %v693, %v692
      %v703 = vpack.c.b16 %v695, %v694
      %712 = vmatprep.subr.bf16.mxu0 0
      %713 = vmatpush1.bf16.msra.mxu0 %v703
      %714 = vmatprep.subr.bf16.mxu0 0
      %715 = vmatpush1.bf16.msra.mxu0 %v702
      %716 = vmatprep.subr.bf16.mxu0 0
      %717 = vmatpush1.bf16.msra.mxu0 %v701
      %718 = vmatprep.subr.bf16.mxu0 0
      %719 = vmatpush1.bf16.msra.mxu0 %v700
      %720 = vmatprep.subr.bf16.mxu0 0
      %721 = vmatpush1.bf16.msra.mxu0 %v699
      %722 = vmatprep.subr.bf16.mxu0 0
      %723 = vmatpush1.bf16.msra.mxu0 %v698
      %724 = vmatprep.subr.bf16.mxu0 0
      %725 = vmatpush1.bf16.msra.mxu0 %v697
      %726 = vmatprep.subr.bf16.mxu0 0
      %727 = vmatpush1.bf16.msra.mxu0 %v696
      %728 = vmatprep.subr.bf16.mxu0 0
      %729 = vmatpush2.bf16.msra.mxu0 0
      %730 = vmatprep.subr.bf16.mxu0 0
      %731 = vmatpush2.bf16.msra.mxu0 0
      %732 = vmatprep.subr.bf16.mxu0 0
      %733 = vmatpush2.bf16.msra.mxu0 0
      %734 = vmatprep.subr.bf16.mxu0 0
      %735 = vmatpush2.bf16.msra.mxu0 0
      %736 = vmatprep.subr.bf16.mxu0 0
      %737 = vmatpush2.bf16.msra.mxu0 0
      %738 = vmatprep.subr.bf16.mxu0 0
      %739 = vmatpush2.bf16.msra.mxu0 0
      %740 = vmatprep.subr.bf16.mxu0 0
      %741 = vmatpush2.bf16.msra.mxu0 0
      %742 = vmatprep.subr.bf16.mxu0 0
      %743 = vmatpush2.bf16.msra.mxu0 0
      %744 = vmatprep.mubr.bf16.mxu0 0
      %745 = vmatmul.mubr.bf16.gmra.mxu0 %v600
      %v746 = vpop.f32.mrf.mxu0
      %v747 = vadd.f32 0.0, %v746
      %v748 = vpop.f32.mrf.mxu0
      %v749 = vpop.f32.mrf.mxu0
      %v750 = vadd.f32 0.0, %v749
      %v751 = vpop.f32.mrf.mxu0
      %752 = vmatprep.mubr.bf16.mxu0 0
      %753 = vmatmul.mubr.bf16.gmra.mxu0 %v601
      %v754 = vpop.f32.mrf.mxu0
      %v755 = vadd.f32 0.0, %v754
      %v756 = vpop.f32.mrf.mxu0
      %v757 = vpop.f32.mrf.mxu0
      %v758 = vadd.f32 0.0, %v757
      %v759 = vpop.f32.mrf.mxu0
      %760 = vmatprep.mubr.bf16.mxu0 0
      %761 = vmatmul.mubr.bf16.gmra.mxu0 %v602
      %v762 = vpop.f32.mrf.mxu0
      %v763 = vadd.f32 0.0, %v762
      %v764 = vpop.f32.mrf.mxu0
      %v765 = vpop.f32.mrf.mxu0
      %v766 = vadd.f32 0.0, %v765
      %v767 = vpop.f32.mrf.mxu0
      %768 = vmatprep.mubr.bf16.mxu0 0
      %769 = vmatmul.mubr.bf16.gmra.mxu0 %v603
      %v770 = vpop.f32.mrf.mxu0
      %v771 = vadd.f32 0.0, %v770
      %v772 = vpop.f32.mrf.mxu0
      %v773 = vpop.f32.mrf.mxu0
      %v774 = vadd.f32 0.0, %v773
      %v775 = vpop.f32.mrf.mxu0
      %776 = vmatprep.mubr.bf16.mxu0 0
      %777 = vmatmul.mubr.bf16.gmra.mxu0 %v604
      %v778 = vpop.f32.mrf.mxu0
      %v779 = vadd.f32 0.0, %v778
      %v780 = vpop.f32.mrf.mxu0
      %v781 = vpop.f32.mrf.mxu0
      %v782 = vadd.f32 0.0, %v781
      %v783 = vpop.f32.mrf.mxu0
      %784 = vmatprep.mubr.bf16.mxu0 0
      %785 = vmatmul.mubr.bf16.gmra.mxu0 %v605
      %v786 = vpop.f32.mrf.mxu0
      %v787 = vadd.f32 0.0, %v786
      %v788 = vpop.f32.mrf.mxu0
      %v789 = vpop.f32.mrf.mxu0
      %v790 = vadd.f32 0.0, %v789
      %v791 = vpop.f32.mrf.mxu0
      %792 = vmatprep.mubr.bf16.mxu0 0
      %793 = vmatmul.mubr.bf16.gmra.mxu0 %v606
      %v794 = vpop.f32.mrf.mxu0
      %v795 = vadd.f32 0.0, %v794
      %v796 = vpop.f32.mrf.mxu0
      %v797 = vpop.f32.mrf.mxu0
      %v798 = vadd.f32 0.0, %v797
      %v799 = vpop.f32.mrf.mxu0
      %800 = vmatprep.mubr.bf16.mxu0 0
      %801 = vmatmul.mubr.bf16.gmra.mxu0 %v607
      %v802 = vpop.f32.mrf.mxu0
      %v803 = vadd.f32 0.0, %v802
      %v804 = vpop.f32.mrf.mxu0
      %v805 = vpop.f32.mrf.mxu0
      %v806 = vadd.f32 0.0, %v805
      %v807 = vpop.f32.mrf.mxu0
      %808 = vmatprep.mubr.bf16.mxu0 0
      %809 = vmatmul.mubr.bf16.gmra.mxu0 %v608
      %v810 = vpop.f32.mrf.mxu0
      %v811 = vadd.f32 0.0, %v810
      %v812 = vpop.f32.mrf.mxu0
      %v813 = vpop.f32.mrf.mxu0
      %v814 = vadd.f32 0.0, %v813
      %v815 = vpop.f32.mrf.mxu0
      %816 = vmatprep.mubr.bf16.mxu0 0
      %817 = vmatmul.mubr.bf16.gmra.mxu0 %v609
      %v818 = vpop.f32.mrf.mxu0
      %v819 = vadd.f32 0.0, %v818
      %v820 = vpop.f32.mrf.mxu0
      %v821 = vpop.f32.mrf.mxu0
      %v822 = vadd.f32 0.0, %v821
      %v823 = vpop.f32.mrf.mxu0
      %824 = vmatprep.mubr.bf16.mxu0 0
      %825 = vmatmul.mubr.bf16.gmra.mxu0 %v610
      %v826 = vpop.f32.mrf.mxu0
      %v827 = vadd.f32 0.0, %v826
      %v828 = vpop.f32.mrf.mxu0
      %v829 = vpop.f32.mrf.mxu0
      %v830 = vadd.f32 0.0, %v829
      %v831 = vpop.f32.mrf.mxu0
      %832 = vmatprep.mubr.bf16.mxu0 0
      %833 = vmatmul.mubr.bf16.gmra.mxu0 %v611
      %v834 = vpop.f32.mrf.mxu0
      %v835 = vadd.f32 0.0, %v834
      %v836 = vpop.f32.mrf.mxu0
      %v837 = vpop.f32.mrf.mxu0
      %v838 = vadd.f32 0.0, %v837
      %v839 = vpop.f32.mrf.mxu0
      %840 = vmatprep.mubr.bf16.mxu0 0
      %841 = vmatmul.mubr.bf16.gmra.mxu0 %v612
      %v842 = vpop.f32.mrf.mxu0
      %v843 = vadd.f32 0.0, %v842
      %v844 = vpop.f32.mrf.mxu0
      %v845 = vpop.f32.mrf.mxu0
      %v846 = vadd.f32 0.0, %v845
      %v847 = vpop.f32.mrf.mxu0
      %848 = vmatprep.mubr.bf16.mxu0 0
      %849 = vmatmul.mubr.bf16.gmra.mxu0 %v613
      %v850 = vpop.f32.mrf.mxu0
      %v851 = vadd.f32 0.0, %v850
      %v852 = vpop.f32.mrf.mxu0
      %v853 = vpop.f32.mrf.mxu0
      %v854 = vadd.f32 0.0, %v853
      %v855 = vpop.f32.mrf.mxu0
      %856 = vmatprep.mubr.bf16.mxu0 0
      %857 = vmatmul.mubr.bf16.gmra.mxu0 %v614
      %v858 = vpop.f32.mrf.mxu0
      %v859 = vadd.f32 0.0, %v858
      %v860 = vpop.f32.mrf.mxu0
      %v861 = vpop.f32.mrf.mxu0
      %v862 = vadd.f32 0.0, %v861
      %v863 = vpop.f32.mrf.mxu0
      %864 = vmatprep.mubr.bf16.mxu0 0
      %865 = vmatmul.mubr.bf16.gmra.mxu0 %v615
      %v866 = vpop.f32.mrf.mxu0
      %v867 = vadd.f32 0.0, %v866
      %v868 = vpop.f32.mrf.mxu0
      %v869 = vpop.f32.mrf.mxu0
      %v870 = vadd.f32 0.0, %v869
      %v871 = vpop.f32.mrf.mxu0
      %872 = vmatprep.mubr.bf16.mxu0 0
      %873 = vmatmul.mubr.bf16.gmra.mxu0 %v616
      %v874 = vpop.f32.mrf.mxu0
      %v875 = vadd.f32 0.0, %v874
      %v876 = vpop.f32.mrf.mxu0
      %v877 = vpop.f32.mrf.mxu0
      %v878 = vadd.f32 0.0, %v877
      %v879 = vpop.f32.mrf.mxu0
      %880 = vmatprep.mubr.bf16.mxu0 0
      %881 = vmatmul.mubr.bf16.gmra.mxu0 %v617
      %v882 = vpop.f32.mrf.mxu0
      %v883 = vadd.f32 0.0, %v882
      %v884 = vpop.f32.mrf.mxu0
      %v885 = vpop.f32.mrf.mxu0
      %v886 = vadd.f32 0.0, %v885
      %v887 = vpop.f32.mrf.mxu0
      %888 = vmatprep.mubr.bf16.mxu0 0
      %889 = vmatmul.mubr.bf16.gmra.mxu0 %v618
      %v890 = vpop.f32.mrf.mxu0
      %v891 = vadd.f32 0.0, %v890
      %v892 = vpop.f32.mrf.mxu0
      %v893 = vpop.f32.mrf.mxu0
      %v894 = vadd.f32 0.0, %v893
      %v895 = vpop.f32.mrf.mxu0
      %896 = vmatprep.mubr.bf16.mxu0 0
      %897 = vmatmul.mubr.bf16.gmra.mxu0 %v619
      %v898 = vpop.f32.mrf.mxu0
      %v899 = vadd.f32 0.0, %v898
      %v900 = vpop.f32.mrf.mxu0
      %v901 = vpop.f32.mrf.mxu0
      %v902 = vadd.f32 0.0, %v901
      %v903 = vpop.f32.mrf.mxu0
      %904 = vmatprep.mubr.bf16.mxu0 0
      %905 = vmatmul.mubr.bf16.gmra.mxu0 %v620
      %v906 = vpop.f32.mrf.mxu0
      %v907 = vadd.f32 0.0, %v906
      %v908 = vpop.f32.mrf.mxu0
      %v909 = vpop.f32.mrf.mxu0
      %v910 = vadd.f32 0.0, %v909
      %v911 = vpop.f32.mrf.mxu0
      %912 = vmatprep.mubr.bf16.mxu0 0
      %913 = vmatmul.mubr.bf16.gmra.mxu0 %v621
      %v914 = vpop.f32.mrf.mxu0
      %v915 = vadd.f32 0.0, %v914
      %v916 = vpop.f32.mrf.mxu0
      %v917 = vpop.f32.mrf.mxu0
      %v918 = vadd.f32 0.0, %v917
      %v919 = vpop.f32.mrf.mxu0
      %920 = vmatprep.mubr.bf16.mxu0 0
      %921 = vmatmul.mubr.bf16.gmra.mxu0 %v622
      %v922 = vpop.f32.mrf.mxu0
      %v923 = vadd.f32 0.0, %v922
      %v924 = vpop.f32.mrf.mxu0
      %v925 = vpop.f32.mrf.mxu0
      %v926 = vadd.f32 0.0, %v925
      %v927 = vpop.f32.mrf.mxu0
      %928 = vmatprep.mubr.bf16.mxu0 0
      %929 = vmatmul.mubr.bf16.gmra.mxu0 %v623
      %v930 = vpop.f32.mrf.mxu0
      %v931 = vadd.f32 0.0, %v930
      %v932 = vpop.f32.mrf.mxu0
      %v933 = vpop.f32.mrf.mxu0
      %v934 = vadd.f32 0.0, %v933
      %v935 = vpop.f32.mrf.mxu0
      %936 = vmatprep.mubr.bf16.mxu0 0
      %937 = vmatmul.mubr.bf16.gmra.mxu0 %v624
      %v938 = vpop.f32.mrf.mxu0
      %v939 = vadd.f32 0.0, %v938
      %v940 = vpop.f32.mrf.mxu0
      %v941 = vpop.f32.mrf.mxu0
      %v942 = vadd.f32 0.0, %v941
      %v943 = vpop.f32.mrf.mxu0
      %944 = vmatprep.mubr.bf16.mxu0 0
      %945 = vmatmul.mubr.bf16.gmra.mxu0 %v625
      %v946 = vpop.f32.mrf.mxu0
      %v947 = vadd.f32 0.0, %v946
      %v948 = vpop.f32.mrf.mxu0
      %v949 = vpop.f32.mrf.mxu0
      %v950 = vadd.f32 0.0, %v949
      %v951 = vpop.f32.mrf.mxu0
      %952 = vmatprep.mubr.bf16.mxu0 0
      %953 = vmatmul.mubr.bf16.gmra.mxu0 %v626
      %v954 = vpop.f32.mrf.mxu0
      %v955 = vadd.f32 0.0, %v954
      %v956 = vpop.f32.mrf.mxu0
      %v957 = vpop.f32.mrf.mxu0
      %v958 = vadd.f32 0.0, %v957
      %v959 = vpop.f32.mrf.mxu0
      %960 = vmatprep.mubr.bf16.mxu0 0
      %961 = vmatmul.mubr.bf16.gmra.mxu0 %v627
      %v962 = vpop.f32.mrf.mxu0
      %v963 = vadd.f32 0.0, %v962
      %v964 = vpop.f32.mrf.mxu0
      %v965 = vpop.f32.mrf.mxu0
      %v966 = vadd.f32 0.0, %v965
      %v967 = vpop.f32.mrf.mxu0
      %968 = vmatprep.mubr.bf16.mxu0 0
      %969 = vmatmul.mubr.bf16.gmra.mxu0 %v628
      %v970 = vpop.f32.mrf.mxu0
      %v971 = vadd.f32 0.0, %v970
      %v972 = vpop.f32.mrf.mxu0
      %v973 = vpop.f32.mrf.mxu0
      %v974 = vadd.f32 0.0, %v973
      %v975 = vpop.f32.mrf.mxu0
      %976 = vmatprep.mubr.bf16.mxu0 0
      %977 = vmatmul.mubr.bf16.gmra.mxu0 %v629
      %v978 = vpop.f32.mrf.mxu0
      %v979 = vadd.f32 0.0, %v978
      %v980 = vpop.f32.mrf.mxu0
      %v981 = vpop.f32.mrf.mxu0
      %v982 = vadd.f32 0.0, %v981
      %v983 = vpop.f32.mrf.mxu0
      %984 = vmatprep.mubr.bf16.mxu0 0
      %985 = vmatmul.mubr.bf16.gmra.mxu0 %v630
      %v986 = vpop.f32.mrf.mxu0
      %v987 = vadd.f32 0.0, %v986
      %v988 = vpop.f32.mrf.mxu0
      %v989 = vpop.f32.mrf.mxu0
      %v990 = vadd.f32 0.0, %v989
      %v991 = vpop.f32.mrf.mxu0
      %992 = vmatprep.mubr.bf16.mxu0 0
      %993 = vmatmul.mubr.bf16.gmra.mxu0 %v631
      %v994 = vpop.f32.mrf.mxu0
      %v995 = vadd.f32 0.0, %v994
      %v996 = vpop.f32.mrf.mxu0
      %v997 = vpop.f32.mrf.mxu0
      %v998 = vadd.f32 0.0, %v997
      %v999 = vpop.f32.mrf.mxu0
      %1000 = vdwg.mxu0
      %v1001 = vadd.f32 %v328, %v747
      %v1002 = vadd.f32 %v329, %v750
      %v1003 = vadd.f32 %v330, %v755
      %v1004 = vadd.f32 %v331, %v758
      %v1005 = vadd.f32 %v332, %v763
      %v1006 = vadd.f32 %v333, %v766
      %v1007 = vadd.f32 %v334, %v771
      %v1008 = vadd.f32 %v335, %v774
      %v1009 = vadd.f32 %v336, %v779
      %v1010 = vadd.f32 %v337, %v782
      %v1011 = vadd.f32 %v338, %v787
      %v1012 = vadd.f32 %v339, %v790
      %v1013 = vadd.f32 %v340, %v795
      %v1014 = vadd.f32 %v341, %v798
      %v1015 = vadd.f32 %v342, %v803
      %v1016 = vadd.f32 %v343, %v806
      %v1017 = vadd.f32 %v344, %v811
      %v1018 = vadd.f32 %v345, %v814
      %v1019 = vadd.f32 %v346, %v819
      %v1020 = vadd.f32 %v347, %v822
      %v1021 = vadd.f32 %v348, %v827
      %v1022 = vadd.f32 %v349, %v830
      %v1023 = vadd.f32 %v350, %v835
      %v1024 = vadd.f32 %v351, %v838
      %v1025 = vadd.f32 %v352, %v843
      %v1026 = vadd.f32 %v353, %v846
      %v1027 = vadd.f32 %v354, %v851
      %v1028 = vadd.f32 %v355, %v854
      %v1029 = vadd.f32 %v356, %v859
      %v1030 = vadd.f32 %v357, %v862
      %v1031 = vadd.f32 %v358, %v867
      %v1032 = vadd.f32 %v359, %v870
      %v1033 = vadd.f32 %v360, %v875
      %v1034 = vadd.f32 %v361, %v878
      %v1035 = vadd.f32 %v362, %v883
      %v1036 = vadd.f32 %v363, %v886
      %v1037 = vadd.f32 %v364, %v891
      %v1038 = vadd.f32 %v365, %v894
      %v1039 = vadd.f32 %v366, %v899
      %v1040 = vadd.f32 %v367, %v902
      %v1041 = vadd.f32 %v368, %v907
      %v1042 = vadd.f32 %v369, %v910
      %v1043 = vadd.f32 %v370, %v915
      %v1044 = vadd.f32 %v371, %v918
      %v1045 = vadd.f32 %v372, %v923
      %v1046 = vadd.f32 %v373, %v926
      %v1047 = vadd.f32 %v374, %v931
      %v1048 = vadd.f32 %v375, %v934
      %v1049 = vadd.f32 %v376, %v939
      %v1050 = vadd.f32 %v377, %v942
      %v1051 = vadd.f32 %v378, %v947
      %v1052 = vadd.f32 %v379, %v950
      %v1053 = vadd.f32 %v380, %v955
      %v1054 = vadd.f32 %v381, %v958
      %v1055 = vadd.f32 %v382, %v963
      %v1056 = vadd.f32 %v383, %v966
      %v1057 = vadd.f32 %v384, %v971
      %v1058 = vadd.f32 %v385, %v974
      %v1059 = vadd.f32 %v386, %v979
      %v1060 = vadd.f32 %v387, %v982
      %v1061 = vadd.f32 %v388, %v987
      %v1062 = vadd.f32 %v389, %v990
      %v1063 = vadd.f32 %v390, %v995
      %v1064 = vadd.f32 %v391, %v998
      %1065 = vst [vmem:[#allocation2] sm:$0xff] %v1001
      %1066 = vst [vmem:[#allocation2 + $0x8] sm:$0xff] %v1002
      %1067 = vst [vmem:[#allocation2 + $0x10] sm:$0xff] %v1003
      %1068 = vst [vmem:[#allocation2 + $0x18] sm:$0xff] %v1004
      %1069 = vst [vmem:[#allocation2 + $0x20] sm:$0xff] %v1005
      %1070 = vst [vmem:[#allocation2 + $0x28] sm:$0xff] %v1006
      %1071 = vst [vmem:[#allocation2 + $0x30] sm:$0xff] %v1007
      %1072 = vst [vmem:[#allocation2 + $0x38] sm:$0xff] %v1008
      %1073 = vst [vmem:[#allocation2 + $0x40] sm:$0xff] %v1009
      %1074 = vst [vmem:[#allocation2 + $0x48] sm:$0xff] %v1010
      %1075 = vst [vmem:[#allocation2 + $0x50] sm:$0xff] %v1011
      %1076 = vst [vmem:[#allocation2 + $0x58] sm:$0xff] %v1012
      %1077 = vst [vmem:[#allocation2 + $0x60] sm:$0xff] %v1013
      %1078 = vst [vmem:[#allocation2 + $0x68] sm:$0xff] %v1014
      %1079 = vst [vmem:[#allocation2 + $0x70] sm:$0xff] %v1015
      %1080 = vst [vmem:[#allocation2 + $0x78] sm:$0xff] %v1016
      %1081 = vst [vmem:[#allocation2 + $0x80] sm:$0xff] %v1017
      %1082 = vst [vmem:[#allocation2 + $0x88] sm:$0xff] %v1018
      %1083 = vst [vmem:[#allocation2 + $0x90] sm:$0xff] %v1019
      %1084 = vst [vmem:[#allocation2 + $0x98] sm:$0xff] %v1020
      %1085 = vst [vmem:[#allocation2 + $0xa0] sm:$0xff] %v1021
      %1086 = vst [vmem:[#allocation2 + $0xa8] sm:$0xff] %v1022
      %1087 = vst [vmem:[#allocation2 + $0xb0] sm:$0xff] %v1023
      %1088 = vst [vmem:[#allocation2 + $0xb8] sm:$0xff] %v1024
      %1089 = vst [vmem:[#allocation2 + $0xc0] sm:$0xff] %v1025
      %1090 = vst [vmem:[#allocation2 + $0xc8] sm:$0xff] %v1026
      %1091 = vst [vmem:[#allocation2 + $0xd0] sm:$0xff] %v1027
      %1092 = vst [vmem:[#allocation2 + $0xd8] sm:$0xff] %v1028
      %1093 = vst [vmem:[#allocation2 + $0xe0] sm:$0xff] %v1029
      %1094 = vst [vmem:[#allocation2 + $0xe8] sm:$0xff] %v1030
      %1095 = vst [vmem:[#allocation2 + $0xf0] sm:$0xff] %v1031
      %1096 = vst [vmem:[#allocation2 + $0xf8] sm:$0xff] %v1032
      %1097 = vst [vmem:[#allocation2 + $0x100] sm:$0xff] %v1033
      %1098 = vst [vmem:[#allocation2 + $0x108] sm:$0xff] %v1034
      %1099 = vst [vmem:[#allocation2 + $0x110] sm:$0xff] %v1035
      %1100 = vst [vmem:[#allocation2 + $0x118] sm:$0xff] %v1036
      %1101 = vst [vmem:[#allocation2 + $0x120] sm:$0xff] %v1037
      %1102 = vst [vmem:[#allocation2 + $0x128] sm:$0xff] %v1038
      %1103 = vst [vmem:[#allocation2 + $0x130] sm:$0xff] %v1039
      %1104 = vst [vmem:[#allocation2 + $0x138] sm:$0xff] %v1040
      %1105 = vst [vmem:[#allocation2 + $0x140] sm:$0xff] %v1041
      %1106 = vst [vmem:[#allocation2 + $0x148] sm:$0xff] %v1042
      %1107 = vst [vmem:[#allocation2 + $0x150] sm:$0xff] %v1043
      %1108 = vst [vmem:[#allocation2 + $0x158] sm:$0xff] %v1044
      %1109 = vst [vmem:[#allocation2 + $0x160] sm:$0xff] %v1045
      %1110 = vst [vmem:[#allocation2 + $0x168] sm:$0xff] %v1046
      %1111 = vst [vmem:[#allocation2 + $0x170] sm:$0xff] %v1047
      %1112 = vst [vmem:[#allocation2 + $0x178] sm:$0xff] %v1048
      %1113 = vst [vmem:[#allocation2 + $0x180] sm:$0xff] %v1049
      %1114 = vst [vmem:[#allocation2 + $0x188] sm:$0xff] %v1050
      %1115 = vst [vmem:[#allocation2 + $0x190] sm:$0xff] %v1051
      %1116 = vst [vmem:[#allocation2 + $0x198] sm:$0xff] %v1052
      %1117 = vst [vmem:[#allocation2 + $0x1a0] sm:$0xff] %v1053
      %1118 = vst [vmem:[#allocation2 + $0x1a8] sm:$0xff] %v1054
      %1119 = vst [vmem:[#allocation2 + $0x1b0] sm:$0xff] %v1055
      %1120 = vst [vmem:[#allocation2 + $0x1b8] sm:$0xff] %v1056
      %1121 = vst [vmem:[#allocation2 + $0x1c0] sm:$0xff] %v1057
      %1122 = vst [vmem:[#allocation2 + $0x1c8] sm:$0xff] %v1058
      %1123 = vst [vmem:[#allocation2 + $0x1d0] sm:$0xff] %v1059
      %1124 = vst [vmem:[#allocation2 + $0x1d8] sm:$0xff] %v1060
      %1125 = vst [vmem:[#allocation2 + $0x1e0] sm:$0xff] %v1061
      %1126 = vst [vmem:[#allocation2 + $0x1e8] sm:$0xff] %v1062
      %1127 = vst [vmem:[#allocation2 + $0x1f0] sm:$0xff] %v1063
      %1128 = vst [vmem:[#allocation2 + $0x1f8] sm:$0xff] %v1064
      // Predicated region
      $region37: #{cnn_model_forward.8} parent=31 // pred_check
        %p1129 = pneg %p260
      $region38: #{cnn_model_forward.8} parent=31 // pred_check_branch
        %1131 = sbr.rel (%p1129) target = $region40
      $region39: #{cnn_model_forward.8} parent=31 // pred_region
        %v1132 = vld [vmem:[#allocation2] sm:$0xff]
        %v1133 = vld [vmem:[#allocation2 + $0x8] sm:$0xff]
        %v1134 = vld [vmem:[#allocation2 + $0x10] sm:$0xff]
        %v1135 = vld [vmem:[#allocation2 + $0x18] sm:$0xff]
        %v1136 = vld [vmem:[#allocation2 + $0x20] sm:$0xff]
        %v1137 = vld [vmem:[#allocation2 + $0x28] sm:$0xff]
        %v1138 = vld [vmem:[#allocation2 + $0x30] sm:$0xff]
        %v1139 = vld [vmem:[#allocation2 + $0x38] sm:$0xff]
        %v1140 = vld [vmem:[#allocation2 + $0x40] sm:$0xff]
        %v1141 = vld [vmem:[#allocation2 + $0x48] sm:$0xff]
        %v1142 = vld [vmem:[#allocation2 + $0x50] sm:$0xff]
        %v1143 = vld [vmem:[#allocation2 + $0x58] sm:$0xff]
        %v1144 = vld [vmem:[#allocation2 + $0x60] sm:$0xff]
        %v1145 = vld [vmem:[#allocation2 + $0x68] sm:$0xff]
        %v1146 = vld [vmem:[#allocation2 + $0x70] sm:$0xff]
        %v1147 = vld [vmem:[#allocation2 + $0x78] sm:$0xff]
        %v1148 = vld [vmem:[#allocation2 + $0x80] sm:$0xff]
        %v1149 = vld [vmem:[#allocation2 + $0x88] sm:$0xff]
        %v1150 = vld [vmem:[#allocation2 + $0x90] sm:$0xff]
        %v1151 = vld [vmem:[#allocation2 + $0x98] sm:$0xff]
        %v1152 = vld [vmem:[#allocation2 + $0xa0] sm:$0xff]
        %v1153 = vld [vmem:[#allocation2 + $0xa8] sm:$0xff]
        %v1154 = vld [vmem:[#allocation2 + $0xb0] sm:$0xff]
        %v1155 = vld [vmem:[#allocation2 + $0xb8] sm:$0xff]
        %v1156 = vld [vmem:[#allocation2 + $0xc0] sm:$0xff]
        %v1157 = vld [vmem:[#allocation2 + $0xc8] sm:$0xff]
        %v1158 = vld [vmem:[#allocation2 + $0xd0] sm:$0xff]
        %v1159 = vld [vmem:[#allocation2 + $0xd8] sm:$0xff]
        %v1160 = vld [vmem:[#allocation2 + $0xe0] sm:$0xff]
        %v1161 = vld [vmem:[#allocation2 + $0xe8] sm:$0xff]
        %v1162 = vld [vmem:[#allocation2 + $0xf0] sm:$0xff]
        %v1163 = vld [vmem:[#allocation2 + $0xf8] sm:$0xff]
        %v1164 = vld [vmem:[#allocation2 + $0x100] sm:$0xff]
        %v1165 = vld [vmem:[#allocation2 + $0x108] sm:$0xff]
        %v1166 = vld [vmem:[#allocation2 + $0x110] sm:$0xff]
        %v1167 = vld [vmem:[#allocation2 + $0x118] sm:$0xff]
        %v1168 = vld [vmem:[#allocation2 + $0x120] sm:$0xff]
        %v1169 = vld [vmem:[#allocation2 + $0x128] sm:$0xff]
        %v1170 = vld [vmem:[#allocation2 + $0x130] sm:$0xff]
        %v1171 = vld [vmem:[#allocation2 + $0x138] sm:$0xff]
        %v1172 = vld [vmem:[#allocation2 + $0x140] sm:$0xff]
        %v1173 = vld [vmem:[#allocation2 + $0x148] sm:$0xff]
        %v1174 = vld [vmem:[#allocation2 + $0x150] sm:$0xff]
        %v1175 = vld [vmem:[#allocation2 + $0x158] sm:$0xff]
        %v1176 = vld [vmem:[#allocation2 + $0x160] sm:$0xff]
        %v1177 = vld [vmem:[#allocation2 + $0x168] sm:$0xff]
        %v1178 = vld [vmem:[#allocation2 + $0x170] sm:$0xff]
        %v1179 = vld [vmem:[#allocation2 + $0x178] sm:$0xff]
        %v1180 = vld [vmem:[#allocation2 + $0x180] sm:$0xff]
        %v1181 = vld [vmem:[#allocation2 + $0x188] sm:$0xff]
        %v1182 = vld [vmem:[#allocation2 + $0x190] sm:$0xff]
        %v1183 = vld [vmem:[#allocation2 + $0x198] sm:$0xff]
        %v1184 = vld [vmem:[#allocation2 + $0x1a0] sm:$0xff]
        %v1185 = vld [vmem:[#allocation2 + $0x1a8] sm:$0xff]
        %v1186 = vld [vmem:[#allocation2 + $0x1b0] sm:$0xff]
        %v1187 = vld [vmem:[#allocation2 + $0x1b8] sm:$0xff]
        %v1188 = vld [vmem:[#allocation2 + $0x1c0] sm:$0xff]
        %v1189 = vld [vmem:[#allocation2 + $0x1c8] sm:$0xff]
        %v1190 = vld [vmem:[#allocation2 + $0x1d0] sm:$0xff]
        %v1191 = vld [vmem:[#allocation2 + $0x1d8] sm:$0xff]
        %v1192 = vld [vmem:[#allocation2 + $0x1e0] sm:$0xff]
        %v1193 = vld [vmem:[#allocation2 + $0x1e8] sm:$0xff]
        %v1194 = vld [vmem:[#allocation2 + $0x1f0] sm:$0xff]
        %v1195 = vld [vmem:[#allocation2 + $0x1f8] sm:$0xff]
        %v1196 = vld [vmem:[%s249] sm:$0x1]
        %v1198 = vlaneseq
        %v1199 = vshrl.u32 %v1198, 7
        %v1200 = vsub.s32 0, %v1199
        %v1201 = vrot.slane %v1196, %v1200
        %v1203 = vadd.f32 %v1132, %v1201
        %v1204 = vadd.f32 %v1133, %v1201
        %v1205 = vadd.f32 %v1134, %v1201
        %v1206 = vadd.f32 %v1135, %v1201
        %v1207 = vadd.f32 %v1136, %v1201
        %v1208 = vadd.f32 %v1137, %v1201
        %v1209 = vadd.f32 %v1138, %v1201
        %v1210 = vadd.f32 %v1139, %v1201
        %v1211 = vadd.f32 %v1140, %v1201
        %v1212 = vadd.f32 %v1141, %v1201
        %v1213 = vadd.f32 %v1142, %v1201
        %v1214 = vadd.f32 %v1143, %v1201
        %v1215 = vadd.f32 %v1144, %v1201
        %v1216 = vadd.f32 %v1145, %v1201
        %v1217 = vadd.f32 %v1146, %v1201
        %v1218 = vadd.f32 %v1147, %v1201
        %v1219 = vadd.f32 %v1148, %v1201
        %v1220 = vadd.f32 %v1149, %v1201
        %v1221 = vadd.f32 %v1150, %v1201
        %v1222 = vadd.f32 %v1151, %v1201
        %v1223 = vadd.f32 %v1152, %v1201
        %v1224 = vadd.f32 %v1153, %v1201
        %v1225 = vadd.f32 %v1154, %v1201
        %v1226 = vadd.f32 %v1155, %v1201
        %v1227 = vadd.f32 %v1156, %v1201
        %v1228 = vadd.f32 %v1157, %v1201
        %v1229 = vadd.f32 %v1158, %v1201
        %v1230 = vadd.f32 %v1159, %v1201
        %v1231 = vadd.f32 %v1160, %v1201
        %v1232 = vadd.f32 %v1161, %v1201
        %v1233 = vadd.f32 %v1162, %v1201
        %v1234 = vadd.f32 %v1163, %v1201
        %v1235 = vadd.f32 %v1164, %v1201
        %v1236 = vadd.f32 %v1165, %v1201
        %v1237 = vadd.f32 %v1166, %v1201
        %v1238 = vadd.f32 %v1167, %v1201
        %v1239 = vadd.f32 %v1168, %v1201
        %v1240 = vadd.f32 %v1169, %v1201
        %v1241 = vadd.f32 %v1170, %v1201
        %v1242 = vadd.f32 %v1171, %v1201
        %v1243 = vadd.f32 %v1172, %v1201
        %v1244 = vadd.f32 %v1173, %v1201
        %v1245 = vadd.f32 %v1174, %v1201
        %v1246 = vadd.f32 %v1175, %v1201
        %v1247 = vadd.f32 %v1176, %v1201
        %v1248 = vadd.f32 %v1177, %v1201
        %v1249 = vadd.f32 %v1178, %v1201
        %v1250 = vadd.f32 %v1179, %v1201
        %v1251 = vadd.f32 %v1180, %v1201
        %v1252 = vadd.f32 %v1181, %v1201
        %v1253 = vadd.f32 %v1182, %v1201
        %v1254 = vadd.f32 %v1183, %v1201
        %v1255 = vadd.f32 %v1184, %v1201
        %v1256 = vadd.f32 %v1185, %v1201
        %v1257 = vadd.f32 %v1186, %v1201
        %v1258 = vadd.f32 %v1187, %v1201
        %v1259 = vadd.f32 %v1188, %v1201
        %v1260 = vadd.f32 %v1189, %v1201
        %v1261 = vadd.f32 %v1190, %v1201
        %v1262 = vadd.f32 %v1191, %v1201
        %v1263 = vadd.f32 %v1192, %v1201
        %v1264 = vadd.f32 %v1193, %v1201
        %v1265 = vadd.f32 %v1194, %v1201
        %v1266 = vadd.f32 %v1195, %v1201
        %v1267 = vmax.f32 %v1203, 0.0
        %v1268 = vmax.f32 %v1204, 0.0
        %v1269 = vmax.f32 %v1205, 0.0
        %v1270 = vmax.f32 %v1206, 0.0
        %v1271 = vmax.f32 %v1207, 0.0
        %v1272 = vmax.f32 %v1208, 0.0
        %v1273 = vmax.f32 %v1209, 0.0
        %v1274 = vmax.f32 %v1210, 0.0
        %v1275 = vmax.f32 %v1211, 0.0
        %v1276 = vmax.f32 %v1212, 0.0
        %v1277 = vmax.f32 %v1213, 0.0
        %v1278 = vmax.f32 %v1214, 0.0
        %v1279 = vmax.f32 %v1215, 0.0
        %v1280 = vmax.f32 %v1216, 0.0
        %v1281 = vmax.f32 %v1217, 0.0
        %v1282 = vmax.f32 %v1218, 0.0
        %v1283 = vmax.f32 %v1219, 0.0
        %v1284 = vmax.f32 %v1220, 0.0
        %v1285 = vmax.f32 %v1221, 0.0
        %v1286 = vmax.f32 %v1222, 0.0
        %v1287 = vmax.f32 %v1223, 0.0
        %v1288 = vmax.f32 %v1224, 0.0
        %v1289 = vmax.f32 %v1225, 0.0
        %v1290 = vmax.f32 %v1226, 0.0
        %v1291 = vmax.f32 %v1227, 0.0
        %v1292 = vmax.f32 %v1228, 0.0
        %v1293 = vmax.f32 %v1229, 0.0
        %v1294 = vmax.f32 %v1230, 0.0
        %v1295 = vmax.f32 %v1231, 0.0
        %v1296 = vmax.f32 %v1232, 0.0
        %v1297 = vmax.f32 %v1233, 0.0
        %v1298 = vmax.f32 %v1234, 0.0
        %v1299 = vmax.f32 %v1235, 0.0
        %v1300 = vmax.f32 %v1236, 0.0
        %v1301 = vmax.f32 %v1237, 0.0
        %v1302 = vmax.f32 %v1238, 0.0
        %v1303 = vmax.f32 %v1239, 0.0
        %v1304 = vmax.f32 %v1240, 0.0
        %v1305 = vmax.f32 %v1241, 0.0
        %v1306 = vmax.f32 %v1242, 0.0
        %v1307 = vmax.f32 %v1243, 0.0
        %v1308 = vmax.f32 %v1244, 0.0
        %v1309 = vmax.f32 %v1245, 0.0
        %v1310 = vmax.f32 %v1246, 0.0
        %v1311 = vmax.f32 %v1247, 0.0
        %v1312 = vmax.f32 %v1248, 0.0
        %v1313 = vmax.f32 %v1249, 0.0
        %v1314 = vmax.f32 %v1250, 0.0
        %v1315 = vmax.f32 %v1251, 0.0
        %v1316 = vmax.f32 %v1252, 0.0
        %v1317 = vmax.f32 %v1253, 0.0
        %v1318 = vmax.f32 %v1254, 0.0
        %v1319 = vmax.f32 %v1255, 0.0
        %v1320 = vmax.f32 %v1256, 0.0
        %v1321 = vmax.f32 %v1257, 0.0
        %v1322 = vmax.f32 %v1258, 0.0
        %v1323 = vmax.f32 %v1259, 0.0
        %v1324 = vmax.f32 %v1260, 0.0
        %v1325 = vmax.f32 %v1261, 0.0
        %v1326 = vmax.f32 %v1262, 0.0
        %v1327 = vmax.f32 %v1263, 0.0
        %v1328 = vmax.f32 %v1264, 0.0
        %v1329 = vmax.f32 %v1265, 0.0
        %v1330 = vmax.f32 %v1266, 0.0
        %1331 = vst [vmem:[%s257] sm:$0xff] %v1267
        %1332 = vst [vmem:[%s257 + $0x8] sm:$0xff] %v1268
        %1333 = vst [vmem:[%s257 + $0x10] sm:$0xff] %v1269
        %1334 = vst [vmem:[%s257 + $0x18] sm:$0xff] %v1270
        %1335 = vst [vmem:[%s257 + $0x20] sm:$0xff] %v1271
        %1336 = vst [vmem:[%s257 + $0x28] sm:$0xff] %v1272
        %1337 = vst [vmem:[%s257 + $0x30] sm:$0xff] %v1273
        %1338 = vst [vmem:[%s257 + $0x38] sm:$0xff] %v1274
        %1339 = vst [vmem:[%s257 + $0x40] sm:$0xff] %v1275
        %1340 = vst [vmem:[%s257 + $0x48] sm:$0xff] %v1276
        %1341 = vst [vmem:[%s257 + $0x50] sm:$0xff] %v1277
        %1342 = vst [vmem:[%s257 + $0x58] sm:$0xff] %v1278
        %1343 = vst [vmem:[%s257 + $0x60] sm:$0xff] %v1279
        %1344 = vst [vmem:[%s257 + $0x68] sm:$0xff] %v1280
        %1345 = vst [vmem:[%s257 + $0x70] sm:$0xff] %v1281
        %1346 = vst [vmem:[%s257 + $0x78] sm:$0xff] %v1282
        %1347 = vst [vmem:[%s257 + $0x80] sm:$0xff] %v1283
        %1348 = vst [vmem:[%s257 + $0x88] sm:$0xff] %v1284
        %1349 = vst [vmem:[%s257 + $0x90] sm:$0xff] %v1285
        %1350 = vst [vmem:[%s257 + $0x98] sm:$0xff] %v1286
        %1351 = vst [vmem:[%s257 + $0xa0] sm:$0xff] %v1287
        %1352 = vst [vmem:[%s257 + $0xa8] sm:$0xff] %v1288
        %1353 = vst [vmem:[%s257 + $0xb0] sm:$0xff] %v1289
        %1354 = vst [vmem:[%s257 + $0xb8] sm:$0xff] %v1290
        %1355 = vst [vmem:[%s257 + $0xc0] sm:$0xff] %v1291
        %1356 = vst [vmem:[%s257 + $0xc8] sm:$0xff] %v1292
        %1357 = vst [vmem:[%s257 + $0xd0] sm:$0xff] %v1293
        %1358 = vst [vmem:[%s257 + $0xd8] sm:$0xff] %v1294
        %1359 = vst [vmem:[%s257 + $0xe0] sm:$0xff] %v1295
        %1360 = vst [vmem:[%s257 + $0xe8] sm:$0xff] %v1296
        %1361 = vst [vmem:[%s257 + $0xf0] sm:$0xff] %v1297
        %1362 = vst [vmem:[%s257 + $0xf8] sm:$0xff] %v1298
        %1363 = vst [vmem:[%s257 + $0x100] sm:$0xff] %v1299
        %1364 = vst [vmem:[%s257 + $0x108] sm:$0xff] %v1300
        %1365 = vst [vmem:[%s257 + $0x110] sm:$0xff] %v1301
        %1366 = vst [vmem:[%s257 + $0x118] sm:$0xff] %v1302
        %1367 = vst [vmem:[%s257 + $0x120] sm:$0xff] %v1303
        %1368 = vst [vmem:[%s257 + $0x128] sm:$0xff] %v1304
        %1369 = vst [vmem:[%s257 + $0x130] sm:$0xff] %v1305
        %1370 = vst [vmem:[%s257 + $0x138] sm:$0xff] %v1306
        %1371 = vst [vmem:[%s257 + $0x140] sm:$0xff] %v1307
        %1372 = vst [vmem:[%s257 + $0x148] sm:$0xff] %v1308
        %1373 = vst [vmem:[%s257 + $0x150] sm:$0xff] %v1309
        %1374 = vst [vmem:[%s257 + $0x158] sm:$0xff] %v1310
        %1375 = vst [vmem:[%s257 + $0x160] sm:$0xff] %v1311
        %1376 = vst [vmem:[%s257 + $0x168] sm:$0xff] %v1312
        %1377 = vst [vmem:[%s257 + $0x170] sm:$0xff] %v1313
        %1378 = vst [vmem:[%s257 + $0x178] sm:$0xff] %v1314
        %1379 = vst [vmem:[%s257 + $0x180] sm:$0xff] %v1315
        %1380 = vst [vmem:[%s257 + $0x188] sm:$0xff] %v1316
        %1381 = vst [vmem:[%s257 + $0x190] sm:$0xff] %v1317
        %1382 = vst [vmem:[%s257 + $0x198] sm:$0xff] %v1318
        %1383 = vst [vmem:[%s257 + $0x1a0] sm:$0xff] %v1319
        %1384 = vst [vmem:[%s257 + $0x1a8] sm:$0xff] %v1320
        %1385 = vst [vmem:[%s257 + $0x1b0] sm:$0xff] %v1321
        %1386 = vst [vmem:[%s257 + $0x1b8] sm:$0xff] %v1322
        %1387 = vst [vmem:[%s257 + $0x1c0] sm:$0xff] %v1323
        %1388 = vst [vmem:[%s257 + $0x1c8] sm:$0xff] %v1324
        %1389 = vst [vmem:[%s257 + $0x1d0] sm:$0xff] %v1325
        %1390 = vst [vmem:[%s257 + $0x1d8] sm:$0xff] %v1326
        %1391 = vst [vmem:[%s257 + $0x1e0] sm:$0xff] %v1327
        %1392 = vst [vmem:[%s257 + $0x1e8] sm:$0xff] %v1328
        %1393 = vst [vmem:[%s257 + $0x1f0] sm:$0xff] %v1329
        %1394 = vst [vmem:[%s257 + $0x1f8] sm:$0xff] %v1330
      $region40: #{cnn_model_forward.8} parent=31 // pred_fallthru
        _
      %s1395 = smul.u32 64, %s19
      %p1396 = scmp.lt.s32.totalorder %s1395, 255
      %s1397 = scalar_select %p1396, %s1395, 255
      %p1398 = scmp.lt.s32.totalorder %s20, 0
      %s1399 = scalar_select %p1398, %s20, 0
      %s1400 = sadd.s32 %s1399, %s1397
      %s1401 = smul.addr %s1400, 8
      %s1402 = scalar_lea.vmem %s3, %s1401
      // Predicated region
      $region41: #{cnn_model_forward.8} parent=31 // pred_check
        %p1403 = pneg %p135
      $region42: #{cnn_model_forward.8} parent=31 // pred_check_branch
        %1405 = sbr.rel (%p1403) target = $region44
      $region43: #{cnn_model_forward.8} parent=31 // pred_region
        %s1406 = smul.u32 64, %s19
      $region44: #{cnn_model_forward.8} parent=31 // pred_fallthru
        _
    $region32: #{cnn_model_forward.8} parent=5 // pred_fallthru
      _
    %p1407 = scmp.le.s32.totalorder 2, %s9
    // Predicated region
    $region45: #{cnn_model_forward.8} parent=5 // pred_check
      %p1408 = pneg %p1407
    $region46: #{cnn_model_forward.8} parent=5 // pred_check_branch
      %1410 = sbr.rel (%p1408) target = $region48
    $region47: #{cnn_model_forward.8} parent=5 // pred_region
      %s1411 = ssub.s32 %s9, 2
      // Predicated region
      $region49: #{cnn_model_forward.8} parent=47 // pred_check
        %p1412 = pneg %p141
      $region50: #{cnn_model_forward.8} parent=47 // pred_check_branch
        %1414 = sbr.rel (%p1412) target = $region52
      $region51: #{cnn_model_forward.8} parent=47 // pred_region
        %s1415 = smul.u32 64, %s22
        %p1416 = scmp.lt.s32.totalorder %s1415, 255
        %s1417 = scalar_select %p1416, %s1415, 255
        %p1418 = scmp.lt.s32.totalorder %s23, 0
        %s1419 = scalar_select %p1418, %s23, 0
        %s1420 = sadd.s32 %s1419, %s1417
        %s1421 = smul.addr %s1420, 8
        %s1422 = scalar_lea.vmem %s3, %s1421
      $region52: #{cnn_model_forward.8} parent=47 // pred_fallthru
        _
    $region48: #{cnn_model_forward.8} parent=5 // pred_fallthru
      _
  $region6: #{cnn_model_forward.8} parent=0 // loop_footer
    %s13 = sadd.s32 1, %s9
  $region7: #{cnn_model_forward.8} parent=0 // loop_footer_branch
    %8 = sbr.rel target = $region3
  $region8: #{cnn_model_forward.8} parent=0 // loop_exit
    _

// kernel: cnn_model_forward.9
$region0: #{cnn_model_forward.9}
  #allocation0 [shape = 'u32[]', space=smem, size = 0x4, offset = 0x4, fixed_abs, tag = 'smem constant byte address 0x4 - core index']
  #allocation1 [shape = 'u32[144,128]{1,0:T(1,128)}', space=vmem, size = 0x12000, scoped, tag = 'internal scratch']
  #allocation2 [shape = 'f32[592,128]{1,0:T(8,128)}', space=vmem, size = 0x4a000, scoped, tag = 'scratch operand']
  %s0 = inlined_call_operand.vmem [shape: bf16[592,256], index: 0, kind: input, shape index: {}]
  %s1 = inlined_call_operand.vmem [shape: bf16[256,128], index: 1, kind: input, shape index: {}]
  %s2 = inlined_call_operand.vmem [shape: f32[1,128], index: 2, kind: input, shape index: {}]
  %s3 = inlined_call_operand.vmem [shape: f32[592,128], index: 3, kind: output, shape index: {}]
  %s4 = sld [smem:[#allocation0]]
  $region30: #{cnn_model_forward.9} parent=0
    _
  %s6 = ssub.s32 1, %s4
  %s7 = scalar_select 0, %s6, %s4
  // Predicated region
  $region2: #{cnn_model_forward.9} parent=0 // pred_check
    _
  $region3: #{cnn_model_forward.9} parent=0 // pred_check_branch
    %9 = sbr.rel (0) target = $region5
  $region4: #{cnn_model_forward.9} parent=0 // pred_region
    _
  $region5: #{cnn_model_forward.9} parent=0 // pred_fallthru
    _
  // Predicated region
  $region6: #{cnn_model_forward.9} parent=0 // pred_check
    _
  $region7: #{cnn_model_forward.9} parent=0 // pred_check_branch
    %11 = sbr.rel (0) target = $region9
  $region8: #{cnn_model_forward.9} parent=0 // pred_region
    _
  $region9: #{cnn_model_forward.9} parent=0 // pred_fallthru
    _
  // Predicated region
  $region10: #{cnn_model_forward.9} parent=0 // pred_check
    _
  $region11: #{cnn_model_forward.9} parent=0 // pred_check_branch
    %13 = sbr.rel (0) target = $region13
  $region12: #{cnn_model_forward.9} parent=0 // pred_region
    _
  $region13: #{cnn_model_forward.9} parent=0 // pred_fallthru
    _
  %p15 = scmp.eq.s32.totalorder 0, 0
  // Predicated region
  $region14: #{cnn_model_forward.9} parent=0 // pred_check
    %p16 = pneg %p15
  $region15: #{cnn_model_forward.9} parent=0 // pred_check_branch
    %18 = sbr.rel (%p16) target = $region17
  $region16: #{cnn_model_forward.9} parent=0 // pred_region
    %19 = vst [vmem:[#allocation2] sm:$0xff] 0.0
    %20 = vst [vmem:[#allocation2 + $0x8] sm:$0xff] 0.0
    %21 = vst [vmem:[#allocation2 + $0x10] sm:$0xff] 0.0
    %22 = vst [vmem:[#allocation2 + $0x18] sm:$0xff] 0.0
    %23 = vst [vmem:[#allocation2 + $0x20] sm:$0xff] 0.0
    %24 = vst [vmem:[#allocation2 + $0x28] sm:$0xff] 0.0
    %25 = vst [vmem:[#allocation2 + $0x30] sm:$0xff] 0.0
    %26 = vst [vmem:[#allocation2 + $0x38] sm:$0xff] 0.0
    %27 = vst [vmem:[#allocation2 + $0x40] sm:$0xff] 0.0
    %28 = vst [vmem:[#allocation2 + $0x48] sm:$0xff] 0.0
    %29 = vst [vmem:[#allocation2 + $0x50] sm:$0xff] 0.0
    %30 = vst [vmem:[#allocation2 + $0x58] sm:$0xff] 0.0
    %31 = vst [vmem:[#allocation2 + $0x60] sm:$0xff] 0.0
    %32 = vst [vmem:[#allocation2 + $0x68] sm:$0xff] 0.0
    %33 = vst [vmem:[#allocation2 + $0x70] sm:$0xff] 0.0
    %34 = vst [vmem:[#allocation2 + $0x78] sm:$0xff] 0.0
    %35 = vst [vmem:[#allocation2 + $0x80] sm:$0xff] 0.0
    %36 = vst [vmem:[#allocation2 + $0x88] sm:$0xff] 0.0
    %37 = vst [vmem:[#allocation2 + $0x90] sm:$0xff] 0.0
    %38 = vst [vmem:[#allocation2 + $0x98] sm:$0xff] 0.0
    %39 = vst [vmem:[#allocation2 + $0xa0] sm:$0xff] 0.0
    %40 = vst [vmem:[#allocation2 + $0xa8] sm:$0xff] 0.0
    %41 = vst [vmem:[#allocation2 + $0xb0] sm:$0xff] 0.0
    %42 = vst [vmem:[#allocation2 + $0xb8] sm:$0xff] 0.0
    %43 = vst [vmem:[#allocation2 + $0xc0] sm:$0xff] 0.0
    %44 = vst [vmem:[#allocation2 + $0xc8] sm:$0xff] 0.0
    %45 = vst [vmem:[#allocation2 + $0xd0] sm:$0xff] 0.0
    %46 = vst [vmem:[#allocation2 + $0xd8] sm:$0xff] 0.0
    %47 = vst [vmem:[#allocation2 + $0xe0] sm:$0xff] 0.0
    %48 = vst [vmem:[#allocation2 + $0xe8] sm:$0xff] 0.0
    %49 = vst [vmem:[#allocation2 + $0xf0] sm:$0xff] 0.0
    %50 = vst [vmem:[#allocation2 + $0xf8] sm:$0xff] 0.0
    %51 = vst [vmem:[#allocation2 + $0x100] sm:$0xff] 0.0
    %52 = vst [vmem:[#allocation2 + $0x108] sm:$0xff] 0.0
    %53 = vst [vmem:[#allocation2 + $0x110] sm:$0xff] 0.0
    %54 = vst [vmem:[#allocation2 + $0x118] sm:$0xff] 0.0
    %55 = vst [vmem:[#allocation2 + $0x120] sm:$0xff] 0.0
    %56 = vst [vmem:[#allocation2 + $0x128] sm:$0xff] 0.0
    %57 = vst [vmem:[#allocation2 + $0x130] sm:$0xff] 0.0
    %58 = vst [vmem:[#allocation2 + $0x138] sm:$0xff] 0.0
    %59 = vst [vmem:[#allocation2 + $0x140] sm:$0xff] 0.0
    %60 = vst [vmem:[#allocation2 + $0x148] sm:$0xff] 0.0
    %61 = vst [vmem:[#allocation2 + $0x150] sm:$0xff] 0.0
    %62 = vst [vmem:[#allocation2 + $0x158] sm:$0xff] 0.0
    %63 = vst [vmem:[#allocation2 + $0x160] sm:$0xff] 0.0
    %64 = vst [vmem:[#allocation2 + $0x168] sm:$0xff] 0.0
    %65 = vst [vmem:[#allocation2 + $0x170] sm:$0xff] 0.0
    %66 = vst [vmem:[#allocation2 + $0x178] sm:$0xff] 0.0
    %67 = vst [vmem:[#allocation2 + $0x180] sm:$0xff] 0.0
    %68 = vst [vmem:[#allocation2 + $0x188] sm:$0xff] 0.0
    %69 = vst [vmem:[#allocation2 + $0x190] sm:$0xff] 0.0
    %70 = vst [vmem:[#allocation2 + $0x198] sm:$0xff] 0.0
    %71 = vst [vmem:[#allocation2 + $0x1a0] sm:$0xff] 0.0
    %72 = vst [vmem:[#allocation2 + $0x1a8] sm:$0xff] 0.0
    %73 = vst [vmem:[#allocation2 + $0x1b0] sm:$0xff] 0.0
    %74 = vst [vmem:[#allocation2 + $0x1b8] sm:$0xff] 0.0
    %75 = vst [vmem:[#allocation2 + $0x1c0] sm:$0xff] 0.0
    %76 = vst [vmem:[#allocation2 + $0x1c8] sm:$0xff] 0.0
    %77 = vst [vmem:[#allocation2 + $0x1d0] sm:$0xff] 0.0
    %78 = vst [vmem:[#allocation2 + $0x1d8] sm:$0xff] 0.0
    %79 = vst [vmem:[#allocation2 + $0x1e0] sm:$0xff] 0.0
    %80 = vst [vmem:[#allocation2 + $0x1e8] sm:$0xff] 0.0
    %81 = vst [vmem:[#allocation2 + $0x1f0] sm:$0xff] 0.0
    %82 = vst [vmem:[#allocation2 + $0x1f8] sm:$0xff] 0.0
    %83 = vst [vmem:[#allocation2 + $0x200] sm:$0xff] 0.0
    %84 = vst [vmem:[#allocation2 + $0x208] sm:$0xff] 0.0
    %85 = vst [vmem:[#allocation2 + $0x210] sm:$0xff] 0.0
    %86 = vst [vmem:[#allocation2 + $0x218] sm:$0xff] 0.0
    %87 = vst [vmem:[#allocation2 + $0x220] sm:$0xff] 0.0
    %88 = vst [vmem:[#allocation2 + $0x228] sm:$0xff] 0.0
    %89 = vst [vmem:[#allocation2 + $0x230] sm:$0xff] 0.0
    %90 = vst [vmem:[#allocation2 + $0x238] sm:$0xff] 0.0
    %91 = vst [vmem:[#allocation2 + $0x240] sm:$0xff] 0.0
    %92 = vst [vmem:[#allocation2 + $0x248] sm:$0xff] 0.0
  $region17: #{cnn_model_forward.9} parent=0 // pred_fallthru
    _
  %v93 = vld [vmem:[#allocation2] sm:$0xff]
  %v94 = vld [vmem:[#allocation2 + $0x8] sm:$0xff]
  %v95 = vld [vmem:[#allocation2 + $0x10] sm:$0xff]
  %v96 = vld [vmem:[#allocation2 + $0x18] sm:$0xff]
  %v97 = vld [vmem:[#allocation2 + $0x20] sm:$0xff]
  %v98 = vld [vmem:[#allocation2 + $0x28] sm:$0xff]
  %v99 = vld [vmem:[#allocation2 + $0x30] sm:$0xff]
  %v100 = vld [vmem:[#allocation2 + $0x38] sm:$0xff]
  %v101 = vld [vmem:[#allocation2 + $0x40] sm:$0xff]
  %v102 = vld [vmem:[#allocation2 + $0x48] sm:$0xff]
  %v103 = vld [vmem:[#allocation2 + $0x50] sm:$0xff]
  %v104 = vld [vmem:[#allocation2 + $0x58] sm:$0xff]
  %v105 = vld [vmem:[#allocation2 + $0x60] sm:$0xff]
  %v106 = vld [vmem:[#allocation2 + $0x68] sm:$0xff]
  %v107 = vld [vmem:[#allocation2 + $0x70] sm:$0xff]
  %v108 = vld [vmem:[#allocation2 + $0x78] sm:$0xff]
  %v109 = vld [vmem:[#allocation2 + $0x80] sm:$0xff]
  %v110 = vld [vmem:[#allocation2 + $0x88] sm:$0xff]
  %v111 = vld [vmem:[#allocation2 + $0x90] sm:$0xff]
  %v112 = vld [vmem:[#allocation2 + $0x98] sm:$0xff]
  %v113 = vld [vmem:[#allocation2 + $0xa0] sm:$0xff]
  %v114 = vld [vmem:[#allocation2 + $0xa8] sm:$0xff]
  %v115 = vld [vmem:[#allocation2 + $0xb0] sm:$0xff]
  %v116 = vld [vmem:[#allocation2 + $0xb8] sm:$0xff]
  %v117 = vld [vmem:[#allocation2 + $0xc0] sm:$0xff]
  %v118 = vld [vmem:[#allocation2 + $0xc8] sm:$0xff]
  %v119 = vld [vmem:[#allocation2 + $0xd0] sm:$0xff]
  %v120 = vld [vmem:[#allocation2 + $0xd8] sm:$0xff]
  %v121 = vld [vmem:[#allocation2 + $0xe0] sm:$0xff]
  %v122 = vld [vmem:[#allocation2 + $0xe8] sm:$0xff]
  %v123 = vld [vmem:[#allocation2 + $0xf0] sm:$0xff]
  %v124 = vld [vmem:[#allocation2 + $0xf8] sm:$0xff]
  %v125 = vld [vmem:[#allocation2 + $0x100] sm:$0xff]
  %v126 = vld [vmem:[#allocation2 + $0x108] sm:$0xff]
  %v127 = vld [vmem:[#allocation2 + $0x110] sm:$0xff]
  %v128 = vld [vmem:[#allocation2 + $0x118] sm:$0xff]
  %v129 = vld [vmem:[#allocation2 + $0x120] sm:$0xff]
  %v130 = vld [vmem:[#allocation2 + $0x128] sm:$0xff]
  %v131 = vld [vmem:[#allocation2 + $0x130] sm:$0xff]
  %v132 = vld [vmem:[#allocation2 + $0x138] sm:$0xff]
  %v133 = vld [vmem:[#allocation2 + $0x140] sm:$0xff]
  %v134 = vld [vmem:[#allocation2 + $0x148] sm:$0xff]
  %v135 = vld [vmem:[#allocation2 + $0x150] sm:$0xff]
  %v136 = vld [vmem:[#allocation2 + $0x158] sm:$0xff]
  %v137 = vld [vmem:[#allocation2 + $0x160] sm:$0xff]
  %v138 = vld [vmem:[#allocation2 + $0x168] sm:$0xff]
  %v139 = vld [vmem:[#allocation2 + $0x170] sm:$0xff]
  %v140 = vld [vmem:[#allocation2 + $0x178] sm:$0xff]
  %v141 = vld [vmem:[#allocation2 + $0x180] sm:$0xff]
  %v142 = vld [vmem:[#allocation2 + $0x188] sm:$0xff]
  %v143 = vld [vmem:[#allocation2 + $0x190] sm:$0xff]
  %v144 = vld [vmem:[#allocation2 + $0x198] sm:$0xff]
  %v145 = vld [vmem:[#allocation2 + $0x1a0] sm:$0xff]
  %v146 = vld [vmem:[#allocation2 + $0x1a8] sm:$0xff]
  %v147 = vld [vmem:[#allocation2 + $0x1b0] sm:$0xff]
  %v148 = vld [vmem:[#allocation2 + $0x1b8] sm:$0xff]
  %v149 = vld [vmem:[#allocation2 + $0x1c0] sm:$0xff]
  %v150 = vld [vmem:[#allocation2 + $0x1c8] sm:$0xff]
  %v151 = vld [vmem:[#allocation2 + $0x1d0] sm:$0xff]
  %v152 = vld [vmem:[#allocation2 + $0x1d8] sm:$0xff]
  %v153 = vld [vmem:[#allocation2 + $0x1e0] sm:$0xff]
  %v154 = vld [vmem:[#allocation2 + $0x1e8] sm:$0xff]
  %v155 = vld [vmem:[#allocation2 + $0x1f0] sm:$0xff]
  %v156 = vld [vmem:[#allocation2 + $0x1f8] sm:$0xff]
  %v157 = vld [vmem:[#allocation2 + $0x200] sm:$0xff]
  %v158 = vld [vmem:[#allocation2 + $0x208] sm:$0xff]
  %v159 = vld [vmem:[#allocation2 + $0x210] sm:$0xff]
  %v160 = vld [vmem:[#allocation2 + $0x218] sm:$0xff]
  %v161 = vld [vmem:[#allocation2 + $0x220] sm:$0xff]
  %v162 = vld [vmem:[#allocation2 + $0x228] sm:$0xff]
  %v163 = vld [vmem:[#allocation2 + $0x230] sm:$0xff]
  %v164 = vld [vmem:[#allocation2 + $0x238] sm:$0xff]
  %v165 = vld [vmem:[#allocation2 + $0x240] sm:$0xff]
  %v166 = vld [vmem:[#allocation2 + $0x248] sm:$0xff]
  %v167 = vld [vmem:[%s0] sm:$0xff]
  %v168 = vld [vmem:[%s0 + $0x8] sm:$0xff]
  %v169 = vld [vmem:[%s0 + $0x10] sm:$0xff]
  %v170 = vld [vmem:[%s0 + $0x18] sm:$0xff]
  %v171 = vld [vmem:[%s0 + $0x20] sm:$0xff]
  %v172 = vld [vmem:[%s0 + $0x28] sm:$0xff]
  %v173 = vld [vmem:[%s0 + $0x30] sm:$0xff]
  %v174 = vld [vmem:[%s0 + $0x38] sm:$0xff]
  %v175 = vld [vmem:[%s0 + $0x40] sm:$0xff]
  %v176 = vld [vmem:[%s0 + $0x48] sm:$0xff]
  %v177 = vld [vmem:[%s0 + $0x50] sm:$0xff]
  %v178 = vld [vmem:[%s0 + $0x58] sm:$0xff]
  %v179 = vld [vmem:[%s0 + $0x60] sm:$0xff]
  %v180 = vld [vmem:[%s0 + $0x68] sm:$0xff]
  %v181 = vld [vmem:[%s0 + $0x70] sm:$0xff]
  %v182 = vld [vmem:[%s0 + $0x78] sm:$0xff]
  %v183 = vld [vmem:[%s0 + $0x80] sm:$0xff]
  %v184 = vld [vmem:[%s0 + $0x88] sm:$0xff]
  %v185 = vld [vmem:[%s0 + $0x90] sm:$0xff]
  %v186 = vld [vmem:[%s0 + $0x98] sm:$0xff]
  %v187 = vld [vmem:[%s0 + $0xa0] sm:$0xff]
  %v188 = vld [vmem:[%s0 + $0xa8] sm:$0xff]
  %v189 = vld [vmem:[%s0 + $0xb0] sm:$0xff]
  %v190 = vld [vmem:[%s0 + $0xb8] sm:$0xff]
  %v191 = vld [vmem:[%s0 + $0xc0] sm:$0xff]
  %v192 = vld [vmem:[%s0 + $0xc8] sm:$0xff]
  %v193 = vld [vmem:[%s0 + $0xd0] sm:$0xff]
  %v194 = vld [vmem:[%s0 + $0xd8] sm:$0xff]
  %v195 = vld [vmem:[%s0 + $0xe0] sm:$0xff]
  %v196 = vld [vmem:[%s0 + $0xe8] sm:$0xff]
  %v197 = vld [vmem:[%s0 + $0xf0] sm:$0xff]
  %v198 = vld [vmem:[%s0 + $0xf8] sm:$0xff]
  %v199 = vld [vmem:[%s0 + $0x100] sm:$0xff]
  %v200 = vld [vmem:[%s0 + $0x108] sm:$0xff]
  %v201 = vld [vmem:[%s0 + $0x110] sm:$0xff]
  %v202 = vld [vmem:[%s0 + $0x118] sm:$0xff]
  %v203 = vld [vmem:[%s0 + $0x120] sm:$0xff]
  %v204 = vld [vmem:[%s0 + $0x128] sm:$0xff]
  %v205 = vld [vmem:[%s0 + $0x130] sm:$0xff]
  %v206 = vld [vmem:[%s0 + $0x138] sm:$0xff]
  %v207 = vld [vmem:[%s0 + $0x140] sm:$0xff]
  %v208 = vld [vmem:[%s0 + $0x148] sm:$0xff]
  %v209 = vld [vmem:[%s0 + $0x150] sm:$0xff]
  %v210 = vld [vmem:[%s0 + $0x158] sm:$0xff]
  %v211 = vld [vmem:[%s0 + $0x160] sm:$0xff]
  %v212 = vld [vmem:[%s0 + $0x168] sm:$0xff]
  %v213 = vld [vmem:[%s0 + $0x170] sm:$0xff]
  %v214 = vld [vmem:[%s0 + $0x178] sm:$0xff]
  %v215 = vld [vmem:[%s0 + $0x180] sm:$0xff]
  %v216 = vld [vmem:[%s0 + $0x188] sm:$0xff]
  %v217 = vld [vmem:[%s0 + $0x190] sm:$0xff]
  %v218 = vld [vmem:[%s0 + $0x198] sm:$0xff]
  %v219 = vld [vmem:[%s0 + $0x1a0] sm:$0xff]
  %v220 = vld [vmem:[%s0 + $0x1a8] sm:$0xff]
  %v221 = vld [vmem:[%s0 + $0x1b0] sm:$0xff]
  %v222 = vld [vmem:[%s0 + $0x1b8] sm:$0xff]
  %v223 = vld [vmem:[%s0 + $0x1c0] sm:$0xff]
  %v224 = vld [vmem:[%s0 + $0x1c8] sm:$0xff]
  %v225 = vld [vmem:[%s0 + $0x1d0] sm:$0xff]
  %v226 = vld [vmem:[%s0 + $0x1d8] sm:$0xff]
  %v227 = vld [vmem:[%s0 + $0x1e0] sm:$0xff]
  %v228 = vld [vmem:[%s0 + $0x1e8] sm:$0xff]
  %v229 = vld [vmem:[%s0 + $0x1f0] sm:$0xff]
  %v230 = vld [vmem:[%s0 + $0x1f8] sm:$0xff]
  %v231 = vld [vmem:[%s0 + $0x200] sm:$0xff]
  %v232 = vld [vmem:[%s0 + $0x208] sm:$0xff]
  %v233 = vld [vmem:[%s0 + $0x210] sm:$0xff]
  %v234 = vld [vmem:[%s0 + $0x218] sm:$0xff]
  %v235 = vld [vmem:[%s0 + $0x220] sm:$0xff]
  %v236 = vld [vmem:[%s0 + $0x228] sm:$0xff]
  %v237 = vld [vmem:[%s0 + $0x230] sm:$0xff]
  %v238 = vld [vmem:[%s0 + $0x238] sm:$0xff]
  %v239 = vld [vmem:[%s0 + $0x240] sm:$0xff]
  %v240 = vld [vmem:[%s0 + $0x248] sm:$0xff]
  %v241 = vld [vmem:[%s1] sm:$0xf]
  %v242 = vld [vmem:[%s1 + $0x4] sm:$0xf]
  %v243 = vld [vmem:[%s1 + $0x8] sm:$0xf]
  %v244 = vld [vmem:[%s1 + $0xc] sm:$0xf]
  %v245 = vld [vmem:[%s1 + $0x10] sm:$0xf]
  %v246 = vld [vmem:[%s1 + $0x14] sm:$0xf]
  %v247 = vld [vmem:[%s1 + $0x18] sm:$0xf]
  %v248 = vld [vmem:[%s1 + $0x1c] sm:$0xf]
  %v249 = vld [vmem:[%s1 + $0x20] sm:$0xf]
  %v250 = vld [vmem:[%s1 + $0x24] sm:$0xf]
  %v251 = vld [vmem:[%s1 + $0x28] sm:$0xf]
  %v252 = vld [vmem:[%s1 + $0x2c] sm:$0xf]
  %v253 = vld [vmem:[%s1 + $0x30] sm:$0xf]
  %v254 = vld [vmem:[%s1 + $0x34] sm:$0xf]
  %v255 = vld [vmem:[%s1 + $0x38] sm:$0xf]
  %v256 = vld [vmem:[%s1 + $0x3c] sm:$0xf]
  %v257 = vld [vmem:[%s1 + $0x40] sm:$0xf]
  %v258 = vld [vmem:[%s1 + $0x44] sm:$0xf]
  %v259 = vld [vmem:[%s1 + $0x48] sm:$0xf]
  %v260 = vld [vmem:[%s1 + $0x4c] sm:$0xf]
  %v261 = vld [vmem:[%s1 + $0x50] sm:$0xf]
  %v262 = vld [vmem:[%s1 + $0x54] sm:$0xf]
  %v263 = vld [vmem:[%s1 + $0x58] sm:$0xf]
  %v264 = vld [vmem:[%s1 + $0x5c] sm:$0xf]
  %v265 = vld [vmem:[%s1 + $0x60] sm:$0xf]
  %v266 = vld [vmem:[%s1 + $0x64] sm:$0xf]
  %v267 = vld [vmem:[%s1 + $0x68] sm:$0xf]
  %v268 = vld [vmem:[%s1 + $0x6c] sm:$0xf]
  %v269 = vld [vmem:[%s1 + $0x70] sm:$0xf]
  %v270 = vld [vmem:[%s1 + $0x74] sm:$0xf]
  %v271 = vld [vmem:[%s1 + $0x78] sm:$0xf]
  %v272 = vld [vmem:[%s1 + $0x7c] sm:$0xf]
  %v347 = vunpack.c.l.b16 %v167
  %v348 = vunpack.c.h.b16 %v167
  %v349 = vunpack.c.l.b16 %v168
  %v350 = vunpack.c.h.b16 %v168
  %v351 = vunpack.c.l.b16 %v169
  %v352 = vunpack.c.h.b16 %v169
  %v353 = vunpack.c.l.b16 %v170
  %v354 = vunpack.c.h.b16 %v170
  %v355 = vunpack.c.l.b16 %v171
  %v356 = vunpack.c.h.b16 %v171
  %v357 = vunpack.c.l.b16 %v172
  %v358 = vunpack.c.h.b16 %v172
  %v359 = vunpack.c.l.b16 %v173
  %v360 = vunpack.c.h.b16 %v173
  %v361 = vunpack.c.l.b16 %v174
  %v362 = vunpack.c.h.b16 %v174
  %v363 = vunpack.c.l.b16 %v175
  %v364 = vunpack.c.h.b16 %v175
  %v365 = vunpack.c.l.b16 %v176
  %v366 = vunpack.c.h.b16 %v176
  %v367 = vunpack.c.l.b16 %v177
  %v368 = vunpack.c.h.b16 %v177
  %v369 = vunpack.c.l.b16 %v178
  %v370 = vunpack.c.h.b16 %v178
  %v371 = vunpack.c.l.b16 %v179
  %v372 = vunpack.c.h.b16 %v179
  %v373 = vunpack.c.l.b16 %v180
  %v374 = vunpack.c.h.b16 %v180
  %v375 = vunpack.c.l.b16 %v181
  %v376 = vunpack.c.h.b16 %v181
  %v377 = vunpack.c.l.b16 %v182
  %v378 = vunpack.c.h.b16 %v182
  %v379 = vunpack.c.l.b16 %v183
  %v380 = vunpack.c.h.b16 %v183
  %v381 = vunpack.c.l.b16 %v184
  %v382 = vunpack.c.h.b16 %v184
  %v383 = vunpack.c.l.b16 %v185
  %v384 = vunpack.c.h.b16 %v185
  %v385 = vunpack.c.l.b16 %v186
  %v386 = vunpack.c.h.b16 %v186
  %v387 = vunpack.c.l.b16 %v187
  %v388 = vunpack.c.h.b16 %v187
  %v389 = vunpack.c.l.b16 %v188
  %v390 = vunpack.c.h.b16 %v188
  %v391 = vunpack.c.l.b16 %v189
  %v392 = vunpack.c.h.b16 %v189
  %v393 = vunpack.c.l.b16 %v190
  %v394 = vunpack.c.h.b16 %v190
  %v395 = vunpack.c.l.b16 %v191
  %v396 = vunpack.c.h.b16 %v191
  %v397 = vunpack.c.l.b16 %v192
  %v398 = vunpack.c.h.b16 %v192
  %v399 = vunpack.c.l.b16 %v193
  %v400 = vunpack.c.h.b16 %v193
  %v401 = vunpack.c.l.b16 %v194
  %v402 = vunpack.c.h.b16 %v194
  %v403 = vunpack.c.l.b16 %v195
  %v404 = vunpack.c.h.b16 %v195
  %v405 = vunpack.c.l.b16 %v196
  %v406 = vunpack.c.h.b16 %v196
  %v407 = vunpack.c.l.b16 %v197
  %v408 = vunpack.c.h.b16 %v197
  %v409 = vunpack.c.l.b16 %v198
  %v410 = vunpack.c.h.b16 %v198
  %v411 = vunpack.c.l.b16 %v199
  %v412 = vunpack.c.h.b16 %v199
  %v413 = vunpack.c.l.b16 %v200
  %v414 = vunpack.c.h.b16 %v200
  %v415 = vunpack.c.l.b16 %v201
  %v416 = vunpack.c.h.b16 %v201
  %v417 = vunpack.c.l.b16 %v202
  %v418 = vunpack.c.h.b16 %v202
  %v419 = vunpack.c.l.b16 %v203
  %v420 = vunpack.c.h.b16 %v203
  %v421 = vunpack.c.l.b16 %v204
  %v422 = vunpack.c.h.b16 %v204
  %v423 = vunpack.c.l.b16 %v205
  %v424 = vunpack.c.h.b16 %v205
  %v425 = vunpack.c.l.b16 %v206
  %v426 = vunpack.c.h.b16 %v206
  %v427 = vunpack.c.l.b16 %v207
  %v428 = vunpack.c.h.b16 %v207
  %v429 = vunpack.c.l.b16 %v208
  %v430 = vunpack.c.h.b16 %v208
  %v431 = vunpack.c.l.b16 %v209
  %v432 = vunpack.c.h.b16 %v209
  %v433 = vunpack.c.l.b16 %v210
  %v434 = vunpack.c.h.b16 %v210
  %v435 = vunpack.c.l.b16 %v211
  %v436 = vunpack.c.h.b16 %v211
  %v437 = vunpack.c.l.b16 %v212
  %v438 = vunpack.c.h.b16 %v212
  %v439 = vunpack.c.l.b16 %v213
  %v440 = vunpack.c.h.b16 %v213
  %v441 = vunpack.c.l.b16 %v214
  %v442 = vunpack.c.h.b16 %v214
  %v443 = vunpack.c.l.b16 %v215
  %v444 = vunpack.c.h.b16 %v215
  %v445 = vunpack.c.l.b16 %v216
  %v446 = vunpack.c.h.b16 %v216
  %v447 = vunpack.c.l.b16 %v217
  %v448 = vunpack.c.h.b16 %v217
  %v449 = vunpack.c.l.b16 %v218
  %v450 = vunpack.c.h.b16 %v218
  %v451 = vunpack.c.l.b16 %v219
  %v452 = vunpack.c.h.b16 %v219
  %v453 = vunpack.c.l.b16 %v220
  %v454 = vunpack.c.h.b16 %v220
  %v455 = vunpack.c.l.b16 %v221
  %v456 = vunpack.c.h.b16 %v221
  %v457 = vunpack.c.l.b16 %v222
  %v458 = vunpack.c.h.b16 %v222
  %v459 = vunpack.c.l.b16 %v223
  %v460 = vunpack.c.h.b16 %v223
  %v461 = vunpack.c.l.b16 %v224
  %v462 = vunpack.c.h.b16 %v224
  %v463 = vunpack.c.l.b16 %v225
  %v464 = vunpack.c.h.b16 %v225
  %v465 = vunpack.c.l.b16 %v226
  %v466 = vunpack.c.h.b16 %v226
  %v467 = vunpack.c.l.b16 %v227
  %v468 = vunpack.c.h.b16 %v227
  %v469 = vunpack.c.l.b16 %v228
  %v470 = vunpack.c.h.b16 %v228
  %v471 = vunpack.c.l.b16 %v229
  %v472 = vunpack.c.h.b16 %v229
  %v473 = vunpack.c.l.b16 %v230
  %v474 = vunpack.c.h.b16 %v230
  %v475 = vunpack.c.l.b16 %v231
  %v476 = vunpack.c.h.b16 %v231
  %v477 = vunpack.c.l.b16 %v232
  %v478 = vunpack.c.h.b16 %v232
  %v479 = vunpack.c.l.b16 %v233
  %v480 = vunpack.c.h.b16 %v233
  %v481 = vunpack.c.l.b16 %v234
  %v482 = vunpack.c.h.b16 %v234
  %v483 = vunpack.c.l.b16 %v235
  %v484 = vunpack.c.h.b16 %v235
  %v485 = vunpack.c.l.b16 %v236
  %v486 = vunpack.c.h.b16 %v236
  %v487 = vunpack.c.l.b16 %v237
  %v488 = vunpack.c.h.b16 %v237
  %v489 = vunpack.c.l.b16 %v238
  %v490 = vunpack.c.h.b16 %v238
  %v491 = vunpack.c.l.b16 %v239
  %v492 = vunpack.c.h.b16 %v239
  %v493 = vunpack.c.l.b16 %v240
  %v494 = vunpack.c.h.b16 %v240
  %v495 = vpack.c.b16 %v349, %v347
  %v496 = vpack.c.b16 %v350, %v348
  %v497 = vpack.c.b16 %v353, %v351
  %v498 = vpack.c.b16 %v354, %v352
  %v499 = vpack.c.b16 %v357, %v355
  %v500 = vpack.c.b16 %v358, %v356
  %v501 = vpack.c.b16 %v361, %v359
  %v502 = vpack.c.b16 %v362, %v360
  %v503 = vpack.c.b16 %v365, %v363
  %v504 = vpack.c.b16 %v366, %v364
  %v505 = vpack.c.b16 %v369, %v367
  %v506 = vpack.c.b16 %v370, %v368
  %v507 = vpack.c.b16 %v373, %v371
  %v508 = vpack.c.b16 %v374, %v372
  %v509 = vpack.c.b16 %v377, %v375
  %v510 = vpack.c.b16 %v378, %v376
  %v511 = vpack.c.b16 %v381, %v379
  %v512 = vpack.c.b16 %v382, %v380
  %v513 = vpack.c.b16 %v385, %v383
  %v514 = vpack.c.b16 %v386, %v384
  %v515 = vpack.c.b16 %v389, %v387
  %v516 = vpack.c.b16 %v390, %v388
  %v517 = vpack.c.b16 %v393, %v391
  %v518 = vpack.c.b16 %v394, %v392
  %v519 = vpack.c.b16 %v397, %v395
  %v520 = vpack.c.b16 %v398, %v396
  %v521 = vpack.c.b16 %v401, %v399
  %v522 = vpack.c.b16 %v402, %v400
  %v523 = vpack.c.b16 %v405, %v403
  %v524 = vpack.c.b16 %v406, %v404
  %v525 = vpack.c.b16 %v409, %v407
  %v526 = vpack.c.b16 %v410, %v408
  %v527 = vpack.c.b16 %v413, %v411
  %v528 = vpack.c.b16 %v414, %v412
  %v529 = vpack.c.b16 %v417, %v415
  %v530 = vpack.c.b16 %v418, %v416
  %v531 = vpack.c.b16 %v421, %v419
  %v532 = vpack.c.b16 %v422, %v420
  %v533 = vpack.c.b16 %v425, %v423
  %v534 = vpack.c.b16 %v426, %v424
  %v535 = vpack.c.b16 %v429, %v427
  %v536 = vpack.c.b16 %v430, %v428
  %v537 = vpack.c.b16 %v433, %v431
  %v538 = vpack.c.b16 %v434, %v432
  %v539 = vpack.c.b16 %v437, %v435
  %v540 = vpack.c.b16 %v438, %v436
  %v541 = vpack.c.b16 %v441, %v439
  %v542 = vpack.c.b16 %v442, %v440
  %v543 = vpack.c.b16 %v445, %v443
  %v544 = vpack.c.b16 %v446, %v444
  %v545 = vpack.c.b16 %v449, %v447
  %v546 = vpack.c.b16 %v450, %v448
  %v547 = vpack.c.b16 %v453, %v451
  %v548 = vpack.c.b16 %v454, %v452
  %v549 = vpack.c.b16 %v457, %v455
  %v550 = vpack.c.b16 %v458, %v456
  %v551 = vpack.c.b16 %v461, %v459
  %v552 = vpack.c.b16 %v462, %v460
  %v553 = vpack.c.b16 %v465, %v463
  %v554 = vpack.c.b16 %v466, %v464
  %v555 = vpack.c.b16 %v469, %v467
  %v556 = vpack.c.b16 %v470, %v468
  %v557 = vpack.c.b16 %v473, %v471
  %v558 = vpack.c.b16 %v474, %v472
  %v559 = vpack.c.b16 %v477, %v475
  %v560 = vpack.c.b16 %v478, %v476
  %v561 = vpack.c.b16 %v481, %v479
  %v562 = vpack.c.b16 %v482, %v480
  %v563 = vpack.c.b16 %v485, %v483
  %v564 = vpack.c.b16 %v486, %v484
  %v565 = vpack.c.b16 %v489, %v487
  %v566 = vpack.c.b16 %v490, %v488
  %v567 = vpack.c.b16 %v493, %v491
  %v568 = vpack.c.b16 %v494, %v492
  %v675 = vunpack.c.l.b16 %v241
  %v676 = vunpack.c.l.b16 %v242
  %v677 = vunpack.c.l.b16 %v243
  %v678 = vunpack.c.l.b16 %v244
  %v679 = vunpack.c.l.b16 %v245
  %v680 = vunpack.c.l.b16 %v246
  %v681 = vunpack.c.l.b16 %v247
  %v682 = vunpack.c.l.b16 %v248
  %v683 = vunpack.c.l.b16 %v249
  %v684 = vunpack.c.l.b16 %v250
  %v685 = vunpack.c.l.b16 %v251
  %v686 = vunpack.c.l.b16 %v252
  %v687 = vunpack.c.l.b16 %v253
  %v688 = vunpack.c.l.b16 %v254
  %v689 = vunpack.c.l.b16 %v255
  %v690 = vunpack.c.l.b16 %v256
  %v691 = vunpack.c.l.b16 %v257
  %v692 = vunpack.c.l.b16 %v258
  %v693 = vunpack.c.l.b16 %v259
  %v694 = vunpack.c.l.b16 %v260
  %v695 = vunpack.c.l.b16 %v261
  %v696 = vunpack.c.l.b16 %v262
  %v697 = vunpack.c.l.b16 %v263
  %v698 = vunpack.c.l.b16 %v264
  %v699 = vunpack.c.l.b16 %v265
  %v700 = vunpack.c.l.b16 %v266
  %v701 = vunpack.c.l.b16 %v267
  %v702 = vunpack.c.l.b16 %v268
  %v703 = vunpack.c.l.b16 %v269
  %v704 = vunpack.c.l.b16 %v270
  %v705 = vunpack.c.l.b16 %v271
  %v706 = vunpack.c.l.b16 %v272
  %v707 = vpack.c.b16 %v676, %v675
  %v708 = vpack.c.b16 %v678, %v677
  %v709 = vpack.c.b16 %v680, %v679
  %v710 = vpack.c.b16 %v682, %v681
  %v711 = vpack.c.b16 %v684, %v683
  %v712 = vpack.c.b16 %v686, %v685
  %v713 = vpack.c.b16 %v688, %v687
  %v714 = vpack.c.b16 %v690, %v689
  %v715 = vpack.c.b16 %v692, %v691
  %v716 = vpack.c.b16 %v694, %v693
  %v717 = vpack.c.b16 %v696, %v695
  %v718 = vpack.c.b16 %v698, %v697
  %v719 = vpack.c.b16 %v700, %v699
  %v720 = vpack.c.b16 %v702, %v701
  %v721 = vpack.c.b16 %v704, %v703
  %v722 = vpack.c.b16 %v706, %v705
  %739 = vmatprep.subr.bf16.mxu0 0
  %740 = vmatpush1.bf16.msra.mxu0 %v714
  %741 = vmatprep.subr.bf16.mxu0 0
  %742 = vmatpush1.bf16.msra.mxu0 %v713
  %743 = vmatprep.subr.bf16.mxu0 0
  %744 = vmatpush1.bf16.msra.mxu0 %v712
  %745 = vmatprep.subr.bf16.mxu0 0
  %746 = vmatpush1.bf16.msra.mxu0 %v711
  %747 = vmatprep.subr.bf16.mxu0 0
  %748 = vmatpush1.bf16.msra.mxu0 %v710
  %749 = vmatprep.subr.bf16.mxu0 0
  %750 = vmatpush1.bf16.msra.mxu0 %v709
  %751 = vmatprep.subr.bf16.mxu0 0
  %752 = vmatpush1.bf16.msra.mxu0 %v708
  %753 = vmatprep.subr.bf16.mxu0 0
  %754 = vmatpush1.bf16.msra.mxu0 %v707
  %755 = vmatprep.subr.bf16.mxu0 0
  %756 = vmatpush2.bf16.msra.mxu0 %v722
  %757 = vmatprep.subr.bf16.mxu0 0
  %758 = vmatpush2.bf16.msra.mxu0 %v721
  %759 = vmatprep.subr.bf16.mxu0 0
  %760 = vmatpush2.bf16.msra.mxu0 %v720
  %761 = vmatprep.subr.bf16.mxu0 0
  %762 = vmatpush2.bf16.msra.mxu0 %v719
  %763 = vmatprep.subr.bf16.mxu0 0
  %764 = vmatpush2.bf16.msra.mxu0 %v718
  %765 = vmatprep.subr.bf16.mxu0 0
  %766 = vmatpush2.bf16.msra.mxu0 %v717
  %767 = vmatprep.subr.bf16.mxu0 0
  %768 = vmatpush2.bf16.msra.mxu0 %v716
  %769 = vmatprep.subr.bf16.mxu0 0
  %770 = vmatpush2.bf16.msra.mxu0 %v715
  %771 = vmatprep.mubr.bf16.mxu0 %v496
  %772 = vmatmul.mubr.bf16.gmra.mxu0 %v495
  %v773 = vpop.f32.mrf.mxu0
  %v774 = vadd.f32 0.0, %v773
  %v775 = vpop.f32.mrf.mxu0
  %v776 = vpop.f32.mrf.mxu0
  %v777 = vadd.f32 0.0, %v776
  %v778 = vpop.f32.mrf.mxu0
  %779 = vmatprep.mubr.bf16.mxu0 %v498
  %780 = vmatmul.mubr.bf16.gmra.mxu0 %v497
  %v781 = vpop.f32.mrf.mxu0
  %v782 = vadd.f32 0.0, %v781
  %v783 = vpop.f32.mrf.mxu0
  %v784 = vpop.f32.mrf.mxu0
  %v785 = vadd.f32 0.0, %v784
  %v786 = vpop.f32.mrf.mxu0
  %787 = vmatprep.mubr.bf16.mxu0 %v500
  %788 = vmatmul.mubr.bf16.gmra.mxu0 %v499
  %v789 = vpop.f32.mrf.mxu0
  %v790 = vadd.f32 0.0, %v789
  %v791 = vpop.f32.mrf.mxu0
  %v792 = vpop.f32.mrf.mxu0
  %v793 = vadd.f32 0.0, %v792
  %v794 = vpop.f32.mrf.mxu0
  %795 = vmatprep.mubr.bf16.mxu0 %v502
  %796 = vmatmul.mubr.bf16.gmra.mxu0 %v501
  %v797 = vpop.f32.mrf.mxu0
  %v798 = vadd.f32 0.0, %v797
  %v799 = vpop.f32.mrf.mxu0
  %v800 = vpop.f32.mrf.mxu0
  %v801 = vadd.f32 0.0, %v800
  %v802 = vpop.f32.mrf.mxu0
  %803 = vmatprep.mubr.bf16.mxu0 %v504
  %804 = vmatmul.mubr.bf16.gmra.mxu0 %v503
  %v805 = vpop.f32.mrf.mxu0
  %v806 = vadd.f32 0.0, %v805
  %v807 = vpop.f32.mrf.mxu0
  %v808 = vpop.f32.mrf.mxu0
  %v809 = vadd.f32 0.0, %v808
  %v810 = vpop.f32.mrf.mxu0
  %811 = vmatprep.mubr.bf16.mxu0 %v506
  %812 = vmatmul.mubr.bf16.gmra.mxu0 %v505
  %v813 = vpop.f32.mrf.mxu0
  %v814 = vadd.f32 0.0, %v813
  %v815 = vpop.f32.mrf.mxu0
  %v816 = vpop.f32.mrf.mxu0
  %v817 = vadd.f32 0.0, %v816
  %v818 = vpop.f32.mrf.mxu0
  %819 = vmatprep.mubr.bf16.mxu0 %v508
  %820 = vmatmul.mubr.bf16.gmra.mxu0 %v507
  %v821 = vpop.f32.mrf.mxu0
  %v822 = vadd.f32 0.0, %v821
  %v823 = vpop.f32.mrf.mxu0
  %v824 = vpop.f32.mrf.mxu0
  %v825 = vadd.f32 0.0, %v824
  %v826 = vpop.f32.mrf.mxu0
  %827 = vmatprep.mubr.bf16.mxu0 %v510
  %828 = vmatmul.mubr.bf16.gmra.mxu0 %v509
  %v829 = vpop.f32.mrf.mxu0
  %v830 = vadd.f32 0.0, %v829
  %v831 = vpop.f32.mrf.mxu0
  %v832 = vpop.f32.mrf.mxu0
  %v833 = vadd.f32 0.0, %v832
  %v834 = vpop.f32.mrf.mxu0
  %835 = vmatprep.mubr.bf16.mxu0 %v512
  %836 = vmatmul.mubr.bf16.gmra.mxu0 %v511
  %v837 = vpop.f32.mrf.mxu0
  %v838 = vadd.f32 0.0, %v837
  %v839 = vpop.f32.mrf.mxu0
  %v840 = vpop.f32.mrf.mxu0
  %v841 = vadd.f32 0.0, %v840
  %v842 = vpop.f32.mrf.mxu0
  %843 = vmatprep.mubr.bf16.mxu0 %v514
  %844 = vmatmul.mubr.bf16.gmra.mxu0 %v513
  %v845 = vpop.f32.mrf.mxu0
  %v846 = vadd.f32 0.0, %v845
  %v847 = vpop.f32.mrf.mxu0
  %v848 = vpop.f32.mrf.mxu0
  %v849 = vadd.f32 0.0, %v848
  %v850 = vpop.f32.mrf.mxu0
  %851 = vmatprep.mubr.bf16.mxu0 %v516
  %852 = vmatmul.mubr.bf16.gmra.mxu0 %v515
  %v853 = vpop.f32.mrf.mxu0
  %v854 = vadd.f32 0.0, %v853
  %v855 = vpop.f32.mrf.mxu0
  %v856 = vpop.f32.mrf.mxu0
  %v857 = vadd.f32 0.0, %v856
  %v858 = vpop.f32.mrf.mxu0
  %859 = vmatprep.mubr.bf16.mxu0 %v518
  %860 = vmatmul.mubr.bf16.gmra.mxu0 %v517
  %v861 = vpop.f32.mrf.mxu0
  %v862 = vadd.f32 0.0, %v861
  %v863 = vpop.f32.mrf.mxu0
  %v864 = vpop.f32.mrf.mxu0
  %v865 = vadd.f32 0.0, %v864
  %v866 = vpop.f32.mrf.mxu0
  %867 = vmatprep.mubr.bf16.mxu0 %v520
  %868 = vmatmul.mubr.bf16.gmra.mxu0 %v519
  %v869 = vpop.f32.mrf.mxu0
  %v870 = vadd.f32 0.0, %v869
  %v871 = vpop.f32.mrf.mxu0
  %v872 = vpop.f32.mrf.mxu0
  %v873 = vadd.f32 0.0, %v872
  %v874 = vpop.f32.mrf.mxu0
  %875 = vmatprep.mubr.bf16.mxu0 %v522
  %876 = vmatmul.mubr.bf16.gmra.mxu0 %v521
  %v877 = vpop.f32.mrf.mxu0
  %v878 = vadd.f32 0.0, %v877
  %v879 = vpop.f32.mrf.mxu0
  %v880 = vpop.f32.mrf.mxu0
  %v881 = vadd.f32 0.0, %v880
  %v882 = vpop.f32.mrf.mxu0
  %883 = vmatprep.mubr.bf16.mxu0 %v524
  %884 = vmatmul.mubr.bf16.gmra.mxu0 %v523
  %v885 = vpop.f32.mrf.mxu0
  %v886 = vadd.f32 0.0, %v885
  %v887 = vpop.f32.mrf.mxu0
  %v888 = vpop.f32.mrf.mxu0
  %v889 = vadd.f32 0.0, %v888
  %v890 = vpop.f32.mrf.mxu0
  %891 = vmatprep.mubr.bf16.mxu0 %v526
  %892 = vmatmul.mubr.bf16.gmra.mxu0 %v525
  %v893 = vpop.f32.mrf.mxu0
  %v894 = vadd.f32 0.0, %v893
  %v895 = vpop.f32.mrf.mxu0
  %v896 = vpop.f32.mrf.mxu0
  %v897 = vadd.f32 0.0, %v896
  %v898 = vpop.f32.mrf.mxu0
  %899 = vmatprep.mubr.bf16.mxu0 %v528
  %900 = vmatmul.mubr.bf16.gmra.mxu0 %v527
  %v901 = vpop.f32.mrf.mxu0
  %v902 = vadd.f32 0.0, %v901
  %v903 = vpop.f32.mrf.mxu0
  %v904 = vpop.f32.mrf.mxu0
  %v905 = vadd.f32 0.0, %v904
  %v906 = vpop.f32.mrf.mxu0
  %907 = vmatprep.mubr.bf16.mxu0 %v530
  %908 = vmatmul.mubr.bf16.gmra.mxu0 %v529
  %v909 = vpop.f32.mrf.mxu0
  %v910 = vadd.f32 0.0, %v909
  %v911 = vpop.f32.mrf.mxu0
  %v912 = vpop.f32.mrf.mxu0
  %v913 = vadd.f32 0.0, %v912
  %v914 = vpop.f32.mrf.mxu0
  %915 = vmatprep.mubr.bf16.mxu0 %v532
  %916 = vmatmul.mubr.bf16.gmra.mxu0 %v531
  %v917 = vpop.f32.mrf.mxu0
  %v918 = vadd.f32 0.0, %v917
  %v919 = vpop.f32.mrf.mxu0
  %v920 = vpop.f32.mrf.mxu0
  %v921 = vadd.f32 0.0, %v920
  %v922 = vpop.f32.mrf.mxu0
  %923 = vmatprep.mubr.bf16.mxu0 %v534
  %924 = vmatmul.mubr.bf16.gmra.mxu0 %v533
  %v925 = vpop.f32.mrf.mxu0
  %v926 = vadd.f32 0.0, %v925
  %v927 = vpop.f32.mrf.mxu0
  %v928 = vpop.f32.mrf.mxu0
  %v929 = vadd.f32 0.0, %v928
  %v930 = vpop.f32.mrf.mxu0
  %931 = vmatprep.mubr.bf16.mxu0 %v536
  %932 = vmatmul.mubr.bf16.gmra.mxu0 %v535
  %v933 = vpop.f32.mrf.mxu0
  %v934 = vadd.f32 0.0, %v933
  %v935 = vpop.f32.mrf.mxu0
  %v936 = vpop.f32.mrf.mxu0
  %v937 = vadd.f32 0.0, %v936
  %v938 = vpop.f32.mrf.mxu0
  %939 = vmatprep.mubr.bf16.mxu0 %v538
  %940 = vmatmul.mubr.bf16.gmra.mxu0 %v537
  %v941 = vpop.f32.mrf.mxu0
  %v942 = vadd.f32 0.0, %v941
  %v943 = vpop.f32.mrf.mxu0
  %v944 = vpop.f32.mrf.mxu0
  %v945 = vadd.f32 0.0, %v944
  %v946 = vpop.f32.mrf.mxu0
  %947 = vmatprep.mubr.bf16.mxu0 %v540
  %948 = vmatmul.mubr.bf16.gmra.mxu0 %v539
  %v949 = vpop.f32.mrf.mxu0
  %v950 = vadd.f32 0.0, %v949
  %v951 = vpop.f32.mrf.mxu0
  %v952 = vpop.f32.mrf.mxu0
  %v953 = vadd.f32 0.0, %v952
  %v954 = vpop.f32.mrf.mxu0
  %955 = vmatprep.mubr.bf16.mxu0 %v542
  %956 = vmatmul.mubr.bf16.gmra.mxu0 %v541
  %v957 = vpop.f32.mrf.mxu0
  %v958 = vadd.f32 0.0, %v957
  %v959 = vpop.f32.mrf.mxu0
  %v960 = vpop.f32.mrf.mxu0
  %v961 = vadd.f32 0.0, %v960
  %v962 = vpop.f32.mrf.mxu0
  %963 = vmatprep.mubr.bf16.mxu0 %v544
  %964 = vmatmul.mubr.bf16.gmra.mxu0 %v543
  %v965 = vpop.f32.mrf.mxu0
  %v966 = vadd.f32 0.0, %v965
  %v967 = vpop.f32.mrf.mxu0
  %v968 = vpop.f32.mrf.mxu0
  %v969 = vadd.f32 0.0, %v968
  %v970 = vpop.f32.mrf.mxu0
  %971 = vmatprep.mubr.bf16.mxu0 %v546
  %972 = vmatmul.mubr.bf16.gmra.mxu0 %v545
  %v973 = vpop.f32.mrf.mxu0
  %v974 = vadd.f32 0.0, %v973
  %v975 = vpop.f32.mrf.mxu0
  %v976 = vpop.f32.mrf.mxu0
  %v977 = vadd.f32 0.0, %v976
  %v978 = vpop.f32.mrf.mxu0
  %979 = vmatprep.mubr.bf16.mxu0 %v548
  %980 = vmatmul.mubr.bf16.gmra.mxu0 %v547
  %v981 = vpop.f32.mrf.mxu0
  %v982 = vadd.f32 0.0, %v981
  %v983 = vpop.f32.mrf.mxu0
  %v984 = vpop.f32.mrf.mxu0
  %v985 = vadd.f32 0.0, %v984
  %v986 = vpop.f32.mrf.mxu0
  %987 = vmatprep.mubr.bf16.mxu0 %v550
  %988 = vmatmul.mubr.bf16.gmra.mxu0 %v549
  %v989 = vpop.f32.mrf.mxu0
  %v990 = vadd.f32 0.0, %v989
  %v991 = vpop.f32.mrf.mxu0
  %v992 = vpop.f32.mrf.mxu0
  %v993 = vadd.f32 0.0, %v992
  %v994 = vpop.f32.mrf.mxu0
  %995 = vmatprep.mubr.bf16.mxu0 %v552
  %996 = vmatmul.mubr.bf16.gmra.mxu0 %v551
  %v997 = vpop.f32.mrf.mxu0
  %v998 = vadd.f32 0.0, %v997
  %v999 = vpop.f32.mrf.mxu0
  %v1000 = vpop.f32.mrf.mxu0
  %v1001 = vadd.f32 0.0, %v1000
  %v1002 = vpop.f32.mrf.mxu0
  %1003 = vmatprep.mubr.bf16.mxu0 %v554
  %1004 = vmatmul.mubr.bf16.gmra.mxu0 %v553
  %v1005 = vpop.f32.mrf.mxu0
  %v1006 = vadd.f32 0.0, %v1005
  %v1007 = vpop.f32.mrf.mxu0
  %v1008 = vpop.f32.mrf.mxu0
  %v1009 = vadd.f32 0.0, %v1008
  %v1010 = vpop.f32.mrf.mxu0
  %1011 = vmatprep.mubr.bf16.mxu0 %v556
  %1012 = vmatmul.mubr.bf16.gmra.mxu0 %v555
  %v1013 = vpop.f32.mrf.mxu0
  %v1014 = vadd.f32 0.0, %v1013
  %v1015 = vpop.f32.mrf.mxu0
  %v1016 = vpop.f32.mrf.mxu0
  %v1017 = vadd.f32 0.0, %v1016
  %v1018 = vpop.f32.mrf.mxu0
  %1019 = vmatprep.mubr.bf16.mxu0 %v558
  %1020 = vmatmul.mubr.bf16.gmra.mxu0 %v557
  %v1021 = vpop.f32.mrf.mxu0
  %v1022 = vadd.f32 0.0, %v1021
  %v1023 = vpop.f32.mrf.mxu0
  %v1024 = vpop.f32.mrf.mxu0
  %v1025 = vadd.f32 0.0, %v1024
  %v1026 = vpop.f32.mrf.mxu0
  %1027 = vmatprep.mubr.bf16.mxu0 %v560
  %1028 = vmatmul.mubr.bf16.gmra.mxu0 %v559
  %v1029 = vpop.f32.mrf.mxu0
  %v1030 = vadd.f32 0.0, %v1029
  %v1031 = vpop.f32.mrf.mxu0
  %v1032 = vpop.f32.mrf.mxu0
  %v1033 = vadd.f32 0.0, %v1032
  %v1034 = vpop.f32.mrf.mxu0
  %1035 = vmatprep.mubr.bf16.mxu0 %v562
  %1036 = vmatmul.mubr.bf16.gmra.mxu0 %v561
  %v1037 = vpop.f32.mrf.mxu0
  %v1038 = vadd.f32 0.0, %v1037
  %v1039 = vpop.f32.mrf.mxu0
  %v1040 = vpop.f32.mrf.mxu0
  %v1041 = vadd.f32 0.0, %v1040
  %v1042 = vpop.f32.mrf.mxu0
  %1043 = vmatprep.mubr.bf16.mxu0 %v564
  %1044 = vmatmul.mubr.bf16.gmra.mxu0 %v563
  %v1045 = vpop.f32.mrf.mxu0
  %v1046 = vadd.f32 0.0, %v1045
  %v1047 = vpop.f32.mrf.mxu0
  %v1048 = vpop.f32.mrf.mxu0
  %v1049 = vadd.f32 0.0, %v1048
  %v1050 = vpop.f32.mrf.mxu0
  %1051 = vmatprep.mubr.bf16.mxu0 %v566
  %1052 = vmatmul.mubr.bf16.gmra.mxu0 %v565
  %v1053 = vpop.f32.mrf.mxu0
  %v1054 = vadd.f32 0.0, %v1053
  %v1055 = vpop.f32.mrf.mxu0
  %v1056 = vpop.f32.mrf.mxu0
  %v1057 = vadd.f32 0.0, %v1056
  %v1058 = vpop.f32.mrf.mxu0
  %1059 = vmatprep.mubr.bf16.mxu0 %v568
  %1060 = vmatmul.mubr.bf16.gmra.mxu0 %v567
  %v1061 = vpop.f32.mrf.mxu0
  %v1062 = vadd.f32 0.0, %v1061
  %v1063 = vpop.f32.mrf.mxu0
  %v1064 = vpop.f32.mrf.mxu0
  %v1065 = vadd.f32 0.0, %v1064
  %v1066 = vpop.f32.mrf.mxu0
  %1067 = vdwg.mxu0
  %v1068 = vadd.f32 %v93, %v774
  %v1069 = vadd.f32 %v94, %v777
  %v1070 = vadd.f32 %v95, %v782
  %v1071 = vadd.f32 %v96, %v785
  %v1072 = vadd.f32 %v97, %v790
  %v1073 = vadd.f32 %v98, %v793
  %v1074 = vadd.f32 %v99, %v798
  %v1075 = vadd.f32 %v100, %v801
  %v1076 = vadd.f32 %v101, %v806
  %v1077 = vadd.f32 %v102, %v809
  %v1078 = vadd.f32 %v103, %v814
  %v1079 = vadd.f32 %v104, %v817
  %v1080 = vadd.f32 %v105, %v822
  %v1081 = vadd.f32 %v106, %v825
  %v1082 = vadd.f32 %v107, %v830
  %v1083 = vadd.f32 %v108, %v833
  %v1084 = vadd.f32 %v109, %v838
  %v1085 = vadd.f32 %v110, %v841
  %v1086 = vadd.f32 %v111, %v846
  %v1087 = vadd.f32 %v112, %v849
  %v1088 = vadd.f32 %v113, %v854
  %v1089 = vadd.f32 %v114, %v857
  %v1090 = vadd.f32 %v115, %v862
  %v1091 = vadd.f32 %v116, %v865
  %v1092 = vadd.f32 %v117, %v870
  %v1093 = vadd.f32 %v118, %v873
  %v1094 = vadd.f32 %v119, %v878
  %v1095 = vadd.f32 %v120, %v881
  %v1096 = vadd.f32 %v121, %v886
  %v1097 = vadd.f32 %v122, %v889
  %v1098 = vadd.f32 %v123, %v894
  %v1099 = vadd.f32 %v124, %v897
  %v1100 = vadd.f32 %v125, %v902
  %v1101 = vadd.f32 %v126, %v905
  %v1102 = vadd.f32 %v127, %v910
  %v1103 = vadd.f32 %v128, %v913
  %v1104 = vadd.f32 %v129, %v918
  %v1105 = vadd.f32 %v130, %v921
  %v1106 = vadd.f32 %v131, %v926
  %v1107 = vadd.f32 %v132, %v929
  %v1108 = vadd.f32 %v133, %v934
  %v1109 = vadd.f32 %v134, %v937
  %v1110 = vadd.f32 %v135, %v942
  %v1111 = vadd.f32 %v136, %v945
  %v1112 = vadd.f32 %v137, %v950
  %v1113 = vadd.f32 %v138, %v953
  %v1114 = vadd.f32 %v139, %v958
  %v1115 = vadd.f32 %v140, %v961
  %v1116 = vadd.f32 %v141, %v966
  %v1117 = vadd.f32 %v142, %v969
  %v1118 = vadd.f32 %v143, %v974
  %v1119 = vadd.f32 %v144, %v977
  %v1120 = vadd.f32 %v145, %v982
  %v1121 = vadd.f32 %v146, %v985
  %v1122 = vadd.f32 %v147, %v990
  %v1123 = vadd.f32 %v148, %v993
  %v1124 = vadd.f32 %v149, %v998
  %v1125 = vadd.f32 %v150, %v1001
  %v1126 = vadd.f32 %v151, %v1006
  %v1127 = vadd.f32 %v152, %v1009
  %v1128 = vadd.f32 %v153, %v1014
  %v1129 = vadd.f32 %v154, %v1017
  %v1130 = vadd.f32 %v155, %v1022
  %v1131 = vadd.f32 %v156, %v1025
  %v1132 = vadd.f32 %v157, %v1030
  %v1133 = vadd.f32 %v158, %v1033
  %v1134 = vadd.f32 %v159, %v1038
  %v1135 = vadd.f32 %v160, %v1041
  %v1136 = vadd.f32 %v161, %v1046
  %v1137 = vadd.f32 %v162, %v1049
  %v1138 = vadd.f32 %v163, %v1054
  %v1139 = vadd.f32 %v164, %v1057
  %v1140 = vadd.f32 %v165, %v1062
  %v1141 = vadd.f32 %v166, %v1065
  %1142 = vst [vmem:[#allocation2] sm:$0xff] %v1068
  %1143 = vst [vmem:[#allocation2 + $0x8] sm:$0xff] %v1069
  %1144 = vst [vmem:[#allocation2 + $0x10] sm:$0xff] %v1070
  %1145 = vst [vmem:[#allocation2 + $0x18] sm:$0xff] %v1071
  %1146 = vst [vmem:[#allocation2 + $0x20] sm:$0xff] %v1072
  %1147 = vst [vmem:[#allocation2 + $0x28] sm:$0xff] %v1073
  %1148 = vst [vmem:[#allocation2 + $0x30] sm:$0xff] %v1074
  %1149 = vst [vmem:[#allocation2 + $0x38] sm:$0xff] %v1075
  %1150 = vst [vmem:[#allocation2 + $0x40] sm:$0xff] %v1076
  %1151 = vst [vmem:[#allocation2 + $0x48] sm:$0xff] %v1077
  %1152 = vst [vmem:[#allocation2 + $0x50] sm:$0xff] %v1078
  %1153 = vst [vmem:[#allocation2 + $0x58] sm:$0xff] %v1079
  %1154 = vst [vmem:[#allocation2 + $0x60] sm:$0xff] %v1080
  %1155 = vst [vmem:[#allocation2 + $0x68] sm:$0xff] %v1081
  %1156 = vst [vmem:[#allocation2 + $0x70] sm:$0xff] %v1082
  %1157 = vst [vmem:[#allocation2 + $0x78] sm:$0xff] %v1083
  %1158 = vst [vmem:[#allocation2 + $0x80] sm:$0xff] %v1084
  %1159 = vst [vmem:[#allocation2 + $0x88] sm:$0xff] %v1085
  %1160 = vst [vmem:[#allocation2 + $0x90] sm:$0xff] %v1086
  %1161 = vst [vmem:[#allocation2 + $0x98] sm:$0xff] %v1087
  %1162 = vst [vmem:[#allocation2 + $0xa0] sm:$0xff] %v1088
  %1163 = vst [vmem:[#allocation2 + $0xa8] sm:$0xff] %v1089
  %1164 = vst [vmem:[#allocation2 + $0xb0] sm:$0xff] %v1090
  %1165 = vst [vmem:[#allocation2 + $0xb8] sm:$0xff] %v1091
  %1166 = vst [vmem:[#allocation2 + $0xc0] sm:$0xff] %v1092
  %1167 = vst [vmem:[#allocation2 + $0xc8] sm:$0xff] %v1093
  %1168 = vst [vmem:[#allocation2 + $0xd0] sm:$0xff] %v1094
  %1169 = vst [vmem:[#allocation2 + $0xd8] sm:$0xff] %v1095
  %1170 = vst [vmem:[#allocation2 + $0xe0] sm:$0xff] %v1096
  %1171 = vst [vmem:[#allocation2 + $0xe8] sm:$0xff] %v1097
  %1172 = vst [vmem:[#allocation2 + $0xf0] sm:$0xff] %v1098
  %1173 = vst [vmem:[#allocation2 + $0xf8] sm:$0xff] %v1099
  %1174 = vst [vmem:[#allocation2 + $0x100] sm:$0xff] %v1100
  %1175 = vst [vmem:[#allocation2 + $0x108] sm:$0xff] %v1101
  %1176 = vst [vmem:[#allocation2 + $0x110] sm:$0xff] %v1102
  %1177 = vst [vmem:[#allocation2 + $0x118] sm:$0xff] %v1103
  %1178 = vst [vmem:[#allocation2 + $0x120] sm:$0xff] %v1104
  %1179 = vst [vmem:[#allocation2 + $0x128] sm:$0xff] %v1105
  %1180 = vst [vmem:[#allocation2 + $0x130] sm:$0xff] %v1106
  %1181 = vst [vmem:[#allocation2 + $0x138] sm:$0xff] %v1107
  %1182 = vst [vmem:[#allocation2 + $0x140] sm:$0xff] %v1108
  %1183 = vst [vmem:[#allocation2 + $0x148] sm:$0xff] %v1109
  %1184 = vst [vmem:[#allocation2 + $0x150] sm:$0xff] %v1110
  %1185 = vst [vmem:[#allocation2 + $0x158] sm:$0xff] %v1111
  %1186 = vst [vmem:[#allocation2 + $0x160] sm:$0xff] %v1112
  %1187 = vst [vmem:[#allocation2 + $0x168] sm:$0xff] %v1113
  %1188 = vst [vmem:[#allocation2 + $0x170] sm:$0xff] %v1114
  %1189 = vst [vmem:[#allocation2 + $0x178] sm:$0xff] %v1115
  %1190 = vst [vmem:[#allocation2 + $0x180] sm:$0xff] %v1116
  %1191 = vst [vmem:[#allocation2 + $0x188] sm:$0xff] %v1117
  %1192 = vst [vmem:[#allocation2 + $0x190] sm:$0xff] %v1118
  %1193 = vst [vmem:[#allocation2 + $0x198] sm:$0xff] %v1119
  %1194 = vst [vmem:[#allocation2 + $0x1a0] sm:$0xff] %v1120
  %1195 = vst [vmem:[#allocation2 + $0x1a8] sm:$0xff] %v1121
  %1196 = vst [vmem:[#allocation2 + $0x1b0] sm:$0xff] %v1122
  %1197 = vst [vmem:[#allocation2 + $0x1b8] sm:$0xff] %v1123
  %1198 = vst [vmem:[#allocation2 + $0x1c0] sm:$0xff] %v1124
  %1199 = vst [vmem:[#allocation2 + $0x1c8] sm:$0xff] %v1125
  %1200 = vst [vmem:[#allocation2 + $0x1d0] sm:$0xff] %v1126
  %1201 = vst [vmem:[#allocation2 + $0x1d8] sm:$0xff] %v1127
  %1202 = vst [vmem:[#allocation2 + $0x1e0] sm:$0xff] %v1128
  %1203 = vst [vmem:[#allocation2 + $0x1e8] sm:$0xff] %v1129
  %1204 = vst [vmem:[#allocation2 + $0x1f0] sm:$0xff] %v1130
  %1205 = vst [vmem:[#allocation2 + $0x1f8] sm:$0xff] %v1131
  %1206 = vst [vmem:[#allocation2 + $0x200] sm:$0xff] %v1132
  %1207 = vst [vmem:[#allocation2 + $0x208] sm:$0xff] %v1133
  %1208 = vst [vmem:[#allocation2 + $0x210] sm:$0xff] %v1134
  %1209 = vst [vmem:[#allocation2 + $0x218] sm:$0xff] %v1135
  %1210 = vst [vmem:[#allocation2 + $0x220] sm:$0xff] %v1136
  %1211 = vst [vmem:[#allocation2 + $0x228] sm:$0xff] %v1137
  %1212 = vst [vmem:[#allocation2 + $0x230] sm:$0xff] %v1138
  %1213 = vst [vmem:[#allocation2 + $0x238] sm:$0xff] %v1139
  %1214 = vst [vmem:[#allocation2 + $0x240] sm:$0xff] %v1140
  %1215 = vst [vmem:[#allocation2 + $0x248] sm:$0xff] %v1141
  // Predicated region
  $region18: #{cnn_model_forward.9} parent=0 // pred_check
    %p1216 = pneg %p15
  $region19: #{cnn_model_forward.9} parent=0 // pred_check_branch
    %1218 = sbr.rel (%p1216) target = $region21
  $region20: #{cnn_model_forward.9} parent=0 // pred_region
    %v1219 = vld [vmem:[#allocation2] sm:$0xff]
    %v1220 = vld [vmem:[#allocation2 + $0x8] sm:$0xff]
    %v1221 = vld [vmem:[#allocation2 + $0x10] sm:$0xff]
    %v1222 = vld [vmem:[#allocation2 + $0x18] sm:$0xff]
    %v1223 = vld [vmem:[#allocation2 + $0x20] sm:$0xff]
    %v1224 = vld [vmem:[#allocation2 + $0x28] sm:$0xff]
    %v1225 = vld [vmem:[#allocation2 + $0x30] sm:$0xff]
    %v1226 = vld [vmem:[#allocation2 + $0x38] sm:$0xff]
    %v1227 = vld [vmem:[#allocation2 + $0x40] sm:$0xff]
    %v1228 = vld [vmem:[#allocation2 + $0x48] sm:$0xff]
    %v1229 = vld [vmem:[#allocation2 + $0x50] sm:$0xff]
    %v1230 = vld [vmem:[#allocation2 + $0x58] sm:$0xff]
    %v1231 = vld [vmem:[#allocation2 + $0x60] sm:$0xff]
    %v1232 = vld [vmem:[#allocation2 + $0x68] sm:$0xff]
    %v1233 = vld [vmem:[#allocation2 + $0x70] sm:$0xff]
    %v1234 = vld [vmem:[#allocation2 + $0x78] sm:$0xff]
    %v1235 = vld [vmem:[#allocation2 + $0x80] sm:$0xff]
    %v1236 = vld [vmem:[#allocation2 + $0x88] sm:$0xff]
    %v1237 = vld [vmem:[#allocation2 + $0x90] sm:$0xff]
    %v1238 = vld [vmem:[#allocation2 + $0x98] sm:$0xff]
    %v1239 = vld [vmem:[#allocation2 + $0xa0] sm:$0xff]
    %v1240 = vld [vmem:[#allocation2 + $0xa8] sm:$0xff]
    %v1241 = vld [vmem:[#allocation2 + $0xb0] sm:$0xff]
    %v1242 = vld [vmem:[#allocation2 + $0xb8] sm:$0xff]
    %v1243 = vld [vmem:[#allocation2 + $0xc0] sm:$0xff]
    %v1244 = vld [vmem:[#allocation2 + $0xc8] sm:$0xff]
    %v1245 = vld [vmem:[#allocation2 + $0xd0] sm:$0xff]
    %v1246 = vld [vmem:[#allocation2 + $0xd8] sm:$0xff]
    %v1247 = vld [vmem:[#allocation2 + $0xe0] sm:$0xff]
    %v1248 = vld [vmem:[#allocation2 + $0xe8] sm:$0xff]
    %v1249 = vld [vmem:[#allocation2 + $0xf0] sm:$0xff]
    %v1250 = vld [vmem:[#allocation2 + $0xf8] sm:$0xff]
    %v1251 = vld [vmem:[#allocation2 + $0x100] sm:$0xff]
    %v1252 = vld [vmem:[#allocation2 + $0x108] sm:$0xff]
    %v1253 = vld [vmem:[#allocation2 + $0x110] sm:$0xff]
    %v1254 = vld [vmem:[#allocation2 + $0x118] sm:$0xff]
    %v1255 = vld [vmem:[#allocation2 + $0x120] sm:$0xff]
    %v1256 = vld [vmem:[#allocation2 + $0x128] sm:$0xff]
    %v1257 = vld [vmem:[#allocation2 + $0x130] sm:$0xff]
    %v1258 = vld [vmem:[#allocation2 + $0x138] sm:$0xff]
    %v1259 = vld [vmem:[#allocation2 + $0x140] sm:$0xff]
    %v1260 = vld [vmem:[#allocation2 + $0x148] sm:$0xff]
    %v1261 = vld [vmem:[#allocation2 + $0x150] sm:$0xff]
    %v1262 = vld [vmem:[#allocation2 + $0x158] sm:$0xff]
    %v1263 = vld [vmem:[#allocation2 + $0x160] sm:$0xff]
    %v1264 = vld [vmem:[#allocation2 + $0x168] sm:$0xff]
    %v1265 = vld [vmem:[#allocation2 + $0x170] sm:$0xff]
    %v1266 = vld [vmem:[#allocation2 + $0x178] sm:$0xff]
    %v1267 = vld [vmem:[#allocation2 + $0x180] sm:$0xff]
    %v1268 = vld [vmem:[#allocation2 + $0x188] sm:$0xff]
    %v1269 = vld [vmem:[#allocation2 + $0x190] sm:$0xff]
    %v1270 = vld [vmem:[#allocation2 + $0x198] sm:$0xff]
    %v1271 = vld [vmem:[#allocation2 + $0x1a0] sm:$0xff]
    %v1272 = vld [vmem:[#allocation2 + $0x1a8] sm:$0xff]
    %v1273 = vld [vmem:[#allocation2 + $0x1b0] sm:$0xff]
    %v1274 = vld [vmem:[#allocation2 + $0x1b8] sm:$0xff]
    %v1275 = vld [vmem:[#allocation2 + $0x1c0] sm:$0xff]
    %v1276 = vld [vmem:[#allocation2 + $0x1c8] sm:$0xff]
    %v1277 = vld [vmem:[#allocation2 + $0x1d0] sm:$0xff]
    %v1278 = vld [vmem:[#allocation2 + $0x1d8] sm:$0xff]
    %v1279 = vld [vmem:[#allocation2 + $0x1e0] sm:$0xff]
    %v1280 = vld [vmem:[#allocation2 + $0x1e8] sm:$0xff]
    %v1281 = vld [vmem:[#allocation2 + $0x1f0] sm:$0xff]
    %v1282 = vld [vmem:[#allocation2 + $0x1f8] sm:$0xff]
    %v1283 = vld [vmem:[#allocation2 + $0x200] sm:$0xff]
    %v1284 = vld [vmem:[#allocation2 + $0x208] sm:$0xff]
    %v1285 = vld [vmem:[#allocation2 + $0x210] sm:$0xff]
    %v1286 = vld [vmem:[#allocation2 + $0x218] sm:$0xff]
    %v1287 = vld [vmem:[#allocation2 + $0x220] sm:$0xff]
    %v1288 = vld [vmem:[#allocation2 + $0x228] sm:$0xff]
    %v1289 = vld [vmem:[#allocation2 + $0x230] sm:$0xff]
    %v1290 = vld [vmem:[#allocation2 + $0x238] sm:$0xff]
    %v1291 = vld [vmem:[#allocation2 + $0x240] sm:$0xff]
    %v1292 = vld [vmem:[#allocation2 + $0x248] sm:$0xff]
    %v1293 = vld [vmem:[%s2] sm:$0x1]
    %v1295 = vlaneseq
    %v1296 = vshrl.u32 %v1295, 7
    %v1297 = vsub.s32 0, %v1296
    %v1298 = vrot.slane %v1293, %v1297
    %v1300 = vadd.f32 %v1219, %v1298
    %v1301 = vadd.f32 %v1220, %v1298
    %v1302 = vadd.f32 %v1221, %v1298
    %v1303 = vadd.f32 %v1222, %v1298
    %v1304 = vadd.f32 %v1223, %v1298
    %v1305 = vadd.f32 %v1224, %v1298
    %v1306 = vadd.f32 %v1225, %v1298
    %v1307 = vadd.f32 %v1226, %v1298
    %v1308 = vadd.f32 %v1227, %v1298
    %v1309 = vadd.f32 %v1228, %v1298
    %v1310 = vadd.f32 %v1229, %v1298
    %v1311 = vadd.f32 %v1230, %v1298
    %v1312 = vadd.f32 %v1231, %v1298
    %v1313 = vadd.f32 %v1232, %v1298
    %v1314 = vadd.f32 %v1233, %v1298
    %v1315 = vadd.f32 %v1234, %v1298
    %v1316 = vadd.f32 %v1235, %v1298
    %v1317 = vadd.f32 %v1236, %v1298
    %v1318 = vadd.f32 %v1237, %v1298
    %v1319 = vadd.f32 %v1238, %v1298
    %v1320 = vadd.f32 %v1239, %v1298
    %v1321 = vadd.f32 %v1240, %v1298
    %v1322 = vadd.f32 %v1241, %v1298
    %v1323 = vadd.f32 %v1242, %v1298
    %v1324 = vadd.f32 %v1243, %v1298
    %v1325 = vadd.f32 %v1244, %v1298
    %v1326 = vadd.f32 %v1245, %v1298
    %v1327 = vadd.f32 %v1246, %v1298
    %v1328 = vadd.f32 %v1247, %v1298
    %v1329 = vadd.f32 %v1248, %v1298
    %v1330 = vadd.f32 %v1249, %v1298
    %v1331 = vadd.f32 %v1250, %v1298
    %v1332 = vadd.f32 %v1251, %v1298
    %v1333 = vadd.f32 %v1252, %v1298
    %v1334 = vadd.f32 %v1253, %v1298
    %v1335 = vadd.f32 %v1254, %v1298
    %v1336 = vadd.f32 %v1255, %v1298
    %v1337 = vadd.f32 %v1256, %v1298
    %v1338 = vadd.f32 %v1257, %v1298
    %v1339 = vadd.f32 %v1258, %v1298
    %v1340 = vadd.f32 %v1259, %v1298
    %v1341 = vadd.f32 %v1260, %v1298
    %v1342 = vadd.f32 %v1261, %v1298
    %v1343 = vadd.f32 %v1262, %v1298
    %v1344 = vadd.f32 %v1263, %v1298
    %v1345 = vadd.f32 %v1264, %v1298
    %v1346 = vadd.f32 %v1265, %v1298
    %v1347 = vadd.f32 %v1266, %v1298
    %v1348 = vadd.f32 %v1267, %v1298
    %v1349 = vadd.f32 %v1268, %v1298
    %v1350 = vadd.f32 %v1269, %v1298
    %v1351 = vadd.f32 %v1270, %v1298
    %v1352 = vadd.f32 %v1271, %v1298
    %v1353 = vadd.f32 %v1272, %v1298
    %v1354 = vadd.f32 %v1273, %v1298
    %v1355 = vadd.f32 %v1274, %v1298
    %v1356 = vadd.f32 %v1275, %v1298
    %v1357 = vadd.f32 %v1276, %v1298
    %v1358 = vadd.f32 %v1277, %v1298
    %v1359 = vadd.f32 %v1278, %v1298
    %v1360 = vadd.f32 %v1279, %v1298
    %v1361 = vadd.f32 %v1280, %v1298
    %v1362 = vadd.f32 %v1281, %v1298
    %v1363 = vadd.f32 %v1282, %v1298
    %v1364 = vadd.f32 %v1283, %v1298
    %v1365 = vadd.f32 %v1284, %v1298
    %v1366 = vadd.f32 %v1285, %v1298
    %v1367 = vadd.f32 %v1286, %v1298
    %v1368 = vadd.f32 %v1287, %v1298
    %v1369 = vadd.f32 %v1288, %v1298
    %v1370 = vadd.f32 %v1289, %v1298
    %v1371 = vadd.f32 %v1290, %v1298
    %v1372 = vadd.f32 %v1291, %v1298
    %v1373 = vadd.f32 %v1292, %v1298
    %v1374 = vmax.f32 %v1300, 0.0
    %v1375 = vmax.f32 %v1301, 0.0
    %v1376 = vmax.f32 %v1302, 0.0
    %v1377 = vmax.f32 %v1303, 0.0
    %v1378 = vmax.f32 %v1304, 0.0
    %v1379 = vmax.f32 %v1305, 0.0
    %v1380 = vmax.f32 %v1306, 0.0
    %v1381 = vmax.f32 %v1307, 0.0
    %v1382 = vmax.f32 %v1308, 0.0
    %v1383 = vmax.f32 %v1309, 0.0
    %v1384 = vmax.f32 %v1310, 0.0
    %v1385 = vmax.f32 %v1311, 0.0
    %v1386 = vmax.f32 %v1312, 0.0
    %v1387 = vmax.f32 %v1313, 0.0
    %v1388 = vmax.f32 %v1314, 0.0
    %v1389 = vmax.f32 %v1315, 0.0
    %v1390 = vmax.f32 %v1316, 0.0
    %v1391 = vmax.f32 %v1317, 0.0
    %v1392 = vmax.f32 %v1318, 0.0
    %v1393 = vmax.f32 %v1319, 0.0
    %v1394 = vmax.f32 %v1320, 0.0
    %v1395 = vmax.f32 %v1321, 0.0
    %v1396 = vmax.f32 %v1322, 0.0
    %v1397 = vmax.f32 %v1323, 0.0
    %v1398 = vmax.f32 %v1324, 0.0
    %v1399 = vmax.f32 %v1325, 0.0
    %v1400 = vmax.f32 %v1326, 0.0
    %v1401 = vmax.f32 %v1327, 0.0
    %v1402 = vmax.f32 %v1328, 0.0
    %v1403 = vmax.f32 %v1329, 0.0
    %v1404 = vmax.f32 %v1330, 0.0
    %v1405 = vmax.f32 %v1331, 0.0
    %v1406 = vmax.f32 %v1332, 0.0
    %v1407 = vmax.f32 %v1333, 0.0
    %v1408 = vmax.f32 %v1334, 0.0
    %v1409 = vmax.f32 %v1335, 0.0
    %v1410 = vmax.f32 %v1336, 0.0
    %v1411 = vmax.f32 %v1337, 0.0
    %v1412 = vmax.f32 %v1338, 0.0
    %v1413 = vmax.f32 %v1339, 0.0
    %v1414 = vmax.f32 %v1340, 0.0
    %v1415 = vmax.f32 %v1341, 0.0
    %v1416 = vmax.f32 %v1342, 0.0
    %v1417 = vmax.f32 %v1343, 0.0
    %v1418 = vmax.f32 %v1344, 0.0
    %v1419 = vmax.f32 %v1345, 0.0
    %v1420 = vmax.f32 %v1346, 0.0
    %v1421 = vmax.f32 %v1347, 0.0
    %v1422 = vmax.f32 %v1348, 0.0
    %v1423 = vmax.f32 %v1349, 0.0
    %v1424 = vmax.f32 %v1350, 0.0
    %v1425 = vmax.f32 %v1351, 0.0
    %v1426 = vmax.f32 %v1352, 0.0
    %v1427 = vmax.f32 %v1353, 0.0
    %v1428 = vmax.f32 %v1354, 0.0
    %v1429 = vmax.f32 %v1355, 0.0
    %v1430 = vmax.f32 %v1356, 0.0
    %v1431 = vmax.f32 %v1357, 0.0
    %v1432 = vmax.f32 %v1358, 0.0
    %v1433 = vmax.f32 %v1359, 0.0
    %v1434 = vmax.f32 %v1360, 0.0
    %v1435 = vmax.f32 %v1361, 0.0
    %v1436 = vmax.f32 %v1362, 0.0
    %v1437 = vmax.f32 %v1363, 0.0
    %v1438 = vmax.f32 %v1364, 0.0
    %v1439 = vmax.f32 %v1365, 0.0
    %v1440 = vmax.f32 %v1366, 0.0
    %v1441 = vmax.f32 %v1367, 0.0
    %v1442 = vmax.f32 %v1368, 0.0
    %v1443 = vmax.f32 %v1369, 0.0
    %v1444 = vmax.f32 %v1370, 0.0
    %v1445 = vmax.f32 %v1371, 0.0
    %v1446 = vmax.f32 %v1372, 0.0
    %v1447 = vmax.f32 %v1373, 0.0
    %1448 = vst [vmem:[%s3] sm:$0xff] %v1374
    %1449 = vst [vmem:[%s3 + $0x8] sm:$0xff] %v1375
    %1450 = vst [vmem:[%s3 + $0x10] sm:$0xff] %v1376
    %1451 = vst [vmem:[%s3 + $0x18] sm:$0xff] %v1377
    %1452 = vst [vmem:[%s3 + $0x20] sm:$0xff] %v1378
    %1453 = vst [vmem:[%s3 + $0x28] sm:$0xff] %v1379
    %1454 = vst [vmem:[%s3 + $0x30] sm:$0xff] %v1380
    %1455 = vst [vmem:[%s3 + $0x38] sm:$0xff] %v1381
    %1456 = vst [vmem:[%s3 + $0x40] sm:$0xff] %v1382
    %1457 = vst [vmem:[%s3 + $0x48] sm:$0xff] %v1383
    %1458 = vst [vmem:[%s3 + $0x50] sm:$0xff] %v1384
    %1459 = vst [vmem:[%s3 + $0x58] sm:$0xff] %v1385
    %1460 = vst [vmem:[%s3 + $0x60] sm:$0xff] %v1386
    %1461 = vst [vmem:[%s3 + $0x68] sm:$0xff] %v1387
    %1462 = vst [vmem:[%s3 + $0x70] sm:$0xff] %v1388
    %1463 = vst [vmem:[%s3 + $0x78] sm:$0xff] %v1389
    %1464 = vst [vmem:[%s3 + $0x80] sm:$0xff] %v1390
    %1465 = vst [vmem:[%s3 + $0x88] sm:$0xff] %v1391
    %1466 = vst [vmem:[%s3 + $0x90] sm:$0xff] %v1392
    %1467 = vst [vmem:[%s3 + $0x98] sm:$0xff] %v1393
    %1468 = vst [vmem:[%s3 + $0xa0] sm:$0xff] %v1394
    %1469 = vst [vmem:[%s3 + $0xa8] sm:$0xff] %v1395
    %1470 = vst [vmem:[%s3 + $0xb0] sm:$0xff] %v1396
    %1471 = vst [vmem:[%s3 + $0xb8] sm:$0xff] %v1397
    %1472 = vst [vmem:[%s3 + $0xc0] sm:$0xff] %v1398
    %1473 = vst [vmem:[%s3 + $0xc8] sm:$0xff] %v1399
    %1474 = vst [vmem:[%s3 + $0xd0] sm:$0xff] %v1400
    %1475 = vst [vmem:[%s3 + $0xd8] sm:$0xff] %v1401
    %1476 = vst [vmem:[%s3 + $0xe0] sm:$0xff] %v1402
    %1477 = vst [vmem:[%s3 + $0xe8] sm:$0xff] %v1403
    %1478 = vst [vmem:[%s3 + $0xf0] sm:$0xff] %v1404
    %1479 = vst [vmem:[%s3 + $0xf8] sm:$0xff] %v1405
    %1480 = vst [vmem:[%s3 + $0x100] sm:$0xff] %v1406
    %1481 = vst [vmem:[%s3 + $0x108] sm:$0xff] %v1407
    %1482 = vst [vmem:[%s3 + $0x110] sm:$0xff] %v1408
    %1483 = vst [vmem:[%s3 + $0x118] sm:$0xff] %v1409
    %1484 = vst [vmem:[%s3 + $0x120] sm:$0xff] %v1410
    %1485 = vst [vmem:[%s3 + $0x128] sm:$0xff] %v1411
    %1486 = vst [vmem:[%s3 + $0x130] sm:$0xff] %v1412
    %1487 = vst [vmem:[%s3 + $0x138] sm:$0xff] %v1413
    %1488 = vst [vmem:[%s3 + $0x140] sm:$0xff] %v1414
    %1489 = vst [vmem:[%s3 + $0x148] sm:$0xff] %v1415
    %1490 = vst [vmem:[%s3 + $0x150] sm:$0xff] %v1416
    %1491 = vst [vmem:[%s3 + $0x158] sm:$0xff] %v1417
    %1492 = vst [vmem:[%s3 + $0x160] sm:$0xff] %v1418
    %1493 = vst [vmem:[%s3 + $0x168] sm:$0xff] %v1419
    %1494 = vst [vmem:[%s3 + $0x170] sm:$0xff] %v1420
    %1495 = vst [vmem:[%s3 + $0x178] sm:$0xff] %v1421
    %1496 = vst [vmem:[%s3 + $0x180] sm:$0xff] %v1422
    %1497 = vst [vmem:[%s3 + $0x188] sm:$0xff] %v1423
    %1498 = vst [vmem:[%s3 + $0x190] sm:$0xff] %v1424
    %1499 = vst [vmem:[%s3 + $0x198] sm:$0xff] %v1425
    %1500 = vst [vmem:[%s3 + $0x1a0] sm:$0xff] %v1426
    %1501 = vst [vmem:[%s3 + $0x1a8] sm:$0xff] %v1427
    %1502 = vst [vmem:[%s3 + $0x1b0] sm:$0xff] %v1428
    %1503 = vst [vmem:[%s3 + $0x1b8] sm:$0xff] %v1429
    %1504 = vst [vmem:[%s3 + $0x1c0] sm:$0xff] %v1430
    %1505 = vst [vmem:[%s3 + $0x1c8] sm:$0xff] %v1431
    %1506 = vst [vmem:[%s3 + $0x1d0] sm:$0xff] %v1432
    %1507 = vst [vmem:[%s3 + $0x1d8] sm:$0xff] %v1433
    %1508 = vst [vmem:[%s3 + $0x1e0] sm:$0xff] %v1434
    %1509 = vst [vmem:[%s3 + $0x1e8] sm:$0xff] %v1435
    %1510 = vst [vmem:[%s3 + $0x1f0] sm:$0xff] %v1436
    %1511 = vst [vmem:[%s3 + $0x1f8] sm:$0xff] %v1437
    %1512 = vst [vmem:[%s3 + $0x200] sm:$0xff] %v1438
    %1513 = vst [vmem:[%s3 + $0x208] sm:$0xff] %v1439
    %1514 = vst [vmem:[%s3 + $0x210] sm:$0xff] %v1440
    %1515 = vst [vmem:[%s3 + $0x218] sm:$0xff] %v1441
    %1516 = vst [vmem:[%s3 + $0x220] sm:$0xff] %v1442
    %1517 = vst [vmem:[%s3 + $0x228] sm:$0xff] %v1443
    %1518 = vst [vmem:[%s3 + $0x230] sm:$0xff] %v1444
    %1519 = vst [vmem:[%s3 + $0x238] sm:$0xff] %v1445
    %1520 = vst [vmem:[%s3 + $0x240] sm:$0xff] %v1446
    %1521 = vst [vmem:[%s3 + $0x248] sm:$0xff] %v1447
  $region21: #{cnn_model_forward.9} parent=0 // pred_fallthru
    _
  // Predicated region
  $region22: #{cnn_model_forward.9} parent=0 // pred_check
    _
  $region23: #{cnn_model_forward.9} parent=0 // pred_check_branch
    %1523 = sbr.rel (0) target = $region25
  $region24: #{cnn_model_forward.9} parent=0 // pred_region
    _
  $region25: #{cnn_model_forward.9} parent=0 // pred_fallthru
    _
  // Predicated region
  $region26: #{cnn_model_forward.9} parent=0 // pred_check
    _
  $region27: #{cnn_model_forward.9} parent=0 // pred_check_branch
    %1525 = sbr.rel (0) target = $region29
  $region28: #{cnn_model_forward.9} parent=0 // pred_region
    _
  $region29: #{cnn_model_forward.9} parent=0 // pred_fallthru
    _

// kernel: cnn_model_forward.10
$region0: #{cnn_model_forward.10}
  #allocation0 [shape = 'u32[]', space=smem, size = 0x4, offset = 0x4, fixed_abs, tag = 'smem constant byte address 0x4 - core index']
  #allocation1 [shape = 'u32[144,128]{1,0:T(1,128)}', space=vmem, size = 0x12000, scoped, tag = 'internal scratch']
  #allocation2 [shape = 'f32[128,256]{1,0:T(8,128)}', space=vmem, size = 0x20000, scoped, tag = 'scratch operand']
  %s0 = inlined_call_operand.vmem [shape: bf16[128,1152], index: 0, kind: input, shape index: {}]
  %s1 = inlined_call_operand.vmem [shape: bf16[1152,256], index: 1, kind: input, shape index: {}]
  %s2 = inlined_call_operand.vmem [shape: f32[1,256], index: 2, kind: input, shape index: {}]
  %s3 = inlined_call_operand.vmem [shape: f32[128,256], index: 3, kind: output, shape index: {}]
  %s4 = sld [smem:[#allocation0]]
  $region79: #{cnn_model_forward.10} parent=0
    _
  %s6 = ssub.s32 1, %s4
  %s7 = scalar_select 0, %s6, %s4
  $region1: #{cnn_model_forward.10} parent=0
    #allocation3 [shape = 'u8[196608]{0}', space=vmem, size = 0x30000, scoped, tag = 'input window, operand 0']
    loop: start=0, step=1, limit=5
    $region2: #{cnn_model_forward.10} parent=1 // loop_pre_header
      _
    $region3: #{cnn_model_forward.10} parent=1 // loop_header
      %s9 = sphi 0, %s13
      %p10 = scmp.ge.s32.totalorder %s9, 5
      %s16 = sphi 0, %s35
      %s17 = sphi 0, %s31
      %s18 = sphi 0, %s27
      %s19 = sphi 0, %s16
      %s20 = sphi 0, %s17
      %s21 = sphi 0, %s18
      %s22 = sphi 0, %s19
      %s23 = sphi 0, %s20
      %s24 = sphi 0, %s21
      %s40 = sphi 0, %s42
      %s43 = sphi 0, %s40
      %s44 = sphi 0, %s43
      %s60 = sphi 0, %s44
      %s68 = sphi 0, %s70
      %s71 = sphi 0, %s68
      %s72 = sphi 0, %s71
      %s88 = sphi 0, %s72
      %s94 = sphi 0, %s96
      %s97 = sphi 0, %s94
      %s98 = sphi 0, %s97
      %s114 = sphi 0, %s98
      %s122 = sphi 0, %s124
      %s125 = sphi 0, %s122
      %s126 = sphi 0, %s125
      %s142 = sphi 0, %s126
    $region4: #{cnn_model_forward.10} parent=1 // loop_header_branch
      %12 = sbr.rel (%p10) target = $region8
    $region5: #{cnn_model_forward.10} parent=1 // loop_body
      %s14 = ssub.s32 %s9, 1
      %s15 = ssub.s32 %s9, 2
      %s25 = sadd.s32 1, %s18
      %p26 = scmp.ge.s32.totalorder %s25, 3
      %s27 = scalar_select %p26, 0, %s25
      %s28 = sadd.s32 1, %s17
      %s29 = scalar_select %p26, %s28, %s17
      %p30 = scmp.ge.s32.totalorder %s29, 1
      %s31 = scalar_select %p30, 0, %s29
      %s32 = sadd.s32 1, %s16
      %s33 = scalar_select %p30, %s32, %s16
      %p34 = scmp.ge.s32.totalorder %s33, 1
      %s35 = scalar_select %p34, 0, %s33
      %s36 = ssub.s32 %s16, %s35
      %s37 = ssub.s32 %s18, %s27
      %s38 = sor.u32 %s36, %s37
      %p39 = scmp.eq.s32.totalorder %s38, 0
      %s41 = sadd.s32 %s40, 1
      %s42 = scalar_select %p39, %s40, %s41
      %p45 = pneg %p39
      %p46 = scmp.eq.s32.totalorder %s9, 2
      %p47 = por %p45, %p46
      %p48 = scmp.ne.s32.totalorder %s40, %s43
      %p49 = scmp.eq.s32.totalorder %s9, 0
      %p50 = por %p48, %p49
      %p51 = scmp.ne.s32.totalorder %s40, %s43
      %p52 = scmp.eq.s32.totalorder %s14, 2
      %p53 = por %p51, %p52
      %p54 = scmp.ne.s32.totalorder %s43, %s44
      %p55 = scmp.eq.s32.totalorder %s14, 0
      %p56 = por %p54, %p55
      %p57 = scmp.ne.s32.totalorder %s43, %s44
      %p58 = scmp.eq.s32.totalorder %s15, 2
      %p59 = por %p57, %p58
      %p61 = scmp.ne.s32.totalorder %s44, %s60
      %p62 = scmp.eq.s32.totalorder %s15, 0
      %p63 = por %p61, %p62
      %s64 = ssub.s32 %s18, %s27
      %s65 = ssub.s32 %s17, %s31
      %s66 = sor.u32 %s64, %s65
      %p67 = scmp.eq.s32.totalorder %s66, 0
      %s69 = sadd.s32 %s68, 1
      %s70 = scalar_select %p67, %s68, %s69
      %p73 = pneg %p67
      %p74 = scmp.eq.s32.totalorder %s9, 2
      %p75 = por %p73, %p74
      %p76 = scmp.ne.s32.totalorder %s68, %s71
      %p77 = scmp.eq.s32.totalorder %s9, 0
      %p78 = por %p76, %p77
      %p79 = scmp.ne.s32.totalorder %s68, %s71
      %p80 = scmp.eq.s32.totalorder %s14, 2
      %p81 = por %p79, %p80
      %p82 = scmp.ne.s32.totalorder %s71, %s72
      %p83 = scmp.eq.s32.totalorder %s14, 0
      %p84 = por %p82, %p83
      %p85 = scmp.ne.s32.totalorder %s71, %s72
      %p86 = scmp.eq.s32.totalorder %s15, 2
      %p87 = por %p85, %p86
      %p89 = scmp.ne.s32.totalorder %s72, %s88
      %p90 = scmp.eq.s32.totalorder %s15, 0
      %p91 = por %p89, %p90
      %s92 = ssub.s32 %s17, %s31
      %p93 = scmp.eq.s32.totalorder %s92, 0
      %s95 = sadd.s32 %s94, 1
      %s96 = scalar_select %p93, %s94, %s95
      %p99 = pneg %p93
      %p100 = scmp.eq.s32.totalorder %s9, 2
      %p101 = por %p99, %p100
      %p102 = scmp.ne.s32.totalorder %s94, %s97
      %p103 = scmp.eq.s32.totalorder %s9, 0
      %p104 = por %p102, %p103
      %p105 = scmp.ne.s32.totalorder %s94, %s97
      %p106 = scmp.eq.s32.totalorder %s14, 2
      %p107 = por %p105, %p106
      %p108 = scmp.ne.s32.totalorder %s97, %s98
      %p109 = scmp.eq.s32.totalorder %s14, 0
      %p110 = por %p108, %p109
      %p111 = scmp.ne.s32.totalorder %s97, %s98
      %p112 = scmp.eq.s32.totalorder %s15, 2
      %p113 = por %p111, %p112
      %p115 = scmp.ne.s32.totalorder %s98, %s114
      %p116 = scmp.eq.s32.totalorder %s15, 0
      %p117 = por %p115, %p116
      %s118 = ssub.s32 %s16, %s35
      %s119 = ssub.s32 %s17, %s31
      %s120 = sor.u32 %s118, %s119
      %p121 = scmp.eq.s32.totalorder %s120, 0
      %s123 = sadd.s32 %s122, 1
      %s124 = scalar_select %p121, %s122, %s123
      %p127 = pneg %p121
      %p128 = scmp.eq.s32.totalorder %s9, 2
      %p129 = por %p127, %p128
      %p130 = scmp.ne.s32.totalorder %s122, %s125
      %p131 = scmp.eq.s32.totalorder %s9, 0
      %p132 = por %p130, %p131
      %p133 = scmp.ne.s32.totalorder %s122, %s125
      %p134 = scmp.eq.s32.totalorder %s14, 2
      %p135 = por %p133, %p134
      %p136 = scmp.ne.s32.totalorder %s125, %s126
      %p137 = scmp.eq.s32.totalorder %s14, 0
      %p138 = por %p136, %p137
      %p139 = scmp.ne.s32.totalorder %s125, %s126
      %p140 = scmp.eq.s32.totalorder %s15, 2
      %p141 = por %p139, %p140
      %p143 = scmp.ne.s32.totalorder %s126, %s142
      %p144 = scmp.eq.s32.totalorder %s15, 0
      %p145 = por %p143, %p144
      %p146 = scmp.le.s32.totalorder 1, %s9
      %p147 = scmp.lt.s32.totalorder %s9, 4
      %p148 = pnand %p146, %p147
      %p149 = pneg %p148
      // Predicated region
      $region9: #{cnn_model_forward.10} parent=5 // pred_check
        _
      $region10: #{cnn_model_forward.10} parent=5 // pred_check_branch
        %151 = sbr.rel (%p148) target = $region12
      $region11: #{cnn_model_forward.10} parent=5 // pred_region
        %s152 = ssub.s32 %s9, 1
        // Predicated region
        $region13: #{cnn_model_forward.10} parent=11 // pred_check
          %p153 = pneg %p110
        $region14: #{cnn_model_forward.10} parent=11 // pred_check_branch
          %155 = sbr.rel (%p153) target = $region16
        $region15: #{cnn_model_forward.10} parent=11 // pred_region
          %s156 = smul.u32 2, %s20
          %p157 = scmp.lt.s32.totalorder %s156, 1
          %s158 = scalar_select %p157, %s156, 1
          %s159 = scalar_lea.vmem %s2, %s158
          %s160 = smul.u32 2, %s20
        $region16: #{cnn_model_forward.10} parent=11 // pred_fallthru
          _
      $region12: #{cnn_model_forward.10} parent=5 // pred_fallthru
        _
      %p161 = scmp.lt.s32.totalorder %s9, 3
      // Predicated region
      $region17: #{cnn_model_forward.10} parent=5 // pred_check
        %p162 = pneg %p161
      $region18: #{cnn_model_forward.10} parent=5 // pred_check_branch
        %164 = sbr.rel (%p162) target = $region20
      $region19: #{cnn_model_forward.10} parent=5 // pred_region
        // Predicated region
        $region21: #{cnn_model_forward.10} parent=19 // pred_check
          %p165 = pneg %p50
        $region22: #{cnn_model_forward.10} parent=19 // pred_check_branch
          %167 = sbr.rel (%p165) target = $region24
        $region23: #{cnn_model_forward.10} parent=19 // pred_region
          %s168 = sand.u32 %s40, 1
          %s169 = sand.u32 %s40, 1
          %s170 = smul.addr %s169, 192
          %s171 = scalar_lea.vmem [#allocation3], %s170
          %s172 = smul.u32 16, %s16
          %s173 = smul.u32 3, %s18
          %s174 = smul.addr %s172, 9
          %s175 = sadd.s32 %s173, %s174
          %s176 = smul.addr %s175, 4
          %s177 = scalar_lea.vmem %s0, %s176
          // Predicated region
          $region25: #{cnn_model_forward.10} parent=23 // pred_check
            _
          $region26: #{cnn_model_forward.10} parent=23 // pred_check_branch
            %179 = sbr.rel (0) target = $region28
          $region27: #{cnn_model_forward.10} parent=23 // pred_region
            // Predicated region
            $region29: #{cnn_model_forward.10} parent=27 // pred_check
              _
            $region30: #{cnn_model_forward.10} parent=27 // pred_check_branch
              %181 = sbr.rel (0) target = $region32
            $region31: #{cnn_model_forward.10} parent=27 // pred_region
              %s182 = scalar_lea.vmem %s177, 8
              %s183 = scalar_lea.vmem %s171, 8 [#allocation3]
              loop: start=0, step=1, limit=1
              $region33: #{cnn_model_forward.10} parent=31 // loop_pre_header
                _
              $region34: #{cnn_model_forward.10} parent=31 // loop_header
                %s185 = sphi 0, %s189
                %p186 = scmp.ge.s32.totalorder %s185, 1
                %s190 = sphi %s177, %s177
                %s191 = sphi %s171, %s171
              $region35: #{cnn_model_forward.10} parent=31 // loop_header_branch
                %188 = sbr.rel (%p186) target = $region39
              $region36: #{cnn_model_forward.10} parent=31 // loop_body
                %v192 = vld [vmem:[%s190] sm:$0xff]
                %193 = vst [vmem:[%s191] sm:$0xff] %v192
                %v194 = vld [vmem:[%s190 + $0x24] sm:$0xff]
                %195 = vst [vmem:[%s191 + $0xc] sm:$0xff] %v194
                %v196 = vld [vmem:[%s190 + $0x48] sm:$0xff]
                %197 = vst [vmem:[%s191 + $0x18] sm:$0xff] %v196
                %v198 = vld [vmem:[%s190 + $0x6c] sm:$0xff]
                %199 = vst [vmem:[%s191 + $0x24] sm:$0xff] %v198
                %v200 = vld [vmem:[%s190 + $0x90] sm:$0xff]
                %201 = vst [vmem:[%s191 + $0x30] sm:$0xff] %v200
                %v202 = vld [vmem:[%s190 + $0xb4] sm:$0xff]
                %203 = vst [vmem:[%s191 + $0x3c] sm:$0xff] %v202
                %v204 = vld [vmem:[%s190 + $0xd8] sm:$0xff]
                %205 = vst [vmem:[%s191 + $0x48] sm:$0xff] %v204
                %v206 = vld [vmem:[%s190 + $0xfc] sm:$0xff]
                %207 = vst [vmem:[%s191 + $0x54] sm:$0xff] %v206
                %v208 = vld [vmem:[%s190 + $0x120] sm:$0xff]
                %209 = vst [vmem:[%s191 + $0x60] sm:$0xff] %v208
                %v210 = vld [vmem:[%s190 + $0x144] sm:$0xff]
                %211 = vst [vmem:[%s191 + $0x6c] sm:$0xff] %v210
                %v212 = vld [vmem:[%s190 + $0x168] sm:$0xff]
                %213 = vst [vmem:[%s191 + $0x78] sm:$0xff] %v212
                %v214 = vld [vmem:[%s190 + $0x18c] sm:$0xff]
                %215 = vst [vmem:[%s191 + $0x84] sm:$0xff] %v214
                %v216 = vld [vmem:[%s190 + $0x1b0] sm:$0xff]
                %217 = vst [vmem:[%s191 + $0x90] sm:$0xff] %v216
                %v218 = vld [vmem:[%s190 + $0x1d4] sm:$0xff]
                %219 = vst [vmem:[%s191 + $0x9c] sm:$0xff] %v218
                %v220 = vld [vmem:[%s190 + $0x1f8] sm:$0xff]
                %221 = vst [vmem:[%s191 + $0xa8] sm:$0xff] %v220
                %v222 = vld [vmem:[%s190 + $0x21c] sm:$0xff]
                %223 = vst [vmem:[%s191 + $0xb4] sm:$0xff] %v222
              $region37: #{cnn_model_forward.10} parent=31 // loop_footer
                %s189 = sadd.s32 1, %s185
              $region38: #{cnn_model_forward.10} parent=31 // loop_footer_branch
                %184 = sbr.rel target = $region34
              $region39: #{cnn_model_forward.10} parent=31 // loop_exit
                _
              %s225 = ssub.s32 16, 1
              loop: start=0, step=1, limit=1
              $region40: #{cnn_model_forward.10} parent=31 // loop_pre_header
                _
              $region41: #{cnn_model_forward.10} parent=31 // loop_header
                %s227 = sphi 0, %s231
                %p228 = scmp.ge.s32.totalorder %s227, 1
                %s232 = sphi %s182, %s182
                %s233 = sphi %s183, %s183
              $region42: #{cnn_model_forward.10} parent=31 // loop_header_branch
                %230 = sbr.rel (%p228) target = $region46
              $region43: #{cnn_model_forward.10} parent=31 // loop_body
                %v234 = vld [vmem:[%s232] sm:%s225]
                %235 = vst [vmem:[%s233] sm:%s225] %v234
                %v236 = vld [vmem:[%s232 + $0x24] sm:%s225]
                %237 = vst [vmem:[%s233 + $0xc] sm:%s225] %v236
                %v238 = vld [vmem:[%s232 + $0x48] sm:%s225]
                %239 = vst [vmem:[%s233 + $0x18] sm:%s225] %v238
                %v240 = vld [vmem:[%s232 + $0x6c] sm:%s225]
                %241 = vst [vmem:[%s233 + $0x24] sm:%s225] %v240
                %v242 = vld [vmem:[%s232 + $0x90] sm:%s225]
                %243 = vst [vmem:[%s233 + $0x30] sm:%s225] %v242
                %v244 = vld [vmem:[%s232 + $0xb4] sm:%s225]
                %245 = vst [vmem:[%s233 + $0x3c] sm:%s225] %v244
                %v246 = vld [vmem:[%s232 + $0xd8] sm:%s225]
                %247 = vst [vmem:[%s233 + $0x48] sm:%s225] %v246
                %v248 = vld [vmem:[%s232 + $0xfc] sm:%s225]
                %249 = vst [vmem:[%s233 + $0x54] sm:%s225] %v248
                %v250 = vld [vmem:[%s232 + $0x120] sm:%s225]
                %251 = vst [vmem:[%s233 + $0x60] sm:%s225] %v250
                %v252 = vld [vmem:[%s232 + $0x144] sm:%s225]
                %253 = vst [vmem:[%s233 + $0x6c] sm:%s225] %v252
                %v254 = vld [vmem:[%s232 + $0x168] sm:%s225]
                %255 = vst [vmem:[%s233 + $0x78] sm:%s225] %v254
                %v256 = vld [vmem:[%s232 + $0x18c] sm:%s225]
                %257 = vst [vmem:[%s233 + $0x84] sm:%s225] %v256
                %v258 = vld [vmem:[%s232 + $0x1b0] sm:%s225]
                %259 = vst [vmem:[%s233 + $0x90] sm:%s225] %v258
                %v260 = vld [vmem:[%s232 + $0x1d4] sm:%s225]
                %261 = vst [vmem:[%s233 + $0x9c] sm:%s225] %v260
                %v262 = vld [vmem:[%s232 + $0x1f8] sm:%s225]
                %263 = vst [vmem:[%s233 + $0xa8] sm:%s225] %v262
                %v264 = vld [vmem:[%s232 + $0x21c] sm:%s225]
                %265 = vst [vmem:[%s233 + $0xb4] sm:%s225] %v264
              $region44: #{cnn_model_forward.10} parent=31 // loop_footer
                %s231 = sadd.s32 1, %s227
              $region45: #{cnn_model_forward.10} parent=31 // loop_footer_branch
                %226 = sbr.rel target = $region41
              $region46: #{cnn_model_forward.10} parent=31 // loop_exit
                _
            $region32: #{cnn_model_forward.10} parent=27 // pred_fallthru
              _
          $region28: #{cnn_model_forward.10} parent=23 // pred_fallthru
            _
          %266 = vnop
        $region24: #{cnn_model_forward.10} parent=19 // pred_fallthru
          _
        // Predicated region
        $region47: #{cnn_model_forward.10} parent=19 // pred_check
          %p267 = pneg %p78
        $region48: #{cnn_model_forward.10} parent=19 // pred_check_branch
          %269 = sbr.rel (%p267) target = $region50
        $region49: #{cnn_model_forward.10} parent=19 // pred_region
          %s270 = smul.u32 48, %s18
          %s271 = smul.u32 2, %s17
          %p272 = scmp.lt.s32.totalorder %s270, 143
          %s273 = scalar_select %p272, %s270, 143
          %p274 = scmp.lt.s32.totalorder %s271, 1
          %s275 = scalar_select %p274, %s271, 1
          %s276 = smul.addr %s273, 2
          %s277 = sadd.s32 %s275, %s276
          %s278 = smul.addr %s277, 4
          %s279 = scalar_lea.vmem %s1, %s278
          %s280 = smul.u32 48, %s18
          %s281 = smul.u32 2, %s17
        $region50: #{cnn_model_forward.10} parent=19 // pred_fallthru
          _
      $region20: #{cnn_model_forward.10} parent=5 // pred_fallthru
        _
      %p282 = scmp.le.s32.totalorder 1, %s9
      %p283 = scmp.lt.s32.totalorder %s9, 4
      %p284 = pnand %p282, %p283
      %p285 = pneg %p284
      // Predicated region
      $region51: #{cnn_model_forward.10} parent=5 // pred_check
        _
      $region52: #{cnn_model_forward.10} parent=5 // pred_check_branch
        %287 = sbr.rel (%p284) target = $region54
      $region53: #{cnn_model_forward.10} parent=5 // pred_region
        %s288 = ssub.s32 %s9, 1
        %s289 = sand.u32 %s43, 1
        %s290 = sand.u32 %s43, 1
        %s291 = smul.addr %s290, 192
        %s292 = scalar_lea.vmem [#allocation3], %s291
        // Predicated region
        $region55: #{cnn_model_forward.10} parent=53 // pred_check
          %p293 = pneg %p56
        $region56: #{cnn_model_forward.10} parent=53 // pred_check_branch
          %295 = sbr.rel (%p293) target = $region58
        $region57: #{cnn_model_forward.10} parent=53 // pred_region
          _
        $region58: #{cnn_model_forward.10} parent=53 // pred_fallthru
          _
        %s296 = sand.u32 %s43, 1
        %s297 = sand.u32 %s43, 1
        %s298 = smul.addr %s297, 192
        %s299 = scalar_lea.vmem [#allocation3], %s298
        %p300 = pneg %p56
        %p301 = pneg %p53
        %s302 = smul.u32 48, %s21
        %s303 = smul.u32 2, %s20
        %p304 = scmp.lt.s32.totalorder %s302, 143
        %s305 = scalar_select %p304, %s302, 143
        %p306 = scmp.lt.s32.totalorder %s303, 1
        %s307 = scalar_select %p306, %s303, 1
        %s308 = smul.addr %s305, 2
        %s309 = sadd.s32 %s307, %s308
        %s310 = smul.addr %s309, 4
        %s311 = scalar_lea.vmem %s1, %s310
        %p312 = pneg %p84
        %p313 = pneg %p81
        %s314 = smul.u32 2, %s20
        %p315 = scmp.lt.s32.totalorder %s314, 1
        %s316 = scalar_select %p315, %s314, 1
        %s317 = scalar_lea.vmem %s2, %s316
        %p318 = pneg %p110
        %p319 = pneg %p107
        %p320 = pneg %p138
        %p321 = pneg %p135
        %s322 = smul.u32 16, %s19
        %s323 = smul.u32 2, %s20
        %p324 = scmp.lt.s32.totalorder %s322, 15
        %s325 = scalar_select %p324, %s322, 15
        %p326 = scmp.lt.s32.totalorder %s323, 1
        %s327 = scalar_select %p326, %s323, 1
        %s328 = smul.addr %s325, 2
        %s329 = sadd.s32 %s327, %s328
        %s330 = smul.addr %s329, 8
        %s331 = scalar_lea.vmem %s3, %s330
        %s332 = smul.u32 16, %s19
        %s333 = smul.u32 3, %s21
        %s334 = smul.u32 48, %s21
        %s335 = smul.u32 2, %s20
        %p336 = scmp.lt.s32.totalorder %s334, 143
        %s337 = scalar_select %p336, %s334, 143
        %p338 = scmp.lt.s32.totalorder %s335, 1
        %s339 = scalar_select %p338, %s335, 1
        %s340 = smul.addr %s337, 2
        %s341 = sadd.s32 %s339, %s340
        %s342 = smul.addr %s341, 4
        %s343 = scalar_lea.vmem %s1, %s342
        %s344 = smul.u32 48, %s21
        %s345 = smul.u32 2, %s20
        %s346 = smul.u32 2, %s20
        %p347 = scmp.lt.s32.totalorder %s346, 1
        %s348 = scalar_select %p347, %s346, 1
        %s349 = scalar_lea.vmem %s2, %s348
        %s350 = smul.u32 2, %s20
        %s351 = smul.u32 16, %s19
        %s352 = smul.u32 2, %s20
        %p353 = scmp.lt.s32.totalorder %s351, 15
        %s354 = scalar_select %p353, %s351, 15
        %p355 = scmp.lt.s32.totalorder %s352, 1
        %s356 = scalar_select %p355, %s352, 1
        %s357 = smul.addr %s354, 2
        %s358 = sadd.s32 %s356, %s357
        %s359 = smul.addr %s358, 8
        %s360 = scalar_lea.vmem %s3, %s359
        %s361 = smul.u32 16, %s19
        %s362 = smul.u32 2, %s20
        %p364 = scmp.eq.s32.totalorder %s21, 0
        // Predicated region
        $region59: #{cnn_model_forward.10} parent=53 // pred_check
          %p365 = pneg %p364
        $region60: #{cnn_model_forward.10} parent=53 // pred_check_branch
          %367 = sbr.rel (%p365) target = $region62
        $region61: #{cnn_model_forward.10} parent=53 // pred_region
          %368 = vst [vmem:[#allocation2] sm:$0xff] 0.0
          %369 = vst [vmem:[#allocation2 + $0x8] sm:$0xff] 0.0
          %370 = vst [vmem:[#allocation2 + $0x10] sm:$0xff] 0.0
          %371 = vst [vmem:[#allocation2 + $0x18] sm:$0xff] 0.0
          %372 = vst [vmem:[#allocation2 + $0x20] sm:$0xff] 0.0
          %373 = vst [vmem:[#allocation2 + $0x28] sm:$0xff] 0.0
          %374 = vst [vmem:[#allocation2 + $0x30] sm:$0xff] 0.0
          %375 = vst [vmem:[#allocation2 + $0x38] sm:$0xff] 0.0
          %376 = vst [vmem:[#allocation2 + $0x40] sm:$0xff] 0.0
          %377 = vst [vmem:[#allocation2 + $0x48] sm:$0xff] 0.0
          %378 = vst [vmem:[#allocation2 + $0x50] sm:$0xff] 0.0
          %379 = vst [vmem:[#allocation2 + $0x58] sm:$0xff] 0.0
          %380 = vst [vmem:[#allocation2 + $0x60] sm:$0xff] 0.0
          %381 = vst [vmem:[#allocation2 + $0x68] sm:$0xff] 0.0
          %382 = vst [vmem:[#allocation2 + $0x70] sm:$0xff] 0.0
          %383 = vst [vmem:[#allocation2 + $0x78] sm:$0xff] 0.0
          %384 = vst [vmem:[#allocation2 + $0x80] sm:$0xff] 0.0
          %385 = vst [vmem:[#allocation2 + $0x88] sm:$0xff] 0.0
          %386 = vst [vmem:[#allocation2 + $0x90] sm:$0xff] 0.0
          %387 = vst [vmem:[#allocation2 + $0x98] sm:$0xff] 0.0
          %388 = vst [vmem:[#allocation2 + $0xa0] sm:$0xff] 0.0
          %389 = vst [vmem:[#allocation2 + $0xa8] sm:$0xff] 0.0
          %390 = vst [vmem:[#allocation2 + $0xb0] sm:$0xff] 0.0
          %391 = vst [vmem:[#allocation2 + $0xb8] sm:$0xff] 0.0
          %392 = vst [vmem:[#allocation2 + $0xc0] sm:$0xff] 0.0
          %393 = vst [vmem:[#allocation2 + $0xc8] sm:$0xff] 0.0
          %394 = vst [vmem:[#allocation2 + $0xd0] sm:$0xff] 0.0
          %395 = vst [vmem:[#allocation2 + $0xd8] sm:$0xff] 0.0
          %396 = vst [vmem:[#allocation2 + $0xe0] sm:$0xff] 0.0
          %397 = vst [vmem:[#allocation2 + $0xe8] sm:$0xff] 0.0
          %398 = vst [vmem:[#allocation2 + $0xf0] sm:$0xff] 0.0
          %399 = vst [vmem:[#allocation2 + $0xf8] sm:$0xff] 0.0
        $region62: #{cnn_model_forward.10} parent=53 // pred_fallthru
          _
        %v400 = vld [vmem:[#allocation2] sm:$0xff]
        %v401 = vld [vmem:[#allocation2 + $0x8] sm:$0xff]
        %v402 = vld [vmem:[#allocation2 + $0x10] sm:$0xff]
        %v403 = vld [vmem:[#allocation2 + $0x18] sm:$0xff]
        %v404 = vld [vmem:[#allocation2 + $0x20] sm:$0xff]
        %v405 = vld [vmem:[#allocation2 + $0x28] sm:$0xff]
        %v406 = vld [vmem:[#allocation2 + $0x30] sm:$0xff]
        %v407 = vld [vmem:[#allocation2 + $0x38] sm:$0xff]
        %v408 = vld [vmem:[#allocation2 + $0x40] sm:$0xff]
        %v409 = vld [vmem:[#allocation2 + $0x48] sm:$0xff]
        %v410 = vld [vmem:[#allocation2 + $0x50] sm:$0xff]
        %v411 = vld [vmem:[#allocation2 + $0x58] sm:$0xff]
        %v412 = vld [vmem:[#allocation2 + $0x60] sm:$0xff]
        %v413 = vld [vmem:[#allocation2 + $0x68] sm:$0xff]
        %v414 = vld [vmem:[#allocation2 + $0x70] sm:$0xff]
        %v415 = vld [vmem:[#allocation2 + $0x78] sm:$0xff]
        %v416 = vld [vmem:[#allocation2 + $0x80] sm:$0xff]
        %v417 = vld [vmem:[#allocation2 + $0x88] sm:$0xff]
        %v418 = vld [vmem:[#allocation2 + $0x90] sm:$0xff]
        %v419 = vld [vmem:[#allocation2 + $0x98] sm:$0xff]
        %v420 = vld [vmem:[#allocation2 + $0xa0] sm:$0xff]
        %v421 = vld [vmem:[#allocation2 + $0xa8] sm:$0xff]
        %v422 = vld [vmem:[#allocation2 + $0xb0] sm:$0xff]
        %v423 = vld [vmem:[#allocation2 + $0xb8] sm:$0xff]
        %v424 = vld [vmem:[#allocation2 + $0xc0] sm:$0xff]
        %v425 = vld [vmem:[#allocation2 + $0xc8] sm:$0xff]
        %v426 = vld [vmem:[#allocation2 + $0xd0] sm:$0xff]
        %v427 = vld [vmem:[#allocation2 + $0xd8] sm:$0xff]
        %v428 = vld [vmem:[#allocation2 + $0xe0] sm:$0xff]
        %v429 = vld [vmem:[#allocation2 + $0xe8] sm:$0xff]
        %v430 = vld [vmem:[#allocation2 + $0xf0] sm:$0xff]
        %v431 = vld [vmem:[#allocation2 + $0xf8] sm:$0xff]
        %v432 = vld [vmem:[%s292] sm:$0xff]
        %v433 = vld [vmem:[%s292 + $0x8] sm:$0xf]
        %v434 = vld [vmem:[%s292 + $0xc] sm:$0xff]
        %v435 = vld [vmem:[%s292 + $0x14] sm:$0xf]
        %v436 = vld [vmem:[%s292 + $0x18] sm:$0xff]
        %v437 = vld [vmem:[%s292 + $0x20] sm:$0xf]
        %v438 = vld [vmem:[%s292 + $0x24] sm:$0xff]
        %v439 = vld [vmem:[%s292 + $0x2c] sm:$0xf]
        %v440 = vld [vmem:[%s292 + $0x30] sm:$0xff]
        %v441 = vld [vmem:[%s292 + $0x38] sm:$0xf]
        %v442 = vld [vmem:[%s292 + $0x3c] sm:$0xff]
        %v443 = vld [vmem:[%s292 + $0x44] sm:$0xf]
        %v444 = vld [vmem:[%s292 + $0x48] sm:$0xff]
        %v445 = vld [vmem:[%s292 + $0x50] sm:$0xf]
        %v446 = vld [vmem:[%s292 + $0x54] sm:$0xff]
        %v447 = vld [vmem:[%s292 + $0x5c] sm:$0xf]
        %v448 = vld [vmem:[%s292 + $0x60] sm:$0xff]
        %v449 = vld [vmem:[%s292 + $0x68] sm:$0xf]
        %v450 = vld [vmem:[%s292 + $0x6c] sm:$0xff]
        %v451 = vld [vmem:[%s292 + $0x74] sm:$0xf]
        %v452 = vld [vmem:[%s292 + $0x78] sm:$0xff]
        %v453 = vld [vmem:[%s292 + $0x80] sm:$0xf]
        %v454 = vld [vmem:[%s292 + $0x84] sm:$0xff]
        %v455 = vld [vmem:[%s292 + $0x8c] sm:$0xf]
        %v456 = vld [vmem:[%s292 + $0x90] sm:$0xff]
        %v457 = vld [vmem:[%s292 + $0x98] sm:$0xf]
        %v458 = vld [vmem:[%s292 + $0x9c] sm:$0xff]
        %v459 = vld [vmem:[%s292 + $0xa4] sm:$0xf]
        %v460 = vld [vmem:[%s292 + $0xa8] sm:$0xff]
        %v461 = vld [vmem:[%s292 + $0xb0] sm:$0xf]
        %v462 = vld [vmem:[%s292 + $0xb4] sm:$0xff]
        %v463 = vld [vmem:[%s292 + $0xbc] sm:$0xf]
        %v464 = vld [vmem:[%s343] sm:$0xff]
        %v465 = vld [vmem:[%s343 + $0x8] sm:$0xff]
        %v466 = vld [vmem:[%s343 + $0x10] sm:$0xff]
        %v467 = vld [vmem:[%s343 + $0x18] sm:$0xff]
        %v468 = vld [vmem:[%s343 + $0x20] sm:$0xff]
        %v469 = vld [vmem:[%s343 + $0x28] sm:$0xff]
        %v470 = vld [vmem:[%s343 + $0x30] sm:$0xff]
        %v471 = vld [vmem:[%s343 + $0x38] sm:$0xff]
        %v472 = vld [vmem:[%s343 + $0x40] sm:$0xff]
        %v473 = vld [vmem:[%s343 + $0x48] sm:$0xff]
        %v474 = vld [vmem:[%s343 + $0x50] sm:$0xff]
        %v475 = vld [vmem:[%s343 + $0x58] sm:$0xff]
        %v476 = vld [vmem:[%s343 + $0x60] sm:$0xff]
        %v477 = vld [vmem:[%s343 + $0x68] sm:$0xff]
        %v478 = vld [vmem:[%s343 + $0x70] sm:$0xff]
        %v479 = vld [vmem:[%s343 + $0x78] sm:$0xff]
        %v480 = vld [vmem:[%s343 + $0x80] sm:$0xff]
        %v481 = vld [vmem:[%s343 + $0x88] sm:$0xff]
        %v482 = vld [vmem:[%s343 + $0x90] sm:$0xff]
        %v483 = vld [vmem:[%s343 + $0x98] sm:$0xff]
        %v484 = vld [vmem:[%s343 + $0xa0] sm:$0xff]
        %v485 = vld [vmem:[%s343 + $0xa8] sm:$0xff]
        %v486 = vld [vmem:[%s343 + $0xb0] sm:$0xff]
        %v487 = vld [vmem:[%s343 + $0xb8] sm:$0xff]
        %v488 = vld [vmem:[%s343 + $0xc0] sm:$0xff]
        %v489 = vld [vmem:[%s343 + $0xc8] sm:$0xff]
        %v490 = vld [vmem:[%s343 + $0xd0] sm:$0xff]
        %v491 = vld [vmem:[%s343 + $0xd8] sm:$0xff]
        %v492 = vld [vmem:[%s343 + $0xe0] sm:$0xff]
        %v493 = vld [vmem:[%s343 + $0xe8] sm:$0xff]
        %v494 = vld [vmem:[%s343 + $0xf0] sm:$0xff]
        %v495 = vld [vmem:[%s343 + $0xf8] sm:$0xff]
        %v496 = vld [vmem:[%s343 + $0x100] sm:$0xff]
        %v497 = vld [vmem:[%s343 + $0x108] sm:$0xff]
        %v498 = vld [vmem:[%s343 + $0x110] sm:$0xff]
        %v499 = vld [vmem:[%s343 + $0x118] sm:$0xff]
        %v500 = vld [vmem:[%s343 + $0x120] sm:$0xff]
        %v501 = vld [vmem:[%s343 + $0x128] sm:$0xff]
        %v502 = vld [vmem:[%s343 + $0x130] sm:$0xff]
        %v503 = vld [vmem:[%s343 + $0x138] sm:$0xff]
        %v504 = vld [vmem:[%s343 + $0x140] sm:$0xff]
        %v505 = vld [vmem:[%s343 + $0x148] sm:$0xff]
        %v506 = vld [vmem:[%s343 + $0x150] sm:$0xff]
        %v507 = vld [vmem:[%s343 + $0x158] sm:$0xff]
        %v508 = vld [vmem:[%s343 + $0x160] sm:$0xff]
        %v509 = vld [vmem:[%s343 + $0x168] sm:$0xff]
        %v510 = vld [vmem:[%s343 + $0x170] sm:$0xff]
        %v511 = vld [vmem:[%s343 + $0x178] sm:$0xff]
        %v544 = vunpack.c.l.b16 %v432
        %v545 = vunpack.c.h.b16 %v432
        %v546 = vunpack.c.l.b16 %v433
        %v547 = vunpack.c.l.b16 %v434
        %v548 = vunpack.c.h.b16 %v434
        %v549 = vunpack.c.l.b16 %v435
        %v550 = vunpack.c.l.b16 %v436
        %v551 = vunpack.c.h.b16 %v436
        %v552 = vunpack.c.l.b16 %v437
        %v553 = vunpack.c.l.b16 %v438
        %v554 = vunpack.c.h.b16 %v438
        %v555 = vunpack.c.l.b16 %v439
        %v556 = vunpack.c.l.b16 %v440
        %v557 = vunpack.c.h.b16 %v440
        %v558 = vunpack.c.l.b16 %v441
        %v559 = vunpack.c.l.b16 %v442
        %v560 = vunpack.c.h.b16 %v442
        %v561 = vunpack.c.l.b16 %v443
        %v562 = vunpack.c.l.b16 %v444
        %v563 = vunpack.c.h.b16 %v444
        %v564 = vunpack.c.l.b16 %v445
        %v565 = vunpack.c.l.b16 %v446
        %v566 = vunpack.c.h.b16 %v446
        %v567 = vunpack.c.l.b16 %v447
        %v568 = vunpack.c.l.b16 %v448
        %v569 = vunpack.c.h.b16 %v448
        %v570 = vunpack.c.l.b16 %v449
        %v571 = vunpack.c.l.b16 %v450
        %v572 = vunpack.c.h.b16 %v450
        %v573 = vunpack.c.l.b16 %v451
        %v574 = vunpack.c.l.b16 %v452
        %v575 = vunpack.c.h.b16 %v452
        %v576 = vunpack.c.l.b16 %v453
        %v577 = vunpack.c.l.b16 %v454
        %v578 = vunpack.c.h.b16 %v454
        %v579 = vunpack.c.l.b16 %v455
        %v580 = vunpack.c.l.b16 %v456
        %v581 = vunpack.c.h.b16 %v456
        %v582 = vunpack.c.l.b16 %v457
        %v583 = vunpack.c.l.b16 %v458
        %v584 = vunpack.c.h.b16 %v458
        %v585 = vunpack.c.l.b16 %v459
        %v586 = vunpack.c.l.b16 %v460
        %v587 = vunpack.c.h.b16 %v460
        %v588 = vunpack.c.l.b16 %v461
        %v589 = vunpack.c.l.b16 %v462
        %v590 = vunpack.c.h.b16 %v462
        %v591 = vunpack.c.l.b16 %v463
        %v592 = vpack.c.b16 %v547, %v544
        %v593 = vpack.c.b16 %v548, %v545
        %v594 = vpack.c.b16 %v549, %v546
        %v595 = vpack.c.b16 %v553, %v550
        %v596 = vpack.c.b16 %v554, %v551
        %v597 = vpack.c.b16 %v555, %v552
        %v598 = vpack.c.b16 %v559, %v556
        %v599 = vpack.c.b16 %v560, %v557
        %v600 = vpack.c.b16 %v561, %v558
        %v601 = vpack.c.b16 %v565, %v562
        %v602 = vpack.c.b16 %v566, %v563
        %v603 = vpack.c.b16 %v567, %v564
        %v604 = vpack.c.b16 %v571, %v568
        %v605 = vpack.c.b16 %v572, %v569
        %v606 = vpack.c.b16 %v573, %v570
        %v607 = vpack.c.b16 %v577, %v574
        %v608 = vpack.c.b16 %v578, %v575
        %v609 = vpack.c.b16 %v579, %v576
        %v610 = vpack.c.b16 %v583, %v580
        %v611 = vpack.c.b16 %v584, %v581
        %v612 = vpack.c.b16 %v585, %v582
        %v613 = vpack.c.b16 %v589, %v586
        %v614 = vpack.c.b16 %v590, %v587
        %v615 = vpack.c.b16 %v591, %v588
        %v688 = vunpack.c.l.b16 %v464
        %v689 = vunpack.c.h.b16 %v464
        %v690 = vunpack.c.l.b16 %v465
        %v691 = vunpack.c.h.b16 %v465
        %v692 = vunpack.c.l.b16 %v466
        %v693 = vunpack.c.h.b16 %v466
        %v694 = vunpack.c.l.b16 %v467
        %v695 = vunpack.c.h.b16 %v467
        %v696 = vunpack.c.l.b16 %v468
        %v697 = vunpack.c.h.b16 %v468
        %v698 = vunpack.c.l.b16 %v469
        %v699 = vunpack.c.h.b16 %v469
        %v700 = vunpack.c.l.b16 %v470
        %v701 = vunpack.c.h.b16 %v470
        %v702 = vunpack.c.l.b16 %v471
        %v703 = vunpack.c.h.b16 %v471
        %v704 = vunpack.c.l.b16 %v472
        %v705 = vunpack.c.h.b16 %v472
        %v706 = vunpack.c.l.b16 %v473
        %v707 = vunpack.c.h.b16 %v473
        %v708 = vunpack.c.l.b16 %v474
        %v709 = vunpack.c.h.b16 %v474
        %v710 = vunpack.c.l.b16 %v475
        %v711 = vunpack.c.h.b16 %v475
        %v712 = vunpack.c.l.b16 %v476
        %v713 = vunpack.c.h.b16 %v476
        %v714 = vunpack.c.l.b16 %v477
        %v715 = vunpack.c.h.b16 %v477
        %v716 = vunpack.c.l.b16 %v478
        %v717 = vunpack.c.h.b16 %v478
        %v718 = vunpack.c.l.b16 %v479
        %v719 = vunpack.c.h.b16 %v479
        %v720 = vunpack.c.l.b16 %v480
        %v721 = vunpack.c.h.b16 %v480
        %v722 = vunpack.c.l.b16 %v481
        %v723 = vunpack.c.h.b16 %v481
        %v724 = vunpack.c.l.b16 %v482
        %v725 = vunpack.c.h.b16 %v482
        %v726 = vunpack.c.l.b16 %v483
        %v727 = vunpack.c.h.b16 %v483
        %v728 = vunpack.c.l.b16 %v484
        %v729 = vunpack.c.h.b16 %v484
        %v730 = vunpack.c.l.b16 %v485
        %v731 = vunpack.c.h.b16 %v485
        %v732 = vunpack.c.l.b16 %v486
        %v733 = vunpack.c.h.b16 %v486
        %v734 = vunpack.c.l.b16 %v487
        %v735 = vunpack.c.h.b16 %v487
        %v736 = vunpack.c.l.b16 %v488
        %v737 = vunpack.c.h.b16 %v488
        %v738 = vunpack.c.l.b16 %v489
        %v739 = vunpack.c.h.b16 %v489
        %v740 = vunpack.c.l.b16 %v490
        %v741 = vunpack.c.h.b16 %v490
        %v742 = vunpack.c.l.b16 %v491
        %v743 = vunpack.c.h.b16 %v491
        %v744 = vunpack.c.l.b16 %v492
        %v745 = vunpack.c.h.b16 %v492
        %v746 = vunpack.c.l.b16 %v493
        %v747 = vunpack.c.h.b16 %v493
        %v748 = vunpack.c.l.b16 %v494
        %v749 = vunpack.c.h.b16 %v494
        %v750 = vunpack.c.l.b16 %v495
        %v751 = vunpack.c.h.b16 %v495
        %v752 = vunpack.c.l.b16 %v496
        %v753 = vunpack.c.h.b16 %v496
        %v754 = vunpack.c.l.b16 %v497
        %v755 = vunpack.c.h.b16 %v497
        %v756 = vunpack.c.l.b16 %v498
        %v757 = vunpack.c.h.b16 %v498
        %v758 = vunpack.c.l.b16 %v499
        %v759 = vunpack.c.h.b16 %v499
        %v760 = vunpack.c.l.b16 %v500
        %v761 = vunpack.c.h.b16 %v500
        %v762 = vunpack.c.l.b16 %v501
        %v763 = vunpack.c.h.b16 %v501
        %v764 = vunpack.c.l.b16 %v502
        %v765 = vunpack.c.h.b16 %v502
        %v766 = vunpack.c.l.b16 %v503
        %v767 = vunpack.c.h.b16 %v503
        %v768 = vunpack.c.l.b16 %v504
        %v769 = vunpack.c.h.b16 %v504
        %v770 = vunpack.c.l.b16 %v505
        %v771 = vunpack.c.h.b16 %v505
        %v772 = vunpack.c.l.b16 %v506
        %v773 = vunpack.c.h.b16 %v506
        %v774 = vunpack.c.l.b16 %v507
        %v775 = vunpack.c.h.b16 %v507
        %v776 = vunpack.c.l.b16 %v508
        %v777 = vunpack.c.h.b16 %v508
        %v778 = vunpack.c.l.b16 %v509
        %v779 = vunpack.c.h.b16 %v509
        %v780 = vunpack.c.l.b16 %v510
        %v781 = vunpack.c.h.b16 %v510
        %v782 = vunpack.c.l.b16 %v511
        %v783 = vunpack.c.h.b16 %v511
        %v784 = vpack.c.b16 %v690, %v688
        %v785 = vpack.c.b16 %v691, %v689
        %v786 = vpack.c.b16 %v694, %v692
        %v787 = vpack.c.b16 %v695, %v693
        %v788 = vpack.c.b16 %v698, %v696
        %v789 = vpack.c.b16 %v699, %v697
        %v790 = vpack.c.b16 %v702, %v700
        %v791 = vpack.c.b16 %v703, %v701
        %v792 = vpack.c.b16 %v706, %v704
        %v793 = vpack.c.b16 %v707, %v705
        %v794 = vpack.c.b16 %v710, %v708
        %v795 = vpack.c.b16 %v711, %v709
        %v796 = vpack.c.b16 %v714, %v712
        %v797 = vpack.c.b16 %v715, %v713
        %v798 = vpack.c.b16 %v718, %v716
        %v799 = vpack.c.b16 %v719, %v717
        %v800 = vpack.c.b16 %v722, %v720
        %v801 = vpack.c.b16 %v723, %v721
        %v802 = vpack.c.b16 %v726, %v724
        %v803 = vpack.c.b16 %v727, %v725
        %v804 = vpack.c.b16 %v730, %v728
        %v805 = vpack.c.b16 %v731, %v729
        %v806 = vpack.c.b16 %v734, %v732
        %v807 = vpack.c.b16 %v735, %v733
        %v808 = vpack.c.b16 %v738, %v736
        %v809 = vpack.c.b16 %v739, %v737
        %v810 = vpack.c.b16 %v742, %v740
        %v811 = vpack.c.b16 %v743, %v741
        %v812 = vpack.c.b16 %v746, %v744
        %v813 = vpack.c.b16 %v747, %v745
        %v814 = vpack.c.b16 %v750, %v748
        %v815 = vpack.c.b16 %v751, %v749
        %v816 = vpack.c.b16 %v754, %v752
        %v817 = vpack.c.b16 %v755, %v753
        %v818 = vpack.c.b16 %v758, %v756
        %v819 = vpack.c.b16 %v759, %v757
        %v820 = vpack.c.b16 %v762, %v760
        %v821 = vpack.c.b16 %v763, %v761
        %v822 = vpack.c.b16 %v766, %v764
        %v823 = vpack.c.b16 %v767, %v765
        %v824 = vpack.c.b16 %v770, %v768
        %v825 = vpack.c.b16 %v771, %v769
        %v826 = vpack.c.b16 %v774, %v772
        %v827 = vpack.c.b16 %v775, %v773
        %v828 = vpack.c.b16 %v778, %v776
        %v829 = vpack.c.b16 %v779, %v777
        %v830 = vpack.c.b16 %v782, %v780
        %v831 = vpack.c.b16 %v783, %v781
        %880 = vmatprep.subr.bf16.mxu0 %v799
        %881 = vmatpush1.bf16.msra.mxu0 %v798
        %882 = vmatprep.subr.bf16.mxu0 %v797
        %883 = vmatpush1.bf16.msra.mxu0 %v796
        %884 = vmatprep.subr.bf16.mxu0 %v795
        %885 = vmatpush1.bf16.msra.mxu0 %v794
        %886 = vmatprep.subr.bf16.mxu0 %v793
        %887 = vmatpush1.bf16.msra.mxu0 %v792
        %888 = vmatprep.subr.bf16.mxu0 %v791
        %889 = vmatpush1.bf16.msra.mxu0 %v790
        %890 = vmatprep.subr.bf16.mxu0 %v789
        %891 = vmatpush1.bf16.msra.mxu0 %v788
        %892 = vmatprep.subr.bf16.mxu0 %v787
        %893 = vmatpush1.bf16.msra.mxu0 %v786
        %894 = vmatprep.subr.bf16.mxu0 %v785
        %895 = vmatpush1.bf16.msra.mxu0 %v784
        %896 = vmatprep.subr.bf16.mxu0 %v815
        %897 = vmatpush2.bf16.msra.mxu0 %v814
        %898 = vmatprep.subr.bf16.mxu0 %v813
        %899 = vmatpush2.bf16.msra.mxu0 %v812
        %900 = vmatprep.subr.bf16.mxu0 %v811
        %901 = vmatpush2.bf16.msra.mxu0 %v810
        %902 = vmatprep.subr.bf16.mxu0 %v809
        %903 = vmatpush2.bf16.msra.mxu0 %v808
        %904 = vmatprep.subr.bf16.mxu0 %v807
        %905 = vmatpush2.bf16.msra.mxu0 %v806
        %906 = vmatprep.subr.bf16.mxu0 %v805
        %907 = vmatpush2.bf16.msra.mxu0 %v804
        %908 = vmatprep.subr.bf16.mxu0 %v803
        %909 = vmatpush2.bf16.msra.mxu0 %v802
        %910 = vmatprep.subr.bf16.mxu0 %v801
        %911 = vmatpush2.bf16.msra.mxu0 %v800
        %912 = vmatprep.mubr.bf16.mxu0 %v593
        %913 = vmatmul.mubr.bf16.gmra.mxu0 %v592
        %v914 = vpop.f32.mrf.mxu0
        %v915 = vadd.f32 0.0, %v914
        %v916 = vpop.f32.mrf.mxu0
        %v917 = vadd.f32 0.0, %v916
        %v918 = vpop.f32.mrf.mxu0
        %v919 = vadd.f32 0.0, %v918
        %v920 = vpop.f32.mrf.mxu0
        %v921 = vadd.f32 0.0, %v920
        %922 = vmatprep.mubr.bf16.mxu0 %v596
        %923 = vmatmul.mubr.bf16.gmra.mxu0 %v595
        %v924 = vpop.f32.mrf.mxu0
        %v925 = vadd.f32 0.0, %v924
        %v926 = vpop.f32.mrf.mxu0
        %v927 = vadd.f32 0.0, %v926
        %v928 = vpop.f32.mrf.mxu0
        %v929 = vadd.f32 0.0, %v928
        %v930 = vpop.f32.mrf.mxu0
        %v931 = vadd.f32 0.0, %v930
        %932 = vmatprep.mubr.bf16.mxu0 %v599
        %933 = vmatmul.mubr.bf16.gmra.mxu0 %v598
        %v934 = vpop.f32.mrf.mxu0
        %v935 = vadd.f32 0.0, %v934
        %v936 = vpop.f32.mrf.mxu0
        %v937 = vadd.f32 0.0, %v936
        %v938 = vpop.f32.mrf.mxu0
        %v939 = vadd.f32 0.0, %v938
        %v940 = vpop.f32.mrf.mxu0
        %v941 = vadd.f32 0.0, %v940
        %942 = vmatprep.mubr.bf16.mxu0 %v602
        %943 = vmatmul.mubr.bf16.gmra.mxu0 %v601
        %v944 = vpop.f32.mrf.mxu0
        %v945 = vadd.f32 0.0, %v944
        %v946 = vpop.f32.mrf.mxu0
        %v947 = vadd.f32 0.0, %v946
        %v948 = vpop.f32.mrf.mxu0
        %v949 = vadd.f32 0.0, %v948
        %v950 = vpop.f32.mrf.mxu0
        %v951 = vadd.f32 0.0, %v950
        %952 = vmatprep.mubr.bf16.mxu0 %v605
        %953 = vmatmul.mubr.bf16.gmra.mxu0 %v604
        %v954 = vpop.f32.mrf.mxu0
        %v955 = vadd.f32 0.0, %v954
        %v956 = vpop.f32.mrf.mxu0
        %v957 = vadd.f32 0.0, %v956
        %v958 = vpop.f32.mrf.mxu0
        %v959 = vadd.f32 0.0, %v958
        %v960 = vpop.f32.mrf.mxu0
        %v961 = vadd.f32 0.0, %v960
        %962 = vmatprep.mubr.bf16.mxu0 %v608
        %963 = vmatmul.mubr.bf16.gmra.mxu0 %v607
        %v964 = vpop.f32.mrf.mxu0
        %v965 = vadd.f32 0.0, %v964
        %v966 = vpop.f32.mrf.mxu0
        %v967 = vadd.f32 0.0, %v966
        %v968 = vpop.f32.mrf.mxu0
        %v969 = vadd.f32 0.0, %v968
        %v970 = vpop.f32.mrf.mxu0
        %v971 = vadd.f32 0.0, %v970
        %972 = vmatprep.mubr.bf16.mxu0 %v611
        %973 = vmatmul.mubr.bf16.gmra.mxu0 %v610
        %v974 = vpop.f32.mrf.mxu0
        %v975 = vadd.f32 0.0, %v974
        %v976 = vpop.f32.mrf.mxu0
        %v977 = vadd.f32 0.0, %v976
        %v978 = vpop.f32.mrf.mxu0
        %v979 = vadd.f32 0.0, %v978
        %v980 = vpop.f32.mrf.mxu0
        %v981 = vadd.f32 0.0, %v980
        %982 = vmatprep.mubr.bf16.mxu0 %v614
        %983 = vmatmul.mubr.bf16.gmra.mxu0 %v613
        %v984 = vpop.f32.mrf.mxu0
        %v985 = vadd.f32 0.0, %v984
        %v986 = vpop.f32.mrf.mxu0
        %v987 = vadd.f32 0.0, %v986
        %v988 = vpop.f32.mrf.mxu0
        %v989 = vadd.f32 0.0, %v988
        %v990 = vpop.f32.mrf.mxu0
        %v991 = vadd.f32 0.0, %v990
        %992 = vdwg.mxu0
        %993 = vmatprep.subr.bf16.mxu0 %v831
        %994 = vmatpush1.bf16.msra.mxu0 %v830
        %995 = vmatprep.subr.bf16.mxu0 %v829
        %996 = vmatpush1.bf16.msra.mxu0 %v828
        %997 = vmatprep.subr.bf16.mxu0 %v827
        %998 = vmatpush1.bf16.msra.mxu0 %v826
        %999 = vmatprep.subr.bf16.mxu0 %v825
        %1000 = vmatpush1.bf16.msra.mxu0 %v824
        %1001 = vmatprep.subr.bf16.mxu0 %v823
        %1002 = vmatpush1.bf16.msra.mxu0 %v822
        %1003 = vmatprep.subr.bf16.mxu0 %v821
        %1004 = vmatpush1.bf16.msra.mxu0 %v820
        %1005 = vmatprep.subr.bf16.mxu0 %v819
        %1006 = vmatpush1.bf16.msra.mxu0 %v818
        %1007 = vmatprep.subr.bf16.mxu0 %v817
        %1008 = vmatpush1.bf16.msra.mxu0 %v816
        %1009 = vmatprep.subr.bf16.mxu0 0
        %1010 = vmatpush2.bf16.msra.mxu0 0
        %1011 = vmatprep.subr.bf16.mxu0 0
        %1012 = vmatpush2.bf16.msra.mxu0 0
        %1013 = vmatprep.subr.bf16.mxu0 0
        %1014 = vmatpush2.bf16.msra.mxu0 0
        %1015 = vmatprep.subr.bf16.mxu0 0
        %1016 = vmatpush2.bf16.msra.mxu0 0
        %1017 = vmatprep.subr.bf16.mxu0 0
        %1018 = vmatpush2.bf16.msra.mxu0 0
        %1019 = vmatprep.subr.bf16.mxu0 0
        %1020 = vmatpush2.bf16.msra.mxu0 0
        %1021 = vmatprep.subr.bf16.mxu0 0
        %1022 = vmatpush2.bf16.msra.mxu0 0
        %1023 = vmatprep.subr.bf16.mxu0 0
        %1024 = vmatpush2.bf16.msra.mxu0 0
        %1025 = vmatprep.mubr.bf16.mxu0 0
        %1026 = vmatmul.mubr.bf16.gmra.mxu0 %v594
        %v1027 = vpop.f32.mrf.mxu0
        %v1028 = vadd.f32 %v915, %v1027
        %v1029 = vpop.f32.mrf.mxu0
        %v1030 = vadd.f32 %v917, %v1029
        %v1031 = vpop.f32.mrf.mxu0
        %v1032 = vadd.f32 %v919, %v1031
        %v1033 = vpop.f32.mrf.mxu0
        %v1034 = vadd.f32 %v921, %v1033
        %1035 = vmatprep.mubr.bf16.mxu0 0
        %1036 = vmatmul.mubr.bf16.gmra.mxu0 %v597
        %v1037 = vpop.f32.mrf.mxu0
        %v1038 = vadd.f32 %v925, %v1037
        %v1039 = vpop.f32.mrf.mxu0
        %v1040 = vadd.f32 %v927, %v1039
        %v1041 = vpop.f32.mrf.mxu0
        %v1042 = vadd.f32 %v929, %v1041
        %v1043 = vpop.f32.mrf.mxu0
        %v1044 = vadd.f32 %v931, %v1043
        %1045 = vmatprep.mubr.bf16.mxu0 0
        %1046 = vmatmul.mubr.bf16.gmra.mxu0 %v600
        %v1047 = vpop.f32.mrf.mxu0
        %v1048 = vadd.f32 %v935, %v1047
        %v1049 = vpop.f32.mrf.mxu0
        %v1050 = vadd.f32 %v937, %v1049
        %v1051 = vpop.f32.mrf.mxu0
        %v1052 = vadd.f32 %v939, %v1051
        %v1053 = vpop.f32.mrf.mxu0
        %v1054 = vadd.f32 %v941, %v1053
        %1055 = vmatprep.mubr.bf16.mxu0 0
        %1056 = vmatmul.mubr.bf16.gmra.mxu0 %v603
        %v1057 = vpop.f32.mrf.mxu0
        %v1058 = vadd.f32 %v945, %v1057
        %v1059 = vpop.f32.mrf.mxu0
        %v1060 = vadd.f32 %v947, %v1059
        %v1061 = vpop.f32.mrf.mxu0
        %v1062 = vadd.f32 %v949, %v1061
        %v1063 = vpop.f32.mrf.mxu0
        %v1064 = vadd.f32 %v951, %v1063
        %1065 = vmatprep.mubr.bf16.mxu0 0
        %1066 = vmatmul.mubr.bf16.gmra.mxu0 %v606
        %v1067 = vpop.f32.mrf.mxu0
        %v1068 = vadd.f32 %v955, %v1067
        %v1069 = vpop.f32.mrf.mxu0
        %v1070 = vadd.f32 %v957, %v1069
        %v1071 = vpop.f32.mrf.mxu0
        %v1072 = vadd.f32 %v959, %v1071
        %v1073 = vpop.f32.mrf.mxu0
        %v1074 = vadd.f32 %v961, %v1073
        %1075 = vmatprep.mubr.bf16.mxu0 0
        %1076 = vmatmul.mubr.bf16.gmra.mxu0 %v609
        %v1077 = vpop.f32.mrf.mxu0
        %v1078 = vadd.f32 %v965, %v1077
        %v1079 = vpop.f32.mrf.mxu0
        %v1080 = vadd.f32 %v967, %v1079
        %v1081 = vpop.f32.mrf.mxu0
        %v1082 = vadd.f32 %v969, %v1081
        %v1083 = vpop.f32.mrf.mxu0
        %v1084 = vadd.f32 %v971, %v1083
        %1085 = vmatprep.mubr.bf16.mxu0 0
        %1086 = vmatmul.mubr.bf16.gmra.mxu0 %v612
        %v1087 = vpop.f32.mrf.mxu0
        %v1088 = vadd.f32 %v975, %v1087
        %v1089 = vpop.f32.mrf.mxu0
        %v1090 = vadd.f32 %v977, %v1089
        %v1091 = vpop.f32.mrf.mxu0
        %v1092 = vadd.f32 %v979, %v1091
        %v1093 = vpop.f32.mrf.mxu0
        %v1094 = vadd.f32 %v981, %v1093
        %1095 = vmatprep.mubr.bf16.mxu0 0
        %1096 = vmatmul.mubr.bf16.gmra.mxu0 %v615
        %v1097 = vpop.f32.mrf.mxu0
        %v1098 = vadd.f32 %v985, %v1097
        %v1099 = vpop.f32.mrf.mxu0
        %v1100 = vadd.f32 %v987, %v1099
        %v1101 = vpop.f32.mrf.mxu0
        %v1102 = vadd.f32 %v989, %v1101
        %v1103 = vpop.f32.mrf.mxu0
        %v1104 = vadd.f32 %v991, %v1103
        %1105 = vdwg.mxu0
        %v1106 = vadd.f32 %v400, %v1028
        %v1107 = vadd.f32 %v401, %v1030
        %v1108 = vadd.f32 %v402, %v1032
        %v1109 = vadd.f32 %v403, %v1034
        %v1110 = vadd.f32 %v404, %v1038
        %v1111 = vadd.f32 %v405, %v1040
        %v1112 = vadd.f32 %v406, %v1042
        %v1113 = vadd.f32 %v407, %v1044
        %v1114 = vadd.f32 %v408, %v1048
        %v1115 = vadd.f32 %v409, %v1050
        %v1116 = vadd.f32 %v410, %v1052
        %v1117 = vadd.f32 %v411, %v1054
        %v1118 = vadd.f32 %v412, %v1058
        %v1119 = vadd.f32 %v413, %v1060
        %v1120 = vadd.f32 %v414, %v1062
        %v1121 = vadd.f32 %v415, %v1064
        %v1122 = vadd.f32 %v416, %v1068
        %v1123 = vadd.f32 %v417, %v1070
        %v1124 = vadd.f32 %v418, %v1072
        %v1125 = vadd.f32 %v419, %v1074
        %v1126 = vadd.f32 %v420, %v1078
        %v1127 = vadd.f32 %v421, %v1080
        %v1128 = vadd.f32 %v422, %v1082
        %v1129 = vadd.f32 %v423, %v1084
        %v1130 = vadd.f32 %v424, %v1088
        %v1131 = vadd.f32 %v425, %v1090
        %v1132 = vadd.f32 %v426, %v1092
        %v1133 = vadd.f32 %v427, %v1094
        %v1134 = vadd.f32 %v428, %v1098
        %v1135 = vadd.f32 %v429, %v1100
        %v1136 = vadd.f32 %v430, %v1102
        %v1137 = vadd.f32 %v431, %v1104
        %1138 = vst [vmem:[#allocation2] sm:$0xff] %v1106
        %1139 = vst [vmem:[#allocation2 + $0x8] sm:$0xff] %v1107
        %1140 = vst [vmem:[#allocation2 + $0x10] sm:$0xff] %v1108
        %1141 = vst [vmem:[#allocation2 + $0x18] sm:$0xff] %v1109
        %1142 = vst [vmem:[#allocation2 + $0x20] sm:$0xff] %v1110
        %1143 = vst [vmem:[#allocation2 + $0x28] sm:$0xff] %v1111
        %1144 = vst [vmem:[#allocation2 + $0x30] sm:$0xff] %v1112
        %1145 = vst [vmem:[#allocation2 + $0x38] sm:$0xff] %v1113
        %1146 = vst [vmem:[#allocation2 + $0x40] sm:$0xff] %v1114
        %1147 = vst [vmem:[#allocation2 + $0x48] sm:$0xff] %v1115
        %1148 = vst [vmem:[#allocation2 + $0x50] sm:$0xff] %v1116
        %1149 = vst [vmem:[#allocation2 + $0x58] sm:$0xff] %v1117
        %1150 = vst [vmem:[#allocation2 + $0x60] sm:$0xff] %v1118
        %1151 = vst [vmem:[#allocation2 + $0x68] sm:$0xff] %v1119
        %1152 = vst [vmem:[#allocation2 + $0x70] sm:$0xff] %v1120
        %1153 = vst [vmem:[#allocation2 + $0x78] sm:$0xff] %v1121
        %1154 = vst [vmem:[#allocation2 + $0x80] sm:$0xff] %v1122
        %1155 = vst [vmem:[#allocation2 + $0x88] sm:$0xff] %v1123
        %1156 = vst [vmem:[#allocation2 + $0x90] sm:$0xff] %v1124
        %1157 = vst [vmem:[#allocation2 + $0x98] sm:$0xff] %v1125
        %1158 = vst [vmem:[#allocation2 + $0xa0] sm:$0xff] %v1126
        %1159 = vst [vmem:[#allocation2 + $0xa8] sm:$0xff] %v1127
        %1160 = vst [vmem:[#allocation2 + $0xb0] sm:$0xff] %v1128
        %1161 = vst [vmem:[#allocation2 + $0xb8] sm:$0xff] %v1129
        %1162 = vst [vmem:[#allocation2 + $0xc0] sm:$0xff] %v1130
        %1163 = vst [vmem:[#allocation2 + $0xc8] sm:$0xff] %v1131
        %1164 = vst [vmem:[#allocation2 + $0xd0] sm:$0xff] %v1132
        %1165 = vst [vmem:[#allocation2 + $0xd8] sm:$0xff] %v1133
        %1166 = vst [vmem:[#allocation2 + $0xe0] sm:$0xff] %v1134
        %1167 = vst [vmem:[#allocation2 + $0xe8] sm:$0xff] %v1135
        %1168 = vst [vmem:[#allocation2 + $0xf0] sm:$0xff] %v1136
        %1169 = vst [vmem:[#allocation2 + $0xf8] sm:$0xff] %v1137
        %p1170 = scmp.eq.s32.totalorder %s21, 2
        // Predicated region
        $region63: #{cnn_model_forward.10} parent=53 // pred_check
          %p1171 = pneg %p1170
        $region64: #{cnn_model_forward.10} parent=53 // pred_check_branch
          %1173 = sbr.rel (%p1171) target = $region66
        $region65: #{cnn_model_forward.10} parent=53 // pred_region
          %v1174 = vld [vmem:[#allocation2] sm:$0xff]
          %v1175 = vld [vmem:[#allocation2 + $0x8] sm:$0xff]
          %v1176 = vld [vmem:[#allocation2 + $0x10] sm:$0xff]
          %v1177 = vld [vmem:[#allocation2 + $0x18] sm:$0xff]
          %v1178 = vld [vmem:[#allocation2 + $0x20] sm:$0xff]
          %v1179 = vld [vmem:[#allocation2 + $0x28] sm:$0xff]
          %v1180 = vld [vmem:[#allocation2 + $0x30] sm:$0xff]
          %v1181 = vld [vmem:[#allocation2 + $0x38] sm:$0xff]
          %v1182 = vld [vmem:[#allocation2 + $0x40] sm:$0xff]
          %v1183 = vld [vmem:[#allocation2 + $0x48] sm:$0xff]
          %v1184 = vld [vmem:[#allocation2 + $0x50] sm:$0xff]
          %v1185 = vld [vmem:[#allocation2 + $0x58] sm:$0xff]
          %v1186 = vld [vmem:[#allocation2 + $0x60] sm:$0xff]
          %v1187 = vld [vmem:[#allocation2 + $0x68] sm:$0xff]
          %v1188 = vld [vmem:[#allocation2 + $0x70] sm:$0xff]
          %v1189 = vld [vmem:[#allocation2 + $0x78] sm:$0xff]
          %v1190 = vld [vmem:[#allocation2 + $0x80] sm:$0xff]
          %v1191 = vld [vmem:[#allocation2 + $0x88] sm:$0xff]
          %v1192 = vld [vmem:[#allocation2 + $0x90] sm:$0xff]
          %v1193 = vld [vmem:[#allocation2 + $0x98] sm:$0xff]
          %v1194 = vld [vmem:[#allocation2 + $0xa0] sm:$0xff]
          %v1195 = vld [vmem:[#allocation2 + $0xa8] sm:$0xff]
          %v1196 = vld [vmem:[#allocation2 + $0xb0] sm:$0xff]
          %v1197 = vld [vmem:[#allocation2 + $0xb8] sm:$0xff]
          %v1198 = vld [vmem:[#allocation2 + $0xc0] sm:$0xff]
          %v1199 = vld [vmem:[#allocation2 + $0xc8] sm:$0xff]
          %v1200 = vld [vmem:[#allocation2 + $0xd0] sm:$0xff]
          %v1201 = vld [vmem:[#allocation2 + $0xd8] sm:$0xff]
          %v1202 = vld [vmem:[#allocation2 + $0xe0] sm:$0xff]
          %v1203 = vld [vmem:[#allocation2 + $0xe8] sm:$0xff]
          %v1204 = vld [vmem:[#allocation2 + $0xf0] sm:$0xff]
          %v1205 = vld [vmem:[#allocation2 + $0xf8] sm:$0xff]
          %v1206 = vld [vmem:[%s349] sm:$0x3]
          %v1208 = vlaneseq
          %v1209 = vshrl.u32 %v1208, 7
          %v1210 = vsub.s32 0, %v1209
          %v1211 = vrot.slane %v1206, %v1210
          %v1212 = vlaneseq
          %v1213 = vshrl.u32 %v1212, 7
          %v1214 = vsub.s32 1, %v1213
          %v1215 = vrot.slane %v1206, %v1214
          %v1218 = vadd.f32 %v1174, %v1211
          %v1219 = vadd.f32 %v1175, %v1215
          %v1220 = vadd.f32 %v1176, %v1211
          %v1221 = vadd.f32 %v1177, %v1215
          %v1222 = vadd.f32 %v1178, %v1211
          %v1223 = vadd.f32 %v1179, %v1215
          %v1224 = vadd.f32 %v1180, %v1211
          %v1225 = vadd.f32 %v1181, %v1215
          %v1226 = vadd.f32 %v1182, %v1211
          %v1227 = vadd.f32 %v1183, %v1215
          %v1228 = vadd.f32 %v1184, %v1211
          %v1229 = vadd.f32 %v1185, %v1215
          %v1230 = vadd.f32 %v1186, %v1211
          %v1231 = vadd.f32 %v1187, %v1215
          %v1232 = vadd.f32 %v1188, %v1211
          %v1233 = vadd.f32 %v1189, %v1215
          %v1234 = vadd.f32 %v1190, %v1211
          %v1235 = vadd.f32 %v1191, %v1215
          %v1236 = vadd.f32 %v1192, %v1211
          %v1237 = vadd.f32 %v1193, %v1215
          %v1238 = vadd.f32 %v1194, %v1211
          %v1239 = vadd.f32 %v1195, %v1215
          %v1240 = vadd.f32 %v1196, %v1211
          %v1241 = vadd.f32 %v1197, %v1215
          %v1242 = vadd.f32 %v1198, %v1211
          %v1243 = vadd.f32 %v1199, %v1215
          %v1244 = vadd.f32 %v1200, %v1211
          %v1245 = vadd.f32 %v1201, %v1215
          %v1246 = vadd.f32 %v1202, %v1211
          %v1247 = vadd.f32 %v1203, %v1215
          %v1248 = vadd.f32 %v1204, %v1211
          %v1249 = vadd.f32 %v1205, %v1215
          %v1250 = vmax.f32 %v1218, 0.0
          %v1251 = vmax.f32 %v1219, 0.0
          %v1252 = vmax.f32 %v1220, 0.0
          %v1253 = vmax.f32 %v1221, 0.0
          %v1254 = vmax.f32 %v1222, 0.0
          %v1255 = vmax.f32 %v1223, 0.0
          %v1256 = vmax.f32 %v1224, 0.0
          %v1257 = vmax.f32 %v1225, 0.0
          %v1258 = vmax.f32 %v1226, 0.0
          %v1259 = vmax.f32 %v1227, 0.0
          %v1260 = vmax.f32 %v1228, 0.0
          %v1261 = vmax.f32 %v1229, 0.0
          %v1262 = vmax.f32 %v1230, 0.0
          %v1263 = vmax.f32 %v1231, 0.0
          %v1264 = vmax.f32 %v1232, 0.0
          %v1265 = vmax.f32 %v1233, 0.0
          %v1266 = vmax.f32 %v1234, 0.0
          %v1267 = vmax.f32 %v1235, 0.0
          %v1268 = vmax.f32 %v1236, 0.0
          %v1269 = vmax.f32 %v1237, 0.0
          %v1270 = vmax.f32 %v1238, 0.0
          %v1271 = vmax.f32 %v1239, 0.0
          %v1272 = vmax.f32 %v1240, 0.0
          %v1273 = vmax.f32 %v1241, 0.0
          %v1274 = vmax.f32 %v1242, 0.0
          %v1275 = vmax.f32 %v1243, 0.0
          %v1276 = vmax.f32 %v1244, 0.0
          %v1277 = vmax.f32 %v1245, 0.0
          %v1278 = vmax.f32 %v1246, 0.0
          %v1279 = vmax.f32 %v1247, 0.0
          %v1280 = vmax.f32 %v1248, 0.0
          %v1281 = vmax.f32 %v1249, 0.0
          %1282 = vst [vmem:[%s360] sm:$0xff] %v1250
          %1283 = vst [vmem:[%s360 + $0x8] sm:$0xff] %v1251
          %1284 = vst [vmem:[%s360 + $0x10] sm:$0xff] %v1252
          %1285 = vst [vmem:[%s360 + $0x18] sm:$0xff] %v1253
          %1286 = vst [vmem:[%s360 + $0x20] sm:$0xff] %v1254
          %1287 = vst [vmem:[%s360 + $0x28] sm:$0xff] %v1255
          %1288 = vst [vmem:[%s360 + $0x30] sm:$0xff] %v1256
          %1289 = vst [vmem:[%s360 + $0x38] sm:$0xff] %v1257
          %1290 = vst [vmem:[%s360 + $0x40] sm:$0xff] %v1258
          %1291 = vst [vmem:[%s360 + $0x48] sm:$0xff] %v1259
          %1292 = vst [vmem:[%s360 + $0x50] sm:$0xff] %v1260
          %1293 = vst [vmem:[%s360 + $0x58] sm:$0xff] %v1261
          %1294 = vst [vmem:[%s360 + $0x60] sm:$0xff] %v1262
          %1295 = vst [vmem:[%s360 + $0x68] sm:$0xff] %v1263
          %1296 = vst [vmem:[%s360 + $0x70] sm:$0xff] %v1264
          %1297 = vst [vmem:[%s360 + $0x78] sm:$0xff] %v1265
          %1298 = vst [vmem:[%s360 + $0x80] sm:$0xff] %v1266
          %1299 = vst [vmem:[%s360 + $0x88] sm:$0xff] %v1267
          %1300 = vst [vmem:[%s360 + $0x90] sm:$0xff] %v1268
          %1301 = vst [vmem:[%s360 + $0x98] sm:$0xff] %v1269
          %1302 = vst [vmem:[%s360 + $0xa0] sm:$0xff] %v1270
          %1303 = vst [vmem:[%s360 + $0xa8] sm:$0xff] %v1271
          %1304 = vst [vmem:[%s360 + $0xb0] sm:$0xff] %v1272
          %1305 = vst [vmem:[%s360 + $0xb8] sm:$0xff] %v1273
          %1306 = vst [vmem:[%s360 + $0xc0] sm:$0xff] %v1274
          %1307 = vst [vmem:[%s360 + $0xc8] sm:$0xff] %v1275
          %1308 = vst [vmem:[%s360 + $0xd0] sm:$0xff] %v1276
          %1309 = vst [vmem:[%s360 + $0xd8] sm:$0xff] %v1277
          %1310 = vst [vmem:[%s360 + $0xe0] sm:$0xff] %v1278
          %1311 = vst [vmem:[%s360 + $0xe8] sm:$0xff] %v1279
          %1312 = vst [vmem:[%s360 + $0xf0] sm:$0xff] %v1280
          %1313 = vst [vmem:[%s360 + $0xf8] sm:$0xff] %v1281
        $region66: #{cnn_model_forward.10} parent=53 // pred_fallthru
          _
        %s1314 = smul.u32 16, %s19
        %s1315 = smul.u32 2, %s20
        %p1316 = scmp.lt.s32.totalorder %s1314, 15
        %s1317 = scalar_select %p1316, %s1314, 15
        %p1318 = scmp.lt.s32.totalorder %s1315, 1
        %s1319 = scalar_select %p1318, %s1315, 1
        %s1320 = smul.addr %s1317, 2
        %s1321 = sadd.s32 %s1319, %s1320
        %s1322 = smul.addr %s1321, 8
        %s1323 = scalar_lea.vmem %s3, %s1322
        // Predicated region
        $region67: #{cnn_model_forward.10} parent=53 // pred_check
          %p1324 = pneg %p135
        $region68: #{cnn_model_forward.10} parent=53 // pred_check_branch
          %1326 = sbr.rel (%p1324) target = $region70
        $region69: #{cnn_model_forward.10} parent=53 // pred_region
          %s1327 = smul.u32 16, %s19
          %s1328 = smul.u32 2, %s20
        $region70: #{cnn_model_forward.10} parent=53 // pred_fallthru
          _
        // Predicated region
        $region71: #{cnn_model_forward.10} parent=53 // pred_check
          %p1329 = pneg %p135
        $region72: #{cnn_model_forward.10} parent=53 // pred_check_branch
          %1331 = sbr.rel (%p1329) target = $region74
        $region73: #{cnn_model_forward.10} parent=53 // pred_region
          %s1332 = smul.u32 16, %s19
          %s1333 = smul.u32 2, %s20
          %p1334 = scmp.lt.s32.totalorder %s1332, 15
          %s1335 = scalar_select %p1334, %s1332, 15
          %p1336 = scmp.lt.s32.totalorder %s1333, 1
          %s1337 = scalar_select %p1336, %s1333, 1
          %s1338 = smul.addr %s1335, 2
          %s1339 = sadd.s32 %s1337, %s1338
          %s1340 = smul.addr %s1339, 8
          %s1341 = scalar_lea.vmem %s3, %s1340
        $region74: #{cnn_model_forward.10} parent=53 // pred_fallthru
          _
      $region54: #{cnn_model_forward.10} parent=5 // pred_fallthru
        _
      %p1342 = scmp.le.s32.totalorder 2, %s9
      // Predicated region
      $region75: #{cnn_model_forward.10} parent=5 // pred_check
        %p1343 = pneg %p1342
      $region76: #{cnn_model_forward.10} parent=5 // pred_check_branch
        %1345 = sbr.rel (%p1343) target = $region78
      $region77: #{cnn_model_forward.10} parent=5 // pred_region
        %s1346 = ssub.s32 %s9, 2
      $region78: #{cnn_model_forward.10} parent=5 // pred_fallthru
        _
    $region6: #{cnn_model_forward.10} parent=1 // loop_footer
      %s13 = sadd.s32 1, %s9
    $region7: #{cnn_model_forward.10} parent=1 // loop_footer_branch
      %8 = sbr.rel target = $region3
    $region8: #{cnn_model_forward.10} parent=1 // loop_exit
      _

// kernel: cnn_model_forward.11
$region0: #{cnn_model_forward.11}
  #allocation0 [shape = 'u32[]', space=smem, size = 0x4, offset = 0x4, fixed_abs, tag = 'smem constant byte address 0x4 - core index']
  #allocation1 [shape = 'u32[144,128]{1,0:T(1,128)}', space=vmem, size = 0x12000, scoped, tag = 'internal scratch']
  #allocation2 [shape = 'f32[16,512]{1,0:T(8,128)}', space=vmem, size = 0x8000, scoped, tag = 'scratch operand']
  %s0 = inlined_call_operand.vmem [shape: bf16[16,2304], index: 0, kind: input, shape index: {}]
  %s1 = inlined_call_operand.vmem [shape: bf16[2304,512], index: 1, kind: input, shape index: {}]
  %s2 = inlined_call_operand.vmem [shape: f32[1,512], index: 2, kind: input, shape index: {}]
  %s3 = inlined_call_operand.vmem [shape: f32[16,512], index: 3, kind: output, shape index: {}]
  %s4 = sld [smem:[#allocation0]]
  $region79: #{cnn_model_forward.11} parent=0
    _
  %s6 = ssub.s32 1, %s4
  %s7 = scalar_select 0, %s6, %s4
  $region1: #{cnn_model_forward.11} parent=0
    #allocation3 [shape = 'u8[24576]{0}', space=vmem, size = 0x6000, scoped, tag = 'input window, operand 0']
    loop: start=0, step=1, limit=8
    $region2: #{cnn_model_forward.11} parent=1 // loop_pre_header
      _
    $region3: #{cnn_model_forward.11} parent=1 // loop_header
      %s9 = sphi 0, %s13
      %p10 = scmp.ge.s32.totalorder %s9, 8
      %s16 = sphi 0, %s35
      %s17 = sphi 0, %s31
      %s18 = sphi 0, %s27
      %s19 = sphi 0, %s16
      %s20 = sphi 0, %s17
      %s21 = sphi 0, %s18
      %s22 = sphi 0, %s19
      %s23 = sphi 0, %s20
      %s24 = sphi 0, %s21
      %s40 = sphi 0, %s42
      %s43 = sphi 0, %s40
      %s44 = sphi 0, %s43
      %s60 = sphi 0, %s44
      %s68 = sphi 0, %s70
      %s71 = sphi 0, %s68
      %s72 = sphi 0, %s71
      %s88 = sphi 0, %s72
      %s94 = sphi 0, %s96
      %s97 = sphi 0, %s94
      %s98 = sphi 0, %s97
      %s114 = sphi 0, %s98
      %s122 = sphi 0, %s124
      %s125 = sphi 0, %s122
      %s126 = sphi 0, %s125
      %s142 = sphi 0, %s126
    $region4: #{cnn_model_forward.11} parent=1 // loop_header_branch
      %12 = sbr.rel (%p10) target = $region8
    $region5: #{cnn_model_forward.11} parent=1 // loop_body
      %s14 = ssub.s32 %s9, 1
      %s15 = ssub.s32 %s9, 2
      %s25 = sadd.s32 1, %s18
      %p26 = scmp.ge.s32.totalorder %s25, 6
      %s27 = scalar_select %p26, 0, %s25
      %s28 = sadd.s32 1, %s17
      %s29 = scalar_select %p26, %s28, %s17
      %p30 = scmp.ge.s32.totalorder %s29, 1
      %s31 = scalar_select %p30, 0, %s29
      %s32 = sadd.s32 1, %s16
      %s33 = scalar_select %p30, %s32, %s16
      %p34 = scmp.ge.s32.totalorder %s33, 1
      %s35 = scalar_select %p34, 0, %s33
      %s36 = ssub.s32 %s16, %s35
      %s37 = ssub.s32 %s18, %s27
      %s38 = sor.u32 %s36, %s37
      %p39 = scmp.eq.s32.totalorder %s38, 0
      %s41 = sadd.s32 %s40, 1
      %s42 = scalar_select %p39, %s40, %s41
      %p45 = pneg %p39
      %p46 = scmp.eq.s32.totalorder %s9, 5
      %p47 = por %p45, %p46
      %p48 = scmp.ne.s32.totalorder %s40, %s43
      %p49 = scmp.eq.s32.totalorder %s9, 0
      %p50 = por %p48, %p49
      %p51 = scmp.ne.s32.totalorder %s40, %s43
      %p52 = scmp.eq.s32.totalorder %s14, 5
      %p53 = por %p51, %p52
      %p54 = scmp.ne.s32.totalorder %s43, %s44
      %p55 = scmp.eq.s32.totalorder %s14, 0
      %p56 = por %p54, %p55
      %p57 = scmp.ne.s32.totalorder %s43, %s44
      %p58 = scmp.eq.s32.totalorder %s15, 5
      %p59 = por %p57, %p58
      %p61 = scmp.ne.s32.totalorder %s44, %s60
      %p62 = scmp.eq.s32.totalorder %s15, 0
      %p63 = por %p61, %p62
      %s64 = ssub.s32 %s18, %s27
      %s65 = ssub.s32 %s17, %s31
      %s66 = sor.u32 %s64, %s65
      %p67 = scmp.eq.s32.totalorder %s66, 0
      %s69 = sadd.s32 %s68, 1
      %s70 = scalar_select %p67, %s68, %s69
      %p73 = pneg %p67
      %p74 = scmp.eq.s32.totalorder %s9, 5
      %p75 = por %p73, %p74
      %p76 = scmp.ne.s32.totalorder %s68, %s71
      %p77 = scmp.eq.s32.totalorder %s9, 0
      %p78 = por %p76, %p77
      %p79 = scmp.ne.s32.totalorder %s68, %s71
      %p80 = scmp.eq.s32.totalorder %s14, 5
      %p81 = por %p79, %p80
      %p82 = scmp.ne.s32.totalorder %s71, %s72
      %p83 = scmp.eq.s32.totalorder %s14, 0
      %p84 = por %p82, %p83
      %p85 = scmp.ne.s32.totalorder %s71, %s72
      %p86 = scmp.eq.s32.totalorder %s15, 5
      %p87 = por %p85, %p86
      %p89 = scmp.ne.s32.totalorder %s72, %s88
      %p90 = scmp.eq.s32.totalorder %s15, 0
      %p91 = por %p89, %p90
      %s92 = ssub.s32 %s17, %s31
      %p93 = scmp.eq.s32.totalorder %s92, 0
      %s95 = sadd.s32 %s94, 1
      %s96 = scalar_select %p93, %s94, %s95
      %p99 = pneg %p93
      %p100 = scmp.eq.s32.totalorder %s9, 5
      %p101 = por %p99, %p100
      %p102 = scmp.ne.s32.totalorder %s94, %s97
      %p103 = scmp.eq.s32.totalorder %s9, 0
      %p104 = por %p102, %p103
      %p105 = scmp.ne.s32.totalorder %s94, %s97
      %p106 = scmp.eq.s32.totalorder %s14, 5
      %p107 = por %p105, %p106
      %p108 = scmp.ne.s32.totalorder %s97, %s98
      %p109 = scmp.eq.s32.totalorder %s14, 0
      %p110 = por %p108, %p109
      %p111 = scmp.ne.s32.totalorder %s97, %s98
      %p112 = scmp.eq.s32.totalorder %s15, 5
      %p113 = por %p111, %p112
      %p115 = scmp.ne.s32.totalorder %s98, %s114
      %p116 = scmp.eq.s32.totalorder %s15, 0
      %p117 = por %p115, %p116
      %s118 = ssub.s32 %s16, %s35
      %s119 = ssub.s32 %s17, %s31
      %s120 = sor.u32 %s118, %s119
      %p121 = scmp.eq.s32.totalorder %s120, 0
      %s123 = sadd.s32 %s122, 1
      %s124 = scalar_select %p121, %s122, %s123
      %p127 = pneg %p121
      %p128 = scmp.eq.s32.totalorder %s9, 5
      %p129 = por %p127, %p128
      %p130 = scmp.ne.s32.totalorder %s122, %s125
      %p131 = scmp.eq.s32.totalorder %s9, 0
      %p132 = por %p130, %p131
      %p133 = scmp.ne.s32.totalorder %s122, %s125
      %p134 = scmp.eq.s32.totalorder %s14, 5
      %p135 = por %p133, %p134
      %p136 = scmp.ne.s32.totalorder %s125, %s126
      %p137 = scmp.eq.s32.totalorder %s14, 0
      %p138 = por %p136, %p137
      %p139 = scmp.ne.s32.totalorder %s125, %s126
      %p140 = scmp.eq.s32.totalorder %s15, 5
      %p141 = por %p139, %p140
      %p143 = scmp.ne.s32.totalorder %s126, %s142
      %p144 = scmp.eq.s32.totalorder %s15, 0
      %p145 = por %p143, %p144
      %p146 = scmp.le.s32.totalorder 1, %s9
      %p147 = scmp.lt.s32.totalorder %s9, 7
      %p148 = pnand %p146, %p147
      %p149 = pneg %p148
      // Predicated region
      $region9: #{cnn_model_forward.11} parent=5 // pred_check
        _
      $region10: #{cnn_model_forward.11} parent=5 // pred_check_branch
        %151 = sbr.rel (%p148) target = $region12
      $region11: #{cnn_model_forward.11} parent=5 // pred_region
        %s152 = ssub.s32 %s9, 1
        // Predicated region
        $region13: #{cnn_model_forward.11} parent=11 // pred_check
          %p153 = pneg %p110
        $region14: #{cnn_model_forward.11} parent=11 // pred_check_branch
          %155 = sbr.rel (%p153) target = $region16
        $region15: #{cnn_model_forward.11} parent=11 // pred_region
          %s156 = smul.u32 4, %s20
          %p157 = scmp.lt.s32.totalorder %s156, 3
          %s158 = scalar_select %p157, %s156, 3
          %s159 = scalar_lea.vmem %s2, %s158
          %s160 = smul.u32 4, %s20
        $region16: #{cnn_model_forward.11} parent=11 // pred_fallthru
          _
      $region12: #{cnn_model_forward.11} parent=5 // pred_fallthru
        _
      %p161 = scmp.lt.s32.totalorder %s9, 6
      // Predicated region
      $region17: #{cnn_model_forward.11} parent=5 // pred_check
        %p162 = pneg %p161
      $region18: #{cnn_model_forward.11} parent=5 // pred_check_branch
        %164 = sbr.rel (%p162) target = $region20
      $region19: #{cnn_model_forward.11} parent=5 // pred_region
        // Predicated region
        $region21: #{cnn_model_forward.11} parent=19 // pred_check
          %p165 = pneg %p50
        $region22: #{cnn_model_forward.11} parent=19 // pred_check_branch
          %167 = sbr.rel (%p165) target = $region24
        $region23: #{cnn_model_forward.11} parent=19 // pred_region
          %s168 = sand.u32 %s40, 1
          %s169 = sand.u32 %s40, 1
          %s170 = smul.addr %s169, 24
          %s171 = scalar_lea.vmem [#allocation3], %s170
          %s172 = smul.u32 2, %s16
          %s173 = smul.u32 3, %s18
          %s174 = smul.addr %s172, 18
          %s175 = sadd.s32 %s173, %s174
          %s176 = smul.addr %s175, 4
          %s177 = scalar_lea.vmem %s0, %s176
          // Predicated region
          $region25: #{cnn_model_forward.11} parent=23 // pred_check
            _
          $region26: #{cnn_model_forward.11} parent=23 // pred_check_branch
            %179 = sbr.rel (0) target = $region28
          $region27: #{cnn_model_forward.11} parent=23 // pred_region
            // Predicated region
            $region29: #{cnn_model_forward.11} parent=27 // pred_check
              _
            $region30: #{cnn_model_forward.11} parent=27 // pred_check_branch
              %181 = sbr.rel (0) target = $region32
            $region31: #{cnn_model_forward.11} parent=27 // pred_region
              %s182 = scalar_lea.vmem %s177, 8
              %s183 = scalar_lea.vmem %s171, 8 [#allocation3]
              loop: start=0, step=1, limit=1
              $region33: #{cnn_model_forward.11} parent=31 // loop_pre_header
                _
              $region34: #{cnn_model_forward.11} parent=31 // loop_header
                %s185 = sphi 0, %s189
                %p186 = scmp.ge.s32.totalorder %s185, 1
                %s190 = sphi %s177, %s177
                %s191 = sphi %s171, %s171
              $region35: #{cnn_model_forward.11} parent=31 // loop_header_branch
                %188 = sbr.rel (%p186) target = $region39
              $region36: #{cnn_model_forward.11} parent=31 // loop_body
                %v192 = vld [vmem:[%s190] sm:$0xff]
                %193 = vst [vmem:[%s191] sm:$0xff] %v192
                %v194 = vld [vmem:[%s190 + $0x48] sm:$0xff]
                %195 = vst [vmem:[%s191 + $0xc] sm:$0xff] %v194
              $region37: #{cnn_model_forward.11} parent=31 // loop_footer
                %s189 = sadd.s32 1, %s185
              $region38: #{cnn_model_forward.11} parent=31 // loop_footer_branch
                %184 = sbr.rel target = $region34
              $region39: #{cnn_model_forward.11} parent=31 // loop_exit
                _
              %s197 = ssub.s32 16, 1
              loop: start=0, step=1, limit=1
              $region40: #{cnn_model_forward.11} parent=31 // loop_pre_header
                _
              $region41: #{cnn_model_forward.11} parent=31 // loop_header
                %s199 = sphi 0, %s203
                %p200 = scmp.ge.s32.totalorder %s199, 1
                %s204 = sphi %s182, %s182
                %s205 = sphi %s183, %s183
              $region42: #{cnn_model_forward.11} parent=31 // loop_header_branch
                %202 = sbr.rel (%p200) target = $region46
              $region43: #{cnn_model_forward.11} parent=31 // loop_body
                %v206 = vld [vmem:[%s204] sm:%s197]
                %207 = vst [vmem:[%s205] sm:%s197] %v206
                %v208 = vld [vmem:[%s204 + $0x48] sm:%s197]
                %209 = vst [vmem:[%s205 + $0xc] sm:%s197] %v208
              $region44: #{cnn_model_forward.11} parent=31 // loop_footer
                %s203 = sadd.s32 1, %s199
              $region45: #{cnn_model_forward.11} parent=31 // loop_footer_branch
                %198 = sbr.rel target = $region41
              $region46: #{cnn_model_forward.11} parent=31 // loop_exit
                _
            $region32: #{cnn_model_forward.11} parent=27 // pred_fallthru
              _
          $region28: #{cnn_model_forward.11} parent=23 // pred_fallthru
            _
          %210 = vnop
        $region24: #{cnn_model_forward.11} parent=19 // pred_fallthru
          _
        // Predicated region
        $region47: #{cnn_model_forward.11} parent=19 // pred_check
          %p211 = pneg %p78
        $region48: #{cnn_model_forward.11} parent=19 // pred_check_branch
          %213 = sbr.rel (%p211) target = $region50
        $region49: #{cnn_model_forward.11} parent=19 // pred_region
          %s214 = smul.u32 48, %s18
          %s215 = smul.u32 4, %s17
          %p216 = scmp.lt.s32.totalorder %s214, 287
          %s217 = scalar_select %p216, %s214, 287
          %p218 = scmp.lt.s32.totalorder %s215, 3
          %s219 = scalar_select %p218, %s215, 3
          %s220 = smul.addr %s217, 4
          %s221 = sadd.s32 %s219, %s220
          %s222 = smul.addr %s221, 4
          %s223 = scalar_lea.vmem %s1, %s222
          %s224 = smul.u32 48, %s18
          %s225 = smul.u32 4, %s17
        $region50: #{cnn_model_forward.11} parent=19 // pred_fallthru
          _
      $region20: #{cnn_model_forward.11} parent=5 // pred_fallthru
        _
      %p226 = scmp.le.s32.totalorder 1, %s9
      %p227 = scmp.lt.s32.totalorder %s9, 7
      %p228 = pnand %p226, %p227
      %p229 = pneg %p228
      // Predicated region
      $region51: #{cnn_model_forward.11} parent=5 // pred_check
        _
      $region52: #{cnn_model_forward.11} parent=5 // pred_check_branch
        %231 = sbr.rel (%p228) target = $region54
      $region53: #{cnn_model_forward.11} parent=5 // pred_region
        %s232 = ssub.s32 %s9, 1
        %s233 = sand.u32 %s43, 1
        %s234 = sand.u32 %s43, 1
        %s235 = smul.addr %s234, 24
        %s236 = scalar_lea.vmem [#allocation3], %s235
        // Predicated region
        $region55: #{cnn_model_forward.11} parent=53 // pred_check
          %p237 = pneg %p56
        $region56: #{cnn_model_forward.11} parent=53 // pred_check_branch
          %239 = sbr.rel (%p237) target = $region58
        $region57: #{cnn_model_forward.11} parent=53 // pred_region
          _
        $region58: #{cnn_model_forward.11} parent=53 // pred_fallthru
          _
        %s240 = sand.u32 %s43, 1
        %s241 = sand.u32 %s43, 1
        %s242 = smul.addr %s241, 24
        %s243 = scalar_lea.vmem [#allocation3], %s242
        %p244 = pneg %p56
        %p245 = pneg %p53
        %s246 = smul.u32 48, %s21
        %s247 = smul.u32 4, %s20
        %p248 = scmp.lt.s32.totalorder %s246, 287
        %s249 = scalar_select %p248, %s246, 287
        %p250 = scmp.lt.s32.totalorder %s247, 3
        %s251 = scalar_select %p250, %s247, 3
        %s252 = smul.addr %s249, 4
        %s253 = sadd.s32 %s251, %s252
        %s254 = smul.addr %s253, 4
        %s255 = scalar_lea.vmem %s1, %s254
        %p256 = pneg %p84
        %p257 = pneg %p81
        %s258 = smul.u32 4, %s20
        %p259 = scmp.lt.s32.totalorder %s258, 3
        %s260 = scalar_select %p259, %s258, 3
        %s261 = scalar_lea.vmem %s2, %s260
        %p262 = pneg %p110
        %p263 = pneg %p107
        %p264 = pneg %p138
        %p265 = pneg %p135
        %s266 = smul.u32 2, %s19
        %s267 = smul.u32 4, %s20
        %p268 = scmp.lt.s32.totalorder %s266, 1
        %s269 = scalar_select %p268, %s266, 1
        %p270 = scmp.lt.s32.totalorder %s267, 3
        %s271 = scalar_select %p270, %s267, 3
        %s272 = smul.addr %s269, 4
        %s273 = sadd.s32 %s271, %s272
        %s274 = smul.addr %s273, 8
        %s275 = scalar_lea.vmem %s3, %s274
        %s276 = smul.u32 2, %s19
        %s277 = smul.u32 3, %s21
        %s278 = smul.u32 48, %s21
        %s279 = smul.u32 4, %s20
        %p280 = scmp.lt.s32.totalorder %s278, 287
        %s281 = scalar_select %p280, %s278, 287
        %p282 = scmp.lt.s32.totalorder %s279, 3
        %s283 = scalar_select %p282, %s279, 3
        %s284 = smul.addr %s281, 4
        %s285 = sadd.s32 %s283, %s284
        %s286 = smul.addr %s285, 4
        %s287 = scalar_lea.vmem %s1, %s286
        %s288 = smul.u32 48, %s21
        %s289 = smul.u32 4, %s20
        %s290 = smul.u32 4, %s20
        %p291 = scmp.lt.s32.totalorder %s290, 3
        %s292 = scalar_select %p291, %s290, 3
        %s293 = scalar_lea.vmem %s2, %s292
        %s294 = smul.u32 4, %s20
        %s295 = smul.u32 2, %s19
        %s296 = smul.u32 4, %s20
        %p297 = scmp.lt.s32.totalorder %s295, 1
        %s298 = scalar_select %p297, %s295, 1
        %p299 = scmp.lt.s32.totalorder %s296, 3
        %s300 = scalar_select %p299, %s296, 3
        %s301 = smul.addr %s298, 4
        %s302 = sadd.s32 %s300, %s301
        %s303 = smul.addr %s302, 8
        %s304 = scalar_lea.vmem %s3, %s303
        %s305 = smul.u32 2, %s19
        %s306 = smul.u32 4, %s20
        %p308 = scmp.eq.s32.totalorder %s21, 0
        // Predicated region
        $region59: #{cnn_model_forward.11} parent=53 // pred_check
          %p309 = pneg %p308
        $region60: #{cnn_model_forward.11} parent=53 // pred_check_branch
          %311 = sbr.rel (%p309) target = $region62
        $region61: #{cnn_model_forward.11} parent=53 // pred_region
          %312 = vst [vmem:[#allocation2] sm:$0xff] 0.0
          %313 = vst [vmem:[#allocation2 + $0x8] sm:$0xff] 0.0
          %314 = vst [vmem:[#allocation2 + $0x10] sm:$0xff] 0.0
          %315 = vst [vmem:[#allocation2 + $0x18] sm:$0xff] 0.0
          %316 = vst [vmem:[#allocation2 + $0x20] sm:$0xff] 0.0
          %317 = vst [vmem:[#allocation2 + $0x28] sm:$0xff] 0.0
          %318 = vst [vmem:[#allocation2 + $0x30] sm:$0xff] 0.0
          %319 = vst [vmem:[#allocation2 + $0x38] sm:$0xff] 0.0
        $region62: #{cnn_model_forward.11} parent=53 // pred_fallthru
          _
        %v320 = vld [vmem:[#allocation2] sm:$0xff]
        %v321 = vld [vmem:[#allocation2 + $0x8] sm:$0xff]
        %v322 = vld [vmem:[#allocation2 + $0x10] sm:$0xff]
        %v323 = vld [vmem:[#allocation2 + $0x18] sm:$0xff]
        %v324 = vld [vmem:[#allocation2 + $0x20] sm:$0xff]
        %v325 = vld [vmem:[#allocation2 + $0x28] sm:$0xff]
        %v326 = vld [vmem:[#allocation2 + $0x30] sm:$0xff]
        %v327 = vld [vmem:[#allocation2 + $0x38] sm:$0xff]
        %v328 = vld [vmem:[%s236] sm:$0xff]
        %v329 = vld [vmem:[%s236 + $0x8] sm:$0xf]
        %v330 = vld [vmem:[%s236 + $0xc] sm:$0xff]
        %v331 = vld [vmem:[%s236 + $0x14] sm:$0xf]
        %v332 = vld [vmem:[%s287] sm:$0xff]
        %v333 = vld [vmem:[%s287 + $0x8] sm:$0xff]
        %v334 = vld [vmem:[%s287 + $0x10] sm:$0xff]
        %v335 = vld [vmem:[%s287 + $0x18] sm:$0xff]
        %v336 = vld [vmem:[%s287 + $0x20] sm:$0xff]
        %v337 = vld [vmem:[%s287 + $0x28] sm:$0xff]
        %v338 = vld [vmem:[%s287 + $0x30] sm:$0xff]
        %v339 = vld [vmem:[%s287 + $0x38] sm:$0xff]
        %v340 = vld [vmem:[%s287 + $0x40] sm:$0xff]
        %v341 = vld [vmem:[%s287 + $0x48] sm:$0xff]
        %v342 = vld [vmem:[%s287 + $0x50] sm:$0xff]
        %v343 = vld [vmem:[%s287 + $0x58] sm:$0xff]
        %v344 = vld [vmem:[%s287 + $0x60] sm:$0xff]
        %v345 = vld [vmem:[%s287 + $0x68] sm:$0xff]
        %v346 = vld [vmem:[%s287 + $0x70] sm:$0xff]
        %v347 = vld [vmem:[%s287 + $0x78] sm:$0xff]
        %v348 = vld [vmem:[%s287 + $0x80] sm:$0xff]
        %v349 = vld [vmem:[%s287 + $0x88] sm:$0xff]
        %v350 = vld [vmem:[%s287 + $0x90] sm:$0xff]
        %v351 = vld [vmem:[%s287 + $0x98] sm:$0xff]
        %v352 = vld [vmem:[%s287 + $0xa0] sm:$0xff]
        %v353 = vld [vmem:[%s287 + $0xa8] sm:$0xff]
        %v354 = vld [vmem:[%s287 + $0xb0] sm:$0xff]
        %v355 = vld [vmem:[%s287 + $0xb8] sm:$0xff]
        %v356 = vld [vmem:[%s287 + $0xc0] sm:$0xff]
        %v357 = vld [vmem:[%s287 + $0xc8] sm:$0xff]
        %v358 = vld [vmem:[%s287 + $0xd0] sm:$0xff]
        %v359 = vld [vmem:[%s287 + $0xd8] sm:$0xff]
        %v360 = vld [vmem:[%s287 + $0xe0] sm:$0xff]
        %v361 = vld [vmem:[%s287 + $0xe8] sm:$0xff]
        %v362 = vld [vmem:[%s287 + $0xf0] sm:$0xff]
        %v363 = vld [vmem:[%s287 + $0xf8] sm:$0xff]
        %v364 = vld [vmem:[%s287 + $0x100] sm:$0xff]
        %v365 = vld [vmem:[%s287 + $0x108] sm:$0xff]
        %v366 = vld [vmem:[%s287 + $0x110] sm:$0xff]
        %v367 = vld [vmem:[%s287 + $0x118] sm:$0xff]
        %v368 = vld [vmem:[%s287 + $0x120] sm:$0xff]
        %v369 = vld [vmem:[%s287 + $0x128] sm:$0xff]
        %v370 = vld [vmem:[%s287 + $0x130] sm:$0xff]
        %v371 = vld [vmem:[%s287 + $0x138] sm:$0xff]
        %v372 = vld [vmem:[%s287 + $0x140] sm:$0xff]
        %v373 = vld [vmem:[%s287 + $0x148] sm:$0xff]
        %v374 = vld [vmem:[%s287 + $0x150] sm:$0xff]
        %v375 = vld [vmem:[%s287 + $0x158] sm:$0xff]
        %v376 = vld [vmem:[%s287 + $0x160] sm:$0xff]
        %v377 = vld [vmem:[%s287 + $0x168] sm:$0xff]
        %v378 = vld [vmem:[%s287 + $0x170] sm:$0xff]
        %v379 = vld [vmem:[%s287 + $0x178] sm:$0xff]
        %v380 = vld [vmem:[%s287 + $0x180] sm:$0xff]
        %v381 = vld [vmem:[%s287 + $0x188] sm:$0xff]
        %v382 = vld [vmem:[%s287 + $0x190] sm:$0xff]
        %v383 = vld [vmem:[%s287 + $0x198] sm:$0xff]
        %v384 = vld [vmem:[%s287 + $0x1a0] sm:$0xff]
        %v385 = vld [vmem:[%s287 + $0x1a8] sm:$0xff]
        %v386 = vld [vmem:[%s287 + $0x1b0] sm:$0xff]
        %v387 = vld [vmem:[%s287 + $0x1b8] sm:$0xff]
        %v388 = vld [vmem:[%s287 + $0x1c0] sm:$0xff]
        %v389 = vld [vmem:[%s287 + $0x1c8] sm:$0xff]
        %v390 = vld [vmem:[%s287 + $0x1d0] sm:$0xff]
        %v391 = vld [vmem:[%s287 + $0x1d8] sm:$0xff]
        %v392 = vld [vmem:[%s287 + $0x1e0] sm:$0xff]
        %v393 = vld [vmem:[%s287 + $0x1e8] sm:$0xff]
        %v394 = vld [vmem:[%s287 + $0x1f0] sm:$0xff]
        %v395 = vld [vmem:[%s287 + $0x1f8] sm:$0xff]
        %v396 = vld [vmem:[%s287 + $0x200] sm:$0xff]
        %v397 = vld [vmem:[%s287 + $0x208] sm:$0xff]
        %v398 = vld [vmem:[%s287 + $0x210] sm:$0xff]
        %v399 = vld [vmem:[%s287 + $0x218] sm:$0xff]
        %v400 = vld [vmem:[%s287 + $0x220] sm:$0xff]
        %v401 = vld [vmem:[%s287 + $0x228] sm:$0xff]
        %v402 = vld [vmem:[%s287 + $0x230] sm:$0xff]
        %v403 = vld [vmem:[%s287 + $0x238] sm:$0xff]
        %v404 = vld [vmem:[%s287 + $0x240] sm:$0xff]
        %v405 = vld [vmem:[%s287 + $0x248] sm:$0xff]
        %v406 = vld [vmem:[%s287 + $0x250] sm:$0xff]
        %v407 = vld [vmem:[%s287 + $0x258] sm:$0xff]
        %v408 = vld [vmem:[%s287 + $0x260] sm:$0xff]
        %v409 = vld [vmem:[%s287 + $0x268] sm:$0xff]
        %v410 = vld [vmem:[%s287 + $0x270] sm:$0xff]
        %v411 = vld [vmem:[%s287 + $0x278] sm:$0xff]
        %v412 = vld [vmem:[%s287 + $0x280] sm:$0xff]
        %v413 = vld [vmem:[%s287 + $0x288] sm:$0xff]
        %v414 = vld [vmem:[%s287 + $0x290] sm:$0xff]
        %v415 = vld [vmem:[%s287 + $0x298] sm:$0xff]
        %v416 = vld [vmem:[%s287 + $0x2a0] sm:$0xff]
        %v417 = vld [vmem:[%s287 + $0x2a8] sm:$0xff]
        %v418 = vld [vmem:[%s287 + $0x2b0] sm:$0xff]
        %v419 = vld [vmem:[%s287 + $0x2b8] sm:$0xff]
        %v420 = vld [vmem:[%s287 + $0x2c0] sm:$0xff]
        %v421 = vld [vmem:[%s287 + $0x2c8] sm:$0xff]
        %v422 = vld [vmem:[%s287 + $0x2d0] sm:$0xff]
        %v423 = vld [vmem:[%s287 + $0x2d8] sm:$0xff]
        %v424 = vld [vmem:[%s287 + $0x2e0] sm:$0xff]
        %v425 = vld [vmem:[%s287 + $0x2e8] sm:$0xff]
        %v426 = vld [vmem:[%s287 + $0x2f0] sm:$0xff]
        %v427 = vld [vmem:[%s287 + $0x2f8] sm:$0xff]
        %v432 = vunpack.c.l.b16 %v328
        %v433 = vunpack.c.h.b16 %v328
        %v434 = vunpack.c.l.b16 %v329
        %v435 = vunpack.c.l.b16 %v330
        %v436 = vunpack.c.h.b16 %v330
        %v437 = vunpack.c.l.b16 %v331
        %v438 = vpack.c.b16 %v435, %v432
        %v439 = vpack.c.b16 %v436, %v433
        %v440 = vpack.c.b16 %v437, %v434
        %v540 = vunpack.c.l.b16 %v332
        %v541 = vunpack.c.h.b16 %v332
        %v542 = vunpack.c.l.b16 %v333
        %v543 = vunpack.c.h.b16 %v333
        %v544 = vunpack.c.l.b16 %v334
        %v545 = vunpack.c.h.b16 %v334
        %v546 = vunpack.c.l.b16 %v335
        %v547 = vunpack.c.h.b16 %v335
        %v548 = vunpack.c.l.b16 %v336
        %v549 = vunpack.c.h.b16 %v336
        %v550 = vunpack.c.l.b16 %v337
        %v551 = vunpack.c.h.b16 %v337
        %v552 = vunpack.c.l.b16 %v338
        %v553 = vunpack.c.h.b16 %v338
        %v554 = vunpack.c.l.b16 %v339
        %v555 = vunpack.c.h.b16 %v339
        %v556 = vunpack.c.l.b16 %v340
        %v557 = vunpack.c.h.b16 %v340
        %v558 = vunpack.c.l.b16 %v341
        %v559 = vunpack.c.h.b16 %v341
        %v560 = vunpack.c.l.b16 %v342
        %v561 = vunpack.c.h.b16 %v342
        %v562 = vunpack.c.l.b16 %v343
        %v563 = vunpack.c.h.b16 %v343
        %v564 = vunpack.c.l.b16 %v344
        %v565 = vunpack.c.h.b16 %v344
        %v566 = vunpack.c.l.b16 %v345
        %v567 = vunpack.c.h.b16 %v345
        %v568 = vunpack.c.l.b16 %v346
        %v569 = vunpack.c.h.b16 %v346
        %v570 = vunpack.c.l.b16 %v347
        %v571 = vunpack.c.h.b16 %v347
        %v572 = vunpack.c.l.b16 %v348
        %v573 = vunpack.c.h.b16 %v348
        %v574 = vunpack.c.l.b16 %v349
        %v575 = vunpack.c.h.b16 %v349
        %v576 = vunpack.c.l.b16 %v350
        %v577 = vunpack.c.h.b16 %v350
        %v578 = vunpack.c.l.b16 %v351
        %v579 = vunpack.c.h.b16 %v351
        %v580 = vunpack.c.l.b16 %v352
        %v581 = vunpack.c.h.b16 %v352
        %v582 = vunpack.c.l.b16 %v353
        %v583 = vunpack.c.h.b16 %v353
        %v584 = vunpack.c.l.b16 %v354
        %v585 = vunpack.c.h.b16 %v354
        %v586 = vunpack.c.l.b16 %v355
        %v587 = vunpack.c.h.b16 %v355
        %v588 = vunpack.c.l.b16 %v356
        %v589 = vunpack.c.h.b16 %v356
        %v590 = vunpack.c.l.b16 %v357
        %v591 = vunpack.c.h.b16 %v357
        %v592 = vunpack.c.l.b16 %v358
        %v593 = vunpack.c.h.b16 %v358
        %v594 = vunpack.c.l.b16 %v359
        %v595 = vunpack.c.h.b16 %v359
        %v596 = vunpack.c.l.b16 %v360
        %v597 = vunpack.c.h.b16 %v360
        %v598 = vunpack.c.l.b16 %v361
        %v599 = vunpack.c.h.b16 %v361
        %v600 = vunpack.c.l.b16 %v362
        %v601 = vunpack.c.h.b16 %v362
        %v602 = vunpack.c.l.b16 %v363
        %v603 = vunpack.c.h.b16 %v363
        %v604 = vunpack.c.l.b16 %v364
        %v605 = vunpack.c.h.b16 %v364
        %v606 = vunpack.c.l.b16 %v365
        %v607 = vunpack.c.h.b16 %v365
        %v608 = vunpack.c.l.b16 %v366
        %v609 = vunpack.c.h.b16 %v366
        %v610 = vunpack.c.l.b16 %v367
        %v611 = vunpack.c.h.b16 %v367
        %v612 = vunpack.c.l.b16 %v368
        %v613 = vunpack.c.h.b16 %v368
        %v614 = vunpack.c.l.b16 %v369
        %v615 = vunpack.c.h.b16 %v369
        %v616 = vunpack.c.l.b16 %v370
        %v617 = vunpack.c.h.b16 %v370
        %v618 = vunpack.c.l.b16 %v371
        %v619 = vunpack.c.h.b16 %v371
        %v620 = vunpack.c.l.b16 %v372
        %v621 = vunpack.c.h.b16 %v372
        %v622 = vunpack.c.l.b16 %v373
        %v623 = vunpack.c.h.b16 %v373
        %v624 = vunpack.c.l.b16 %v374
        %v625 = vunpack.c.h.b16 %v374
        %v626 = vunpack.c.l.b16 %v375
        %v627 = vunpack.c.h.b16 %v375
        %v628 = vunpack.c.l.b16 %v376
        %v629 = vunpack.c.h.b16 %v376
        %v630 = vunpack.c.l.b16 %v377
        %v631 = vunpack.c.h.b16 %v377
        %v632 = vunpack.c.l.b16 %v378
        %v633 = vunpack.c.h.b16 %v378
        %v634 = vunpack.c.l.b16 %v379
        %v635 = vunpack.c.h.b16 %v379
        %v636 = vunpack.c.l.b16 %v380
        %v637 = vunpack.c.h.b16 %v380
        %v638 = vunpack.c.l.b16 %v381
        %v639 = vunpack.c.h.b16 %v381
        %v640 = vunpack.c.l.b16 %v382
        %v641 = vunpack.c.h.b16 %v382
        %v642 = vunpack.c.l.b16 %v383
        %v643 = vunpack.c.h.b16 %v383
        %v644 = vunpack.c.l.b16 %v384
        %v645 = vunpack.c.h.b16 %v384
        %v646 = vunpack.c.l.b16 %v385
        %v647 = vunpack.c.h.b16 %v385
        %v648 = vunpack.c.l.b16 %v386
        %v649 = vunpack.c.h.b16 %v386
        %v650 = vunpack.c.l.b16 %v387
        %v651 = vunpack.c.h.b16 %v387
        %v652 = vunpack.c.l.b16 %v388
        %v653 = vunpack.c.h.b16 %v388
        %v654 = vunpack.c.l.b16 %v389
        %v655 = vunpack.c.h.b16 %v389
        %v656 = vunpack.c.l.b16 %v390
        %v657 = vunpack.c.h.b16 %v390
        %v658 = vunpack.c.l.b16 %v391
        %v659 = vunpack.c.h.b16 %v391
        %v660 = vunpack.c.l.b16 %v392
        %v661 = vunpack.c.h.b16 %v392
        %v662 = vunpack.c.l.b16 %v393
        %v663 = vunpack.c.h.b16 %v393
        %v664 = vunpack.c.l.b16 %v394
        %v665 = vunpack.c.h.b16 %v394
        %v666 = vunpack.c.l.b16 %v395
        %v667 = vunpack.c.h.b16 %v395
        %v668 = vunpack.c.l.b16 %v396
        %v669 = vunpack.c.h.b16 %v396
        %v670 = vunpack.c.l.b16 %v397
        %v671 = vunpack.c.h.b16 %v397
        %v672 = vunpack.c.l.b16 %v398
        %v673 = vunpack.c.h.b16 %v398
        %v674 = vunpack.c.l.b16 %v399
        %v675 = vunpack.c.h.b16 %v399
        %v676 = vunpack.c.l.b16 %v400
        %v677 = vunpack.c.h.b16 %v400
        %v678 = vunpack.c.l.b16 %v401
        %v679 = vunpack.c.h.b16 %v401
        %v680 = vunpack.c.l.b16 %v402
        %v681 = vunpack.c.h.b16 %v402
        %v682 = vunpack.c.l.b16 %v403
        %v683 = vunpack.c.h.b16 %v403
        %v684 = vunpack.c.l.b16 %v404
        %v685 = vunpack.c.h.b16 %v404
        %v686 = vunpack.c.l.b16 %v405
        %v687 = vunpack.c.h.b16 %v405
        %v688 = vunpack.c.l.b16 %v406
        %v689 = vunpack.c.h.b16 %v406
        %v690 = vunpack.c.l.b16 %v407
        %v691 = vunpack.c.h.b16 %v407
        %v692 = vunpack.c.l.b16 %v408
        %v693 = vunpack.c.h.b16 %v408
        %v694 = vunpack.c.l.b16 %v409
        %v695 = vunpack.c.h.b16 %v409
        %v696 = vunpack.c.l.b16 %v410
        %v697 = vunpack.c.h.b16 %v410
        %v698 = vunpack.c.l.b16 %v411
        %v699 = vunpack.c.h.b16 %v411
        %v700 = vunpack.c.l.b16 %v412
        %v701 = vunpack.c.h.b16 %v412
        %v702 = vunpack.c.l.b16 %v413
        %v703 = vunpack.c.h.b16 %v413
        %v704 = vunpack.c.l.b16 %v414
        %v705 = vunpack.c.h.b16 %v414
        %v706 = vunpack.c.l.b16 %v415
        %v707 = vunpack.c.h.b16 %v415
        %v708 = vunpack.c.l.b16 %v416
        %v709 = vunpack.c.h.b16 %v416
        %v710 = vunpack.c.l.b16 %v417
        %v711 = vunpack.c.h.b16 %v417
        %v712 = vunpack.c.l.b16 %v418
        %v713 = vunpack.c.h.b16 %v418
        %v714 = vunpack.c.l.b16 %v419
        %v715 = vunpack.c.h.b16 %v419
        %v716 = vunpack.c.l.b16 %v420
        %v717 = vunpack.c.h.b16 %v420
        %v718 = vunpack.c.l.b16 %v421
        %v719 = vunpack.c.h.b16 %v421
        %v720 = vunpack.c.l.b16 %v422
        %v721 = vunpack.c.h.b16 %v422
        %v722 = vunpack.c.l.b16 %v423
        %v723 = vunpack.c.h.b16 %v423
        %v724 = vunpack.c.l.b16 %v424
        %v725 = vunpack.c.h.b16 %v424
        %v726 = vunpack.c.l.b16 %v425
        %v727 = vunpack.c.h.b16 %v425
        %v728 = vunpack.c.l.b16 %v426
        %v729 = vunpack.c.h.b16 %v426
        %v730 = vunpack.c.l.b16 %v427
        %v731 = vunpack.c.h.b16 %v427
        %v732 = vpack.c.b16 %v544, %v540
        %v733 = vpack.c.b16 %v545, %v541
        %v734 = vpack.c.b16 %v546, %v542
        %v735 = vpack.c.b16 %v547, %v543
        %v736 = vpack.c.b16 %v552, %v548
        %v737 = vpack.c.b16 %v553, %v549
        %v738 = vpack.c.b16 %v554, %v550
        %v739 = vpack.c.b16 %v555, %v551
        %v740 = vpack.c.b16 %v560, %v556
        %v741 = vpack.c.b16 %v561, %v557
        %v742 = vpack.c.b16 %v562, %v558
        %v743 = vpack.c.b16 %v563, %v559
        %v744 = vpack.c.b16 %v568, %v564
        %v745 = vpack.c.b16 %v569, %v565
        %v746 = vpack.c.b16 %v570, %v566
        %v747 = vpack.c.b16 %v571, %v567
        %v748 = vpack.c.b16 %v576, %v572
        %v749 = vpack.c.b16 %v577, %v573
        %v750 = vpack.c.b16 %v578, %v574
        %v751 = vpack.c.b16 %v579, %v575
        %v752 = vpack.c.b16 %v584, %v580
        %v753 = vpack.c.b16 %v585, %v581
        %v754 = vpack.c.b16 %v586, %v582
        %v755 = vpack.c.b16 %v587, %v583
        %v756 = vpack.c.b16 %v592, %v588
        %v757 = vpack.c.b16 %v593, %v589
        %v758 = vpack.c.b16 %v594, %v590
        %v759 = vpack.c.b16 %v595, %v591
        %v760 = vpack.c.b16 %v600, %v596
        %v761 = vpack.c.b16 %v601, %v597
        %v762 = vpack.c.b16 %v602, %v598
        %v763 = vpack.c.b16 %v603, %v599
        %v764 = vpack.c.b16 %v608, %v604
        %v765 = vpack.c.b16 %v609, %v605
        %v766 = vpack.c.b16 %v610, %v606
        %v767 = vpack.c.b16 %v611, %v607
        %v768 = vpack.c.b16 %v616, %v612
        %v769 = vpack.c.b16 %v617, %v613
        %v770 = vpack.c.b16 %v618, %v614
        %v771 = vpack.c.b16 %v619, %v615
        %v772 = vpack.c.b16 %v624, %v620
        %v773 = vpack.c.b16 %v625, %v621
        %v774 = vpack.c.b16 %v626, %v622
        %v775 = vpack.c.b16 %v627, %v623
        %v776 = vpack.c.b16 %v632, %v628
        %v777 = vpack.c.b16 %v633, %v629
        %v778 = vpack.c.b16 %v634, %v630
        %v779 = vpack.c.b16 %v635, %v631
        %v780 = vpack.c.b16 %v640, %v636
        %v781 = vpack.c.b16 %v641, %v637
        %v782 = vpack.c.b16 %v642, %v638
        %v783 = vpack.c.b16 %v643, %v639
        %v784 = vpack.c.b16 %v648, %v644
        %v785 = vpack.c.b16 %v649, %v645
        %v786 = vpack.c.b16 %v650, %v646
        %v787 = vpack.c.b16 %v651, %v647
        %v788 = vpack.c.b16 %v656, %v652
        %v789 = vpack.c.b16 %v657, %v653
        %v790 = vpack.c.b16 %v658, %v654
        %v791 = vpack.c.b16 %v659, %v655
        %v792 = vpack.c.b16 %v664, %v660
        %v793 = vpack.c.b16 %v665, %v661
        %v794 = vpack.c.b16 %v666, %v662
        %v795 = vpack.c.b16 %v667, %v663
        %v796 = vpack.c.b16 %v672, %v668
        %v797 = vpack.c.b16 %v673, %v669
        %v798 = vpack.c.b16 %v674, %v670
        %v799 = vpack.c.b16 %v675, %v671
        %v800 = vpack.c.b16 %v680, %v676
        %v801 = vpack.c.b16 %v681, %v677
        %v802 = vpack.c.b16 %v682, %v678
        %v803 = vpack.c.b16 %v683, %v679
        %v804 = vpack.c.b16 %v688, %v684
        %v805 = vpack.c.b16 %v689, %v685
        %v806 = vpack.c.b16 %v690, %v686
        %v807 = vpack.c.b16 %v691, %v687
        %v808 = vpack.c.b16 %v696, %v692
        %v809 = vpack.c.b16 %v697, %v693
        %v810 = vpack.c.b16 %v698, %v694
        %v811 = vpack.c.b16 %v699, %v695
        %v812 = vpack.c.b16 %v704, %v700
        %v813 = vpack.c.b16 %v705, %v701
        %v814 = vpack.c.b16 %v706, %v702
        %v815 = vpack.c.b16 %v707, %v703
        %v816 = vpack.c.b16 %v712, %v708
        %v817 = vpack.c.b16 %v713, %v709
        %v818 = vpack.c.b16 %v714, %v710
        %v819 = vpack.c.b16 %v715, %v711
        %v820 = vpack.c.b16 %v720, %v716
        %v821 = vpack.c.b16 %v721, %v717
        %v822 = vpack.c.b16 %v722, %v718
        %v823 = vpack.c.b16 %v723, %v719
        %v824 = vpack.c.b16 %v728, %v724
        %v825 = vpack.c.b16 %v729, %v725
        %v826 = vpack.c.b16 %v730, %v726
        %v827 = vpack.c.b16 %v731, %v727
        %924 = vmatprep.subr.bf16.mxu0 %v761
        %925 = vmatpush1.bf16.msra.mxu0 %v760
        %926 = vmatprep.subr.bf16.mxu0 %v757
        %927 = vmatpush1.bf16.msra.mxu0 %v756
        %928 = vmatprep.subr.bf16.mxu0 %v753
        %929 = vmatpush1.bf16.msra.mxu0 %v752
        %930 = vmatprep.subr.bf16.mxu0 %v749
        %931 = vmatpush1.bf16.msra.mxu0 %v748
        %932 = vmatprep.subr.bf16.mxu0 %v745
        %933 = vmatpush1.bf16.msra.mxu0 %v744
        %934 = vmatprep.subr.bf16.mxu0 %v741
        %935 = vmatpush1.bf16.msra.mxu0 %v740
        %936 = vmatprep.subr.bf16.mxu0 %v737
        %937 = vmatpush1.bf16.msra.mxu0 %v736
        %938 = vmatprep.subr.bf16.mxu0 %v733
        %939 = vmatpush1.bf16.msra.mxu0 %v732
        %940 = vmatprep.subr.bf16.mxu0 %v793
        %941 = vmatpush2.bf16.msra.mxu0 %v792
        %942 = vmatprep.subr.bf16.mxu0 %v789
        %943 = vmatpush2.bf16.msra.mxu0 %v788
        %944 = vmatprep.subr.bf16.mxu0 %v785
        %945 = vmatpush2.bf16.msra.mxu0 %v784
        %946 = vmatprep.subr.bf16.mxu0 %v781
        %947 = vmatpush2.bf16.msra.mxu0 %v780
        %948 = vmatprep.subr.bf16.mxu0 %v777
        %949 = vmatpush2.bf16.msra.mxu0 %v776
        %950 = vmatprep.subr.bf16.mxu0 %v773
        %951 = vmatpush2.bf16.msra.mxu0 %v772
        %952 = vmatprep.subr.bf16.mxu0 %v769
        %953 = vmatpush2.bf16.msra.mxu0 %v768
        %954 = vmatprep.subr.bf16.mxu0 %v765
        %955 = vmatpush2.bf16.msra.mxu0 %v764
        %956 = vmatprep.mubr.bf16.mxu0 %v439
        %957 = vmatmul.mubr.bf16.gmra.mxu0 %v438
        %v958 = vpop.f32.mrf.mxu0
        %v959 = vadd.f32 0.0, %v958
        %v960 = vpop.f32.mrf.mxu0
        %v961 = vadd.f32 0.0, %v960
        %v962 = vpop.f32.mrf.mxu0
        %v963 = vadd.f32 0.0, %v962
        %v964 = vpop.f32.mrf.mxu0
        %v965 = vadd.f32 0.0, %v964
        %966 = vdwg.mxu0
        %967 = vmatprep.subr.bf16.mxu0 %v825
        %968 = vmatpush1.bf16.msra.mxu0 %v824
        %969 = vmatprep.subr.bf16.mxu0 %v821
        %970 = vmatpush1.bf16.msra.mxu0 %v820
        %971 = vmatprep.subr.bf16.mxu0 %v817
        %972 = vmatpush1.bf16.msra.mxu0 %v816
        %973 = vmatprep.subr.bf16.mxu0 %v813
        %974 = vmatpush1.bf16.msra.mxu0 %v812
        %975 = vmatprep.subr.bf16.mxu0 %v809
        %976 = vmatpush1.bf16.msra.mxu0 %v808
        %977 = vmatprep.subr.bf16.mxu0 %v805
        %978 = vmatpush1.bf16.msra.mxu0 %v804
        %979 = vmatprep.subr.bf16.mxu0 %v801
        %980 = vmatpush1.bf16.msra.mxu0 %v800
        %981 = vmatprep.subr.bf16.mxu0 %v797
        %982 = vmatpush1.bf16.msra.mxu0 %v796
        %983 = vmatprep.subr.bf16.mxu0 0
        %984 = vmatpush2.bf16.msra.mxu0 0
        %985 = vmatprep.subr.bf16.mxu0 0
        %986 = vmatpush2.bf16.msra.mxu0 0
        %987 = vmatprep.subr.bf16.mxu0 0
        %988 = vmatpush2.bf16.msra.mxu0 0
        %989 = vmatprep.subr.bf16.mxu0 0
        %990 = vmatpush2.bf16.msra.mxu0 0
        %991 = vmatprep.subr.bf16.mxu0 0
        %992 = vmatpush2.bf16.msra.mxu0 0
        %993 = vmatprep.subr.bf16.mxu0 0
        %994 = vmatpush2.bf16.msra.mxu0 0
        %995 = vmatprep.subr.bf16.mxu0 0
        %996 = vmatpush2.bf16.msra.mxu0 0
        %997 = vmatprep.subr.bf16.mxu0 0
        %998 = vmatpush2.bf16.msra.mxu0 0
        %999 = vmatprep.mubr.bf16.mxu0 0
        %1000 = vmatmul.mubr.bf16.gmra.mxu0 %v440
        %v1001 = vpop.f32.mrf.mxu0
        %v1002 = vadd.f32 %v959, %v1001
        %v1003 = vpop.f32.mrf.mxu0
        %v1004 = vadd.f32 %v961, %v1003
        %v1005 = vpop.f32.mrf.mxu0
        %v1006 = vadd.f32 %v963, %v1005
        %v1007 = vpop.f32.mrf.mxu0
        %v1008 = vadd.f32 %v965, %v1007
        %1009 = vdwg.mxu0
        %1010 = vmatprep.subr.bf16.mxu0 %v763
        %1011 = vmatpush1.bf16.msra.mxu0 %v762
        %1012 = vmatprep.subr.bf16.mxu0 %v759
        %1013 = vmatpush1.bf16.msra.mxu0 %v758
        %1014 = vmatprep.subr.bf16.mxu0 %v755
        %1015 = vmatpush1.bf16.msra.mxu0 %v754
        %1016 = vmatprep.subr.bf16.mxu0 %v751
        %1017 = vmatpush1.bf16.msra.mxu0 %v750
        %1018 = vmatprep.subr.bf16.mxu0 %v747
        %1019 = vmatpush1.bf16.msra.mxu0 %v746
        %1020 = vmatprep.subr.bf16.mxu0 %v743
        %1021 = vmatpush1.bf16.msra.mxu0 %v742
        %1022 = vmatprep.subr.bf16.mxu0 %v739
        %1023 = vmatpush1.bf16.msra.mxu0 %v738
        %1024 = vmatprep.subr.bf16.mxu0 %v735
        %1025 = vmatpush1.bf16.msra.mxu0 %v734
        %1026 = vmatprep.subr.bf16.mxu0 %v795
        %1027 = vmatpush2.bf16.msra.mxu0 %v794
        %1028 = vmatprep.subr.bf16.mxu0 %v791
        %1029 = vmatpush2.bf16.msra.mxu0 %v790
        %1030 = vmatprep.subr.bf16.mxu0 %v787
        %1031 = vmatpush2.bf16.msra.mxu0 %v786
        %1032 = vmatprep.subr.bf16.mxu0 %v783
        %1033 = vmatpush2.bf16.msra.mxu0 %v782
        %1034 = vmatprep.subr.bf16.mxu0 %v779
        %1035 = vmatpush2.bf16.msra.mxu0 %v778
        %1036 = vmatprep.subr.bf16.mxu0 %v775
        %1037 = vmatpush2.bf16.msra.mxu0 %v774
        %1038 = vmatprep.subr.bf16.mxu0 %v771
        %1039 = vmatpush2.bf16.msra.mxu0 %v770
        %1040 = vmatprep.subr.bf16.mxu0 %v767
        %1041 = vmatpush2.bf16.msra.mxu0 %v766
        %1042 = vmatprep.mubr.bf16.mxu0 %v439
        %1043 = vmatmul.mubr.bf16.gmra.mxu0 %v438
        %v1044 = vpop.f32.mrf.mxu0
        %v1045 = vadd.f32 0.0, %v1044
        %v1046 = vpop.f32.mrf.mxu0
        %v1047 = vadd.f32 0.0, %v1046
        %v1048 = vpop.f32.mrf.mxu0
        %v1049 = vadd.f32 0.0, %v1048
        %v1050 = vpop.f32.mrf.mxu0
        %v1051 = vadd.f32 0.0, %v1050
        %1052 = vdwg.mxu0
        %1053 = vmatprep.subr.bf16.mxu0 %v827
        %1054 = vmatpush1.bf16.msra.mxu0 %v826
        %1055 = vmatprep.subr.bf16.mxu0 %v823
        %1056 = vmatpush1.bf16.msra.mxu0 %v822
        %1057 = vmatprep.subr.bf16.mxu0 %v819
        %1058 = vmatpush1.bf16.msra.mxu0 %v818
        %1059 = vmatprep.subr.bf16.mxu0 %v815
        %1060 = vmatpush1.bf16.msra.mxu0 %v814
        %1061 = vmatprep.subr.bf16.mxu0 %v811
        %1062 = vmatpush1.bf16.msra.mxu0 %v810
        %1063 = vmatprep.subr.bf16.mxu0 %v807
        %1064 = vmatpush1.bf16.msra.mxu0 %v806
        %1065 = vmatprep.subr.bf16.mxu0 %v803
        %1066 = vmatpush1.bf16.msra.mxu0 %v802
        %1067 = vmatprep.subr.bf16.mxu0 %v799
        %1068 = vmatpush1.bf16.msra.mxu0 %v798
        %1069 = vmatprep.subr.bf16.mxu0 0
        %1070 = vmatpush2.bf16.msra.mxu0 0
        %1071 = vmatprep.subr.bf16.mxu0 0
        %1072 = vmatpush2.bf16.msra.mxu0 0
        %1073 = vmatprep.subr.bf16.mxu0 0
        %1074 = vmatpush2.bf16.msra.mxu0 0
        %1075 = vmatprep.subr.bf16.mxu0 0
        %1076 = vmatpush2.bf16.msra.mxu0 0
        %1077 = vmatprep.subr.bf16.mxu0 0
        %1078 = vmatpush2.bf16.msra.mxu0 0
        %1079 = vmatprep.subr.bf16.mxu0 0
        %1080 = vmatpush2.bf16.msra.mxu0 0
        %1081 = vmatprep.subr.bf16.mxu0 0
        %1082 = vmatpush2.bf16.msra.mxu0 0
        %1083 = vmatprep.subr.bf16.mxu0 0
        %1084 = vmatpush2.bf16.msra.mxu0 0
        %1085 = vmatprep.mubr.bf16.mxu0 0
        %1086 = vmatmul.mubr.bf16.gmra.mxu0 %v440
        %v1087 = vpop.f32.mrf.mxu0
        %v1088 = vadd.f32 %v1045, %v1087
        %v1089 = vpop.f32.mrf.mxu0
        %v1090 = vadd.f32 %v1047, %v1089
        %v1091 = vpop.f32.mrf.mxu0
        %v1092 = vadd.f32 %v1049, %v1091
        %v1093 = vpop.f32.mrf.mxu0
        %v1094 = vadd.f32 %v1051, %v1093
        %1095 = vdwg.mxu0
        %v1096 = vadd.f32 %v320, %v1002
        %v1097 = vadd.f32 %v321, %v1004
        %v1098 = vadd.f32 %v322, %v1088
        %v1099 = vadd.f32 %v323, %v1090
        %v1100 = vadd.f32 %v324, %v1006
        %v1101 = vadd.f32 %v325, %v1008
        %v1102 = vadd.f32 %v326, %v1092
        %v1103 = vadd.f32 %v327, %v1094
        %1104 = vst [vmem:[#allocation2] sm:$0xff] %v1096
        %1105 = vst [vmem:[#allocation2 + $0x8] sm:$0xff] %v1097
        %1106 = vst [vmem:[#allocation2 + $0x10] sm:$0xff] %v1098
        %1107 = vst [vmem:[#allocation2 + $0x18] sm:$0xff] %v1099
        %1108 = vst [vmem:[#allocation2 + $0x20] sm:$0xff] %v1100
        %1109 = vst [vmem:[#allocation2 + $0x28] sm:$0xff] %v1101
        %1110 = vst [vmem:[#allocation2 + $0x30] sm:$0xff] %v1102
        %1111 = vst [vmem:[#allocation2 + $0x38] sm:$0xff] %v1103
        %p1112 = scmp.eq.s32.totalorder %s21, 5
        // Predicated region
        $region63: #{cnn_model_forward.11} parent=53 // pred_check
          %p1113 = pneg %p1112
        $region64: #{cnn_model_forward.11} parent=53 // pred_check_branch
          %1115 = sbr.rel (%p1113) target = $region66
        $region65: #{cnn_model_forward.11} parent=53 // pred_region
          %v1116 = vld [vmem:[#allocation2] sm:$0xff]
          %v1117 = vld [vmem:[#allocation2 + $0x8] sm:$0xff]
          %v1118 = vld [vmem:[#allocation2 + $0x10] sm:$0xff]
          %v1119 = vld [vmem:[#allocation2 + $0x18] sm:$0xff]
          %v1120 = vld [vmem:[#allocation2 + $0x20] sm:$0xff]
          %v1121 = vld [vmem:[#allocation2 + $0x28] sm:$0xff]
          %v1122 = vld [vmem:[#allocation2 + $0x30] sm:$0xff]
          %v1123 = vld [vmem:[#allocation2 + $0x38] sm:$0xff]
          %v1124 = vld [vmem:[%s293] sm:$0xf]
          %v1126 = vlaneseq
          %v1127 = vshrl.u32 %v1126, 7
          %v1128 = vsub.s32 0, %v1127
          %v1129 = vrot.slane %v1124, %v1128
          %v1130 = vlaneseq
          %v1131 = vshrl.u32 %v1130, 7
          %v1132 = vsub.s32 1, %v1131
          %v1133 = vrot.slane %v1124, %v1132
          %v1134 = vlaneseq
          %v1135 = vshrl.u32 %v1134, 7
          %v1136 = vsub.s32 2, %v1135
          %v1137 = vrot.slane %v1124, %v1136
          %v1138 = vlaneseq
          %v1139 = vshrl.u32 %v1138, 7
          %v1140 = vsub.s32 3, %v1139
          %v1141 = vrot.slane %v1124, %v1140
          %v1146 = vadd.f32 %v1116, %v1129
          %v1147 = vadd.f32 %v1117, %v1133
          %v1148 = vadd.f32 %v1118, %v1137
          %v1149 = vadd.f32 %v1119, %v1141
          %v1150 = vadd.f32 %v1120, %v1129
          %v1151 = vadd.f32 %v1121, %v1133
          %v1152 = vadd.f32 %v1122, %v1137
          %v1153 = vadd.f32 %v1123, %v1141
          %v1154 = vmax.f32 %v1146, 0.0
          %v1155 = vmax.f32 %v1147, 0.0
          %v1156 = vmax.f32 %v1148, 0.0
          %v1157 = vmax.f32 %v1149, 0.0
          %v1158 = vmax.f32 %v1150, 0.0
          %v1159 = vmax.f32 %v1151, 0.0
          %v1160 = vmax.f32 %v1152, 0.0
          %v1161 = vmax.f32 %v1153, 0.0
          %1162 = vst [vmem:[%s304] sm:$0xff] %v1154
          %1163 = vst [vmem:[%s304 + $0x8] sm:$0xff] %v1155
          %1164 = vst [vmem:[%s304 + $0x10] sm:$0xff] %v1156
          %1165 = vst [vmem:[%s304 + $0x18] sm:$0xff] %v1157
          %1166 = vst [vmem:[%s304 + $0x20] sm:$0xff] %v1158
          %1167 = vst [vmem:[%s304 + $0x28] sm:$0xff] %v1159
          %1168 = vst [vmem:[%s304 + $0x30] sm:$0xff] %v1160
          %1169 = vst [vmem:[%s304 + $0x38] sm:$0xff] %v1161
        $region66: #{cnn_model_forward.11} parent=53 // pred_fallthru
          _
        %s1170 = smul.u32 2, %s19
        %s1171 = smul.u32 4, %s20
        %p1172 = scmp.lt.s32.totalorder %s1170, 1
        %s1173 = scalar_select %p1172, %s1170, 1
        %p1174 = scmp.lt.s32.totalorder %s1171, 3
        %s1175 = scalar_select %p1174, %s1171, 3
        %s1176 = smul.addr %s1173, 4
        %s1177 = sadd.s32 %s1175, %s1176
        %s1178 = smul.addr %s1177, 8
        %s1179 = scalar_lea.vmem %s3, %s1178
        // Predicated region
        $region67: #{cnn_model_forward.11} parent=53 // pred_check
          %p1180 = pneg %p135
        $region68: #{cnn_model_forward.11} parent=53 // pred_check_branch
          %1182 = sbr.rel (%p1180) target = $region70
        $region69: #{cnn_model_forward.11} parent=53 // pred_region
          %s1183 = smul.u32 2, %s19
          %s1184 = smul.u32 4, %s20
        $region70: #{cnn_model_forward.11} parent=53 // pred_fallthru
          _
        // Predicated region
        $region71: #{cnn_model_forward.11} parent=53 // pred_check
          %p1185 = pneg %p135
        $region72: #{cnn_model_forward.11} parent=53 // pred_check_branch
          %1187 = sbr.rel (%p1185) target = $region74
        $region73: #{cnn_model_forward.11} parent=53 // pred_region
          %s1188 = smul.u32 2, %s19
          %s1189 = smul.u32 4, %s20
          %p1190 = scmp.lt.s32.totalorder %s1188, 1
          %s1191 = scalar_select %p1190, %s1188, 1
          %p1192 = scmp.lt.s32.totalorder %s1189, 3
          %s1193 = scalar_select %p1192, %s1189, 3
          %s1194 = smul.addr %s1191, 4
          %s1195 = sadd.s32 %s1193, %s1194
          %s1196 = smul.addr %s1195, 8
          %s1197 = scalar_lea.vmem %s3, %s1196
        $region74: #{cnn_model_forward.11} parent=53 // pred_fallthru
          _
      $region54: #{cnn_model_forward.11} parent=5 // pred_fallthru
        _
      %p1198 = scmp.le.s32.totalorder 2, %s9
      // Predicated region
      $region75: #{cnn_model_forward.11} parent=5 // pred_check
        %p1199 = pneg %p1198
      $region76: #{cnn_model_forward.11} parent=5 // pred_check_branch
        %1201 = sbr.rel (%p1199) target = $region78
      $region77: #{cnn_model_forward.11} parent=5 // pred_region
        %s1202 = ssub.s32 %s9, 2
      $region78: #{cnn_model_forward.11} parent=5 // pred_fallthru
        _
    $region6: #{cnn_model_forward.11} parent=1 // loop_footer
      %s13 = sadd.s32 1, %s9
    $region7: #{cnn_model_forward.11} parent=1 // loop_footer_branch
      %8 = sbr.rel target = $region3
    $region8: #{cnn_model_forward.11} parent=1 // loop_exit
      _

// kernel: cnn_model_forward.12
$region0: #{cnn_model_forward.12}
  #allocation0 [shape = 'u32[]', space=smem, size = 0x4, offset = 0x4, fixed_abs, tag = 'smem constant byte address 0x4 - core index']
  #allocation1 [shape = 'u32[144,128]{1,0:T(1,128)}', space=vmem, size = 0x12000, scoped, tag = 'internal scratch']
  #allocation2 [shape = 'f32[16,512]{1,0:T(8,128)}', space=vmem, size = 0x8000, scoped, tag = 'scratch operand']
  %s0 = inlined_call_operand.vmem [shape: bf16[16,2048], index: 0, kind: input, shape index: {}]
  %s1 = inlined_call_operand.vmem [shape: bf16[2048,1024], index: 1, kind: input, shape index: {}]
  %s2 = inlined_call_operand.vmem [shape: f32[1,1024], index: 2, kind: input, shape index: {}]
  %s3 = inlined_call_operand.vmem [shape: f32[16,1024], index: 3, kind: output, shape index: {}]
  %s4 = sld [smem:[#allocation0]]
  $region118: #{cnn_model_forward.12} parent=0
    _
  %s6 = ssub.s32 1, %s4
  %s7 = scalar_select 0, %s6, %s4
  $region1: #{cnn_model_forward.12} parent=0
    #allocation3 [shape = 'u8[32768]{0}', space=vmem, size = 0x8000, scoped, tag = 'input window, operand 0']
    #allocation4 [shape = 'u8[1048576]{0}', space=vmem, size = 0x100000, scoped, tag = 'input window, operand 1']
    #allocation5 [shape = 'u8[65536]{0}', space=vmem, size = 0x10000, scoped, tag = 'output window, operand 0']
    loop: start=0, step=1, limit=10
    $region2: #{cnn_model_forward.12} parent=1 // loop_pre_header
      _
    $region3: #{cnn_model_forward.12} parent=1 // loop_header
      %s9 = sphi 0, %s13
      %p10 = scmp.ge.s32.totalorder %s9, 10
      %s16 = sphi 0, %s35
      %s17 = sphi 0, %s31
      %s18 = sphi 0, %s27
      %s19 = sphi 0, %s16
      %s20 = sphi 0, %s17
      %s21 = sphi 0, %s18
      %s22 = sphi 0, %s19
      %s23 = sphi 0, %s20
      %s24 = sphi 0, %s21
      %s40 = sphi 0, %s42
      %s43 = sphi 0, %s40
      %s44 = sphi 0, %s43
      %s60 = sphi 0, %s44
      %s68 = sphi 0, %s70
      %s71 = sphi 0, %s68
      %s72 = sphi 0, %s71
      %s88 = sphi 0, %s72
      %s94 = sphi 0, %s96
      %s97 = sphi 0, %s94
      %s98 = sphi 0, %s97
      %s114 = sphi 0, %s98
      %s122 = sphi 0, %s124
      %s125 = sphi 0, %s122
      %s126 = sphi 0, %s125
      %s142 = sphi 0, %s126
    $region4: #{cnn_model_forward.12} parent=1 // loop_header_branch
      %12 = sbr.rel (%p10) target = $region8
    $region5: #{cnn_model_forward.12} parent=1 // loop_body
      %s14 = ssub.s32 %s9, 1
      %s15 = ssub.s32 %s9, 2
      %s25 = sadd.s32 1, %s18
      %p26 = scmp.ge.s32.totalorder %s25, 4
      %s27 = scalar_select %p26, 0, %s25
      %s28 = sadd.s32 1, %s17
      %s29 = scalar_select %p26, %s28, %s17
      %p30 = scmp.ge.s32.totalorder %s29, 2
      %s31 = scalar_select %p30, 0, %s29
      %s32 = sadd.s32 1, %s16
      %s33 = scalar_select %p30, %s32, %s16
      %p34 = scmp.ge.s32.totalorder %s33, 1
      %s35 = scalar_select %p34, 0, %s33
      %s36 = ssub.s32 %s16, %s35
      %s37 = ssub.s32 %s18, %s27
      %s38 = sor.u32 %s36, %s37
      %p39 = scmp.eq.s32.totalorder %s38, 0
      %s41 = sadd.s32 %s40, 1
      %s42 = scalar_select %p39, %s40, %s41
      %p45 = pneg %p39
      %p46 = scmp.eq.s32.totalorder %s9, 7
      %p47 = por %p45, %p46
      %p48 = scmp.ne.s32.totalorder %s40, %s43
      %p49 = scmp.eq.s32.totalorder %s9, 0
      %p50 = por %p48, %p49
      %p51 = scmp.ne.s32.totalorder %s40, %s43
      %p52 = scmp.eq.s32.totalorder %s14, 7
      %p53 = por %p51, %p52
      %p54 = scmp.ne.s32.totalorder %s43, %s44
      %p55 = scmp.eq.s32.totalorder %s14, 0
      %p56 = por %p54, %p55
      %p57 = scmp.ne.s32.totalorder %s43, %s44
      %p58 = scmp.eq.s32.totalorder %s15, 7
      %p59 = por %p57, %p58
      %p61 = scmp.ne.s32.totalorder %s44, %s60
      %p62 = scmp.eq.s32.totalorder %s15, 0
      %p63 = por %p61, %p62
      %s64 = ssub.s32 %s18, %s27
      %s65 = ssub.s32 %s17, %s31
      %s66 = sor.u32 %s64, %s65
      %p67 = scmp.eq.s32.totalorder %s66, 0
      %s69 = sadd.s32 %s68, 1
      %s70 = scalar_select %p67, %s68, %s69
      %p73 = pneg %p67
      %p74 = scmp.eq.s32.totalorder %s9, 7
      %p75 = por %p73, %p74
      %p76 = scmp.ne.s32.totalorder %s68, %s71
      %p77 = scmp.eq.s32.totalorder %s9, 0
      %p78 = por %p76, %p77
      %p79 = scmp.ne.s32.totalorder %s68, %s71
      %p80 = scmp.eq.s32.totalorder %s14, 7
      %p81 = por %p79, %p80
      %p82 = scmp.ne.s32.totalorder %s71, %s72
      %p83 = scmp.eq.s32.totalorder %s14, 0
      %p84 = por %p82, %p83
      %p85 = scmp.ne.s32.totalorder %s71, %s72
      %p86 = scmp.eq.s32.totalorder %s15, 7
      %p87 = por %p85, %p86
      %p89 = scmp.ne.s32.totalorder %s72, %s88
      %p90 = scmp.eq.s32.totalorder %s15, 0
      %p91 = por %p89, %p90
      %s92 = ssub.s32 %s17, %s31
      %p93 = scmp.eq.s32.totalorder %s92, 0
      %s95 = sadd.s32 %s94, 1
      %s96 = scalar_select %p93, %s94, %s95
      %p99 = pneg %p93
      %p100 = scmp.eq.s32.totalorder %s9, 7
      %p101 = por %p99, %p100
      %p102 = scmp.ne.s32.totalorder %s94, %s97
      %p103 = scmp.eq.s32.totalorder %s9, 0
      %p104 = por %p102, %p103
      %p105 = scmp.ne.s32.totalorder %s94, %s97
      %p106 = scmp.eq.s32.totalorder %s14, 7
      %p107 = por %p105, %p106
      %p108 = scmp.ne.s32.totalorder %s97, %s98
      %p109 = scmp.eq.s32.totalorder %s14, 0
      %p110 = por %p108, %p109
      %p111 = scmp.ne.s32.totalorder %s97, %s98
      %p112 = scmp.eq.s32.totalorder %s15, 7
      %p113 = por %p111, %p112
      %p115 = scmp.ne.s32.totalorder %s98, %s114
      %p116 = scmp.eq.s32.totalorder %s15, 0
      %p117 = por %p115, %p116
      %s118 = ssub.s32 %s16, %s35
      %s119 = ssub.s32 %s17, %s31
      %s120 = sor.u32 %s118, %s119
      %p121 = scmp.eq.s32.totalorder %s120, 0
      %s123 = sadd.s32 %s122, 1
      %s124 = scalar_select %p121, %s122, %s123
      %p127 = pneg %p121
      %p128 = scmp.eq.s32.totalorder %s9, 7
      %p129 = por %p127, %p128
      %p130 = scmp.ne.s32.totalorder %s122, %s125
      %p131 = scmp.eq.s32.totalorder %s9, 0
      %p132 = por %p130, %p131
      %p133 = scmp.ne.s32.totalorder %s122, %s125
      %p134 = scmp.eq.s32.totalorder %s14, 7
      %p135 = por %p133, %p134
      %p136 = scmp.ne.s32.totalorder %s125, %s126
      %p137 = scmp.eq.s32.totalorder %s14, 0
      %p138 = por %p136, %p137
      %p139 = scmp.ne.s32.totalorder %s125, %s126
      %p140 = scmp.eq.s32.totalorder %s15, 7
      %p141 = por %p139, %p140
      %p143 = scmp.ne.s32.totalorder %s126, %s142
      %p144 = scmp.eq.s32.totalorder %s15, 0
      %p145 = por %p143, %p144
      %p146 = scmp.le.s32.totalorder 1, %s9
      %p147 = scmp.lt.s32.totalorder %s9, 9
      %p148 = pnand %p146, %p147
      %p149 = pneg %p148
      // Predicated region
      $region9: #{cnn_model_forward.12} parent=5 // pred_check
        _
      $region10: #{cnn_model_forward.12} parent=5 // pred_check_branch
        %151 = sbr.rel (%p148) target = $region12
      $region11: #{cnn_model_forward.12} parent=5 // pred_region
        %s152 = ssub.s32 %s9, 1
      $region12: #{cnn_model_forward.12} parent=5 // pred_fallthru
        _
      %p153 = scmp.lt.s32.totalorder %s9, 8
      // Predicated region
      $region13: #{cnn_model_forward.12} parent=5 // pred_check
        %p154 = pneg %p153
      $region14: #{cnn_model_forward.12} parent=5 // pred_check_branch
        %156 = sbr.rel (%p154) target = $region16
      $region15: #{cnn_model_forward.12} parent=5 // pred_region
        // Predicated region
        $region17: #{cnn_model_forward.12} parent=15 // pred_check
          %p157 = pneg %p50
        $region18: #{cnn_model_forward.12} parent=15 // pred_check_branch
          %159 = sbr.rel (%p157) target = $region20
        $region19: #{cnn_model_forward.12} parent=15 // pred_region
          %s160 = sand.u32 %s40, 1
          %s161 = sand.u32 %s40, 1
          %s162 = smul.addr %s161, 32
          %s163 = scalar_lea.vmem [#allocation3], %s162
          %s164 = smul.u32 2, %s16
          %s165 = smul.u32 4, %s18
          %s166 = smul.addr %s164, 16
          %s167 = sadd.s32 %s165, %s166
          %s168 = smul.addr %s167, 4
          %s169 = scalar_lea.vmem %s0, %s168
          // Predicated region
          $region21: #{cnn_model_forward.12} parent=19 // pred_check
            _
          $region22: #{cnn_model_forward.12} parent=19 // pred_check_branch
            %171 = sbr.rel (0) target = $region24
          $region23: #{cnn_model_forward.12} parent=19 // pred_region
            // Predicated region
            $region25: #{cnn_model_forward.12} parent=23 // pred_check
              _
            $region26: #{cnn_model_forward.12} parent=23 // pred_check_branch
              %173 = sbr.rel (0) target = $region28
            $region27: #{cnn_model_forward.12} parent=23 // pred_region
              loop: start=0, step=1, limit=1
              $region29: #{cnn_model_forward.12} parent=27 // loop_pre_header
                _
              $region30: #{cnn_model_forward.12} parent=27 // loop_header
                %s175 = sphi 0, %s179
                %p176 = scmp.ge.s32.totalorder %s175, 1
                %s180 = sphi %s169, %s169
                %s181 = sphi %s163, %s163
              $region31: #{cnn_model_forward.12} parent=27 // loop_header_branch
                %178 = sbr.rel (%p176) target = $region35
              $region32: #{cnn_model_forward.12} parent=27 // loop_body
                %v182 = vld [vmem:[%s180] sm:$0xff]
                %183 = vst [vmem:[%s181] sm:$0xff] %v182
                %v184 = vld [vmem:[%s180 + $0x8] sm:$0xff]
                %185 = vst [vmem:[%s181 + $0x8] sm:$0xff] %v184
                %v186 = vld [vmem:[%s180 + $0x40] sm:$0xff]
                %187 = vst [vmem:[%s181 + $0x10] sm:$0xff] %v186
                %v188 = vld [vmem:[%s180 + $0x48] sm:$0xff]
                %189 = vst [vmem:[%s181 + $0x18] sm:$0xff] %v188
              $region33: #{cnn_model_forward.12} parent=27 // loop_footer
                %s179 = sadd.s32 1, %s175
              $region34: #{cnn_model_forward.12} parent=27 // loop_footer_branch
                %174 = sbr.rel target = $region30
              $region35: #{cnn_model_forward.12} parent=27 // loop_exit
                _
            $region28: #{cnn_model_forward.12} parent=23 // pred_fallthru
              _
            // Predicated region
            $region36: #{cnn_model_forward.12} parent=23 // pred_check
              _
            $region37: #{cnn_model_forward.12} parent=23 // pred_check_branch
              %191 = sbr.rel target = $region39
            $region38: #{cnn_model_forward.12} parent=23 // pred_region
              _
            $region39: #{cnn_model_forward.12} parent=23 // pred_fallthru
              _
          $region24: #{cnn_model_forward.12} parent=19 // pred_fallthru
            _
          %192 = vnop
        $region20: #{cnn_model_forward.12} parent=15 // pred_fallthru
          _
        // Predicated region
        $region40: #{cnn_model_forward.12} parent=15 // pred_check
          %p193 = pneg %p78
        $region41: #{cnn_model_forward.12} parent=15 // pred_check_branch
          %195 = sbr.rel (%p193) target = $region43
        $region42: #{cnn_model_forward.12} parent=15 // pred_region
          %s196 = sand.u32 %s68, 1
          %s197 = sand.u32 %s68, 1
          %s198 = smul.addr %s197, 1024
          %s199 = scalar_lea.vmem [#allocation4], %s198
          %s200 = smul.u32 64, %s18
          %s201 = smul.u32 4, %s17
          %s202 = smul.addr %s200, 8
          %s203 = sadd.s32 %s201, %s202
          %s204 = smul.addr %s203, 4
          %s205 = scalar_lea.vmem %s1, %s204
          // Predicated region
          $region44: #{cnn_model_forward.12} parent=42 // pred_check
            _
          $region45: #{cnn_model_forward.12} parent=42 // pred_check_branch
            %207 = sbr.rel (0) target = $region47
          $region46: #{cnn_model_forward.12} parent=42 // pred_region
            // Predicated region
            $region48: #{cnn_model_forward.12} parent=46 // pred_check
              _
            $region49: #{cnn_model_forward.12} parent=46 // pred_check_branch
              %209 = sbr.rel (0) target = $region51
            $region50: #{cnn_model_forward.12} parent=46 // pred_region
              loop: start=0, step=1, limit=1
              $region52: #{cnn_model_forward.12} parent=50 // loop_pre_header
                _
              $region53: #{cnn_model_forward.12} parent=50 // loop_header
                %s211 = sphi 0, %s215
                %p212 = scmp.ge.s32.totalorder %s211, 1
                %s216 = sphi %s205, %s205
                %s217 = sphi %s199, %s199
              $region54: #{cnn_model_forward.12} parent=50 // loop_header_branch
                %214 = sbr.rel (%p212) target = $region58
              $region55: #{cnn_model_forward.12} parent=50 // loop_body
                %v218 = vld [vmem:[%s216] sm:$0xff]
                %219 = vst [vmem:[%s217] sm:$0xff] %v218
                %v220 = vld [vmem:[%s216 + $0x8] sm:$0xff]
                %221 = vst [vmem:[%s217 + $0x8] sm:$0xff] %v220
                %v222 = vld [vmem:[%s216 + $0x20] sm:$0xff]
                %223 = vst [vmem:[%s217 + $0x10] sm:$0xff] %v222
                %v224 = vld [vmem:[%s216 + $0x28] sm:$0xff]
                %225 = vst [vmem:[%s217 + $0x18] sm:$0xff] %v224
                %v226 = vld [vmem:[%s216 + $0x40] sm:$0xff]
                %227 = vst [vmem:[%s217 + $0x20] sm:$0xff] %v226
                %v228 = vld [vmem:[%s216 + $0x48] sm:$0xff]
                %229 = vst [vmem:[%s217 + $0x28] sm:$0xff] %v228
                %v230 = vld [vmem:[%s216 + $0x60] sm:$0xff]
                %231 = vst [vmem:[%s217 + $0x30] sm:$0xff] %v230
                %v232 = vld [vmem:[%s216 + $0x68] sm:$0xff]
                %233 = vst [vmem:[%s217 + $0x38] sm:$0xff] %v232
                %v234 = vld [vmem:[%s216 + $0x80] sm:$0xff]
                %235 = vst [vmem:[%s217 + $0x40] sm:$0xff] %v234
                %v236 = vld [vmem:[%s216 + $0x88] sm:$0xff]
                %237 = vst [vmem:[%s217 + $0x48] sm:$0xff] %v236
                %v238 = vld [vmem:[%s216 + $0xa0] sm:$0xff]
                %239 = vst [vmem:[%s217 + $0x50] sm:$0xff] %v238
                %v240 = vld [vmem:[%s216 + $0xa8] sm:$0xff]
                %241 = vst [vmem:[%s217 + $0x58] sm:$0xff] %v240
                %v242 = vld [vmem:[%s216 + $0xc0] sm:$0xff]
                %243 = vst [vmem:[%s217 + $0x60] sm:$0xff] %v242
                %v244 = vld [vmem:[%s216 + $0xc8] sm:$0xff]
                %245 = vst [vmem:[%s217 + $0x68] sm:$0xff] %v244
                %v246 = vld [vmem:[%s216 + $0xe0] sm:$0xff]
                %247 = vst [vmem:[%s217 + $0x70] sm:$0xff] %v246
                %v248 = vld [vmem:[%s216 + $0xe8] sm:$0xff]
                %249 = vst [vmem:[%s217 + $0x78] sm:$0xff] %v248
                %v250 = vld [vmem:[%s216 + $0x100] sm:$0xff]
                %251 = vst [vmem:[%s217 + $0x80] sm:$0xff] %v250
                %v252 = vld [vmem:[%s216 + $0x108] sm:$0xff]
                %253 = vst [vmem:[%s217 + $0x88] sm:$0xff] %v252
                %v254 = vld [vmem:[%s216 + $0x120] sm:$0xff]
                %255 = vst [vmem:[%s217 + $0x90] sm:$0xff] %v254
                %v256 = vld [vmem:[%s216 + $0x128] sm:$0xff]
                %257 = vst [vmem:[%s217 + $0x98] sm:$0xff] %v256
                %v258 = vld [vmem:[%s216 + $0x140] sm:$0xff]
                %259 = vst [vmem:[%s217 + $0xa0] sm:$0xff] %v258
                %v260 = vld [vmem:[%s216 + $0x148] sm:$0xff]
                %261 = vst [vmem:[%s217 + $0xa8] sm:$0xff] %v260
                %v262 = vld [vmem:[%s216 + $0x160] sm:$0xff]
                %263 = vst [vmem:[%s217 + $0xb0] sm:$0xff] %v262
                %v264 = vld [vmem:[%s216 + $0x168] sm:$0xff]
                %265 = vst [vmem:[%s217 + $0xb8] sm:$0xff] %v264
                %v266 = vld [vmem:[%s216 + $0x180] sm:$0xff]
                %267 = vst [vmem:[%s217 + $0xc0] sm:$0xff] %v266
                %v268 = vld [vmem:[%s216 + $0x188] sm:$0xff]
                %269 = vst [vmem:[%s217 + $0xc8] sm:$0xff] %v268
                %v270 = vld [vmem:[%s216 + $0x1a0] sm:$0xff]
                %271 = vst [vmem:[%s217 + $0xd0] sm:$0xff] %v270
                %v272 = vld [vmem:[%s216 + $0x1a8] sm:$0xff]
                %273 = vst [vmem:[%s217 + $0xd8] sm:$0xff] %v272
                %v274 = vld [vmem:[%s216 + $0x1c0] sm:$0xff]
                %275 = vst [vmem:[%s217 + $0xe0] sm:$0xff] %v274
                %v276 = vld [vmem:[%s216 + $0x1c8] sm:$0xff]
                %277 = vst [vmem:[%s217 + $0xe8] sm:$0xff] %v276
                %v278 = vld [vmem:[%s216 + $0x1e0] sm:$0xff]
                %279 = vst [vmem:[%s217 + $0xf0] sm:$0xff] %v278
                %v280 = vld [vmem:[%s216 + $0x1e8] sm:$0xff]
                %281 = vst [vmem:[%s217 + $0xf8] sm:$0xff] %v280
                %v282 = vld [vmem:[%s216 + $0x200] sm:$0xff]
                %283 = vst [vmem:[%s217 + $0x100] sm:$0xff] %v282
                %v284 = vld [vmem:[%s216 + $0x208] sm:$0xff]
                %285 = vst [vmem:[%s217 + $0x108] sm:$0xff] %v284
                %v286 = vld [vmem:[%s216 + $0x220] sm:$0xff]
                %287 = vst [vmem:[%s217 + $0x110] sm:$0xff] %v286
                %v288 = vld [vmem:[%s216 + $0x228] sm:$0xff]
                %289 = vst [vmem:[%s217 + $0x118] sm:$0xff] %v288
                %v290 = vld [vmem:[%s216 + $0x240] sm:$0xff]
                %291 = vst [vmem:[%s217 + $0x120] sm:$0xff] %v290
                %v292 = vld [vmem:[%s216 + $0x248] sm:$0xff]
                %293 = vst [vmem:[%s217 + $0x128] sm:$0xff] %v292
                %v294 = vld [vmem:[%s216 + $0x260] sm:$0xff]
                %295 = vst [vmem:[%s217 + $0x130] sm:$0xff] %v294
                %v296 = vld [vmem:[%s216 + $0x268] sm:$0xff]
                %297 = vst [vmem:[%s217 + $0x138] sm:$0xff] %v296
                %v298 = vld [vmem:[%s216 + $0x280] sm:$0xff]
                %299 = vst [vmem:[%s217 + $0x140] sm:$0xff] %v298
                %v300 = vld [vmem:[%s216 + $0x288] sm:$0xff]
                %301 = vst [vmem:[%s217 + $0x148] sm:$0xff] %v300
                %v302 = vld [vmem:[%s216 + $0x2a0] sm:$0xff]
                %303 = vst [vmem:[%s217 + $0x150] sm:$0xff] %v302
                %v304 = vld [vmem:[%s216 + $0x2a8] sm:$0xff]
                %305 = vst [vmem:[%s217 + $0x158] sm:$0xff] %v304
                %v306 = vld [vmem:[%s216 + $0x2c0] sm:$0xff]
                %307 = vst [vmem:[%s217 + $0x160] sm:$0xff] %v306
                %v308 = vld [vmem:[%s216 + $0x2c8] sm:$0xff]
                %309 = vst [vmem:[%s217 + $0x168] sm:$0xff] %v308
                %v310 = vld [vmem:[%s216 + $0x2e0] sm:$0xff]
                %311 = vst [vmem:[%s217 + $0x170] sm:$0xff] %v310
                %v312 = vld [vmem:[%s216 + $0x2e8] sm:$0xff]
                %313 = vst [vmem:[%s217 + $0x178] sm:$0xff] %v312
                %v314 = vld [vmem:[%s216 + $0x300] sm:$0xff]
                %315 = vst [vmem:[%s217 + $0x180] sm:$0xff] %v314
                %v316 = vld [vmem:[%s216 + $0x308] sm:$0xff]
                %317 = vst [vmem:[%s217 + $0x188] sm:$0xff] %v316
                %v318 = vld [vmem:[%s216 + $0x320] sm:$0xff]
                %319 = vst [vmem:[%s217 + $0x190] sm:$0xff] %v318
                %v320 = vld [vmem:[%s216 + $0x328] sm:$0xff]
                %321 = vst [vmem:[%s217 + $0x198] sm:$0xff] %v320
                %v322 = vld [vmem:[%s216 + $0x340] sm:$0xff]
                %323 = vst [vmem:[%s217 + $0x1a0] sm:$0xff] %v322
                %v324 = vld [vmem:[%s216 + $0x348] sm:$0xff]
                %325 = vst [vmem:[%s217 + $0x1a8] sm:$0xff] %v324
                %v326 = vld [vmem:[%s216 + $0x360] sm:$0xff]
                %327 = vst [vmem:[%s217 + $0x1b0] sm:$0xff] %v326
                %v328 = vld [vmem:[%s216 + $0x368] sm:$0xff]
                %329 = vst [vmem:[%s217 + $0x1b8] sm:$0xff] %v328
                %v330 = vld [vmem:[%s216 + $0x380] sm:$0xff]
                %331 = vst [vmem:[%s217 + $0x1c0] sm:$0xff] %v330
                %v332 = vld [vmem:[%s216 + $0x388] sm:$0xff]
                %333 = vst [vmem:[%s217 + $0x1c8] sm:$0xff] %v332
                %v334 = vld [vmem:[%s216 + $0x3a0] sm:$0xff]
                %335 = vst [vmem:[%s217 + $0x1d0] sm:$0xff] %v334
                %v336 = vld [vmem:[%s216 + $0x3a8] sm:$0xff]
                %337 = vst [vmem:[%s217 + $0x1d8] sm:$0xff] %v336
                %v338 = vld [vmem:[%s216 + $0x3c0] sm:$0xff]
                %339 = vst [vmem:[%s217 + $0x1e0] sm:$0xff] %v338
                %v340 = vld [vmem:[%s216 + $0x3c8] sm:$0xff]
                %341 = vst [vmem:[%s217 + $0x1e8] sm:$0xff] %v340
                %v342 = vld [vmem:[%s216 + $0x3e0] sm:$0xff]
                %343 = vst [vmem:[%s217 + $0x1f0] sm:$0xff] %v342
                %v344 = vld [vmem:[%s216 + $0x3e8] sm:$0xff]
                %345 = vst [vmem:[%s217 + $0x1f8] sm:$0xff] %v344
                %v346 = vld [vmem:[%s216 + $0x400] sm:$0xff]
                %347 = vst [vmem:[%s217 + $0x200] sm:$0xff] %v346
                %v348 = vld [vmem:[%s216 + $0x408] sm:$0xff]
                %349 = vst [vmem:[%s217 + $0x208] sm:$0xff] %v348
                %v350 = vld [vmem:[%s216 + $0x420] sm:$0xff]
                %351 = vst [vmem:[%s217 + $0x210] sm:$0xff] %v350
                %v352 = vld [vmem:[%s216 + $0x428] sm:$0xff]
                %353 = vst [vmem:[%s217 + $0x218] sm:$0xff] %v352
                %v354 = vld [vmem:[%s216 + $0x440] sm:$0xff]
                %355 = vst [vmem:[%s217 + $0x220] sm:$0xff] %v354
                %v356 = vld [vmem:[%s216 + $0x448] sm:$0xff]
                %357 = vst [vmem:[%s217 + $0x228] sm:$0xff] %v356
                %v358 = vld [vmem:[%s216 + $0x460] sm:$0xff]
                %359 = vst [vmem:[%s217 + $0x230] sm:$0xff] %v358
                %v360 = vld [vmem:[%s216 + $0x468] sm:$0xff]
                %361 = vst [vmem:[%s217 + $0x238] sm:$0xff] %v360
                %v362 = vld [vmem:[%s216 + $0x480] sm:$0xff]
                %363 = vst [vmem:[%s217 + $0x240] sm:$0xff] %v362
                %v364 = vld [vmem:[%s216 + $0x488] sm:$0xff]
                %365 = vst [vmem:[%s217 + $0x248] sm:$0xff] %v364
                %v366 = vld [vmem:[%s216 + $0x4a0] sm:$0xff]
                %367 = vst [vmem:[%s217 + $0x250] sm:$0xff] %v366
                %v368 = vld [vmem:[%s216 + $0x4a8] sm:$0xff]
                %369 = vst [vmem:[%s217 + $0x258] sm:$0xff] %v368
                %v370 = vld [vmem:[%s216 + $0x4c0] sm:$0xff]
                %371 = vst [vmem:[%s217 + $0x260] sm:$0xff] %v370
                %v372 = vld [vmem:[%s216 + $0x4c8] sm:$0xff]
                %373 = vst [vmem:[%s217 + $0x268] sm:$0xff] %v372
                %v374 = vld [vmem:[%s216 + $0x4e0] sm:$0xff]
                %375 = vst [vmem:[%s217 + $0x270] sm:$0xff] %v374
                %v376 = vld [vmem:[%s216 + $0x4e8] sm:$0xff]
                %377 = vst [vmem:[%s217 + $0x278] sm:$0xff] %v376
                %v378 = vld [vmem:[%s216 + $0x500] sm:$0xff]
                %379 = vst [vmem:[%s217 + $0x280] sm:$0xff] %v378
                %v380 = vld [vmem:[%s216 + $0x508] sm:$0xff]
                %381 = vst [vmem:[%s217 + $0x288] sm:$0xff] %v380
                %v382 = vld [vmem:[%s216 + $0x520] sm:$0xff]
                %383 = vst [vmem:[%s217 + $0x290] sm:$0xff] %v382
                %v384 = vld [vmem:[%s216 + $0x528] sm:$0xff]
                %385 = vst [vmem:[%s217 + $0x298] sm:$0xff] %v384
                %v386 = vld [vmem:[%s216 + $0x540] sm:$0xff]
                %387 = vst [vmem:[%s217 + $0x2a0] sm:$0xff] %v386
                %v388 = vld [vmem:[%s216 + $0x548] sm:$0xff]
                %389 = vst [vmem:[%s217 + $0x2a8] sm:$0xff] %v388
                %v390 = vld [vmem:[%s216 + $0x560] sm:$0xff]
                %391 = vst [vmem:[%s217 + $0x2b0] sm:$0xff] %v390
                %v392 = vld [vmem:[%s216 + $0x568] sm:$0xff]
                %393 = vst [vmem:[%s217 + $0x2b8] sm:$0xff] %v392
                %v394 = vld [vmem:[%s216 + $0x580] sm:$0xff]
                %395 = vst [vmem:[%s217 + $0x2c0] sm:$0xff] %v394
                %v396 = vld [vmem:[%s216 + $0x588] sm:$0xff]
                %397 = vst [vmem:[%s217 + $0x2c8] sm:$0xff] %v396
                %v398 = vld [vmem:[%s216 + $0x5a0] sm:$0xff]
                %399 = vst [vmem:[%s217 + $0x2d0] sm:$0xff] %v398
                %v400 = vld [vmem:[%s216 + $0x5a8] sm:$0xff]
                %401 = vst [vmem:[%s217 + $0x2d8] sm:$0xff] %v400
                %v402 = vld [vmem:[%s216 + $0x5c0] sm:$0xff]
                %403 = vst [vmem:[%s217 + $0x2e0] sm:$0xff] %v402
                %v404 = vld [vmem:[%s216 + $0x5c8] sm:$0xff]
                %405 = vst [vmem:[%s217 + $0x2e8] sm:$0xff] %v404
                %v406 = vld [vmem:[%s216 + $0x5e0] sm:$0xff]
                %407 = vst [vmem:[%s217 + $0x2f0] sm:$0xff] %v406
                %v408 = vld [vmem:[%s216 + $0x5e8] sm:$0xff]
                %409 = vst [vmem:[%s217 + $0x2f8] sm:$0xff] %v408
                %v410 = vld [vmem:[%s216 + $0x600] sm:$0xff]
                %411 = vst [vmem:[%s217 + $0x300] sm:$0xff] %v410
                %v412 = vld [vmem:[%s216 + $0x608] sm:$0xff]
                %413 = vst [vmem:[%s217 + $0x308] sm:$0xff] %v412
                %v414 = vld [vmem:[%s216 + $0x620] sm:$0xff]
                %415 = vst [vmem:[%s217 + $0x310] sm:$0xff] %v414
                %v416 = vld [vmem:[%s216 + $0x628] sm:$0xff]
                %417 = vst [vmem:[%s217 + $0x318] sm:$0xff] %v416
                %v418 = vld [vmem:[%s216 + $0x640] sm:$0xff]
                %419 = vst [vmem:[%s217 + $0x320] sm:$0xff] %v418
                %v420 = vld [vmem:[%s216 + $0x648] sm:$0xff]
                %421 = vst [vmem:[%s217 + $0x328] sm:$0xff] %v420
                %v422 = vld [vmem:[%s216 + $0x660] sm:$0xff]
                %423 = vst [vmem:[%s217 + $0x330] sm:$0xff] %v422
                %v424 = vld [vmem:[%s216 + $0x668] sm:$0xff]
                %425 = vst [vmem:[%s217 + $0x338] sm:$0xff] %v424
                %v426 = vld [vmem:[%s216 + $0x680] sm:$0xff]
                %427 = vst [vmem:[%s217 + $0x340] sm:$0xff] %v426
                %v428 = vld [vmem:[%s216 + $0x688] sm:$0xff]
                %429 = vst [vmem:[%s217 + $0x348] sm:$0xff] %v428
                %v430 = vld [vmem:[%s216 + $0x6a0] sm:$0xff]
                %431 = vst [vmem:[%s217 + $0x350] sm:$0xff] %v430
                %v432 = vld [vmem:[%s216 + $0x6a8] sm:$0xff]
                %433 = vst [vmem:[%s217 + $0x358] sm:$0xff] %v432
                %v434 = vld [vmem:[%s216 + $0x6c0] sm:$0xff]
                %435 = vst [vmem:[%s217 + $0x360] sm:$0xff] %v434
                %v436 = vld [vmem:[%s216 + $0x6c8] sm:$0xff]
                %437 = vst [vmem:[%s217 + $0x368] sm:$0xff] %v436
                %v438 = vld [vmem:[%s216 + $0x6e0] sm:$0xff]
                %439 = vst [vmem:[%s217 + $0x370] sm:$0xff] %v438
                %v440 = vld [vmem:[%s216 + $0x6e8] sm:$0xff]
                %441 = vst [vmem:[%s217 + $0x378] sm:$0xff] %v440
                %v442 = vld [vmem:[%s216 + $0x700] sm:$0xff]
                %443 = vst [vmem:[%s217 + $0x380] sm:$0xff] %v442
                %v444 = vld [vmem:[%s216 + $0x708] sm:$0xff]
                %445 = vst [vmem:[%s217 + $0x388] sm:$0xff] %v444
                %v446 = vld [vmem:[%s216 + $0x720] sm:$0xff]
                %447 = vst [vmem:[%s217 + $0x390] sm:$0xff] %v446
                %v448 = vld [vmem:[%s216 + $0x728] sm:$0xff]
                %449 = vst [vmem:[%s217 + $0x398] sm:$0xff] %v448
                %v450 = vld [vmem:[%s216 + $0x740] sm:$0xff]
                %451 = vst [vmem:[%s217 + $0x3a0] sm:$0xff] %v450
                %v452 = vld [vmem:[%s216 + $0x748] sm:$0xff]
                %453 = vst [vmem:[%s217 + $0x3a8] sm:$0xff] %v452
                %v454 = vld [vmem:[%s216 + $0x760] sm:$0xff]
                %455 = vst [vmem:[%s217 + $0x3b0] sm:$0xff] %v454
                %v456 = vld [vmem:[%s216 + $0x768] sm:$0xff]
                %457 = vst [vmem:[%s217 + $0x3b8] sm:$0xff] %v456
                %v458 = vld [vmem:[%s216 + $0x780] sm:$0xff]
                %459 = vst [vmem:[%s217 + $0x3c0] sm:$0xff] %v458
                %v460 = vld [vmem:[%s216 + $0x788] sm:$0xff]
                %461 = vst [vmem:[%s217 + $0x3c8] sm:$0xff] %v460
                %v462 = vld [vmem:[%s216 + $0x7a0] sm:$0xff]
                %463 = vst [vmem:[%s217 + $0x3d0] sm:$0xff] %v462
                %v464 = vld [vmem:[%s216 + $0x7a8] sm:$0xff]
                %465 = vst [vmem:[%s217 + $0x3d8] sm:$0xff] %v464
                %v466 = vld [vmem:[%s216 + $0x7c0] sm:$0xff]
                %467 = vst [vmem:[%s217 + $0x3e0] sm:$0xff] %v466
                %v468 = vld [vmem:[%s216 + $0x7c8] sm:$0xff]
                %469 = vst [vmem:[%s217 + $0x3e8] sm:$0xff] %v468
                %v470 = vld [vmem:[%s216 + $0x7e0] sm:$0xff]
                %471 = vst [vmem:[%s217 + $0x3f0] sm:$0xff] %v470
                %v472 = vld [vmem:[%s216 + $0x7e8] sm:$0xff]
                %473 = vst [vmem:[%s217 + $0x3f8] sm:$0xff] %v472
              $region56: #{cnn_model_forward.12} parent=50 // loop_footer
                %s215 = sadd.s32 1, %s211
              $region57: #{cnn_model_forward.12} parent=50 // loop_footer_branch
                %210 = sbr.rel target = $region53
              $region58: #{cnn_model_forward.12} parent=50 // loop_exit
                _
            $region51: #{cnn_model_forward.12} parent=46 // pred_fallthru
              _
            // Predicated region
            $region59: #{cnn_model_forward.12} parent=46 // pred_check
              _
            $region60: #{cnn_model_forward.12} parent=46 // pred_check_branch
              %475 = sbr.rel target = $region62
            $region61: #{cnn_model_forward.12} parent=46 // pred_region
              _
            $region62: #{cnn_model_forward.12} parent=46 // pred_fallthru
              _
          $region47: #{cnn_model_forward.12} parent=42 // pred_fallthru
            _
          %476 = vnop
        $region43: #{cnn_model_forward.12} parent=15 // pred_fallthru
          _
        // Predicated region
        $region63: #{cnn_model_forward.12} parent=15 // pred_check
          %p477 = pneg %p104
        $region64: #{cnn_model_forward.12} parent=15 // pred_check_branch
          %479 = sbr.rel (%p477) target = $region66
        $region65: #{cnn_model_forward.12} parent=15 // pred_region
          %s480 = smul.u32 4, %s17
          %p481 = scmp.lt.s32.totalorder %s480, 7
          %s482 = scalar_select %p481, %s480, 7
          %s483 = scalar_lea.vmem %s2, %s482
          %s484 = smul.u32 4, %s17
        $region66: #{cnn_model_forward.12} parent=15 // pred_fallthru
          _
      $region16: #{cnn_model_forward.12} parent=5 // pred_fallthru
        _
      %p485 = scmp.le.s32.totalorder 1, %s9
      %p486 = scmp.lt.s32.totalorder %s9, 9
      %p487 = pnand %p485, %p486
      %p488 = pneg %p487
      // Predicated region
      $region67: #{cnn_model_forward.12} parent=5 // pred_check
        _
      $region68: #{cnn_model_forward.12} parent=5 // pred_check_branch
        %490 = sbr.rel (%p487) target = $region70
      $region69: #{cnn_model_forward.12} parent=5 // pred_region
        %s491 = ssub.s32 %s9, 1
        %s492 = sand.u32 %s43, 1
        %s493 = sand.u32 %s43, 1
        %s494 = smul.addr %s493, 32
        %s495 = scalar_lea.vmem [#allocation3], %s494
        // Predicated region
        $region71: #{cnn_model_forward.12} parent=69 // pred_check
          %p496 = pneg %p56
        $region72: #{cnn_model_forward.12} parent=69 // pred_check_branch
          %498 = sbr.rel (%p496) target = $region74
        $region73: #{cnn_model_forward.12} parent=69 // pred_region
          _
        $region74: #{cnn_model_forward.12} parent=69 // pred_fallthru
          _
        %s499 = sand.u32 %s71, 1
        %s500 = sand.u32 %s71, 1
        %s501 = smul.addr %s500, 1024
        %s502 = scalar_lea.vmem [#allocation4], %s501
        // Predicated region
        $region75: #{cnn_model_forward.12} parent=69 // pred_check
          %p503 = pneg %p84
        $region76: #{cnn_model_forward.12} parent=69 // pred_check_branch
          %505 = sbr.rel (%p503) target = $region78
        $region77: #{cnn_model_forward.12} parent=69 // pred_region
          _
        $region78: #{cnn_model_forward.12} parent=69 // pred_fallthru
          _
        %s506 = sand.u32 %s43, 1
        %s507 = sand.u32 %s43, 1
        %s508 = smul.addr %s507, 32
        %s509 = scalar_lea.vmem [#allocation3], %s508
        %p510 = pneg %p56
        %p511 = pneg %p53
        %s512 = sand.u32 %s71, 1
        %s513 = sand.u32 %s71, 1
        %s514 = smul.addr %s513, 1024
        %s515 = scalar_lea.vmem [#allocation4], %s514
        %p516 = pneg %p84
        %p517 = pneg %p81
        %s518 = smul.u32 4, %s20
        %p519 = scmp.lt.s32.totalorder %s518, 7
        %s520 = scalar_select %p519, %s518, 7
        %s521 = scalar_lea.vmem %s2, %s520
        %p522 = pneg %p110
        %p523 = pneg %p107
        %p524 = pneg %p138
        %p525 = pneg %p135
        %s526 = sand.u32 %s125, 1
        %s527 = sand.u32 %s125, 1
        %s528 = smul.addr %s527, 64
        %s529 = scalar_lea.vmem [#allocation5], %s528
        %s530 = smul.u32 2, %s19
        %s531 = smul.u32 4, %s21
        %s532 = smul.u32 64, %s21
        %s533 = smul.u32 4, %s20
        %s534 = smul.u32 4, %s20
        %p535 = scmp.lt.s32.totalorder %s534, 7
        %s536 = scalar_select %p535, %s534, 7
        %s537 = scalar_lea.vmem %s2, %s536
        %s538 = smul.u32 4, %s20
        %s539 = smul.u32 2, %s19
        %s540 = smul.u32 4, %s20
        %p541 = scmp.eq.s32.totalorder %s21, 0
        // Predicated region
        $region79: #{cnn_model_forward.12} parent=69 // pred_check
          %p542 = pneg %p541
        $region80: #{cnn_model_forward.12} parent=69 // pred_check_branch
          %544 = sbr.rel (%p542) target = $region82
        $region81: #{cnn_model_forward.12} parent=69 // pred_region
          %545 = vst [vmem:[#allocation2] sm:$0xff] 0.0
          %546 = vst [vmem:[#allocation2 + $0x8] sm:$0xff] 0.0
          %547 = vst [vmem:[#allocation2 + $0x10] sm:$0xff] 0.0
          %548 = vst [vmem:[#allocation2 + $0x18] sm:$0xff] 0.0
          %549 = vst [vmem:[#allocation2 + $0x20] sm:$0xff] 0.0
          %550 = vst [vmem:[#allocation2 + $0x28] sm:$0xff] 0.0
          %551 = vst [vmem:[#allocation2 + $0x30] sm:$0xff] 0.0
          %552 = vst [vmem:[#allocation2 + $0x38] sm:$0xff] 0.0
        $region82: #{cnn_model_forward.12} parent=69 // pred_fallthru
          _
        %v553 = vld [vmem:[#allocation2] sm:$0xff]
        %v554 = vld [vmem:[#allocation2 + $0x8] sm:$0xff]
        %v555 = vld [vmem:[#allocation2 + $0x10] sm:$0xff]
        %v556 = vld [vmem:[#allocation2 + $0x18] sm:$0xff]
        %v557 = vld [vmem:[#allocation2 + $0x20] sm:$0xff]
        %v558 = vld [vmem:[#allocation2 + $0x28] sm:$0xff]
        %v559 = vld [vmem:[#allocation2 + $0x30] sm:$0xff]
        %v560 = vld [vmem:[#allocation2 + $0x38] sm:$0xff]
        %v561 = vld [vmem:[%s495] sm:$0xff]
        %v562 = vld [vmem:[%s495 + $0x8] sm:$0xff]
        %v563 = vld [vmem:[%s495 + $0x10] sm:$0xff]
        %v564 = vld [vmem:[%s495 + $0x18] sm:$0xff]
        %v565 = vld [vmem:[%s502] sm:$0xff]
        %v566 = vld [vmem:[%s502 + $0x8] sm:$0xff]
        %v567 = vld [vmem:[%s502 + $0x10] sm:$0xff]
        %v568 = vld [vmem:[%s502 + $0x18] sm:$0xff]
        %v569 = vld [vmem:[%s502 + $0x20] sm:$0xff]
        %v570 = vld [vmem:[%s502 + $0x28] sm:$0xff]
        %v571 = vld [vmem:[%s502 + $0x30] sm:$0xff]
        %v572 = vld [vmem:[%s502 + $0x38] sm:$0xff]
        %v573 = vld [vmem:[%s502 + $0x40] sm:$0xff]
        %v574 = vld [vmem:[%s502 + $0x48] sm:$0xff]
        %v575 = vld [vmem:[%s502 + $0x50] sm:$0xff]
        %v576 = vld [vmem:[%s502 + $0x58] sm:$0xff]
        %v577 = vld [vmem:[%s502 + $0x60] sm:$0xff]
        %v578 = vld [vmem:[%s502 + $0x68] sm:$0xff]
        %v579 = vld [vmem:[%s502 + $0x70] sm:$0xff]
        %v580 = vld [vmem:[%s502 + $0x78] sm:$0xff]
        %v581 = vld [vmem:[%s502 + $0x80] sm:$0xff]
        %v582 = vld [vmem:[%s502 + $0x88] sm:$0xff]
        %v583 = vld [vmem:[%s502 + $0x90] sm:$0xff]
        %v584 = vld [vmem:[%s502 + $0x98] sm:$0xff]
        %v585 = vld [vmem:[%s502 + $0xa0] sm:$0xff]
        %v586 = vld [vmem:[%s502 + $0xa8] sm:$0xff]
        %v587 = vld [vmem:[%s502 + $0xb0] sm:$0xff]
        %v588 = vld [vmem:[%s502 + $0xb8] sm:$0xff]
        %v589 = vld [vmem:[%s502 + $0xc0] sm:$0xff]
        %v590 = vld [vmem:[%s502 + $0xc8] sm:$0xff]
        %v591 = vld [vmem:[%s502 + $0xd0] sm:$0xff]
        %v592 = vld [vmem:[%s502 + $0xd8] sm:$0xff]
        %v593 = vld [vmem:[%s502 + $0xe0] sm:$0xff]
        %v594 = vld [vmem:[%s502 + $0xe8] sm:$0xff]
        %v595 = vld [vmem:[%s502 + $0xf0] sm:$0xff]
        %v596 = vld [vmem:[%s502 + $0xf8] sm:$0xff]
        %v597 = vld [vmem:[%s502 + $0x100] sm:$0xff]
        %v598 = vld [vmem:[%s502 + $0x108] sm:$0xff]
        %v599 = vld [vmem:[%s502 + $0x110] sm:$0xff]
        %v600 = vld [vmem:[%s502 + $0x118] sm:$0xff]
        %v601 = vld [vmem:[%s502 + $0x120] sm:$0xff]
        %v602 = vld [vmem:[%s502 + $0x128] sm:$0xff]
        %v603 = vld [vmem:[%s502 + $0x130] sm:$0xff]
        %v604 = vld [vmem:[%s502 + $0x138] sm:$0xff]
        %v605 = vld [vmem:[%s502 + $0x140] sm:$0xff]
        %v606 = vld [vmem:[%s502 + $0x148] sm:$0xff]
        %v607 = vld [vmem:[%s502 + $0x150] sm:$0xff]
        %v608 = vld [vmem:[%s502 + $0x158] sm:$0xff]
        %v609 = vld [vmem:[%s502 + $0x160] sm:$0xff]
        %v610 = vld [vmem:[%s502 + $0x168] sm:$0xff]
        %v611 = vld [vmem:[%s502 + $0x170] sm:$0xff]
        %v612 = vld [vmem:[%s502 + $0x178] sm:$0xff]
        %v613 = vld [vmem:[%s502 + $0x180] sm:$0xff]
        %v614 = vld [vmem:[%s502 + $0x188] sm:$0xff]
        %v615 = vld [vmem:[%s502 + $0x190] sm:$0xff]
        %v616 = vld [vmem:[%s502 + $0x198] sm:$0xff]
        %v617 = vld [vmem:[%s502 + $0x1a0] sm:$0xff]
        %v618 = vld [vmem:[%s502 + $0x1a8] sm:$0xff]
        %v619 = vld [vmem:[%s502 + $0x1b0] sm:$0xff]
        %v620 = vld [vmem:[%s502 + $0x1b8] sm:$0xff]
        %v621 = vld [vmem:[%s502 + $0x1c0] sm:$0xff]
        %v622 = vld [vmem:[%s502 + $0x1c8] sm:$0xff]
        %v623 = vld [vmem:[%s502 + $0x1d0] sm:$0xff]
        %v624 = vld [vmem:[%s502 + $0x1d8] sm:$0xff]
        %v625 = vld [vmem:[%s502 + $0x1e0] sm:$0xff]
        %v626 = vld [vmem:[%s502 + $0x1e8] sm:$0xff]
        %v627 = vld [vmem:[%s502 + $0x1f0] sm:$0xff]
        %v628 = vld [vmem:[%s502 + $0x1f8] sm:$0xff]
        %v629 = vld [vmem:[%s502 + $0x200] sm:$0xff]
        %v630 = vld [vmem:[%s502 + $0x208] sm:$0xff]
        %v631 = vld [vmem:[%s502 + $0x210] sm:$0xff]
        %v632 = vld [vmem:[%s502 + $0x218] sm:$0xff]
        %v633 = vld [vmem:[%s502 + $0x220] sm:$0xff]
        %v634 = vld [vmem:[%s502 + $0x228] sm:$0xff]
        %v635 = vld [vmem:[%s502 + $0x230] sm:$0xff]
        %v636 = vld [vmem:[%s502 + $0x238] sm:$0xff]
        %v637 = vld [vmem:[%s502 + $0x240] sm:$0xff]
        %v638 = vld [vmem:[%s502 + $0x248] sm:$0xff]
        %v639 = vld [vmem:[%s502 + $0x250] sm:$0xff]
        %v640 = vld [vmem:[%s502 + $0x258] sm:$0xff]
        %v641 = vld [vmem:[%s502 + $0x260] sm:$0xff]
        %v642 = vld [vmem:[%s502 + $0x268] sm:$0xff]
        %v643 = vld [vmem:[%s502 + $0x270] sm:$0xff]
        %v644 = vld [vmem:[%s502 + $0x278] sm:$0xff]
        %v645 = vld [vmem:[%s502 + $0x280] sm:$0xff]
        %v646 = vld [vmem:[%s502 + $0x288] sm:$0xff]
        %v647 = vld [vmem:[%s502 + $0x290] sm:$0xff]
        %v648 = vld [vmem:[%s502 + $0x298] sm:$0xff]
        %v649 = vld [vmem:[%s502 + $0x2a0] sm:$0xff]
        %v650 = vld [vmem:[%s502 + $0x2a8] sm:$0xff]
        %v651 = vld [vmem:[%s502 + $0x2b0] sm:$0xff]
        %v652 = vld [vmem:[%s502 + $0x2b8] sm:$0xff]
        %v653 = vld [vmem:[%s502 + $0x2c0] sm:$0xff]
        %v654 = vld [vmem:[%s502 + $0x2c8] sm:$0xff]
        %v655 = vld [vmem:[%s502 + $0x2d0] sm:$0xff]
        %v656 = vld [vmem:[%s502 + $0x2d8] sm:$0xff]
        %v657 = vld [vmem:[%s502 + $0x2e0] sm:$0xff]
        %v658 = vld [vmem:[%s502 + $0x2e8] sm:$0xff]
        %v659 = vld [vmem:[%s502 + $0x2f0] sm:$0xff]
        %v660 = vld [vmem:[%s502 + $0x2f8] sm:$0xff]
        %v661 = vld [vmem:[%s502 + $0x300] sm:$0xff]
        %v662 = vld [vmem:[%s502 + $0x308] sm:$0xff]
        %v663 = vld [vmem:[%s502 + $0x310] sm:$0xff]
        %v664 = vld [vmem:[%s502 + $0x318] sm:$0xff]
        %v665 = vld [vmem:[%s502 + $0x320] sm:$0xff]
        %v666 = vld [vmem:[%s502 + $0x328] sm:$0xff]
        %v667 = vld [vmem:[%s502 + $0x330] sm:$0xff]
        %v668 = vld [vmem:[%s502 + $0x338] sm:$0xff]
        %v669 = vld [vmem:[%s502 + $0x340] sm:$0xff]
        %v670 = vld [vmem:[%s502 + $0x348] sm:$0xff]
        %v671 = vld [vmem:[%s502 + $0x350] sm:$0xff]
        %v672 = vld [vmem:[%s502 + $0x358] sm:$0xff]
        %v673 = vld [vmem:[%s502 + $0x360] sm:$0xff]
        %v674 = vld [vmem:[%s502 + $0x368] sm:$0xff]
        %v675 = vld [vmem:[%s502 + $0x370] sm:$0xff]
        %v676 = vld [vmem:[%s502 + $0x378] sm:$0xff]
        %v677 = vld [vmem:[%s502 + $0x380] sm:$0xff]
        %v678 = vld [vmem:[%s502 + $0x388] sm:$0xff]
        %v679 = vld [vmem:[%s502 + $0x390] sm:$0xff]
        %v680 = vld [vmem:[%s502 + $0x398] sm:$0xff]
        %v681 = vld [vmem:[%s502 + $0x3a0] sm:$0xff]
        %v682 = vld [vmem:[%s502 + $0x3a8] sm:$0xff]
        %v683 = vld [vmem:[%s502 + $0x3b0] sm:$0xff]
        %v684 = vld [vmem:[%s502 + $0x3b8] sm:$0xff]
        %v685 = vld [vmem:[%s502 + $0x3c0] sm:$0xff]
        %v686 = vld [vmem:[%s502 + $0x3c8] sm:$0xff]
        %v687 = vld [vmem:[%s502 + $0x3d0] sm:$0xff]
        %v688 = vld [vmem:[%s502 + $0x3d8] sm:$0xff]
        %v689 = vld [vmem:[%s502 + $0x3e0] sm:$0xff]
        %v690 = vld [vmem:[%s502 + $0x3e8] sm:$0xff]
        %v691 = vld [vmem:[%s502 + $0x3f0] sm:$0xff]
        %v692 = vld [vmem:[%s502 + $0x3f8] sm:$0xff]
        %v697 = vunpack.c.l.b16 %v561
        %v698 = vunpack.c.h.b16 %v561
        %v699 = vunpack.c.l.b16 %v562
        %v700 = vunpack.c.h.b16 %v562
        %v701 = vunpack.c.l.b16 %v563
        %v702 = vunpack.c.h.b16 %v563
        %v703 = vunpack.c.l.b16 %v564
        %v704 = vunpack.c.h.b16 %v564
        %v705 = vpack.c.b16 %v701, %v697
        %v706 = vpack.c.b16 %v702, %v698
        %v707 = vpack.c.b16 %v703, %v699
        %v708 = vpack.c.b16 %v704, %v700
        %v841 = vunpack.c.l.b16 %v565
        %v842 = vunpack.c.h.b16 %v565
        %v843 = vunpack.c.l.b16 %v566
        %v844 = vunpack.c.h.b16 %v566
        %v845 = vunpack.c.l.b16 %v567
        %v846 = vunpack.c.h.b16 %v567
        %v847 = vunpack.c.l.b16 %v568
        %v848 = vunpack.c.h.b16 %v568
        %v849 = vunpack.c.l.b16 %v569
        %v850 = vunpack.c.h.b16 %v569
        %v851 = vunpack.c.l.b16 %v570
        %v852 = vunpack.c.h.b16 %v570
        %v853 = vunpack.c.l.b16 %v571
        %v854 = vunpack.c.h.b16 %v571
        %v855 = vunpack.c.l.b16 %v572
        %v856 = vunpack.c.h.b16 %v572
        %v857 = vunpack.c.l.b16 %v573
        %v858 = vunpack.c.h.b16 %v573
        %v859 = vunpack.c.l.b16 %v574
        %v860 = vunpack.c.h.b16 %v574
        %v861 = vunpack.c.l.b16 %v575
        %v862 = vunpack.c.h.b16 %v575
        %v863 = vunpack.c.l.b16 %v576
        %v864 = vunpack.c.h.b16 %v576
        %v865 = vunpack.c.l.b16 %v577
        %v866 = vunpack.c.h.b16 %v577
        %v867 = vunpack.c.l.b16 %v578
        %v868 = vunpack.c.h.b16 %v578
        %v869 = vunpack.c.l.b16 %v579
        %v870 = vunpack.c.h.b16 %v579
        %v871 = vunpack.c.l.b16 %v580
        %v872 = vunpack.c.h.b16 %v580
        %v873 = vunpack.c.l.b16 %v581
        %v874 = vunpack.c.h.b16 %v581
        %v875 = vunpack.c.l.b16 %v582
        %v876 = vunpack.c.h.b16 %v582
        %v877 = vunpack.c.l.b16 %v583
        %v878 = vunpack.c.h.b16 %v583
        %v879 = vunpack.c.l.b16 %v584
        %v880 = vunpack.c.h.b16 %v584
        %v881 = vunpack.c.l.b16 %v585
        %v882 = vunpack.c.h.b16 %v585
        %v883 = vunpack.c.l.b16 %v586
        %v884 = vunpack.c.h.b16 %v586
        %v885 = vunpack.c.l.b16 %v587
        %v886 = vunpack.c.h.b16 %v587
        %v887 = vunpack.c.l.b16 %v588
        %v888 = vunpack.c.h.b16 %v588
        %v889 = vunpack.c.l.b16 %v589
        %v890 = vunpack.c.h.b16 %v589
        %v891 = vunpack.c.l.b16 %v590
        %v892 = vunpack.c.h.b16 %v590
        %v893 = vunpack.c.l.b16 %v591
        %v894 = vunpack.c.h.b16 %v591
        %v895 = vunpack.c.l.b16 %v592
        %v896 = vunpack.c.h.b16 %v592
        %v897 = vunpack.c.l.b16 %v593
        %v898 = vunpack.c.h.b16 %v593
        %v899 = vunpack.c.l.b16 %v594
        %v900 = vunpack.c.h.b16 %v594
        %v901 = vunpack.c.l.b16 %v595
        %v902 = vunpack.c.h.b16 %v595
        %v903 = vunpack.c.l.b16 %v596
        %v904 = vunpack.c.h.b16 %v596
        %v905 = vunpack.c.l.b16 %v597
        %v906 = vunpack.c.h.b16 %v597
        %v907 = vunpack.c.l.b16 %v598
        %v908 = vunpack.c.h.b16 %v598
        %v909 = vunpack.c.l.b16 %v599
        %v910 = vunpack.c.h.b16 %v599
        %v911 = vunpack.c.l.b16 %v600
        %v912 = vunpack.c.h.b16 %v600
        %v913 = vunpack.c.l.b16 %v601
        %v914 = vunpack.c.h.b16 %v601
        %v915 = vunpack.c.l.b16 %v602
        %v916 = vunpack.c.h.b16 %v602
        %v917 = vunpack.c.l.b16 %v603
        %v918 = vunpack.c.h.b16 %v603
        %v919 = vunpack.c.l.b16 %v604
        %v920 = vunpack.c.h.b16 %v604
        %v921 = vunpack.c.l.b16 %v605
        %v922 = vunpack.c.h.b16 %v605
        %v923 = vunpack.c.l.b16 %v606
        %v924 = vunpack.c.h.b16 %v606
        %v925 = vunpack.c.l.b16 %v607
        %v926 = vunpack.c.h.b16 %v607
        %v927 = vunpack.c.l.b16 %v608
        %v928 = vunpack.c.h.b16 %v608
        %v929 = vunpack.c.l.b16 %v609
        %v930 = vunpack.c.h.b16 %v609
        %v931 = vunpack.c.l.b16 %v610
        %v932 = vunpack.c.h.b16 %v610
        %v933 = vunpack.c.l.b16 %v611
        %v934 = vunpack.c.h.b16 %v611
        %v935 = vunpack.c.l.b16 %v612
        %v936 = vunpack.c.h.b16 %v612
        %v937 = vunpack.c.l.b16 %v613
        %v938 = vunpack.c.h.b16 %v613
        %v939 = vunpack.c.l.b16 %v614
        %v940 = vunpack.c.h.b16 %v614
        %v941 = vunpack.c.l.b16 %v615
        %v942 = vunpack.c.h.b16 %v615
        %v943 = vunpack.c.l.b16 %v616
        %v944 = vunpack.c.h.b16 %v616
        %v945 = vunpack.c.l.b16 %v617
        %v946 = vunpack.c.h.b16 %v617
        %v947 = vunpack.c.l.b16 %v618
        %v948 = vunpack.c.h.b16 %v618
        %v949 = vunpack.c.l.b16 %v619
        %v950 = vunpack.c.h.b16 %v619
        %v951 = vunpack.c.l.b16 %v620
        %v952 = vunpack.c.h.b16 %v620
        %v953 = vunpack.c.l.b16 %v621
        %v954 = vunpack.c.h.b16 %v621
        %v955 = vunpack.c.l.b16 %v622
        %v956 = vunpack.c.h.b16 %v622
        %v957 = vunpack.c.l.b16 %v623
        %v958 = vunpack.c.h.b16 %v623
        %v959 = vunpack.c.l.b16 %v624
        %v960 = vunpack.c.h.b16 %v624
        %v961 = vunpack.c.l.b16 %v625
        %v962 = vunpack.c.h.b16 %v625
        %v963 = vunpack.c.l.b16 %v626
        %v964 = vunpack.c.h.b16 %v626
        %v965 = vunpack.c.l.b16 %v627
        %v966 = vunpack.c.h.b16 %v627
        %v967 = vunpack.c.l.b16 %v628
        %v968 = vunpack.c.h.b16 %v628
        %v969 = vunpack.c.l.b16 %v629
        %v970 = vunpack.c.h.b16 %v629
        %v971 = vunpack.c.l.b16 %v630
        %v972 = vunpack.c.h.b16 %v630
        %v973 = vunpack.c.l.b16 %v631
        %v974 = vunpack.c.h.b16 %v631
        %v975 = vunpack.c.l.b16 %v632
        %v976 = vunpack.c.h.b16 %v632
        %v977 = vunpack.c.l.b16 %v633
        %v978 = vunpack.c.h.b16 %v633
        %v979 = vunpack.c.l.b16 %v634
        %v980 = vunpack.c.h.b16 %v634
        %v981 = vunpack.c.l.b16 %v635
        %v982 = vunpack.c.h.b16 %v635
        %v983 = vunpack.c.l.b16 %v636
        %v984 = vunpack.c.h.b16 %v636
        %v985 = vunpack.c.l.b16 %v637
        %v986 = vunpack.c.h.b16 %v637
        %v987 = vunpack.c.l.b16 %v638
        %v988 = vunpack.c.h.b16 %v638
        %v989 = vunpack.c.l.b16 %v639
        %v990 = vunpack.c.h.b16 %v639
        %v991 = vunpack.c.l.b16 %v640
        %v992 = vunpack.c.h.b16 %v640
        %v993 = vunpack.c.l.b16 %v641
        %v994 = vunpack.c.h.b16 %v641
        %v995 = vunpack.c.l.b16 %v642
        %v996 = vunpack.c.h.b16 %v642
        %v997 = vunpack.c.l.b16 %v643
        %v998 = vunpack.c.h.b16 %v643
        %v999 = vunpack.c.l.b16 %v644
        %v1000 = vunpack.c.h.b16 %v644
        %v1001 = vunpack.c.l.b16 %v645
        %v1002 = vunpack.c.h.b16 %v645
        %v1003 = vunpack.c.l.b16 %v646
        %v1004 = vunpack.c.h.b16 %v646
        %v1005 = vunpack.c.l.b16 %v647
        %v1006 = vunpack.c.h.b16 %v647
        %v1007 = vunpack.c.l.b16 %v648
        %v1008 = vunpack.c.h.b16 %v648
        %v1009 = vunpack.c.l.b16 %v649
        %v1010 = vunpack.c.h.b16 %v649
        %v1011 = vunpack.c.l.b16 %v650
        %v1012 = vunpack.c.h.b16 %v650
        %v1013 = vunpack.c.l.b16 %v651
        %v1014 = vunpack.c.h.b16 %v651
        %v1015 = vunpack.c.l.b16 %v652
        %v1016 = vunpack.c.h.b16 %v652
        %v1017 = vunpack.c.l.b16 %v653
        %v1018 = vunpack.c.h.b16 %v653
        %v1019 = vunpack.c.l.b16 %v654
        %v1020 = vunpack.c.h.b16 %v654
        %v1021 = vunpack.c.l.b16 %v655
        %v1022 = vunpack.c.h.b16 %v655
        %v1023 = vunpack.c.l.b16 %v656
        %v1024 = vunpack.c.h.b16 %v656
        %v1025 = vunpack.c.l.b16 %v657
        %v1026 = vunpack.c.h.b16 %v657
        %v1027 = vunpack.c.l.b16 %v658
        %v1028 = vunpack.c.h.b16 %v658
        %v1029 = vunpack.c.l.b16 %v659
        %v1030 = vunpack.c.h.b16 %v659
        %v1031 = vunpack.c.l.b16 %v660
        %v1032 = vunpack.c.h.b16 %v660
        %v1033 = vunpack.c.l.b16 %v661
        %v1034 = vunpack.c.h.b16 %v661
        %v1035 = vunpack.c.l.b16 %v662
        %v1036 = vunpack.c.h.b16 %v662
        %v1037 = vunpack.c.l.b16 %v663
        %v1038 = vunpack.c.h.b16 %v663
        %v1039 = vunpack.c.l.b16 %v664
        %v1040 = vunpack.c.h.b16 %v664
        %v1041 = vunpack.c.l.b16 %v665
        %v1042 = vunpack.c.h.b16 %v665
        %v1043 = vunpack.c.l.b16 %v666
        %v1044 = vunpack.c.h.b16 %v666
        %v1045 = vunpack.c.l.b16 %v667
        %v1046 = vunpack.c.h.b16 %v667
        %v1047 = vunpack.c.l.b16 %v668
        %v1048 = vunpack.c.h.b16 %v668
        %v1049 = vunpack.c.l.b16 %v669
        %v1050 = vunpack.c.h.b16 %v669
        %v1051 = vunpack.c.l.b16 %v670
        %v1052 = vunpack.c.h.b16 %v670
        %v1053 = vunpack.c.l.b16 %v671
        %v1054 = vunpack.c.h.b16 %v671
        %v1055 = vunpack.c.l.b16 %v672
        %v1056 = vunpack.c.h.b16 %v672
        %v1057 = vunpack.c.l.b16 %v673
        %v1058 = vunpack.c.h.b16 %v673
        %v1059 = vunpack.c.l.b16 %v674
        %v1060 = vunpack.c.h.b16 %v674
        %v1061 = vunpack.c.l.b16 %v675
        %v1062 = vunpack.c.h.b16 %v675
        %v1063 = vunpack.c.l.b16 %v676
        %v1064 = vunpack.c.h.b16 %v676
        %v1065 = vunpack.c.l.b16 %v677
        %v1066 = vunpack.c.h.b16 %v677
        %v1067 = vunpack.c.l.b16 %v678
        %v1068 = vunpack.c.h.b16 %v678
        %v1069 = vunpack.c.l.b16 %v679
        %v1070 = vunpack.c.h.b16 %v679
        %v1071 = vunpack.c.l.b16 %v680
        %v1072 = vunpack.c.h.b16 %v680
        %v1073 = vunpack.c.l.b16 %v681
        %v1074 = vunpack.c.h.b16 %v681
        %v1075 = vunpack.c.l.b16 %v682
        %v1076 = vunpack.c.h.b16 %v682
        %v1077 = vunpack.c.l.b16 %v683
        %v1078 = vunpack.c.h.b16 %v683
        %v1079 = vunpack.c.l.b16 %v684
        %v1080 = vunpack.c.h.b16 %v684
        %v1081 = vunpack.c.l.b16 %v685
        %v1082 = vunpack.c.h.b16 %v685
        %v1083 = vunpack.c.l.b16 %v686
        %v1084 = vunpack.c.h.b16 %v686
        %v1085 = vunpack.c.l.b16 %v687
        %v1086 = vunpack.c.h.b16 %v687
        %v1087 = vunpack.c.l.b16 %v688
        %v1088 = vunpack.c.h.b16 %v688
        %v1089 = vunpack.c.l.b16 %v689
        %v1090 = vunpack.c.h.b16 %v689
        %v1091 = vunpack.c.l.b16 %v690
        %v1092 = vunpack.c.h.b16 %v690
        %v1093 = vunpack.c.l.b16 %v691
        %v1094 = vunpack.c.h.b16 %v691
        %v1095 = vunpack.c.l.b16 %v692
        %v1096 = vunpack.c.h.b16 %v692
        %v1097 = vpack.c.b16 %v845, %v841
        %v1098 = vpack.c.b16 %v846, %v842
        %v1099 = vpack.c.b16 %v847, %v843
        %v1100 = vpack.c.b16 %v848, %v844
        %v1101 = vpack.c.b16 %v853, %v849
        %v1102 = vpack.c.b16 %v854, %v850
        %v1103 = vpack.c.b16 %v855, %v851
        %v1104 = vpack.c.b16 %v856, %v852
        %v1105 = vpack.c.b16 %v861, %v857
        %v1106 = vpack.c.b16 %v862, %v858
        %v1107 = vpack.c.b16 %v863, %v859
        %v1108 = vpack.c.b16 %v864, %v860
        %v1109 = vpack.c.b16 %v869, %v865
        %v1110 = vpack.c.b16 %v870, %v866
        %v1111 = vpack.c.b16 %v871, %v867
        %v1112 = vpack.c.b16 %v872, %v868
        %v1113 = vpack.c.b16 %v877, %v873
        %v1114 = vpack.c.b16 %v878, %v874
        %v1115 = vpack.c.b16 %v879, %v875
        %v1116 = vpack.c.b16 %v880, %v876
        %v1117 = vpack.c.b16 %v885, %v881
        %v1118 = vpack.c.b16 %v886, %v882
        %v1119 = vpack.c.b16 %v887, %v883
        %v1120 = vpack.c.b16 %v888, %v884
        %v1121 = vpack.c.b16 %v893, %v889
        %v1122 = vpack.c.b16 %v894, %v890
        %v1123 = vpack.c.b16 %v895, %v891
        %v1124 = vpack.c.b16 %v896, %v892
        %v1125 = vpack.c.b16 %v901, %v897
        %v1126 = vpack.c.b16 %v902, %v898
        %v1127 = vpack.c.b16 %v903, %v899
        %v1128 = vpack.c.b16 %v904, %v900
        %v1129 = vpack.c.b16 %v909, %v905
        %v1130 = vpack.c.b16 %v910, %v906
        %v1131 = vpack.c.b16 %v911, %v907
        %v1132 = vpack.c.b16 %v912, %v908
        %v1133 = vpack.c.b16 %v917, %v913
        %v1134 = vpack.c.b16 %v918, %v914
        %v1135 = vpack.c.b16 %v919, %v915
        %v1136 = vpack.c.b16 %v920, %v916
        %v1137 = vpack.c.b16 %v925, %v921
        %v1138 = vpack.c.b16 %v926, %v922
        %v1139 = vpack.c.b16 %v927, %v923
        %v1140 = vpack.c.b16 %v928, %v924
        %v1141 = vpack.c.b16 %v933, %v929
        %v1142 = vpack.c.b16 %v934, %v930
        %v1143 = vpack.c.b16 %v935, %v931
        %v1144 = vpack.c.b16 %v936, %v932
        %v1145 = vpack.c.b16 %v941, %v937
        %v1146 = vpack.c.b16 %v942, %v938
        %v1147 = vpack.c.b16 %v943, %v939
        %v1148 = vpack.c.b16 %v944, %v940
        %v1149 = vpack.c.b16 %v949, %v945
        %v1150 = vpack.c.b16 %v950, %v946
        %v1151 = vpack.c.b16 %v951, %v947
        %v1152 = vpack.c.b16 %v952, %v948
        %v1153 = vpack.c.b16 %v957, %v953
        %v1154 = vpack.c.b16 %v958, %v954
        %v1155 = vpack.c.b16 %v959, %v955
        %v1156 = vpack.c.b16 %v960, %v956
        %v1157 = vpack.c.b16 %v965, %v961
        %v1158 = vpack.c.b16 %v966, %v962
        %v1159 = vpack.c.b16 %v967, %v963
        %v1160 = vpack.c.b16 %v968, %v964
        %v1161 = vpack.c.b16 %v973, %v969
        %v1162 = vpack.c.b16 %v974, %v970
        %v1163 = vpack.c.b16 %v975, %v971
        %v1164 = vpack.c.b16 %v976, %v972
        %v1165 = vpack.c.b16 %v981, %v977
        %v1166 = vpack.c.b16 %v982, %v978
        %v1167 = vpack.c.b16 %v983, %v979
        %v1168 = vpack.c.b16 %v984, %v980
        %v1169 = vpack.c.b16 %v989, %v985
        %v1170 = vpack.c.b16 %v990, %v986
        %v1171 = vpack.c.b16 %v991, %v987
        %v1172 = vpack.c.b16 %v992, %v988
        %v1173 = vpack.c.b16 %v997, %v993
        %v1174 = vpack.c.b16 %v998, %v994
        %v1175 = vpack.c.b16 %v999, %v995
        %v1176 = vpack.c.b16 %v1000, %v996
        %v1177 = vpack.c.b16 %v1005, %v1001
        %v1178 = vpack.c.b16 %v1006, %v1002
        %v1179 = vpack.c.b16 %v1007, %v1003
        %v1180 = vpack.c.b16 %v1008, %v1004
        %v1181 = vpack.c.b16 %v1013, %v1009
        %v1182 = vpack.c.b16 %v1014, %v1010
        %v1183 = vpack.c.b16 %v1015, %v1011
        %v1184 = vpack.c.b16 %v1016, %v1012
        %v1185 = vpack.c.b16 %v1021, %v1017
        %v1186 = vpack.c.b16 %v1022, %v1018
        %v1187 = vpack.c.b16 %v1023, %v1019
        %v1188 = vpack.c.b16 %v1024, %v1020
        %v1189 = vpack.c.b16 %v1029, %v1025
        %v1190 = vpack.c.b16 %v1030, %v1026
        %v1191 = vpack.c.b16 %v1031, %v1027
        %v1192 = vpack.c.b16 %v1032, %v1028
        %v1193 = vpack.c.b16 %v1037, %v1033
        %v1194 = vpack.c.b16 %v1038, %v1034
        %v1195 = vpack.c.b16 %v1039, %v1035
        %v1196 = vpack.c.b16 %v1040, %v1036
        %v1197 = vpack.c.b16 %v1045, %v1041
        %v1198 = vpack.c.b16 %v1046, %v1042
        %v1199 = vpack.c.b16 %v1047, %v1043
        %v1200 = vpack.c.b16 %v1048, %v1044
        %v1201 = vpack.c.b16 %v1053, %v1049
        %v1202 = vpack.c.b16 %v1054, %v1050
        %v1203 = vpack.c.b16 %v1055, %v1051
        %v1204 = vpack.c.b16 %v1056, %v1052
        %v1205 = vpack.c.b16 %v1061, %v1057
        %v1206 = vpack.c.b16 %v1062, %v1058
        %v1207 = vpack.c.b16 %v1063, %v1059
        %v1208 = vpack.c.b16 %v1064, %v1060
        %v1209 = vpack.c.b16 %v1069, %v1065
        %v1210 = vpack.c.b16 %v1070, %v1066
        %v1211 = vpack.c.b16 %v1071, %v1067
        %v1212 = vpack.c.b16 %v1072, %v1068
        %v1213 = vpack.c.b16 %v1077, %v1073
        %v1214 = vpack.c.b16 %v1078, %v1074
        %v1215 = vpack.c.b16 %v1079, %v1075
        %v1216 = vpack.c.b16 %v1080, %v1076
        %v1217 = vpack.c.b16 %v1085, %v1081
        %v1218 = vpack.c.b16 %v1086, %v1082
        %v1219 = vpack.c.b16 %v1087, %v1083
        %v1220 = vpack.c.b16 %v1088, %v1084
        %v1221 = vpack.c.b16 %v1093, %v1089
        %v1222 = vpack.c.b16 %v1094, %v1090
        %v1223 = vpack.c.b16 %v1095, %v1091
        %v1224 = vpack.c.b16 %v1096, %v1092
        %1353 = vmatprep.subr.bf16.mxu0 %v1126
        %1354 = vmatpush1.bf16.msra.mxu0 %v1125
        %1355 = vmatprep.subr.bf16.mxu0 %v1122
        %1356 = vmatpush1.bf16.msra.mxu0 %v1121
        %1357 = vmatprep.subr.bf16.mxu0 %v1118
        %1358 = vmatpush1.bf16.msra.mxu0 %v1117
        %1359 = vmatprep.subr.bf16.mxu0 %v1114
        %1360 = vmatpush1.bf16.msra.mxu0 %v1113
        %1361 = vmatprep.subr.bf16.mxu0 %v1110
        %1362 = vmatpush1.bf16.msra.mxu0 %v1109
        %1363 = vmatprep.subr.bf16.mxu0 %v1106
        %1364 = vmatpush1.bf16.msra.mxu0 %v1105
        %1365 = vmatprep.subr.bf16.mxu0 %v1102
        %1366 = vmatpush1.bf16.msra.mxu0 %v1101
        %1367 = vmatprep.subr.bf16.mxu0 %v1098
        %1368 = vmatpush1.bf16.msra.mxu0 %v1097
        %1369 = vmatprep.subr.bf16.mxu0 %v1158
        %1370 = vmatpush2.bf16.msra.mxu0 %v1157
        %1371 = vmatprep.subr.bf16.mxu0 %v1154
        %1372 = vmatpush2.bf16.msra.mxu0 %v1153
        %1373 = vmatprep.subr.bf16.mxu0 %v1150
        %1374 = vmatpush2.bf16.msra.mxu0 %v1149
        %1375 = vmatprep.subr.bf16.mxu0 %v1146
        %1376 = vmatpush2.bf16.msra.mxu0 %v1145
        %1377 = vmatprep.subr.bf16.mxu0 %v1142
        %1378 = vmatpush2.bf16.msra.mxu0 %v1141
        %1379 = vmatprep.subr.bf16.mxu0 %v1138
        %1380 = vmatpush2.bf16.msra.mxu0 %v1137
        %1381 = vmatprep.subr.bf16.mxu0 %v1134
        %1382 = vmatpush2.bf16.msra.mxu0 %v1133
        %1383 = vmatprep.subr.bf16.mxu0 %v1130
        %1384 = vmatpush2.bf16.msra.mxu0 %v1129
        %1385 = vmatprep.mubr.bf16.mxu0 %v706
        %1386 = vmatmul.mubr.bf16.gmra.mxu0 %v705
        %v1387 = vpop.f32.mrf.mxu0
        %v1388 = vadd.f32 0.0, %v1387
        %v1389 = vpop.f32.mrf.mxu0
        %v1390 = vadd.f32 0.0, %v1389
        %v1391 = vpop.f32.mrf.mxu0
        %v1392 = vadd.f32 0.0, %v1391
        %v1393 = vpop.f32.mrf.mxu0
        %v1394 = vadd.f32 0.0, %v1393
        %1395 = vdwg.mxu0
        %1396 = vmatprep.subr.bf16.mxu0 %v1190
        %1397 = vmatpush1.bf16.msra.mxu0 %v1189
        %1398 = vmatprep.subr.bf16.mxu0 %v1186
        %1399 = vmatpush1.bf16.msra.mxu0 %v1185
        %1400 = vmatprep.subr.bf16.mxu0 %v1182
        %1401 = vmatpush1.bf16.msra.mxu0 %v1181
        %1402 = vmatprep.subr.bf16.mxu0 %v1178
        %1403 = vmatpush1.bf16.msra.mxu0 %v1177
        %1404 = vmatprep.subr.bf16.mxu0 %v1174
        %1405 = vmatpush1.bf16.msra.mxu0 %v1173
        %1406 = vmatprep.subr.bf16.mxu0 %v1170
        %1407 = vmatpush1.bf16.msra.mxu0 %v1169
        %1408 = vmatprep.subr.bf16.mxu0 %v1166
        %1409 = vmatpush1.bf16.msra.mxu0 %v1165
        %1410 = vmatprep.subr.bf16.mxu0 %v1162
        %1411 = vmatpush1.bf16.msra.mxu0 %v1161
        %1412 = vmatprep.subr.bf16.mxu0 %v1222
        %1413 = vmatpush2.bf16.msra.mxu0 %v1221
        %1414 = vmatprep.subr.bf16.mxu0 %v1218
        %1415 = vmatpush2.bf16.msra.mxu0 %v1217
        %1416 = vmatprep.subr.bf16.mxu0 %v1214
        %1417 = vmatpush2.bf16.msra.mxu0 %v1213
        %1418 = vmatprep.subr.bf16.mxu0 %v1210
        %1419 = vmatpush2.bf16.msra.mxu0 %v1209
        %1420 = vmatprep.subr.bf16.mxu0 %v1206
        %1421 = vmatpush2.bf16.msra.mxu0 %v1205
        %1422 = vmatprep.subr.bf16.mxu0 %v1202
        %1423 = vmatpush2.bf16.msra.mxu0 %v1201
        %1424 = vmatprep.subr.bf16.mxu0 %v1198
        %1425 = vmatpush2.bf16.msra.mxu0 %v1197
        %1426 = vmatprep.subr.bf16.mxu0 %v1194
        %1427 = vmatpush2.bf16.msra.mxu0 %v1193
        %1428 = vmatprep.mubr.bf16.mxu0 %v708
        %1429 = vmatmul.mubr.bf16.gmra.mxu0 %v707
        %v1430 = vpop.f32.mrf.mxu0
        %v1431 = vadd.f32 %v1388, %v1430
        %v1432 = vpop.f32.mrf.mxu0
        %v1433 = vadd.f32 %v1390, %v1432
        %v1434 = vpop.f32.mrf.mxu0
        %v1435 = vadd.f32 %v1392, %v1434
        %v1436 = vpop.f32.mrf.mxu0
        %v1437 = vadd.f32 %v1394, %v1436
        %1438 = vdwg.mxu0
        %1439 = vmatprep.subr.bf16.mxu0 %v1128
        %1440 = vmatpush1.bf16.msra.mxu0 %v1127
        %1441 = vmatprep.subr.bf16.mxu0 %v1124
        %1442 = vmatpush1.bf16.msra.mxu0 %v1123
        %1443 = vmatprep.subr.bf16.mxu0 %v1120
        %1444 = vmatpush1.bf16.msra.mxu0 %v1119
        %1445 = vmatprep.subr.bf16.mxu0 %v1116
        %1446 = vmatpush1.bf16.msra.mxu0 %v1115
        %1447 = vmatprep.subr.bf16.mxu0 %v1112
        %1448 = vmatpush1.bf16.msra.mxu0 %v1111
        %1449 = vmatprep.subr.bf16.mxu0 %v1108
        %1450 = vmatpush1.bf16.msra.mxu0 %v1107
        %1451 = vmatprep.subr.bf16.mxu0 %v1104
        %1452 = vmatpush1.bf16.msra.mxu0 %v1103
        %1453 = vmatprep.subr.bf16.mxu0 %v1100
        %1454 = vmatpush1.bf16.msra.mxu0 %v1099
        %1455 = vmatprep.subr.bf16.mxu0 %v1160
        %1456 = vmatpush2.bf16.msra.mxu0 %v1159
        %1457 = vmatprep.subr.bf16.mxu0 %v1156
        %1458 = vmatpush2.bf16.msra.mxu0 %v1155
        %1459 = vmatprep.subr.bf16.mxu0 %v1152
        %1460 = vmatpush2.bf16.msra.mxu0 %v1151
        %1461 = vmatprep.subr.bf16.mxu0 %v1148
        %1462 = vmatpush2.bf16.msra.mxu0 %v1147
        %1463 = vmatprep.subr.bf16.mxu0 %v1144
        %1464 = vmatpush2.bf16.msra.mxu0 %v1143
        %1465 = vmatprep.subr.bf16.mxu0 %v1140
        %1466 = vmatpush2.bf16.msra.mxu0 %v1139
        %1467 = vmatprep.subr.bf16.mxu0 %v1136
        %1468 = vmatpush2.bf16.msra.mxu0 %v1135
        %1469 = vmatprep.subr.bf16.mxu0 %v1132
        %1470 = vmatpush2.bf16.msra.mxu0 %v1131
        %1471 = vmatprep.mubr.bf16.mxu0 %v706
        %1472 = vmatmul.mubr.bf16.gmra.mxu0 %v705
        %v1473 = vpop.f32.mrf.mxu0
        %v1474 = vadd.f32 0.0, %v1473
        %v1475 = vpop.f32.mrf.mxu0
        %v1476 = vadd.f32 0.0, %v1475
        %v1477 = vpop.f32.mrf.mxu0
        %v1478 = vadd.f32 0.0, %v1477
        %v1479 = vpop.f32.mrf.mxu0
        %v1480 = vadd.f32 0.0, %v1479
        %1481 = vdwg.mxu0
        %1482 = vmatprep.subr.bf16.mxu0 %v1192
        %1483 = vmatpush1.bf16.msra.mxu0 %v1191
        %1484 = vmatprep.subr.bf16.mxu0 %v1188
        %1485 = vmatpush1.bf16.msra.mxu0 %v1187
        %1486 = vmatprep.subr.bf16.mxu0 %v1184
        %1487 = vmatpush1.bf16.msra.mxu0 %v1183
        %1488 = vmatprep.subr.bf16.mxu0 %v1180
        %1489 = vmatpush1.bf16.msra.mxu0 %v1179
        %1490 = vmatprep.subr.bf16.mxu0 %v1176
        %1491 = vmatpush1.bf16.msra.mxu0 %v1175
        %1492 = vmatprep.subr.bf16.mxu0 %v1172
        %1493 = vmatpush1.bf16.msra.mxu0 %v1171
        %1494 = vmatprep.subr.bf16.mxu0 %v1168
        %1495 = vmatpush1.bf16.msra.mxu0 %v1167
        %1496 = vmatprep.subr.bf16.mxu0 %v1164
        %1497 = vmatpush1.bf16.msra.mxu0 %v1163
        %1498 = vmatprep.subr.bf16.mxu0 %v1224
        %1499 = vmatpush2.bf16.msra.mxu0 %v1223
        %1500 = vmatprep.subr.bf16.mxu0 %v1220
        %1501 = vmatpush2.bf16.msra.mxu0 %v1219
        %1502 = vmatprep.subr.bf16.mxu0 %v1216
        %1503 = vmatpush2.bf16.msra.mxu0 %v1215
        %1504 = vmatprep.subr.bf16.mxu0 %v1212
        %1505 = vmatpush2.bf16.msra.mxu0 %v1211
        %1506 = vmatprep.subr.bf16.mxu0 %v1208
        %1507 = vmatpush2.bf16.msra.mxu0 %v1207
        %1508 = vmatprep.subr.bf16.mxu0 %v1204
        %1509 = vmatpush2.bf16.msra.mxu0 %v1203
        %1510 = vmatprep.subr.bf16.mxu0 %v1200
        %1511 = vmatpush2.bf16.msra.mxu0 %v1199
        %1512 = vmatprep.subr.bf16.mxu0 %v1196
        %1513 = vmatpush2.bf16.msra.mxu0 %v1195
        %1514 = vmatprep.mubr.bf16.mxu0 %v708
        %1515 = vmatmul.mubr.bf16.gmra.mxu0 %v707
        %v1516 = vpop.f32.mrf.mxu0
        %v1517 = vadd.f32 %v1474, %v1516
        %v1518 = vpop.f32.mrf.mxu0
        %v1519 = vadd.f32 %v1476, %v1518
        %v1520 = vpop.f32.mrf.mxu0
        %v1521 = vadd.f32 %v1478, %v1520
        %v1522 = vpop.f32.mrf.mxu0
        %v1523 = vadd.f32 %v1480, %v1522
        %1524 = vdwg.mxu0
        %v1525 = vadd.f32 %v553, %v1431
        %v1526 = vadd.f32 %v554, %v1433
        %v1527 = vadd.f32 %v555, %v1517
        %v1528 = vadd.f32 %v556, %v1519
        %v1529 = vadd.f32 %v557, %v1435
        %v1530 = vadd.f32 %v558, %v1437
        %v1531 = vadd.f32 %v559, %v1521
        %v1532 = vadd.f32 %v560, %v1523
        %1533 = vst [vmem:[#allocation2] sm:$0xff] %v1525
        %1534 = vst [vmem:[#allocation2 + $0x8] sm:$0xff] %v1526
        %1535 = vst [vmem:[#allocation2 + $0x10] sm:$0xff] %v1527
        %1536 = vst [vmem:[#allocation2 + $0x18] sm:$0xff] %v1528
        %1537 = vst [vmem:[#allocation2 + $0x20] sm:$0xff] %v1529
        %1538 = vst [vmem:[#allocation2 + $0x28] sm:$0xff] %v1530
        %1539 = vst [vmem:[#allocation2 + $0x30] sm:$0xff] %v1531
        %1540 = vst [vmem:[#allocation2 + $0x38] sm:$0xff] %v1532
        %p1541 = scmp.eq.s32.totalorder %s21, 3
        // Predicated region
        $region83: #{cnn_model_forward.12} parent=69 // pred_check
          %p1542 = pneg %p1541
        $region84: #{cnn_model_forward.12} parent=69 // pred_check_branch
          %1544 = sbr.rel (%p1542) target = $region86
        $region85: #{cnn_model_forward.12} parent=69 // pred_region
          %v1545 = vld [vmem:[#allocation2] sm:$0xff]
          %v1546 = vld [vmem:[#allocation2 + $0x8] sm:$0xff]
          %v1547 = vld [vmem:[#allocation2 + $0x10] sm:$0xff]
          %v1548 = vld [vmem:[#allocation2 + $0x18] sm:$0xff]
          %v1549 = vld [vmem:[#allocation2 + $0x20] sm:$0xff]
          %v1550 = vld [vmem:[#allocation2 + $0x28] sm:$0xff]
          %v1551 = vld [vmem:[#allocation2 + $0x30] sm:$0xff]
          %v1552 = vld [vmem:[#allocation2 + $0x38] sm:$0xff]
          %v1553 = vld [vmem:[%s537] sm:$0xf]
          %v1555 = vlaneseq
          %v1556 = vshrl.u32 %v1555, 7
          %v1557 = vsub.s32 0, %v1556
          %v1558 = vrot.slane %v1553, %v1557
          %v1559 = vlaneseq
          %v1560 = vshrl.u32 %v1559, 7
          %v1561 = vsub.s32 1, %v1560
          %v1562 = vrot.slane %v1553, %v1561
          %v1563 = vlaneseq
          %v1564 = vshrl.u32 %v1563, 7
          %v1565 = vsub.s32 2, %v1564
          %v1566 = vrot.slane %v1553, %v1565
          %v1567 = vlaneseq
          %v1568 = vshrl.u32 %v1567, 7
          %v1569 = vsub.s32 3, %v1568
          %v1570 = vrot.slane %v1553, %v1569
          %v1575 = vadd.f32 %v1545, %v1558
          %v1576 = vadd.f32 %v1546, %v1562
          %v1577 = vadd.f32 %v1547, %v1566
          %v1578 = vadd.f32 %v1548, %v1570
          %v1579 = vadd.f32 %v1549, %v1558
          %v1580 = vadd.f32 %v1550, %v1562
          %v1581 = vadd.f32 %v1551, %v1566
          %v1582 = vadd.f32 %v1552, %v1570
          %v1583 = vmax.f32 %v1575, 0.0
          %v1584 = vmax.f32 %v1576, 0.0
          %v1585 = vmax.f32 %v1577, 0.0
          %v1586 = vmax.f32 %v1578, 0.0
          %v1587 = vmax.f32 %v1579, 0.0
          %v1588 = vmax.f32 %v1580, 0.0
          %v1589 = vmax.f32 %v1581, 0.0
          %v1590 = vmax.f32 %v1582, 0.0
          %1591 = vst [vmem:[%s529] sm:$0xff] %v1583
          %1592 = vst [vmem:[%s529 + $0x8] sm:$0xff] %v1584
          %1593 = vst [vmem:[%s529 + $0x10] sm:$0xff] %v1585
          %1594 = vst [vmem:[%s529 + $0x18] sm:$0xff] %v1586
          %1595 = vst [vmem:[%s529 + $0x20] sm:$0xff] %v1587
          %1596 = vst [vmem:[%s529 + $0x28] sm:$0xff] %v1588
          %1597 = vst [vmem:[%s529 + $0x30] sm:$0xff] %v1589
          %1598 = vst [vmem:[%s529 + $0x38] sm:$0xff] %v1590
        $region86: #{cnn_model_forward.12} parent=69 // pred_fallthru
          _
        %s1599 = sand.u32 %s125, 1
        %s1600 = sand.u32 %s125, 1
        %s1601 = smul.addr %s1600, 64
        %s1602 = scalar_lea.vmem [#allocation5], %s1601
        // Predicated region
        $region87: #{cnn_model_forward.12} parent=69 // pred_check
          %p1603 = pneg %p135
        $region88: #{cnn_model_forward.12} parent=69 // pred_check_branch
          %1605 = sbr.rel (%p1603) target = $region90
        $region89: #{cnn_model_forward.12} parent=69 // pred_region
          %s1606 = smul.u32 2, %s19
          %s1607 = smul.u32 4, %s20
          %s1608 = smul.addr %s1606, 8
          %s1609 = sadd.s32 %s1607, %s1608
          %s1610 = smul.addr %s1609, 8
          %s1611 = scalar_lea.vmem %s3, %s1610
          // Predicated region
          $region91: #{cnn_model_forward.12} parent=89 // pred_check
            _
          $region92: #{cnn_model_forward.12} parent=89 // pred_check_branch
            %1613 = sbr.rel (0) target = $region94
          $region93: #{cnn_model_forward.12} parent=89 // pred_region
            // Predicated region
            $region95: #{cnn_model_forward.12} parent=93 // pred_check
              _
            $region96: #{cnn_model_forward.12} parent=93 // pred_check_branch
              %1615 = sbr.rel (0) target = $region98
            $region97: #{cnn_model_forward.12} parent=93 // pred_region
              loop: start=0, step=1, limit=1
              $region99: #{cnn_model_forward.12} parent=97 // loop_pre_header
                _
              $region100: #{cnn_model_forward.12} parent=97 // loop_header
                %s1617 = sphi 0, %s1621
                %p1618 = scmp.ge.s32.totalorder %s1617, 1
                %s1622 = sphi %s1602, %s1602
                %s1623 = sphi %s1611, %s1611
              $region101: #{cnn_model_forward.12} parent=97 // loop_header_branch
                %1620 = sbr.rel (%p1618) target = $region105
              $region102: #{cnn_model_forward.12} parent=97 // loop_body
                %v1624 = vld [vmem:[%s1622] sm:$0xff]
                %1625 = vst [vmem:[%s1623] sm:$0xff] %v1624
                %v1626 = vld [vmem:[%s1622 + $0x8] sm:$0xff]
                %1627 = vst [vmem:[%s1623 + $0x8] sm:$0xff] %v1626
                %v1628 = vld [vmem:[%s1622 + $0x10] sm:$0xff]
                %1629 = vst [vmem:[%s1623 + $0x10] sm:$0xff] %v1628
                %v1630 = vld [vmem:[%s1622 + $0x18] sm:$0xff]
                %1631 = vst [vmem:[%s1623 + $0x18] sm:$0xff] %v1630
                %v1632 = vld [vmem:[%s1622 + $0x20] sm:$0xff]
                %1633 = vst [vmem:[%s1623 + $0x40] sm:$0xff] %v1632
                %v1634 = vld [vmem:[%s1622 + $0x28] sm:$0xff]
                %1635 = vst [vmem:[%s1623 + $0x48] sm:$0xff] %v1634
                %v1636 = vld [vmem:[%s1622 + $0x30] sm:$0xff]
                %1637 = vst [vmem:[%s1623 + $0x50] sm:$0xff] %v1636
                %v1638 = vld [vmem:[%s1622 + $0x38] sm:$0xff]
                %1639 = vst [vmem:[%s1623 + $0x58] sm:$0xff] %v1638
              $region103: #{cnn_model_forward.12} parent=97 // loop_footer
                %s1621 = sadd.s32 1, %s1617
              $region104: #{cnn_model_forward.12} parent=97 // loop_footer_branch
                %1616 = sbr.rel target = $region100
              $region105: #{cnn_model_forward.12} parent=97 // loop_exit
                _
            $region98: #{cnn_model_forward.12} parent=93 // pred_fallthru
              _
            // Predicated region
            $region106: #{cnn_model_forward.12} parent=93 // pred_check
              _
            $region107: #{cnn_model_forward.12} parent=93 // pred_check_branch
              %1641 = sbr.rel target = $region109
            $region108: #{cnn_model_forward.12} parent=93 // pred_region
              _
            $region109: #{cnn_model_forward.12} parent=93 // pred_fallthru
              _
          $region94: #{cnn_model_forward.12} parent=89 // pred_fallthru
            _
          %1642 = vnop
        $region90: #{cnn_model_forward.12} parent=69 // pred_fallthru
          _
      $region70: #{cnn_model_forward.12} parent=5 // pred_fallthru
        _
      %p1643 = scmp.le.s32.totalorder 2, %s9
      // Predicated region
      $region110: #{cnn_model_forward.12} parent=5 // pred_check
        %p1644 = pneg %p1643
      $region111: #{cnn_model_forward.12} parent=5 // pred_check_branch
        %1646 = sbr.rel (%p1644) target = $region113
      $region112: #{cnn_model_forward.12} parent=5 // pred_region
        %s1647 = ssub.s32 %s9, 2
        // Predicated region
        $region114: #{cnn_model_forward.12} parent=112 // pred_check
          %p1648 = pneg %p141
        $region115: #{cnn_model_forward.12} parent=112 // pred_check_branch
          %1650 = sbr.rel (%p1648) target = $region117
        $region116: #{cnn_model_forward.12} parent=112 // pred_region
          %s1651 = sand.u32 %s126, 1
          %s1652 = sand.u32 %s126, 1
          %s1653 = smul.addr %s1652, 64
          %s1654 = scalar_lea.vmem [#allocation5], %s1653
        $region117: #{cnn_model_forward.12} parent=112 // pred_fallthru
          _
      $region113: #{cnn_model_forward.12} parent=5 // pred_fallthru
        _
    $region6: #{cnn_model_forward.12} parent=1 // loop_footer
      %s13 = sadd.s32 1, %s9
    $region7: #{cnn_model_forward.12} parent=1 // loop_footer_branch
      %8 = sbr.rel target = $region3
    $region8: #{cnn_model_forward.12} parent=1 // loop_exit
      _

// kernel: cnn_model_forward.13
$region0: #{cnn_model_forward.13}
  #allocation0 [shape = 'u32[]', space=smem, size = 0x4, offset = 0x4, fixed_abs, tag = 'smem constant byte address 0x4 - core index']
  #allocation1 [shape = 'u32[144,128]{1,0:T(1,128)}', space=vmem, size = 0x12000, scoped, tag = 'internal scratch']
  #allocation2 [shape = 'f32[16,512]{1,0:T(8,128)}', space=vmem, size = 0x8000, scoped, tag = 'scratch operand']
  %s0 = inlined_call_operand.vmem [shape: bf16[16,1024], index: 0, kind: input, shape index: {}]
  %s1 = inlined_call_operand.vmem [shape: bf16[1024,512], index: 1, kind: input, shape index: {}]
  %s2 = inlined_call_operand.vmem [shape: f32[1,512], index: 2, kind: input, shape index: {}]
  %s3 = inlined_call_operand.vmem [shape: f32[16,512], index: 3, kind: output, shape index: {}]
  %s4 = sld [smem:[#allocation0]]
  $region76: #{cnn_model_forward.13} parent=0
    _
  %s6 = ssub.s32 1, %s4
  %s7 = scalar_select 0, %s6, %s4
  $region1: #{cnn_model_forward.13} parent=0
    #allocation3 [shape = 'u8[32768]{0}', space=vmem, size = 0x8000, scoped, tag = 'input window, operand 0']
    loop: start=0, step=1, limit=4
    $region2: #{cnn_model_forward.13} parent=1 // loop_pre_header
      _
    $region3: #{cnn_model_forward.13} parent=1 // loop_header
      %s9 = sphi 0, %s13
      %p10 = scmp.ge.s32.totalorder %s9, 4
      %s16 = sphi 0, %s35
      %s17 = sphi 0, %s31
      %s18 = sphi 0, %s27
      %s19 = sphi 0, %s16
      %s20 = sphi 0, %s17
      %s21 = sphi 0, %s18
      %s22 = sphi 0, %s19
      %s23 = sphi 0, %s20
      %s24 = sphi 0, %s21
      %s40 = sphi 0, %s42
      %s43 = sphi 0, %s40
      %s44 = sphi 0, %s43
      %s60 = sphi 0, %s44
      %s68 = sphi 0, %s70
      %s71 = sphi 0, %s68
      %s72 = sphi 0, %s71
      %s88 = sphi 0, %s72
      %s94 = sphi 0, %s96
      %s97 = sphi 0, %s94
      %s98 = sphi 0, %s97
      %s114 = sphi 0, %s98
      %s122 = sphi 0, %s124
      %s125 = sphi 0, %s122
      %s126 = sphi 0, %s125
      %s142 = sphi 0, %s126
    $region4: #{cnn_model_forward.13} parent=1 // loop_header_branch
      %12 = sbr.rel (%p10) target = $region8
    $region5: #{cnn_model_forward.13} parent=1 // loop_body
      %s14 = ssub.s32 %s9, 1
      %s15 = ssub.s32 %s9, 2
      %s25 = sadd.s32 1, %s18
      %p26 = scmp.ge.s32.totalorder %s25, 2
      %s27 = scalar_select %p26, 0, %s25
      %s28 = sadd.s32 1, %s17
      %s29 = scalar_select %p26, %s28, %s17
      %p30 = scmp.ge.s32.totalorder %s29, 1
      %s31 = scalar_select %p30, 0, %s29
      %s32 = sadd.s32 1, %s16
      %s33 = scalar_select %p30, %s32, %s16
      %p34 = scmp.ge.s32.totalorder %s33, 1
      %s35 = scalar_select %p34, 0, %s33
      %s36 = ssub.s32 %s16, %s35
      %s37 = ssub.s32 %s18, %s27
      %s38 = sor.u32 %s36, %s37
      %p39 = scmp.eq.s32.totalorder %s38, 0
      %s41 = sadd.s32 %s40, 1
      %s42 = scalar_select %p39, %s40, %s41
      %p45 = pneg %p39
      %p46 = scmp.eq.s32.totalorder %s9, 1
      %p47 = por %p45, %p46
      %p48 = scmp.ne.s32.totalorder %s40, %s43
      %p49 = scmp.eq.s32.totalorder %s9, 0
      %p50 = por %p48, %p49
      %p51 = scmp.ne.s32.totalorder %s40, %s43
      %p52 = scmp.eq.s32.totalorder %s14, 1
      %p53 = por %p51, %p52
      %p54 = scmp.ne.s32.totalorder %s43, %s44
      %p55 = scmp.eq.s32.totalorder %s14, 0
      %p56 = por %p54, %p55
      %p57 = scmp.ne.s32.totalorder %s43, %s44
      %p58 = scmp.eq.s32.totalorder %s15, 1
      %p59 = por %p57, %p58
      %p61 = scmp.ne.s32.totalorder %s44, %s60
      %p62 = scmp.eq.s32.totalorder %s15, 0
      %p63 = por %p61, %p62
      %s64 = ssub.s32 %s18, %s27
      %s65 = ssub.s32 %s17, %s31
      %s66 = sor.u32 %s64, %s65
      %p67 = scmp.eq.s32.totalorder %s66, 0
      %s69 = sadd.s32 %s68, 1
      %s70 = scalar_select %p67, %s68, %s69
      %p73 = pneg %p67
      %p74 = scmp.eq.s32.totalorder %s9, 1
      %p75 = por %p73, %p74
      %p76 = scmp.ne.s32.totalorder %s68, %s71
      %p77 = scmp.eq.s32.totalorder %s9, 0
      %p78 = por %p76, %p77
      %p79 = scmp.ne.s32.totalorder %s68, %s71
      %p80 = scmp.eq.s32.totalorder %s14, 1
      %p81 = por %p79, %p80
      %p82 = scmp.ne.s32.totalorder %s71, %s72
      %p83 = scmp.eq.s32.totalorder %s14, 0
      %p84 = por %p82, %p83
      %p85 = scmp.ne.s32.totalorder %s71, %s72
      %p86 = scmp.eq.s32.totalorder %s15, 1
      %p87 = por %p85, %p86
      %p89 = scmp.ne.s32.totalorder %s72, %s88
      %p90 = scmp.eq.s32.totalorder %s15, 0
      %p91 = por %p89, %p90
      %s92 = ssub.s32 %s17, %s31
      %p93 = scmp.eq.s32.totalorder %s92, 0
      %s95 = sadd.s32 %s94, 1
      %s96 = scalar_select %p93, %s94, %s95
      %p99 = pneg %p93
      %p100 = scmp.eq.s32.totalorder %s9, 1
      %p101 = por %p99, %p100
      %p102 = scmp.ne.s32.totalorder %s94, %s97
      %p103 = scmp.eq.s32.totalorder %s9, 0
      %p104 = por %p102, %p103
      %p105 = scmp.ne.s32.totalorder %s94, %s97
      %p106 = scmp.eq.s32.totalorder %s14, 1
      %p107 = por %p105, %p106
      %p108 = scmp.ne.s32.totalorder %s97, %s98
      %p109 = scmp.eq.s32.totalorder %s14, 0
      %p110 = por %p108, %p109
      %p111 = scmp.ne.s32.totalorder %s97, %s98
      %p112 = scmp.eq.s32.totalorder %s15, 1
      %p113 = por %p111, %p112
      %p115 = scmp.ne.s32.totalorder %s98, %s114
      %p116 = scmp.eq.s32.totalorder %s15, 0
      %p117 = por %p115, %p116
      %s118 = ssub.s32 %s16, %s35
      %s119 = ssub.s32 %s17, %s31
      %s120 = sor.u32 %s118, %s119
      %p121 = scmp.eq.s32.totalorder %s120, 0
      %s123 = sadd.s32 %s122, 1
      %s124 = scalar_select %p121, %s122, %s123
      %p127 = pneg %p121
      %p128 = scmp.eq.s32.totalorder %s9, 1
      %p129 = por %p127, %p128
      %p130 = scmp.ne.s32.totalorder %s122, %s125
      %p131 = scmp.eq.s32.totalorder %s9, 0
      %p132 = por %p130, %p131
      %p133 = scmp.ne.s32.totalorder %s122, %s125
      %p134 = scmp.eq.s32.totalorder %s14, 1
      %p135 = por %p133, %p134
      %p136 = scmp.ne.s32.totalorder %s125, %s126
      %p137 = scmp.eq.s32.totalorder %s14, 0
      %p138 = por %p136, %p137
      %p139 = scmp.ne.s32.totalorder %s125, %s126
      %p140 = scmp.eq.s32.totalorder %s15, 1
      %p141 = por %p139, %p140
      %p143 = scmp.ne.s32.totalorder %s126, %s142
      %p144 = scmp.eq.s32.totalorder %s15, 0
      %p145 = por %p143, %p144
      %p146 = scmp.le.s32.totalorder 1, %s9
      %p147 = scmp.lt.s32.totalorder %s9, 3
      %p148 = pnand %p146, %p147
      %p149 = pneg %p148
      // Predicated region
      $region9: #{cnn_model_forward.13} parent=5 // pred_check
        _
      $region10: #{cnn_model_forward.13} parent=5 // pred_check_branch
        %151 = sbr.rel (%p148) target = $region12
      $region11: #{cnn_model_forward.13} parent=5 // pred_region
        %s152 = ssub.s32 %s9, 1
        // Predicated region
        $region13: #{cnn_model_forward.13} parent=11 // pred_check
          %p153 = pneg %p110
        $region14: #{cnn_model_forward.13} parent=11 // pred_check_branch
          %155 = sbr.rel (%p153) target = $region16
        $region15: #{cnn_model_forward.13} parent=11 // pred_region
          %s156 = smul.u32 4, %s20
          %p157 = scmp.lt.s32.totalorder %s156, 3
          %s158 = scalar_select %p157, %s156, 3
          %s159 = scalar_lea.vmem %s2, %s158
          %s160 = smul.u32 4, %s20
        $region16: #{cnn_model_forward.13} parent=11 // pred_fallthru
          _
      $region12: #{cnn_model_forward.13} parent=5 // pred_fallthru
        _
      %p161 = scmp.lt.s32.totalorder %s9, 2
      // Predicated region
      $region17: #{cnn_model_forward.13} parent=5 // pred_check
        %p162 = pneg %p161
      $region18: #{cnn_model_forward.13} parent=5 // pred_check_branch
        %164 = sbr.rel (%p162) target = $region20
      $region19: #{cnn_model_forward.13} parent=5 // pred_region
        // Predicated region
        $region21: #{cnn_model_forward.13} parent=19 // pred_check
          %p165 = pneg %p50
        $region22: #{cnn_model_forward.13} parent=19 // pred_check_branch
          %167 = sbr.rel (%p165) target = $region24
        $region23: #{cnn_model_forward.13} parent=19 // pred_region
          %s168 = sand.u32 %s40, 1
          %s169 = sand.u32 %s40, 1
          %s170 = smul.addr %s169, 32
          %s171 = scalar_lea.vmem [#allocation3], %s170
          %s172 = smul.u32 2, %s16
          %s173 = smul.u32 4, %s18
          %s174 = smul.addr %s172, 8
          %s175 = sadd.s32 %s173, %s174
          %s176 = smul.addr %s175, 4
          %s177 = scalar_lea.vmem %s0, %s176
          // Predicated region
          $region25: #{cnn_model_forward.13} parent=23 // pred_check
            _
          $region26: #{cnn_model_forward.13} parent=23 // pred_check_branch
            %179 = sbr.rel (0) target = $region28
          $region27: #{cnn_model_forward.13} parent=23 // pred_region
            // Predicated region
            $region29: #{cnn_model_forward.13} parent=27 // pred_check
              _
            $region30: #{cnn_model_forward.13} parent=27 // pred_check_branch
              %181 = sbr.rel (0) target = $region32
            $region31: #{cnn_model_forward.13} parent=27 // pred_region
              loop: start=0, step=1, limit=1
              $region33: #{cnn_model_forward.13} parent=31 // loop_pre_header
                _
              $region34: #{cnn_model_forward.13} parent=31 // loop_header
                %s183 = sphi 0, %s187
                %p184 = scmp.ge.s32.totalorder %s183, 1
                %s188 = sphi %s177, %s177
                %s189 = sphi %s171, %s171
              $region35: #{cnn_model_forward.13} parent=31 // loop_header_branch
                %186 = sbr.rel (%p184) target = $region39
              $region36: #{cnn_model_forward.13} parent=31 // loop_body
                %v190 = vld [vmem:[%s188] sm:$0xff]
                %191 = vst [vmem:[%s189] sm:$0xff] %v190
                %v192 = vld [vmem:[%s188 + $0x8] sm:$0xff]
                %193 = vst [vmem:[%s189 + $0x8] sm:$0xff] %v192
                %v194 = vld [vmem:[%s188 + $0x20] sm:$0xff]
                %195 = vst [vmem:[%s189 + $0x10] sm:$0xff] %v194
                %v196 = vld [vmem:[%s188 + $0x28] sm:$0xff]
                %197 = vst [vmem:[%s189 + $0x18] sm:$0xff] %v196
              $region37: #{cnn_model_forward.13} parent=31 // loop_footer
                %s187 = sadd.s32 1, %s183
              $region38: #{cnn_model_forward.13} parent=31 // loop_footer_branch
                %182 = sbr.rel target = $region34
              $region39: #{cnn_model_forward.13} parent=31 // loop_exit
                _
            $region32: #{cnn_model_forward.13} parent=27 // pred_fallthru
              _
            // Predicated region
            $region40: #{cnn_model_forward.13} parent=27 // pred_check
              _
            $region41: #{cnn_model_forward.13} parent=27 // pred_check_branch
              %199 = sbr.rel target = $region43
            $region42: #{cnn_model_forward.13} parent=27 // pred_region
              _
            $region43: #{cnn_model_forward.13} parent=27 // pred_fallthru
              _
          $region28: #{cnn_model_forward.13} parent=23 // pred_fallthru
            _
          %200 = vnop
        $region24: #{cnn_model_forward.13} parent=19 // pred_fallthru
          _
        // Predicated region
        $region44: #{cnn_model_forward.13} parent=19 // pred_check
          %p201 = pneg %p78
        $region45: #{cnn_model_forward.13} parent=19 // pred_check_branch
          %203 = sbr.rel (%p201) target = $region47
        $region46: #{cnn_model_forward.13} parent=19 // pred_region
          %s204 = smul.u32 64, %s18
          %s205 = smul.u32 4, %s17
          %p206 = scmp.lt.s32.totalorder %s204, 127
          %s207 = scalar_select %p206, %s204, 127
          %p208 = scmp.lt.s32.totalorder %s205, 3
          %s209 = scalar_select %p208, %s205, 3
          %s210 = smul.addr %s207, 4
          %s211 = sadd.s32 %s209, %s210
          %s212 = smul.addr %s211, 4
          %s213 = scalar_lea.vmem %s1, %s212
          %s214 = smul.u32 64, %s18
          %s215 = smul.u32 4, %s17
        $region47: #{cnn_model_forward.13} parent=19 // pred_fallthru
          _
      $region20: #{cnn_model_forward.13} parent=5 // pred_fallthru
        _
      %p216 = scmp.le.s32.totalorder 1, %s9
      %p217 = scmp.lt.s32.totalorder %s9, 3
      %p218 = pnand %p216, %p217
      %p219 = pneg %p218
      // Predicated region
      $region48: #{cnn_model_forward.13} parent=5 // pred_check
        _
      $region49: #{cnn_model_forward.13} parent=5 // pred_check_branch
        %221 = sbr.rel (%p218) target = $region51
      $region50: #{cnn_model_forward.13} parent=5 // pred_region
        %s222 = ssub.s32 %s9, 1
        %s223 = sand.u32 %s43, 1
        %s224 = sand.u32 %s43, 1
        %s225 = smul.addr %s224, 32
        %s226 = scalar_lea.vmem [#allocation3], %s225
        // Predicated region
        $region52: #{cnn_model_forward.13} parent=50 // pred_check
          %p227 = pneg %p56
        $region53: #{cnn_model_forward.13} parent=50 // pred_check_branch
          %229 = sbr.rel (%p227) target = $region55
        $region54: #{cnn_model_forward.13} parent=50 // pred_region
          _
        $region55: #{cnn_model_forward.13} parent=50 // pred_fallthru
          _
        %s230 = sand.u32 %s43, 1
        %s231 = sand.u32 %s43, 1
        %s232 = smul.addr %s231, 32
        %s233 = scalar_lea.vmem [#allocation3], %s232
        %p234 = pneg %p56
        %p235 = pneg %p53
        %s236 = smul.u32 64, %s21
        %s237 = smul.u32 4, %s20
        %p238 = scmp.lt.s32.totalorder %s236, 127
        %s239 = scalar_select %p238, %s236, 127
        %p240 = scmp.lt.s32.totalorder %s237, 3
        %s241 = scalar_select %p240, %s237, 3
        %s242 = smul.addr %s239, 4
        %s243 = sadd.s32 %s241, %s242
        %s244 = smul.addr %s243, 4
        %s245 = scalar_lea.vmem %s1, %s244
        %p246 = pneg %p84
        %p247 = pneg %p81
        %s248 = smul.u32 4, %s20
        %p249 = scmp.lt.s32.totalorder %s248, 3
        %s250 = scalar_select %p249, %s248, 3
        %s251 = scalar_lea.vmem %s2, %s250
        %p252 = pneg %p110
        %p253 = pneg %p107
        %p254 = pneg %p138
        %p255 = pneg %p135
        %s256 = smul.u32 2, %s19
        %s257 = smul.u32 4, %s20
        %p258 = scmp.lt.s32.totalorder %s256, 1
        %s259 = scalar_select %p258, %s256, 1
        %p260 = scmp.lt.s32.totalorder %s257, 3
        %s261 = scalar_select %p260, %s257, 3
        %s262 = smul.addr %s259, 4
        %s263 = sadd.s32 %s261, %s262
        %s264 = smul.addr %s263, 8
        %s265 = scalar_lea.vmem %s3, %s264
        %s266 = smul.u32 2, %s19
        %s267 = smul.u32 4, %s21
        %s268 = smul.u32 64, %s21
        %s269 = smul.u32 4, %s20
        %p270 = scmp.lt.s32.totalorder %s268, 127
        %s271 = scalar_select %p270, %s268, 127
        %p272 = scmp.lt.s32.totalorder %s269, 3
        %s273 = scalar_select %p272, %s269, 3
        %s274 = smul.addr %s271, 4
        %s275 = sadd.s32 %s273, %s274
        %s276 = smul.addr %s275, 4
        %s277 = scalar_lea.vmem %s1, %s276
        %s278 = smul.u32 64, %s21
        %s279 = smul.u32 4, %s20
        %s280 = smul.u32 4, %s20
        %p281 = scmp.lt.s32.totalorder %s280, 3
        %s282 = scalar_select %p281, %s280, 3
        %s283 = scalar_lea.vmem %s2, %s282
        %s284 = smul.u32 4, %s20
        %s285 = smul.u32 2, %s19
        %s286 = smul.u32 4, %s20
        %p287 = scmp.lt.s32.totalorder %s285, 1
        %s288 = scalar_select %p287, %s285, 1
        %p289 = scmp.lt.s32.totalorder %s286, 3
        %s290 = scalar_select %p289, %s286, 3
        %s291 = smul.addr %s288, 4
        %s292 = sadd.s32 %s290, %s291
        %s293 = smul.addr %s292, 8
        %s294 = scalar_lea.vmem %s3, %s293
        %s295 = smul.u32 2, %s19
        %s296 = smul.u32 4, %s20
        %p297 = scmp.eq.s32.totalorder %s21, 0
        // Predicated region
        $region56: #{cnn_model_forward.13} parent=50 // pred_check
          %p298 = pneg %p297
        $region57: #{cnn_model_forward.13} parent=50 // pred_check_branch
          %300 = sbr.rel (%p298) target = $region59
        $region58: #{cnn_model_forward.13} parent=50 // pred_region
          %301 = vst [vmem:[#allocation2] sm:$0xff] 0.0
          %302 = vst [vmem:[#allocation2 + $0x8] sm:$0xff] 0.0
          %303 = vst [vmem:[#allocation2 + $0x10] sm:$0xff] 0.0
          %304 = vst [vmem:[#allocation2 + $0x18] sm:$0xff] 0.0
          %305 = vst [vmem:[#allocation2 + $0x20] sm:$0xff] 0.0
          %306 = vst [vmem:[#allocation2 + $0x28] sm:$0xff] 0.0
          %307 = vst [vmem:[#allocation2 + $0x30] sm:$0xff] 0.0
          %308 = vst [vmem:[#allocation2 + $0x38] sm:$0xff] 0.0
        $region59: #{cnn_model_forward.13} parent=50 // pred_fallthru
          _
        %v309 = vld [vmem:[#allocation2] sm:$0xff]
        %v310 = vld [vmem:[#allocation2 + $0x8] sm:$0xff]
        %v311 = vld [vmem:[#allocation2 + $0x10] sm:$0xff]
        %v312 = vld [vmem:[#allocation2 + $0x18] sm:$0xff]
        %v313 = vld [vmem:[#allocation2 + $0x20] sm:$0xff]
        %v314 = vld [vmem:[#allocation2 + $0x28] sm:$0xff]
        %v315 = vld [vmem:[#allocation2 + $0x30] sm:$0xff]
        %v316 = vld [vmem:[#allocation2 + $0x38] sm:$0xff]
        %v317 = vld [vmem:[%s226] sm:$0xff]
        %v318 = vld [vmem:[%s226 + $0x8] sm:$0xff]
        %v319 = vld [vmem:[%s226 + $0x10] sm:$0xff]
        %v320 = vld [vmem:[%s226 + $0x18] sm:$0xff]
        %v321 = vld [vmem:[%s277] sm:$0xff]
        %v322 = vld [vmem:[%s277 + $0x8] sm:$0xff]
        %v323 = vld [vmem:[%s277 + $0x10] sm:$0xff]
        %v324 = vld [vmem:[%s277 + $0x18] sm:$0xff]
        %v325 = vld [vmem:[%s277 + $0x20] sm:$0xff]
        %v326 = vld [vmem:[%s277 + $0x28] sm:$0xff]
        %v327 = vld [vmem:[%s277 + $0x30] sm:$0xff]
        %v328 = vld [vmem:[%s277 + $0x38] sm:$0xff]
        %v329 = vld [vmem:[%s277 + $0x40] sm:$0xff]
        %v330 = vld [vmem:[%s277 + $0x48] sm:$0xff]
        %v331 = vld [vmem:[%s277 + $0x50] sm:$0xff]
        %v332 = vld [vmem:[%s277 + $0x58] sm:$0xff]
        %v333 = vld [vmem:[%s277 + $0x60] sm:$0xff]
        %v334 = vld [vmem:[%s277 + $0x68] sm:$0xff]
        %v335 = vld [vmem:[%s277 + $0x70] sm:$0xff]
        %v336 = vld [vmem:[%s277 + $0x78] sm:$0xff]
        %v337 = vld [vmem:[%s277 + $0x80] sm:$0xff]
        %v338 = vld [vmem:[%s277 + $0x88] sm:$0xff]
        %v339 = vld [vmem:[%s277 + $0x90] sm:$0xff]
        %v340 = vld [vmem:[%s277 + $0x98] sm:$0xff]
        %v341 = vld [vmem:[%s277 + $0xa0] sm:$0xff]
        %v342 = vld [vmem:[%s277 + $0xa8] sm:$0xff]
        %v343 = vld [vmem:[%s277 + $0xb0] sm:$0xff]
        %v344 = vld [vmem:[%s277 + $0xb8] sm:$0xff]
        %v345 = vld [vmem:[%s277 + $0xc0] sm:$0xff]
        %v346 = vld [vmem:[%s277 + $0xc8] sm:$0xff]
        %v347 = vld [vmem:[%s277 + $0xd0] sm:$0xff]
        %v348 = vld [vmem:[%s277 + $0xd8] sm:$0xff]
        %v349 = vld [vmem:[%s277 + $0xe0] sm:$0xff]
        %v350 = vld [vmem:[%s277 + $0xe8] sm:$0xff]
        %v351 = vld [vmem:[%s277 + $0xf0] sm:$0xff]
        %v352 = vld [vmem:[%s277 + $0xf8] sm:$0xff]
        %v353 = vld [vmem:[%s277 + $0x100] sm:$0xff]
        %v354 = vld [vmem:[%s277 + $0x108] sm:$0xff]
        %v355 = vld [vmem:[%s277 + $0x110] sm:$0xff]
        %v356 = vld [vmem:[%s277 + $0x118] sm:$0xff]
        %v357 = vld [vmem:[%s277 + $0x120] sm:$0xff]
        %v358 = vld [vmem:[%s277 + $0x128] sm:$0xff]
        %v359 = vld [vmem:[%s277 + $0x130] sm:$0xff]
        %v360 = vld [vmem:[%s277 + $0x138] sm:$0xff]
        %v361 = vld [vmem:[%s277 + $0x140] sm:$0xff]
        %v362 = vld [vmem:[%s277 + $0x148] sm:$0xff]
        %v363 = vld [vmem:[%s277 + $0x150] sm:$0xff]
        %v364 = vld [vmem:[%s277 + $0x158] sm:$0xff]
        %v365 = vld [vmem:[%s277 + $0x160] sm:$0xff]
        %v366 = vld [vmem:[%s277 + $0x168] sm:$0xff]
        %v367 = vld [vmem:[%s277 + $0x170] sm:$0xff]
        %v368 = vld [vmem:[%s277 + $0x178] sm:$0xff]
        %v369 = vld [vmem:[%s277 + $0x180] sm:$0xff]
        %v370 = vld [vmem:[%s277 + $0x188] sm:$0xff]
        %v371 = vld [vmem:[%s277 + $0x190] sm:$0xff]
        %v372 = vld [vmem:[%s277 + $0x198] sm:$0xff]
        %v373 = vld [vmem:[%s277 + $0x1a0] sm:$0xff]
        %v374 = vld [vmem:[%s277 + $0x1a8] sm:$0xff]
        %v375 = vld [vmem:[%s277 + $0x1b0] sm:$0xff]
        %v376 = vld [vmem:[%s277 + $0x1b8] sm:$0xff]
        %v377 = vld [vmem:[%s277 + $0x1c0] sm:$0xff]
        %v378 = vld [vmem:[%s277 + $0x1c8] sm:$0xff]
        %v379 = vld [vmem:[%s277 + $0x1d0] sm:$0xff]
        %v380 = vld [vmem:[%s277 + $0x1d8] sm:$0xff]
        %v381 = vld [vmem:[%s277 + $0x1e0] sm:$0xff]
        %v382 = vld [vmem:[%s277 + $0x1e8] sm:$0xff]
        %v383 = vld [vmem:[%s277 + $0x1f0] sm:$0xff]
        %v384 = vld [vmem:[%s277 + $0x1f8] sm:$0xff]
        %v385 = vld [vmem:[%s277 + $0x200] sm:$0xff]
        %v386 = vld [vmem:[%s277 + $0x208] sm:$0xff]
        %v387 = vld [vmem:[%s277 + $0x210] sm:$0xff]
        %v388 = vld [vmem:[%s277 + $0x218] sm:$0xff]
        %v389 = vld [vmem:[%s277 + $0x220] sm:$0xff]
        %v390 = vld [vmem:[%s277 + $0x228] sm:$0xff]
        %v391 = vld [vmem:[%s277 + $0x230] sm:$0xff]
        %v392 = vld [vmem:[%s277 + $0x238] sm:$0xff]
        %v393 = vld [vmem:[%s277 + $0x240] sm:$0xff]
        %v394 = vld [vmem:[%s277 + $0x248] sm:$0xff]
        %v395 = vld [vmem:[%s277 + $0x250] sm:$0xff]
        %v396 = vld [vmem:[%s277 + $0x258] sm:$0xff]
        %v397 = vld [vmem:[%s277 + $0x260] sm:$0xff]
        %v398 = vld [vmem:[%s277 + $0x268] sm:$0xff]
        %v399 = vld [vmem:[%s277 + $0x270] sm:$0xff]
        %v400 = vld [vmem:[%s277 + $0x278] sm:$0xff]
        %v401 = vld [vmem:[%s277 + $0x280] sm:$0xff]
        %v402 = vld [vmem:[%s277 + $0x288] sm:$0xff]
        %v403 = vld [vmem:[%s277 + $0x290] sm:$0xff]
        %v404 = vld [vmem:[%s277 + $0x298] sm:$0xff]
        %v405 = vld [vmem:[%s277 + $0x2a0] sm:$0xff]
        %v406 = vld [vmem:[%s277 + $0x2a8] sm:$0xff]
        %v407 = vld [vmem:[%s277 + $0x2b0] sm:$0xff]
        %v408 = vld [vmem:[%s277 + $0x2b8] sm:$0xff]
        %v409 = vld [vmem:[%s277 + $0x2c0] sm:$0xff]
        %v410 = vld [vmem:[%s277 + $0x2c8] sm:$0xff]
        %v411 = vld [vmem:[%s277 + $0x2d0] sm:$0xff]
        %v412 = vld [vmem:[%s277 + $0x2d8] sm:$0xff]
        %v413 = vld [vmem:[%s277 + $0x2e0] sm:$0xff]
        %v414 = vld [vmem:[%s277 + $0x2e8] sm:$0xff]
        %v415 = vld [vmem:[%s277 + $0x2f0] sm:$0xff]
        %v416 = vld [vmem:[%s277 + $0x2f8] sm:$0xff]
        %v417 = vld [vmem:[%s277 + $0x300] sm:$0xff]
        %v418 = vld [vmem:[%s277 + $0x308] sm:$0xff]
        %v419 = vld [vmem:[%s277 + $0x310] sm:$0xff]
        %v420 = vld [vmem:[%s277 + $0x318] sm:$0xff]
        %v421 = vld [vmem:[%s277 + $0x320] sm:$0xff]
        %v422 = vld [vmem:[%s277 + $0x328] sm:$0xff]
        %v423 = vld [vmem:[%s277 + $0x330] sm:$0xff]
        %v424 = vld [vmem:[%s277 + $0x338] sm:$0xff]
        %v425 = vld [vmem:[%s277 + $0x340] sm:$0xff]
        %v426 = vld [vmem:[%s277 + $0x348] sm:$0xff]
        %v427 = vld [vmem:[%s277 + $0x350] sm:$0xff]
        %v428 = vld [vmem:[%s277 + $0x358] sm:$0xff]
        %v429 = vld [vmem:[%s277 + $0x360] sm:$0xff]
        %v430 = vld [vmem:[%s277 + $0x368] sm:$0xff]
        %v431 = vld [vmem:[%s277 + $0x370] sm:$0xff]
        %v432 = vld [vmem:[%s277 + $0x378] sm:$0xff]
        %v433 = vld [vmem:[%s277 + $0x380] sm:$0xff]
        %v434 = vld [vmem:[%s277 + $0x388] sm:$0xff]
        %v435 = vld [vmem:[%s277 + $0x390] sm:$0xff]
        %v436 = vld [vmem:[%s277 + $0x398] sm:$0xff]
        %v437 = vld [vmem:[%s277 + $0x3a0] sm:$0xff]
        %v438 = vld [vmem:[%s277 + $0x3a8] sm:$0xff]
        %v439 = vld [vmem:[%s277 + $0x3b0] sm:$0xff]
        %v440 = vld [vmem:[%s277 + $0x3b8] sm:$0xff]
        %v441 = vld [vmem:[%s277 + $0x3c0] sm:$0xff]
        %v442 = vld [vmem:[%s277 + $0x3c8] sm:$0xff]
        %v443 = vld [vmem:[%s277 + $0x3d0] sm:$0xff]
        %v444 = vld [vmem:[%s277 + $0x3d8] sm:$0xff]
        %v445 = vld [vmem:[%s277 + $0x3e0] sm:$0xff]
        %v446 = vld [vmem:[%s277 + $0x3e8] sm:$0xff]
        %v447 = vld [vmem:[%s277 + $0x3f0] sm:$0xff]
        %v448 = vld [vmem:[%s277 + $0x3f8] sm:$0xff]
        %v453 = vunpack.c.l.b16 %v317
        %v454 = vunpack.c.h.b16 %v317
        %v455 = vunpack.c.l.b16 %v318
        %v456 = vunpack.c.h.b16 %v318
        %v457 = vunpack.c.l.b16 %v319
        %v458 = vunpack.c.h.b16 %v319
        %v459 = vunpack.c.l.b16 %v320
        %v460 = vunpack.c.h.b16 %v320
        %v461 = vpack.c.b16 %v457, %v453
        %v462 = vpack.c.b16 %v458, %v454
        %v463 = vpack.c.b16 %v459, %v455
        %v464 = vpack.c.b16 %v460, %v456
        %v597 = vunpack.c.l.b16 %v321
        %v598 = vunpack.c.h.b16 %v321
        %v599 = vunpack.c.l.b16 %v322
        %v600 = vunpack.c.h.b16 %v322
        %v601 = vunpack.c.l.b16 %v323
        %v602 = vunpack.c.h.b16 %v323
        %v603 = vunpack.c.l.b16 %v324
        %v604 = vunpack.c.h.b16 %v324
        %v605 = vunpack.c.l.b16 %v325
        %v606 = vunpack.c.h.b16 %v325
        %v607 = vunpack.c.l.b16 %v326
        %v608 = vunpack.c.h.b16 %v326
        %v609 = vunpack.c.l.b16 %v327
        %v610 = vunpack.c.h.b16 %v327
        %v611 = vunpack.c.l.b16 %v328
        %v612 = vunpack.c.h.b16 %v328
        %v613 = vunpack.c.l.b16 %v329
        %v614 = vunpack.c.h.b16 %v329
        %v615 = vunpack.c.l.b16 %v330
        %v616 = vunpack.c.h.b16 %v330
        %v617 = vunpack.c.l.b16 %v331
        %v618 = vunpack.c.h.b16 %v331
        %v619 = vunpack.c.l.b16 %v332
        %v620 = vunpack.c.h.b16 %v332
        %v621 = vunpack.c.l.b16 %v333
        %v622 = vunpack.c.h.b16 %v333
        %v623 = vunpack.c.l.b16 %v334
        %v624 = vunpack.c.h.b16 %v334
        %v625 = vunpack.c.l.b16 %v335
        %v626 = vunpack.c.h.b16 %v335
        %v627 = vunpack.c.l.b16 %v336
        %v628 = vunpack.c.h.b16 %v336
        %v629 = vunpack.c.l.b16 %v337
        %v630 = vunpack.c.h.b16 %v337
        %v631 = vunpack.c.l.b16 %v338
        %v632 = vunpack.c.h.b16 %v338
        %v633 = vunpack.c.l.b16 %v339
        %v634 = vunpack.c.h.b16 %v339
        %v635 = vunpack.c.l.b16 %v340
        %v636 = vunpack.c.h.b16 %v340
        %v637 = vunpack.c.l.b16 %v341
        %v638 = vunpack.c.h.b16 %v341
        %v639 = vunpack.c.l.b16 %v342
        %v640 = vunpack.c.h.b16 %v342
        %v641 = vunpack.c.l.b16 %v343
        %v642 = vunpack.c.h.b16 %v343
        %v643 = vunpack.c.l.b16 %v344
        %v644 = vunpack.c.h.b16 %v344
        %v645 = vunpack.c.l.b16 %v345
        %v646 = vunpack.c.h.b16 %v345
        %v647 = vunpack.c.l.b16 %v346
        %v648 = vunpack.c.h.b16 %v346
        %v649 = vunpack.c.l.b16 %v347
        %v650 = vunpack.c.h.b16 %v347
        %v651 = vunpack.c.l.b16 %v348
        %v652 = vunpack.c.h.b16 %v348
        %v653 = vunpack.c.l.b16 %v349
        %v654 = vunpack.c.h.b16 %v349
        %v655 = vunpack.c.l.b16 %v350
        %v656 = vunpack.c.h.b16 %v350
        %v657 = vunpack.c.l.b16 %v351
        %v658 = vunpack.c.h.b16 %v351
        %v659 = vunpack.c.l.b16 %v352
        %v660 = vunpack.c.h.b16 %v352
        %v661 = vunpack.c.l.b16 %v353
        %v662 = vunpack.c.h.b16 %v353
        %v663 = vunpack.c.l.b16 %v354
        %v664 = vunpack.c.h.b16 %v354
        %v665 = vunpack.c.l.b16 %v355
        %v666 = vunpack.c.h.b16 %v355
        %v667 = vunpack.c.l.b16 %v356
        %v668 = vunpack.c.h.b16 %v356
        %v669 = vunpack.c.l.b16 %v357
        %v670 = vunpack.c.h.b16 %v357
        %v671 = vunpack.c.l.b16 %v358
        %v672 = vunpack.c.h.b16 %v358
        %v673 = vunpack.c.l.b16 %v359
        %v674 = vunpack.c.h.b16 %v359
        %v675 = vunpack.c.l.b16 %v360
        %v676 = vunpack.c.h.b16 %v360
        %v677 = vunpack.c.l.b16 %v361
        %v678 = vunpack.c.h.b16 %v361
        %v679 = vunpack.c.l.b16 %v362
        %v680 = vunpack.c.h.b16 %v362
        %v681 = vunpack.c.l.b16 %v363
        %v682 = vunpack.c.h.b16 %v363
        %v683 = vunpack.c.l.b16 %v364
        %v684 = vunpack.c.h.b16 %v364
        %v685 = vunpack.c.l.b16 %v365
        %v686 = vunpack.c.h.b16 %v365
        %v687 = vunpack.c.l.b16 %v366
        %v688 = vunpack.c.h.b16 %v366
        %v689 = vunpack.c.l.b16 %v367
        %v690 = vunpack.c.h.b16 %v367
        %v691 = vunpack.c.l.b16 %v368
        %v692 = vunpack.c.h.b16 %v368
        %v693 = vunpack.c.l.b16 %v369
        %v694 = vunpack.c.h.b16 %v369
        %v695 = vunpack.c.l.b16 %v370
        %v696 = vunpack.c.h.b16 %v370
        %v697 = vunpack.c.l.b16 %v371
        %v698 = vunpack.c.h.b16 %v371
        %v699 = vunpack.c.l.b16 %v372
        %v700 = vunpack.c.h.b16 %v372
        %v701 = vunpack.c.l.b16 %v373
        %v702 = vunpack.c.h.b16 %v373
        %v703 = vunpack.c.l.b16 %v374
        %v704 = vunpack.c.h.b16 %v374
        %v705 = vunpack.c.l.b16 %v375
        %v706 = vunpack.c.h.b16 %v375
        %v707 = vunpack.c.l.b16 %v376
        %v708 = vunpack.c.h.b16 %v376
        %v709 = vunpack.c.l.b16 %v377
        %v710 = vunpack.c.h.b16 %v377
        %v711 = vunpack.c.l.b16 %v378
        %v712 = vunpack.c.h.b16 %v378
        %v713 = vunpack.c.l.b16 %v379
        %v714 = vunpack.c.h.b16 %v379
        %v715 = vunpack.c.l.b16 %v380
        %v716 = vunpack.c.h.b16 %v380
        %v717 = vunpack.c.l.b16 %v381
        %v718 = vunpack.c.h.b16 %v381
        %v719 = vunpack.c.l.b16 %v382
        %v720 = vunpack.c.h.b16 %v382
        %v721 = vunpack.c.l.b16 %v383
        %v722 = vunpack.c.h.b16 %v383
        %v723 = vunpack.c.l.b16 %v384
        %v724 = vunpack.c.h.b16 %v384
        %v725 = vunpack.c.l.b16 %v385
        %v726 = vunpack.c.h.b16 %v385
        %v727 = vunpack.c.l.b16 %v386
        %v728 = vunpack.c.h.b16 %v386
        %v729 = vunpack.c.l.b16 %v387
        %v730 = vunpack.c.h.b16 %v387
        %v731 = vunpack.c.l.b16 %v388
        %v732 = vunpack.c.h.b16 %v388
        %v733 = vunpack.c.l.b16 %v389
        %v734 = vunpack.c.h.b16 %v389
        %v735 = vunpack.c.l.b16 %v390
        %v736 = vunpack.c.h.b16 %v390
        %v737 = vunpack.c.l.b16 %v391
        %v738 = vunpack.c.h.b16 %v391
        %v739 = vunpack.c.l.b16 %v392
        %v740 = vunpack.c.h.b16 %v392
        %v741 = vunpack.c.l.b16 %v393
        %v742 = vunpack.c.h.b16 %v393
        %v743 = vunpack.c.l.b16 %v394
        %v744 = vunpack.c.h.b16 %v394
        %v745 = vunpack.c.l.b16 %v395
        %v746 = vunpack.c.h.b16 %v395
        %v747 = vunpack.c.l.b16 %v396
        %v748 = vunpack.c.h.b16 %v396
        %v749 = vunpack.c.l.b16 %v397
        %v750 = vunpack.c.h.b16 %v397
        %v751 = vunpack.c.l.b16 %v398
        %v752 = vunpack.c.h.b16 %v398
        %v753 = vunpack.c.l.b16 %v399
        %v754 = vunpack.c.h.b16 %v399
        %v755 = vunpack.c.l.b16 %v400
        %v756 = vunpack.c.h.b16 %v400
        %v757 = vunpack.c.l.b16 %v401
        %v758 = vunpack.c.h.b16 %v401
        %v759 = vunpack.c.l.b16 %v402
        %v760 = vunpack.c.h.b16 %v402
        %v761 = vunpack.c.l.b16 %v403
        %v762 = vunpack.c.h.b16 %v403
        %v763 = vunpack.c.l.b16 %v404
        %v764 = vunpack.c.h.b16 %v404
        %v765 = vunpack.c.l.b16 %v405
        %v766 = vunpack.c.h.b16 %v405
        %v767 = vunpack.c.l.b16 %v406
        %v768 = vunpack.c.h.b16 %v406
        %v769 = vunpack.c.l.b16 %v407
        %v770 = vunpack.c.h.b16 %v407
        %v771 = vunpack.c.l.b16 %v408
        %v772 = vunpack.c.h.b16 %v408
        %v773 = vunpack.c.l.b16 %v409
        %v774 = vunpack.c.h.b16 %v409
        %v775 = vunpack.c.l.b16 %v410
        %v776 = vunpack.c.h.b16 %v410
        %v777 = vunpack.c.l.b16 %v411
        %v778 = vunpack.c.h.b16 %v411
        %v779 = vunpack.c.l.b16 %v412
        %v780 = vunpack.c.h.b16 %v412
        %v781 = vunpack.c.l.b16 %v413
        %v782 = vunpack.c.h.b16 %v413
        %v783 = vunpack.c.l.b16 %v414
        %v784 = vunpack.c.h.b16 %v414
        %v785 = vunpack.c.l.b16 %v415
        %v786 = vunpack.c.h.b16 %v415
        %v787 = vunpack.c.l.b16 %v416
        %v788 = vunpack.c.h.b16 %v416
        %v789 = vunpack.c.l.b16 %v417
        %v790 = vunpack.c.h.b16 %v417
        %v791 = vunpack.c.l.b16 %v418
        %v792 = vunpack.c.h.b16 %v418
        %v793 = vunpack.c.l.b16 %v419
        %v794 = vunpack.c.h.b16 %v419
        %v795 = vunpack.c.l.b16 %v420
        %v796 = vunpack.c.h.b16 %v420
        %v797 = vunpack.c.l.b16 %v421
        %v798 = vunpack.c.h.b16 %v421
        %v799 = vunpack.c.l.b16 %v422
        %v800 = vunpack.c.h.b16 %v422
        %v801 = vunpack.c.l.b16 %v423
        %v802 = vunpack.c.h.b16 %v423
        %v803 = vunpack.c.l.b16 %v424
        %v804 = vunpack.c.h.b16 %v424
        %v805 = vunpack.c.l.b16 %v425
        %v806 = vunpack.c.h.b16 %v425
        %v807 = vunpack.c.l.b16 %v426
        %v808 = vunpack.c.h.b16 %v426
        %v809 = vunpack.c.l.b16 %v427
        %v810 = vunpack.c.h.b16 %v427
        %v811 = vunpack.c.l.b16 %v428
        %v812 = vunpack.c.h.b16 %v428
        %v813 = vunpack.c.l.b16 %v429
        %v814 = vunpack.c.h.b16 %v429
        %v815 = vunpack.c.l.b16 %v430
        %v816 = vunpack.c.h.b16 %v430
        %v817 = vunpack.c.l.b16 %v431
        %v818 = vunpack.c.h.b16 %v431
        %v819 = vunpack.c.l.b16 %v432
        %v820 = vunpack.c.h.b16 %v432
        %v821 = vunpack.c.l.b16 %v433
        %v822 = vunpack.c.h.b16 %v433
        %v823 = vunpack.c.l.b16 %v434
        %v824 = vunpack.c.h.b16 %v434
        %v825 = vunpack.c.l.b16 %v435
        %v826 = vunpack.c.h.b16 %v435
        %v827 = vunpack.c.l.b16 %v436
        %v828 = vunpack.c.h.b16 %v436
        %v829 = vunpack.c.l.b16 %v437
        %v830 = vunpack.c.h.b16 %v437
        %v831 = vunpack.c.l.b16 %v438
        %v832 = vunpack.c.h.b16 %v438
        %v833 = vunpack.c.l.b16 %v439
        %v834 = vunpack.c.h.b16 %v439
        %v835 = vunpack.c.l.b16 %v440
        %v836 = vunpack.c.h.b16 %v440
        %v837 = vunpack.c.l.b16 %v441
        %v838 = vunpack.c.h.b16 %v441
        %v839 = vunpack.c.l.b16 %v442
        %v840 = vunpack.c.h.b16 %v442
        %v841 = vunpack.c.l.b16 %v443
        %v842 = vunpack.c.h.b16 %v443
        %v843 = vunpack.c.l.b16 %v444
        %v844 = vunpack.c.h.b16 %v444
        %v845 = vunpack.c.l.b16 %v445
        %v846 = vunpack.c.h.b16 %v445
        %v847 = vunpack.c.l.b16 %v446
        %v848 = vunpack.c.h.b16 %v446
        %v849 = vunpack.c.l.b16 %v447
        %v850 = vunpack.c.h.b16 %v447
        %v851 = vunpack.c.l.b16 %v448
        %v852 = vunpack.c.h.b16 %v448
        %v853 = vpack.c.b16 %v601, %v597
        %v854 = vpack.c.b16 %v602, %v598
        %v855 = vpack.c.b16 %v603, %v599
        %v856 = vpack.c.b16 %v604, %v600
        %v857 = vpack.c.b16 %v609, %v605
        %v858 = vpack.c.b16 %v610, %v606
        %v859 = vpack.c.b16 %v611, %v607
        %v860 = vpack.c.b16 %v612, %v608
        %v861 = vpack.c.b16 %v617, %v613
        %v862 = vpack.c.b16 %v618, %v614
        %v863 = vpack.c.b16 %v619, %v615
        %v864 = vpack.c.b16 %v620, %v616
        %v865 = vpack.c.b16 %v625, %v621
        %v866 = vpack.c.b16 %v626, %v622
        %v867 = vpack.c.b16 %v627, %v623
        %v868 = vpack.c.b16 %v628, %v624
        %v869 = vpack.c.b16 %v633, %v629
        %v870 = vpack.c.b16 %v634, %v630
        %v871 = vpack.c.b16 %v635, %v631
        %v872 = vpack.c.b16 %v636, %v632
        %v873 = vpack.c.b16 %v641, %v637
        %v874 = vpack.c.b16 %v642, %v638
        %v875 = vpack.c.b16 %v643, %v639
        %v876 = vpack.c.b16 %v644, %v640
        %v877 = vpack.c.b16 %v649, %v645
        %v878 = vpack.c.b16 %v650, %v646
        %v879 = vpack.c.b16 %v651, %v647
        %v880 = vpack.c.b16 %v652, %v648
        %v881 = vpack.c.b16 %v657, %v653
        %v882 = vpack.c.b16 %v658, %v654
        %v883 = vpack.c.b16 %v659, %v655
        %v884 = vpack.c.b16 %v660, %v656
        %v885 = vpack.c.b16 %v665, %v661
        %v886 = vpack.c.b16 %v666, %v662
        %v887 = vpack.c.b16 %v667, %v663
        %v888 = vpack.c.b16 %v668, %v664
        %v889 = vpack.c.b16 %v673, %v669
        %v890 = vpack.c.b16 %v674, %v670
        %v891 = vpack.c.b16 %v675, %v671
        %v892 = vpack.c.b16 %v676, %v672
        %v893 = vpack.c.b16 %v681, %v677
        %v894 = vpack.c.b16 %v682, %v678
        %v895 = vpack.c.b16 %v683, %v679
        %v896 = vpack.c.b16 %v684, %v680
        %v897 = vpack.c.b16 %v689, %v685
        %v898 = vpack.c.b16 %v690, %v686
        %v899 = vpack.c.b16 %v691, %v687
        %v900 = vpack.c.b16 %v692, %v688
        %v901 = vpack.c.b16 %v697, %v693
        %v902 = vpack.c.b16 %v698, %v694
        %v903 = vpack.c.b16 %v699, %v695
        %v904 = vpack.c.b16 %v700, %v696
        %v905 = vpack.c.b16 %v705, %v701
        %v906 = vpack.c.b16 %v706, %v702
        %v907 = vpack.c.b16 %v707, %v703
        %v908 = vpack.c.b16 %v708, %v704
        %v909 = vpack.c.b16 %v713, %v709
        %v910 = vpack.c.b16 %v714, %v710
        %v911 = vpack.c.b16 %v715, %v711
        %v912 = vpack.c.b16 %v716, %v712
        %v913 = vpack.c.b16 %v721, %v717
        %v914 = vpack.c.b16 %v722, %v718
        %v915 = vpack.c.b16 %v723, %v719
        %v916 = vpack.c.b16 %v724, %v720
        %v917 = vpack.c.b16 %v729, %v725
        %v918 = vpack.c.b16 %v730, %v726
        %v919 = vpack.c.b16 %v731, %v727
        %v920 = vpack.c.b16 %v732, %v728
        %v921 = vpack.c.b16 %v737, %v733
        %v922 = vpack.c.b16 %v738, %v734
        %v923 = vpack.c.b16 %v739, %v735
        %v924 = vpack.c.b16 %v740, %v736
        %v925 = vpack.c.b16 %v745, %v741
        %v926 = vpack.c.b16 %v746, %v742
        %v927 = vpack.c.b16 %v747, %v743
        %v928 = vpack.c.b16 %v748, %v744
        %v929 = vpack.c.b16 %v753, %v749
        %v930 = vpack.c.b16 %v754, %v750
        %v931 = vpack.c.b16 %v755, %v751
        %v932 = vpack.c.b16 %v756, %v752
        %v933 = vpack.c.b16 %v761, %v757
        %v934 = vpack.c.b16 %v762, %v758
        %v935 = vpack.c.b16 %v763, %v759
        %v936 = vpack.c.b16 %v764, %v760
        %v937 = vpack.c.b16 %v769, %v765
        %v938 = vpack.c.b16 %v770, %v766
        %v939 = vpack.c.b16 %v771, %v767
        %v940 = vpack.c.b16 %v772, %v768
        %v941 = vpack.c.b16 %v777, %v773
        %v942 = vpack.c.b16 %v778, %v774
        %v943 = vpack.c.b16 %v779, %v775
        %v944 = vpack.c.b16 %v780, %v776
        %v945 = vpack.c.b16 %v785, %v781
        %v946 = vpack.c.b16 %v786, %v782
        %v947 = vpack.c.b16 %v787, %v783
        %v948 = vpack.c.b16 %v788, %v784
        %v949 = vpack.c.b16 %v793, %v789
        %v950 = vpack.c.b16 %v794, %v790
        %v951 = vpack.c.b16 %v795, %v791
        %v952 = vpack.c.b16 %v796, %v792
        %v953 = vpack.c.b16 %v801, %v797
        %v954 = vpack.c.b16 %v802, %v798
        %v955 = vpack.c.b16 %v803, %v799
        %v956 = vpack.c.b16 %v804, %v800
        %v957 = vpack.c.b16 %v809, %v805
        %v958 = vpack.c.b16 %v810, %v806
        %v959 = vpack.c.b16 %v811, %v807
        %v960 = vpack.c.b16 %v812, %v808
        %v961 = vpack.c.b16 %v817, %v813
        %v962 = vpack.c.b16 %v818, %v814
        %v963 = vpack.c.b16 %v819, %v815
        %v964 = vpack.c.b16 %v820, %v816
        %v965 = vpack.c.b16 %v825, %v821
        %v966 = vpack.c.b16 %v826, %v822
        %v967 = vpack.c.b16 %v827, %v823
        %v968 = vpack.c.b16 %v828, %v824
        %v969 = vpack.c.b16 %v833, %v829
        %v970 = vpack.c.b16 %v834, %v830
        %v971 = vpack.c.b16 %v835, %v831
        %v972 = vpack.c.b16 %v836, %v832
        %v973 = vpack.c.b16 %v841, %v837
        %v974 = vpack.c.b16 %v842, %v838
        %v975 = vpack.c.b16 %v843, %v839
        %v976 = vpack.c.b16 %v844, %v840
        %v977 = vpack.c.b16 %v849, %v845
        %v978 = vpack.c.b16 %v850, %v846
        %v979 = vpack.c.b16 %v851, %v847
        %v980 = vpack.c.b16 %v852, %v848
        %1109 = vmatprep.subr.bf16.mxu0 %v882
        %1110 = vmatpush1.bf16.msra.mxu0 %v881
        %1111 = vmatprep.subr.bf16.mxu0 %v878
        %1112 = vmatpush1.bf16.msra.mxu0 %v877
        %1113 = vmatprep.subr.bf16.mxu0 %v874
        %1114 = vmatpush1.bf16.msra.mxu0 %v873
        %1115 = vmatprep.subr.bf16.mxu0 %v870
        %1116 = vmatpush1.bf16.msra.mxu0 %v869
        %1117 = vmatprep.subr.bf16.mxu0 %v866
        %1118 = vmatpush1.bf16.msra.mxu0 %v865
        %1119 = vmatprep.subr.bf16.mxu0 %v862
        %1120 = vmatpush1.bf16.msra.mxu0 %v861
        %1121 = vmatprep.subr.bf16.mxu0 %v858
        %1122 = vmatpush1.bf16.msra.mxu0 %v857
        %1123 = vmatprep.subr.bf16.mxu0 %v854
        %1124 = vmatpush1.bf16.msra.mxu0 %v853
        %1125 = vmatprep.subr.bf16.mxu0 %v914
        %1126 = vmatpush2.bf16.msra.mxu0 %v913
        %1127 = vmatprep.subr.bf16.mxu0 %v910
        %1128 = vmatpush2.bf16.msra.mxu0 %v909
        %1129 = vmatprep.subr.bf16.mxu0 %v906
        %1130 = vmatpush2.bf16.msra.mxu0 %v905
        %1131 = vmatprep.subr.bf16.mxu0 %v902
        %1132 = vmatpush2.bf16.msra.mxu0 %v901
        %1133 = vmatprep.subr.bf16.mxu0 %v898
        %1134 = vmatpush2.bf16.msra.mxu0 %v897
        %1135 = vmatprep.subr.bf16.mxu0 %v894
        %1136 = vmatpush2.bf16.msra.mxu0 %v893
        %1137 = vmatprep.subr.bf16.mxu0 %v890
        %1138 = vmatpush2.bf16.msra.mxu0 %v889
        %1139 = vmatprep.subr.bf16.mxu0 %v886
        %1140 = vmatpush2.bf16.msra.mxu0 %v885
        %1141 = vmatprep.mubr.bf16.mxu0 %v462
        %1142 = vmatmul.mubr.bf16.gmra.mxu0 %v461
        %v1143 = vpop.f32.mrf.mxu0
        %v1144 = vadd.f32 0.0, %v1143
        %v1145 = vpop.f32.mrf.mxu0
        %v1146 = vadd.f32 0.0, %v1145
        %v1147 = vpop.f32.mrf.mxu0
        %v1148 = vadd.f32 0.0, %v1147
        %v1149 = vpop.f32.mrf.mxu0
        %v1150 = vadd.f32 0.0, %v1149
        %1151 = vdwg.mxu0
        %1152 = vmatprep.subr.bf16.mxu0 %v946
        %1153 = vmatpush1.bf16.msra.mxu0 %v945
        %1154 = vmatprep.subr.bf16.mxu0 %v942
        %1155 = vmatpush1.bf16.msra.mxu0 %v941
        %1156 = vmatprep.subr.bf16.mxu0 %v938
        %1157 = vmatpush1.bf16.msra.mxu0 %v937
        %1158 = vmatprep.subr.bf16.mxu0 %v934
        %1159 = vmatpush1.bf16.msra.mxu0 %v933
        %1160 = vmatprep.subr.bf16.mxu0 %v930
        %1161 = vmatpush1.bf16.msra.mxu0 %v929
        %1162 = vmatprep.subr.bf16.mxu0 %v926
        %1163 = vmatpush1.bf16.msra.mxu0 %v925
        %1164 = vmatprep.subr.bf16.mxu0 %v922
        %1165 = vmatpush1.bf16.msra.mxu0 %v921
        %1166 = vmatprep.subr.bf16.mxu0 %v918
        %1167 = vmatpush1.bf16.msra.mxu0 %v917
        %1168 = vmatprep.subr.bf16.mxu0 %v978
        %1169 = vmatpush2.bf16.msra.mxu0 %v977
        %1170 = vmatprep.subr.bf16.mxu0 %v974
        %1171 = vmatpush2.bf16.msra.mxu0 %v973
        %1172 = vmatprep.subr.bf16.mxu0 %v970
        %1173 = vmatpush2.bf16.msra.mxu0 %v969
        %1174 = vmatprep.subr.bf16.mxu0 %v966
        %1175 = vmatpush2.bf16.msra.mxu0 %v965
        %1176 = vmatprep.subr.bf16.mxu0 %v962
        %1177 = vmatpush2.bf16.msra.mxu0 %v961
        %1178 = vmatprep.subr.bf16.mxu0 %v958
        %1179 = vmatpush2.bf16.msra.mxu0 %v957
        %1180 = vmatprep.subr.bf16.mxu0 %v954
        %1181 = vmatpush2.bf16.msra.mxu0 %v953
        %1182 = vmatprep.subr.bf16.mxu0 %v950
        %1183 = vmatpush2.bf16.msra.mxu0 %v949
        %1184 = vmatprep.mubr.bf16.mxu0 %v464
        %1185 = vmatmul.mubr.bf16.gmra.mxu0 %v463
        %v1186 = vpop.f32.mrf.mxu0
        %v1187 = vadd.f32 %v1144, %v1186
        %v1188 = vpop.f32.mrf.mxu0
        %v1189 = vadd.f32 %v1146, %v1188
        %v1190 = vpop.f32.mrf.mxu0
        %v1191 = vadd.f32 %v1148, %v1190
        %v1192 = vpop.f32.mrf.mxu0
        %v1193 = vadd.f32 %v1150, %v1192
        %1194 = vdwg.mxu0
        %1195 = vmatprep.subr.bf16.mxu0 %v884
        %1196 = vmatpush1.bf16.msra.mxu0 %v883
        %1197 = vmatprep.subr.bf16.mxu0 %v880
        %1198 = vmatpush1.bf16.msra.mxu0 %v879
        %1199 = vmatprep.subr.bf16.mxu0 %v876
        %1200 = vmatpush1.bf16.msra.mxu0 %v875
        %1201 = vmatprep.subr.bf16.mxu0 %v872
        %1202 = vmatpush1.bf16.msra.mxu0 %v871
        %1203 = vmatprep.subr.bf16.mxu0 %v868
        %1204 = vmatpush1.bf16.msra.mxu0 %v867
        %1205 = vmatprep.subr.bf16.mxu0 %v864
        %1206 = vmatpush1.bf16.msra.mxu0 %v863
        %1207 = vmatprep.subr.bf16.mxu0 %v860
        %1208 = vmatpush1.bf16.msra.mxu0 %v859
        %1209 = vmatprep.subr.bf16.mxu0 %v856
        %1210 = vmatpush1.bf16.msra.mxu0 %v855
        %1211 = vmatprep.subr.bf16.mxu0 %v916
        %1212 = vmatpush2.bf16.msra.mxu0 %v915
        %1213 = vmatprep.subr.bf16.mxu0 %v912
        %1214 = vmatpush2.bf16.msra.mxu0 %v911
        %1215 = vmatprep.subr.bf16.mxu0 %v908
        %1216 = vmatpush2.bf16.msra.mxu0 %v907
        %1217 = vmatprep.subr.bf16.mxu0 %v904
        %1218 = vmatpush2.bf16.msra.mxu0 %v903
        %1219 = vmatprep.subr.bf16.mxu0 %v900
        %1220 = vmatpush2.bf16.msra.mxu0 %v899
        %1221 = vmatprep.subr.bf16.mxu0 %v896
        %1222 = vmatpush2.bf16.msra.mxu0 %v895
        %1223 = vmatprep.subr.bf16.mxu0 %v892
        %1224 = vmatpush2.bf16.msra.mxu0 %v891
        %1225 = vmatprep.subr.bf16.mxu0 %v888
        %1226 = vmatpush2.bf16.msra.mxu0 %v887
        %1227 = vmatprep.mubr.bf16.mxu0 %v462
        %1228 = vmatmul.mubr.bf16.gmra.mxu0 %v461
        %v1229 = vpop.f32.mrf.mxu0
        %v1230 = vadd.f32 0.0, %v1229
        %v1231 = vpop.f32.mrf.mxu0
        %v1232 = vadd.f32 0.0, %v1231
        %v1233 = vpop.f32.mrf.mxu0
        %v1234 = vadd.f32 0.0, %v1233
        %v1235 = vpop.f32.mrf.mxu0
        %v1236 = vadd.f32 0.0, %v1235
        %1237 = vdwg.mxu0
        %1238 = vmatprep.subr.bf16.mxu0 %v948
        %1239 = vmatpush1.bf16.msra.mxu0 %v947
        %1240 = vmatprep.subr.bf16.mxu0 %v944
        %1241 = vmatpush1.bf16.msra.mxu0 %v943
        %1242 = vmatprep.subr.bf16.mxu0 %v940
        %1243 = vmatpush1.bf16.msra.mxu0 %v939
        %1244 = vmatprep.subr.bf16.mxu0 %v936
        %1245 = vmatpush1.bf16.msra.mxu0 %v935
        %1246 = vmatprep.subr.bf16.mxu0 %v932
        %1247 = vmatpush1.bf16.msra.mxu0 %v931
        %1248 = vmatprep.subr.bf16.mxu0 %v928
        %1249 = vmatpush1.bf16.msra.mxu0 %v927
        %1250 = vmatprep.subr.bf16.mxu0 %v924
        %1251 = vmatpush1.bf16.msra.mxu0 %v923
        %1252 = vmatprep.subr.bf16.mxu0 %v920
        %1253 = vmatpush1.bf16.msra.mxu0 %v919
        %1254 = vmatprep.subr.bf16.mxu0 %v980
        %1255 = vmatpush2.bf16.msra.mxu0 %v979
        %1256 = vmatprep.subr.bf16.mxu0 %v976
        %1257 = vmatpush2.bf16.msra.mxu0 %v975
        %1258 = vmatprep.subr.bf16.mxu0 %v972
        %1259 = vmatpush2.bf16.msra.mxu0 %v971
        %1260 = vmatprep.subr.bf16.mxu0 %v968
        %1261 = vmatpush2.bf16.msra.mxu0 %v967
        %1262 = vmatprep.subr.bf16.mxu0 %v964
        %1263 = vmatpush2.bf16.msra.mxu0 %v963
        %1264 = vmatprep.subr.bf16.mxu0 %v960
        %1265 = vmatpush2.bf16.msra.mxu0 %v959
        %1266 = vmatprep.subr.bf16.mxu0 %v956
        %1267 = vmatpush2.bf16.msra.mxu0 %v955
        %1268 = vmatprep.subr.bf16.mxu0 %v952
        %1269 = vmatpush2.bf16.msra.mxu0 %v951
        %1270 = vmatprep.mubr.bf16.mxu0 %v464
        %1271 = vmatmul.mubr.bf16.gmra.mxu0 %v463
        %v1272 = vpop.f32.mrf.mxu0
        %v1273 = vadd.f32 %v1230, %v1272
        %v1274 = vpop.f32.mrf.mxu0
        %v1275 = vadd.f32 %v1232, %v1274
        %v1276 = vpop.f32.mrf.mxu0
        %v1277 = vadd.f32 %v1234, %v1276
        %v1278 = vpop.f32.mrf.mxu0
        %v1279 = vadd.f32 %v1236, %v1278
        %1280 = vdwg.mxu0
        %v1281 = vadd.f32 %v309, %v1187
        %v1282 = vadd.f32 %v310, %v1189
        %v1283 = vadd.f32 %v311, %v1273
        %v1284 = vadd.f32 %v312, %v1275
        %v1285 = vadd.f32 %v313, %v1191
        %v1286 = vadd.f32 %v314, %v1193
        %v1287 = vadd.f32 %v315, %v1277
        %v1288 = vadd.f32 %v316, %v1279
        %1289 = vst [vmem:[#allocation2] sm:$0xff] %v1281
        %1290 = vst [vmem:[#allocation2 + $0x8] sm:$0xff] %v1282
        %1291 = vst [vmem:[#allocation2 + $0x10] sm:$0xff] %v1283
        %1292 = vst [vmem:[#allocation2 + $0x18] sm:$0xff] %v1284
        %1293 = vst [vmem:[#allocation2 + $0x20] sm:$0xff] %v1285
        %1294 = vst [vmem:[#allocation2 + $0x28] sm:$0xff] %v1286
        %1295 = vst [vmem:[#allocation2 + $0x30] sm:$0xff] %v1287
        %1296 = vst [vmem:[#allocation2 + $0x38] sm:$0xff] %v1288
        %p1297 = scmp.eq.s32.totalorder %s21, 1
        // Predicated region
        $region60: #{cnn_model_forward.13} parent=50 // pred_check
          %p1298 = pneg %p1297
        $region61: #{cnn_model_forward.13} parent=50 // pred_check_branch
          %1300 = sbr.rel (%p1298) target = $region63
        $region62: #{cnn_model_forward.13} parent=50 // pred_region
          %v1301 = vld [vmem:[#allocation2] sm:$0xff]
          %v1302 = vld [vmem:[#allocation2 + $0x8] sm:$0xff]
          %v1303 = vld [vmem:[#allocation2 + $0x10] sm:$0xff]
          %v1304 = vld [vmem:[#allocation2 + $0x18] sm:$0xff]
          %v1305 = vld [vmem:[#allocation2 + $0x20] sm:$0xff]
          %v1306 = vld [vmem:[#allocation2 + $0x28] sm:$0xff]
          %v1307 = vld [vmem:[#allocation2 + $0x30] sm:$0xff]
          %v1308 = vld [vmem:[#allocation2 + $0x38] sm:$0xff]
          %v1309 = vld [vmem:[%s283] sm:$0xf]
          %v1311 = vlaneseq
          %v1312 = vshrl.u32 %v1311, 7
          %v1313 = vsub.s32 0, %v1312
          %v1314 = vrot.slane %v1309, %v1313
          %v1315 = vlaneseq
          %v1316 = vshrl.u32 %v1315, 7
          %v1317 = vsub.s32 1, %v1316
          %v1318 = vrot.slane %v1309, %v1317
          %v1319 = vlaneseq
          %v1320 = vshrl.u32 %v1319, 7
          %v1321 = vsub.s32 2, %v1320
          %v1322 = vrot.slane %v1309, %v1321
          %v1323 = vlaneseq
          %v1324 = vshrl.u32 %v1323, 7
          %v1325 = vsub.s32 3, %v1324
          %v1326 = vrot.slane %v1309, %v1325
          %v1331 = vadd.f32 %v1301, %v1314
          %v1332 = vadd.f32 %v1302, %v1318
          %v1333 = vadd.f32 %v1303, %v1322
          %v1334 = vadd.f32 %v1304, %v1326
          %v1335 = vadd.f32 %v1305, %v1314
          %v1336 = vadd.f32 %v1306, %v1318
          %v1337 = vadd.f32 %v1307, %v1322
          %v1338 = vadd.f32 %v1308, %v1326
          %v1339 = vmax.f32 %v1331, 0.0
          %v1340 = vmax.f32 %v1332, 0.0
          %v1341 = vmax.f32 %v1333, 0.0
          %v1342 = vmax.f32 %v1334, 0.0
          %v1343 = vmax.f32 %v1335, 0.0
          %v1344 = vmax.f32 %v1336, 0.0
          %v1345 = vmax.f32 %v1337, 0.0
          %v1346 = vmax.f32 %v1338, 0.0
          %1347 = vst [vmem:[%s294] sm:$0xff] %v1339
          %1348 = vst [vmem:[%s294 + $0x8] sm:$0xff] %v1340
          %1349 = vst [vmem:[%s294 + $0x10] sm:$0xff] %v1341
          %1350 = vst [vmem:[%s294 + $0x18] sm:$0xff] %v1342
          %1351 = vst [vmem:[%s294 + $0x20] sm:$0xff] %v1343
          %1352 = vst [vmem:[%s294 + $0x28] sm:$0xff] %v1344
          %1353 = vst [vmem:[%s294 + $0x30] sm:$0xff] %v1345
          %1354 = vst [vmem:[%s294 + $0x38] sm:$0xff] %v1346
        $region63: #{cnn_model_forward.13} parent=50 // pred_fallthru
          _
        %s1355 = smul.u32 2, %s19
        %s1356 = smul.u32 4, %s20
        %p1357 = scmp.lt.s32.totalorder %s1355, 1
        %s1358 = scalar_select %p1357, %s1355, 1
        %p1359 = scmp.lt.s32.totalorder %s1356, 3
        %s1360 = scalar_select %p1359, %s1356, 3
        %s1361 = smul.addr %s1358, 4
        %s1362 = sadd.s32 %s1360, %s1361
        %s1363 = smul.addr %s1362, 8
        %s1364 = scalar_lea.vmem %s3, %s1363
        // Predicated region
        $region64: #{cnn_model_forward.13} parent=50 // pred_check
          %p1365 = pneg %p135
        $region65: #{cnn_model_forward.13} parent=50 // pred_check_branch
          %1367 = sbr.rel (%p1365) target = $region67
        $region66: #{cnn_model_forward.13} parent=50 // pred_region
          %s1368 = smul.u32 2, %s19
          %s1369 = smul.u32 4, %s20
        $region67: #{cnn_model_forward.13} parent=50 // pred_fallthru
          _
        // Predicated region
        $region68: #{cnn_model_forward.13} parent=50 // pred_check
          %p1370 = pneg %p135
        $region69: #{cnn_model_forward.13} parent=50 // pred_check_branch
          %1372 = sbr.rel (%p1370) target = $region71
        $region70: #{cnn_model_forward.13} parent=50 // pred_region
          %s1373 = smul.u32 2, %s19
          %s1374 = smul.u32 4, %s20
          %p1375 = scmp.lt.s32.totalorder %s1373, 1
          %s1376 = scalar_select %p1375, %s1373, 1
          %p1377 = scmp.lt.s32.totalorder %s1374, 3
          %s1378 = scalar_select %p1377, %s1374, 3
          %s1379 = smul.addr %s1376, 4
          %s1380 = sadd.s32 %s1378, %s1379
          %s1381 = smul.addr %s1380, 8
          %s1382 = scalar_lea.vmem %s3, %s1381
        $region71: #{cnn_model_forward.13} parent=50 // pred_fallthru
          _
      $region51: #{cnn_model_forward.13} parent=5 // pred_fallthru
        _
      %p1383 = scmp.le.s32.totalorder 2, %s9
      // Predicated region
      $region72: #{cnn_model_forward.13} parent=5 // pred_check
        %p1384 = pneg %p1383
      $region73: #{cnn_model_forward.13} parent=5 // pred_check_branch
        %1386 = sbr.rel (%p1384) target = $region75
      $region74: #{cnn_model_forward.13} parent=5 // pred_region
        %s1387 = ssub.s32 %s9, 2
      $region75: #{cnn_model_forward.13} parent=5 // pred_fallthru
        _
    $region6: #{cnn_model_forward.13} parent=1 // loop_footer
      %s13 = sadd.s32 1, %s9
    $region7: #{cnn_model_forward.13} parent=1 // loop_footer_branch
      %8 = sbr.rel target = $region3
    $region8: #{cnn_model_forward.13} parent=1 // loop_exit
      _

// kernel: cnn_model_forward.14
$region0: #{cnn_model_forward.14}
  #allocation0 [shape = 'u32[]', space=smem, size = 0x4, offset = 0x4, fixed_abs, tag = 'smem constant byte address 0x4 - core index']
  #allocation1 [shape = 'u32[144,128]{1,0:T(1,128)}', space=vmem, size = 0x12000, scoped, tag = 'internal scratch']
  #allocation2 [shape = 'f32[16,128]{1,0:T(8,128)}', space=vmem, size = 0x2000, scoped, tag = 'scratch operand']
  %s0 = inlined_call_operand.vmem [shape: bf16[16,512], index: 0, kind: input, shape index: {}]
  %s1 = inlined_call_operand.vmem [shape: bf16[512,128], index: 1, kind: input, shape index: {}]
  %s2 = inlined_call_operand.vmem [shape: f32[1,128], index: 2, kind: input, shape index: {}]
  %s3 = inlined_call_operand.vmem [shape: f32[16,128], index: 3, kind: output, shape index: {}]
  %s4 = sld [smem:[#allocation0]]
  $region30: #{cnn_model_forward.14} parent=0
    _
  %s6 = ssub.s32 1, %s4
  %s7 = scalar_select 0, %s6, %s4
  // Predicated region
  $region2: #{cnn_model_forward.14} parent=0 // pred_check
    _
  $region3: #{cnn_model_forward.14} parent=0 // pred_check_branch
    %9 = sbr.rel (0) target = $region5
  $region4: #{cnn_model_forward.14} parent=0 // pred_region
    _
  $region5: #{cnn_model_forward.14} parent=0 // pred_fallthru
    _
  // Predicated region
  $region6: #{cnn_model_forward.14} parent=0 // pred_check
    _
  $region7: #{cnn_model_forward.14} parent=0 // pred_check_branch
    %11 = sbr.rel (0) target = $region9
  $region8: #{cnn_model_forward.14} parent=0 // pred_region
    _
  $region9: #{cnn_model_forward.14} parent=0 // pred_fallthru
    _
  // Predicated region
  $region10: #{cnn_model_forward.14} parent=0 // pred_check
    _
  $region11: #{cnn_model_forward.14} parent=0 // pred_check_branch
    %13 = sbr.rel (0) target = $region13
  $region12: #{cnn_model_forward.14} parent=0 // pred_region
    _
  $region13: #{cnn_model_forward.14} parent=0 // pred_fallthru
    _
  %p15 = scmp.eq.s32.totalorder 0, 0
  // Predicated region
  $region14: #{cnn_model_forward.14} parent=0 // pred_check
    %p16 = pneg %p15
  $region15: #{cnn_model_forward.14} parent=0 // pred_check_branch
    %18 = sbr.rel (%p16) target = $region17
  $region16: #{cnn_model_forward.14} parent=0 // pred_region
    %19 = vst [vmem:[#allocation2] sm:$0xff] 0.0
    %20 = vst [vmem:[#allocation2 + $0x8] sm:$0xff] 0.0
  $region17: #{cnn_model_forward.14} parent=0 // pred_fallthru
    _
  %v21 = vld [vmem:[#allocation2] sm:$0xff]
  %v22 = vld [vmem:[#allocation2 + $0x8] sm:$0xff]
  %v23 = vld [vmem:[%s0] sm:$0xff]
  %v24 = vld [vmem:[%s0 + $0x8] sm:$0xff]
  %v25 = vld [vmem:[%s0 + $0x10] sm:$0xff]
  %v26 = vld [vmem:[%s0 + $0x18] sm:$0xff]
  %v27 = vld [vmem:[%s1] sm:$0xf]
  %v28 = vld [vmem:[%s1 + $0x4] sm:$0xf]
  %v29 = vld [vmem:[%s1 + $0x8] sm:$0xf]
  %v30 = vld [vmem:[%s1 + $0xc] sm:$0xf]
  %v31 = vld [vmem:[%s1 + $0x10] sm:$0xf]
  %v32 = vld [vmem:[%s1 + $0x14] sm:$0xf]
  %v33 = vld [vmem:[%s1 + $0x18] sm:$0xf]
  %v34 = vld [vmem:[%s1 + $0x1c] sm:$0xf]
  %v35 = vld [vmem:[%s1 + $0x20] sm:$0xf]
  %v36 = vld [vmem:[%s1 + $0x24] sm:$0xf]
  %v37 = vld [vmem:[%s1 + $0x28] sm:$0xf]
  %v38 = vld [vmem:[%s1 + $0x2c] sm:$0xf]
  %v39 = vld [vmem:[%s1 + $0x30] sm:$0xf]
  %v40 = vld [vmem:[%s1 + $0x34] sm:$0xf]
  %v41 = vld [vmem:[%s1 + $0x38] sm:$0xf]
  %v42 = vld [vmem:[%s1 + $0x3c] sm:$0xf]
  %v43 = vld [vmem:[%s1 + $0x40] sm:$0xf]
  %v44 = vld [vmem:[%s1 + $0x44] sm:$0xf]
  %v45 = vld [vmem:[%s1 + $0x48] sm:$0xf]
  %v46 = vld [vmem:[%s1 + $0x4c] sm:$0xf]
  %v47 = vld [vmem:[%s1 + $0x50] sm:$0xf]
  %v48 = vld [vmem:[%s1 + $0x54] sm:$0xf]
  %v49 = vld [vmem:[%s1 + $0x58] sm:$0xf]
  %v50 = vld [vmem:[%s1 + $0x5c] sm:$0xf]
  %v51 = vld [vmem:[%s1 + $0x60] sm:$0xf]
  %v52 = vld [vmem:[%s1 + $0x64] sm:$0xf]
  %v53 = vld [vmem:[%s1 + $0x68] sm:$0xf]
  %v54 = vld [vmem:[%s1 + $0x6c] sm:$0xf]
  %v55 = vld [vmem:[%s1 + $0x70] sm:$0xf]
  %v56 = vld [vmem:[%s1 + $0x74] sm:$0xf]
  %v57 = vld [vmem:[%s1 + $0x78] sm:$0xf]
  %v58 = vld [vmem:[%s1 + $0x7c] sm:$0xf]
  %v59 = vld [vmem:[%s1 + $0x80] sm:$0xf]
  %v60 = vld [vmem:[%s1 + $0x84] sm:$0xf]
  %v61 = vld [vmem:[%s1 + $0x88] sm:$0xf]
  %v62 = vld [vmem:[%s1 + $0x8c] sm:$0xf]
  %v63 = vld [vmem:[%s1 + $0x90] sm:$0xf]
  %v64 = vld [vmem:[%s1 + $0x94] sm:$0xf]
  %v65 = vld [vmem:[%s1 + $0x98] sm:$0xf]
  %v66 = vld [vmem:[%s1 + $0x9c] sm:$0xf]
  %v67 = vld [vmem:[%s1 + $0xa0] sm:$0xf]
  %v68 = vld [vmem:[%s1 + $0xa4] sm:$0xf]
  %v69 = vld [vmem:[%s1 + $0xa8] sm:$0xf]
  %v70 = vld [vmem:[%s1 + $0xac] sm:$0xf]
  %v71 = vld [vmem:[%s1 + $0xb0] sm:$0xf]
  %v72 = vld [vmem:[%s1 + $0xb4] sm:$0xf]
  %v73 = vld [vmem:[%s1 + $0xb8] sm:$0xf]
  %v74 = vld [vmem:[%s1 + $0xbc] sm:$0xf]
  %v75 = vld [vmem:[%s1 + $0xc0] sm:$0xf]
  %v76 = vld [vmem:[%s1 + $0xc4] sm:$0xf]
  %v77 = vld [vmem:[%s1 + $0xc8] sm:$0xf]
  %v78 = vld [vmem:[%s1 + $0xcc] sm:$0xf]
  %v79 = vld [vmem:[%s1 + $0xd0] sm:$0xf]
  %v80 = vld [vmem:[%s1 + $0xd4] sm:$0xf]
  %v81 = vld [vmem:[%s1 + $0xd8] sm:$0xf]
  %v82 = vld [vmem:[%s1 + $0xdc] sm:$0xf]
  %v83 = vld [vmem:[%s1 + $0xe0] sm:$0xf]
  %v84 = vld [vmem:[%s1 + $0xe4] sm:$0xf]
  %v85 = vld [vmem:[%s1 + $0xe8] sm:$0xf]
  %v86 = vld [vmem:[%s1 + $0xec] sm:$0xf]
  %v87 = vld [vmem:[%s1 + $0xf0] sm:$0xf]
  %v88 = vld [vmem:[%s1 + $0xf4] sm:$0xf]
  %v89 = vld [vmem:[%s1 + $0xf8] sm:$0xf]
  %v90 = vld [vmem:[%s1 + $0xfc] sm:$0xf]
  %v95 = vunpack.c.l.b16 %v23
  %v96 = vunpack.c.h.b16 %v23
  %v97 = vunpack.c.l.b16 %v24
  %v98 = vunpack.c.h.b16 %v24
  %v99 = vunpack.c.l.b16 %v25
  %v100 = vunpack.c.h.b16 %v25
  %v101 = vunpack.c.l.b16 %v26
  %v102 = vunpack.c.h.b16 %v26
  %v103 = vpack.c.b16 %v99, %v95
  %v104 = vpack.c.b16 %v100, %v96
  %v105 = vpack.c.b16 %v101, %v97
  %v106 = vpack.c.b16 %v102, %v98
  %v175 = vunpack.c.l.b16 %v27
  %v176 = vunpack.c.l.b16 %v28
  %v177 = vunpack.c.l.b16 %v29
  %v178 = vunpack.c.l.b16 %v30
  %v179 = vunpack.c.l.b16 %v31
  %v180 = vunpack.c.l.b16 %v32
  %v181 = vunpack.c.l.b16 %v33
  %v182 = vunpack.c.l.b16 %v34
  %v183 = vunpack.c.l.b16 %v35
  %v184 = vunpack.c.l.b16 %v36
  %v185 = vunpack.c.l.b16 %v37
  %v186 = vunpack.c.l.b16 %v38
  %v187 = vunpack.c.l.b16 %v39
  %v188 = vunpack.c.l.b16 %v40
  %v189 = vunpack.c.l.b16 %v41
  %v190 = vunpack.c.l.b16 %v42
  %v191 = vunpack.c.l.b16 %v43
  %v192 = vunpack.c.l.b16 %v44
  %v193 = vunpack.c.l.b16 %v45
  %v194 = vunpack.c.l.b16 %v46
  %v195 = vunpack.c.l.b16 %v47
  %v196 = vunpack.c.l.b16 %v48
  %v197 = vunpack.c.l.b16 %v49
  %v198 = vunpack.c.l.b16 %v50
  %v199 = vunpack.c.l.b16 %v51
  %v200 = vunpack.c.l.b16 %v52
  %v201 = vunpack.c.l.b16 %v53
  %v202 = vunpack.c.l.b16 %v54
  %v203 = vunpack.c.l.b16 %v55
  %v204 = vunpack.c.l.b16 %v56
  %v205 = vunpack.c.l.b16 %v57
  %v206 = vunpack.c.l.b16 %v58
  %v207 = vunpack.c.l.b16 %v59
  %v208 = vunpack.c.l.b16 %v60
  %v209 = vunpack.c.l.b16 %v61
  %v210 = vunpack.c.l.b16 %v62
  %v211 = vunpack.c.l.b16 %v63
  %v212 = vunpack.c.l.b16 %v64
  %v213 = vunpack.c.l.b16 %v65
  %v214 = vunpack.c.l.b16 %v66
  %v215 = vunpack.c.l.b16 %v67
  %v216 = vunpack.c.l.b16 %v68
  %v217 = vunpack.c.l.b16 %v69
  %v218 = vunpack.c.l.b16 %v70
  %v219 = vunpack.c.l.b16 %v71
  %v220 = vunpack.c.l.b16 %v72
  %v221 = vunpack.c.l.b16 %v73
  %v222 = vunpack.c.l.b16 %v74
  %v223 = vunpack.c.l.b16 %v75
  %v224 = vunpack.c.l.b16 %v76
  %v225 = vunpack.c.l.b16 %v77
  %v226 = vunpack.c.l.b16 %v78
  %v227 = vunpack.c.l.b16 %v79
  %v228 = vunpack.c.l.b16 %v80
  %v229 = vunpack.c.l.b16 %v81
  %v230 = vunpack.c.l.b16 %v82
  %v231 = vunpack.c.l.b16 %v83
  %v232 = vunpack.c.l.b16 %v84
  %v233 = vunpack.c.l.b16 %v85
  %v234 = vunpack.c.l.b16 %v86
  %v235 = vunpack.c.l.b16 %v87
  %v236 = vunpack.c.l.b16 %v88
  %v237 = vunpack.c.l.b16 %v89
  %v238 = vunpack.c.l.b16 %v90
  %v239 = vpack.c.b16 %v176, %v175
  %v240 = vpack.c.b16 %v178, %v177
  %v241 = vpack.c.b16 %v180, %v179
  %v242 = vpack.c.b16 %v182, %v181
  %v243 = vpack.c.b16 %v184, %v183
  %v244 = vpack.c.b16 %v186, %v185
  %v245 = vpack.c.b16 %v188, %v187
  %v246 = vpack.c.b16 %v190, %v189
  %v247 = vpack.c.b16 %v192, %v191
  %v248 = vpack.c.b16 %v194, %v193
  %v249 = vpack.c.b16 %v196, %v195
  %v250 = vpack.c.b16 %v198, %v197
  %v251 = vpack.c.b16 %v200, %v199
  %v252 = vpack.c.b16 %v202, %v201
  %v253 = vpack.c.b16 %v204, %v203
  %v254 = vpack.c.b16 %v206, %v205
  %v255 = vpack.c.b16 %v208, %v207
  %v256 = vpack.c.b16 %v210, %v209
  %v257 = vpack.c.b16 %v212, %v211
  %v258 = vpack.c.b16 %v214, %v213
  %v259 = vpack.c.b16 %v216, %v215
  %v260 = vpack.c.b16 %v218, %v217
  %v261 = vpack.c.b16 %v220, %v219
  %v262 = vpack.c.b16 %v222, %v221
  %v263 = vpack.c.b16 %v224, %v223
  %v264 = vpack.c.b16 %v226, %v225
  %v265 = vpack.c.b16 %v228, %v227
  %v266 = vpack.c.b16 %v230, %v229
  %v267 = vpack.c.b16 %v232, %v231
  %v268 = vpack.c.b16 %v234, %v233
  %v269 = vpack.c.b16 %v236, %v235
  %v270 = vpack.c.b16 %v238, %v237
  %303 = vmatprep.subr.bf16.mxu0 0
  %304 = vmatpush1.bf16.msra.mxu0 %v246
  %305 = vmatprep.subr.bf16.mxu0 0
  %306 = vmatpush1.bf16.msra.mxu0 %v245
  %307 = vmatprep.subr.bf16.mxu0 0
  %308 = vmatpush1.bf16.msra.mxu0 %v244
  %309 = vmatprep.subr.bf16.mxu0 0
  %310 = vmatpush1.bf16.msra.mxu0 %v243
  %311 = vmatprep.subr.bf16.mxu0 0
  %312 = vmatpush1.bf16.msra.mxu0 %v242
  %313 = vmatprep.subr.bf16.mxu0 0
  %314 = vmatpush1.bf16.msra.mxu0 %v241
  %315 = vmatprep.subr.bf16.mxu0 0
  %316 = vmatpush1.bf16.msra.mxu0 %v240
  %317 = vmatprep.subr.bf16.mxu0 0
  %318 = vmatpush1.bf16.msra.mxu0 %v239
  %319 = vmatprep.subr.bf16.mxu0 0
  %320 = vmatpush2.bf16.msra.mxu0 %v254
  %321 = vmatprep.subr.bf16.mxu0 0
  %322 = vmatpush2.bf16.msra.mxu0 %v253
  %323 = vmatprep.subr.bf16.mxu0 0
  %324 = vmatpush2.bf16.msra.mxu0 %v252
  %325 = vmatprep.subr.bf16.mxu0 0
  %326 = vmatpush2.bf16.msra.mxu0 %v251
  %327 = vmatprep.subr.bf16.mxu0 0
  %328 = vmatpush2.bf16.msra.mxu0 %v250
  %329 = vmatprep.subr.bf16.mxu0 0
  %330 = vmatpush2.bf16.msra.mxu0 %v249
  %331 = vmatprep.subr.bf16.mxu0 0
  %332 = vmatpush2.bf16.msra.mxu0 %v248
  %333 = vmatprep.subr.bf16.mxu0 0
  %334 = vmatpush2.bf16.msra.mxu0 %v247
  %335 = vmatprep.mubr.bf16.mxu0 %v104
  %336 = vmatmul.mubr.bf16.gmra.mxu0 %v103
  %v337 = vpop.f32.mrf.mxu0
  %v338 = vadd.f32 0.0, %v337
  %v339 = vpop.f32.mrf.mxu0
  %v340 = vpop.f32.mrf.mxu0
  %v341 = vadd.f32 0.0, %v340
  %v342 = vpop.f32.mrf.mxu0
  %343 = vdwg.mxu0
  %344 = vmatprep.subr.bf16.mxu0 0
  %345 = vmatpush1.bf16.msra.mxu0 %v262
  %346 = vmatprep.subr.bf16.mxu0 0
  %347 = vmatpush1.bf16.msra.mxu0 %v261
  %348 = vmatprep.subr.bf16.mxu0 0
  %349 = vmatpush1.bf16.msra.mxu0 %v260
  %350 = vmatprep.subr.bf16.mxu0 0
  %351 = vmatpush1.bf16.msra.mxu0 %v259
  %352 = vmatprep.subr.bf16.mxu0 0
  %353 = vmatpush1.bf16.msra.mxu0 %v258
  %354 = vmatprep.subr.bf16.mxu0 0
  %355 = vmatpush1.bf16.msra.mxu0 %v257
  %356 = vmatprep.subr.bf16.mxu0 0
  %357 = vmatpush1.bf16.msra.mxu0 %v256
  %358 = vmatprep.subr.bf16.mxu0 0
  %359 = vmatpush1.bf16.msra.mxu0 %v255
  %360 = vmatprep.subr.bf16.mxu0 0
  %361 = vmatpush2.bf16.msra.mxu0 %v270
  %362 = vmatprep.subr.bf16.mxu0 0
  %363 = vmatpush2.bf16.msra.mxu0 %v269
  %364 = vmatprep.subr.bf16.mxu0 0
  %365 = vmatpush2.bf16.msra.mxu0 %v268
  %366 = vmatprep.subr.bf16.mxu0 0
  %367 = vmatpush2.bf16.msra.mxu0 %v267
  %368 = vmatprep.subr.bf16.mxu0 0
  %369 = vmatpush2.bf16.msra.mxu0 %v266
  %370 = vmatprep.subr.bf16.mxu0 0
  %371 = vmatpush2.bf16.msra.mxu0 %v265
  %372 = vmatprep.subr.bf16.mxu0 0
  %373 = vmatpush2.bf16.msra.mxu0 %v264
  %374 = vmatprep.subr.bf16.mxu0 0
  %375 = vmatpush2.bf16.msra.mxu0 %v263
  %376 = vmatprep.mubr.bf16.mxu0 %v106
  %377 = vmatmul.mubr.bf16.gmra.mxu0 %v105
  %v378 = vpop.f32.mrf.mxu0
  %v379 = vadd.f32 %v338, %v378
  %v380 = vpop.f32.mrf.mxu0
  %v381 = vpop.f32.mrf.mxu0
  %v382 = vadd.f32 %v341, %v381
  %v383 = vpop.f32.mrf.mxu0
  %384 = vdwg.mxu0
  %v385 = vadd.f32 %v21, %v379
  %v386 = vadd.f32 %v22, %v382
  %387 = vst [vmem:[#allocation2] sm:$0xff] %v385
  %388 = vst [vmem:[#allocation2 + $0x8] sm:$0xff] %v386
  // Predicated region
  $region18: #{cnn_model_forward.14} parent=0 // pred_check
    %p389 = pneg %p15
  $region19: #{cnn_model_forward.14} parent=0 // pred_check_branch
    %391 = sbr.rel (%p389) target = $region21
  $region20: #{cnn_model_forward.14} parent=0 // pred_region
    %v392 = vld [vmem:[#allocation2] sm:$0xff]
    %v393 = vld [vmem:[#allocation2 + $0x8] sm:$0xff]
    %v394 = vld [vmem:[%s2] sm:$0x1]
    %v396 = vlaneseq
    %v397 = vshrl.u32 %v396, 7
    %v398 = vsub.s32 0, %v397
    %v399 = vrot.slane %v394, %v398
    %v401 = vadd.f32 %v392, %v399
    %v402 = vadd.f32 %v393, %v399
    %v403 = vmax.f32 %v401, 0.0
    %v404 = vmax.f32 %v402, 0.0
    %405 = vst [vmem:[%s3] sm:$0xff] %v403
    %406 = vst [vmem:[%s3 + $0x8] sm:$0xff] %v404
  $region21: #{cnn_model_forward.14} parent=0 // pred_fallthru
    _
  // Predicated region
  $region22: #{cnn_model_forward.14} parent=0 // pred_check
    _
  $region23: #{cnn_model_forward.14} parent=0 // pred_check_branch
    %408 = sbr.rel (0) target = $region25
  $region24: #{cnn_model_forward.14} parent=0 // pred_region
    _
  $region25: #{cnn_model_forward.14} parent=0 // pred_fallthru
    _
  // Predicated region
  $region26: #{cnn_model_forward.14} parent=0 // pred_check
    _
  $region27: #{cnn_model_forward.14} parent=0 // pred_check_branch
    %410 = sbr.rel (0) target = $region29
  $region28: #{cnn_model_forward.14} parent=0 // pred_region
    _
  $region29: #{cnn_model_forward.14} parent=0 // pred_fallthru
    _

// kernel: cnn_model_forward.15
$region0: #{cnn_model_forward.15}
  #allocation0 [shape = 'u32[]', space=smem, size = 0x4, offset = 0x4, fixed_abs, tag = 'smem constant byte address 0x4 - core index']
  #allocation1 [shape = 'u32[144,128]{1,0:T(1,128)}', space=vmem, size = 0x12000, scoped, tag = 'internal scratch']
  #allocation2 [shape = 'f32[16,128]{1,0:T(8,128)}', space=vmem, size = 0x2000, scoped, tag = 'scratch operand']
  %s0 = inlined_call_operand.vmem [shape: bf16[16,128], index: 0, kind: input, shape index: {}]
  %s1 = inlined_call_operand.vmem [shape: bf16[128,128], index: 1, kind: input, shape index: {}]
  %s2 = inlined_call_operand.vmem [shape: f32[1,128], index: 2, kind: input, shape index: {}]
  %s3 = inlined_call_operand.vmem [shape: f32[16,128], index: 3, kind: output, shape index: {}]
  %s4 = sld [smem:[#allocation0]]
  $region30: #{cnn_model_forward.15} parent=0
    _
  %s6 = ssub.s32 1, %s4
  %s7 = scalar_select 0, %s6, %s4
  // Predicated region
  $region2: #{cnn_model_forward.15} parent=0 // pred_check
    _
  $region3: #{cnn_model_forward.15} parent=0 // pred_check_branch
    %9 = sbr.rel (0) target = $region5
  $region4: #{cnn_model_forward.15} parent=0 // pred_region
    _
  $region5: #{cnn_model_forward.15} parent=0 // pred_fallthru
    _
  // Predicated region
  $region6: #{cnn_model_forward.15} parent=0 // pred_check
    _
  $region7: #{cnn_model_forward.15} parent=0 // pred_check_branch
    %11 = sbr.rel (0) target = $region9
  $region8: #{cnn_model_forward.15} parent=0 // pred_region
    _
  $region9: #{cnn_model_forward.15} parent=0 // pred_fallthru
    _
  // Predicated region
  $region10: #{cnn_model_forward.15} parent=0 // pred_check
    _
  $region11: #{cnn_model_forward.15} parent=0 // pred_check_branch
    %13 = sbr.rel (0) target = $region13
  $region12: #{cnn_model_forward.15} parent=0 // pred_region
    _
  $region13: #{cnn_model_forward.15} parent=0 // pred_fallthru
    _
  %p15 = scmp.eq.s32.totalorder 0, 0
  // Predicated region
  $region14: #{cnn_model_forward.15} parent=0 // pred_check
    %p16 = pneg %p15
  $region15: #{cnn_model_forward.15} parent=0 // pred_check_branch
    %18 = sbr.rel (%p16) target = $region17
  $region16: #{cnn_model_forward.15} parent=0 // pred_region
    %19 = vst [vmem:[#allocation2] sm:$0xff] 0.0
    %20 = vst [vmem:[#allocation2 + $0x8] sm:$0xff] 0.0
  $region17: #{cnn_model_forward.15} parent=0 // pred_fallthru
    _
  %v21 = vld [vmem:[#allocation2] sm:$0xff]
  %v22 = vld [vmem:[#allocation2 + $0x8] sm:$0xff]
  %v23 = vld [vmem:[%s0] sm:$0xf]
  %v24 = vld [vmem:[%s0 + $0x4] sm:$0xf]
  %v25 = vld [vmem:[%s1] sm:$0xf]
  %v26 = vld [vmem:[%s1 + $0x4] sm:$0xf]
  %v27 = vld [vmem:[%s1 + $0x8] sm:$0xf]
  %v28 = vld [vmem:[%s1 + $0xc] sm:$0xf]
  %v29 = vld [vmem:[%s1 + $0x10] sm:$0xf]
  %v30 = vld [vmem:[%s1 + $0x14] sm:$0xf]
  %v31 = vld [vmem:[%s1 + $0x18] sm:$0xf]
  %v32 = vld [vmem:[%s1 + $0x1c] sm:$0xf]
  %v33 = vld [vmem:[%s1 + $0x20] sm:$0xf]
  %v34 = vld [vmem:[%s1 + $0x24] sm:$0xf]
  %v35 = vld [vmem:[%s1 + $0x28] sm:$0xf]
  %v36 = vld [vmem:[%s1 + $0x2c] sm:$0xf]
  %v37 = vld [vmem:[%s1 + $0x30] sm:$0xf]
  %v38 = vld [vmem:[%s1 + $0x34] sm:$0xf]
  %v39 = vld [vmem:[%s1 + $0x38] sm:$0xf]
  %v40 = vld [vmem:[%s1 + $0x3c] sm:$0xf]
  %v43 = vunpack.c.l.b16 %v23
  %v44 = vunpack.c.l.b16 %v24
  %v45 = vpack.c.b16 %v44, %v43
  %v63 = vunpack.c.l.b16 %v25
  %v64 = vunpack.c.l.b16 %v26
  %v65 = vunpack.c.l.b16 %v27
  %v66 = vunpack.c.l.b16 %v28
  %v67 = vunpack.c.l.b16 %v29
  %v68 = vunpack.c.l.b16 %v30
  %v69 = vunpack.c.l.b16 %v31
  %v70 = vunpack.c.l.b16 %v32
  %v71 = vunpack.c.l.b16 %v33
  %v72 = vunpack.c.l.b16 %v34
  %v73 = vunpack.c.l.b16 %v35
  %v74 = vunpack.c.l.b16 %v36
  %v75 = vunpack.c.l.b16 %v37
  %v76 = vunpack.c.l.b16 %v38
  %v77 = vunpack.c.l.b16 %v39
  %v78 = vunpack.c.l.b16 %v40
  %v79 = vpack.c.b16 %v64, %v63
  %v80 = vpack.c.b16 %v66, %v65
  %v81 = vpack.c.b16 %v68, %v67
  %v82 = vpack.c.b16 %v70, %v69
  %v83 = vpack.c.b16 %v72, %v71
  %v84 = vpack.c.b16 %v74, %v73
  %v85 = vpack.c.b16 %v76, %v75
  %v86 = vpack.c.b16 %v78, %v77
  %95 = vmatprep.subr.bf16.mxu0 0
  %96 = vmatpush1.bf16.msra.mxu0 %v86
  %97 = vmatprep.subr.bf16.mxu0 0
  %98 = vmatpush1.bf16.msra.mxu0 %v85
  %99 = vmatprep.subr.bf16.mxu0 0
  %100 = vmatpush1.bf16.msra.mxu0 %v84
  %101 = vmatprep.subr.bf16.mxu0 0
  %102 = vmatpush1.bf16.msra.mxu0 %v83
  %103 = vmatprep.subr.bf16.mxu0 0
  %104 = vmatpush1.bf16.msra.mxu0 %v82
  %105 = vmatprep.subr.bf16.mxu0 0
  %106 = vmatpush1.bf16.msra.mxu0 %v81
  %107 = vmatprep.subr.bf16.mxu0 0
  %108 = vmatpush1.bf16.msra.mxu0 %v80
  %109 = vmatprep.subr.bf16.mxu0 0
  %110 = vmatpush1.bf16.msra.mxu0 %v79
  %111 = vmatprep.subr.bf16.mxu0 0
  %112 = vmatpush2.bf16.msra.mxu0 0
  %113 = vmatprep.subr.bf16.mxu0 0
  %114 = vmatpush2.bf16.msra.mxu0 0
  %115 = vmatprep.subr.bf16.mxu0 0
  %116 = vmatpush2.bf16.msra.mxu0 0
  %117 = vmatprep.subr.bf16.mxu0 0
  %118 = vmatpush2.bf16.msra.mxu0 0
  %119 = vmatprep.subr.bf16.mxu0 0
  %120 = vmatpush2.bf16.msra.mxu0 0
  %121 = vmatprep.subr.bf16.mxu0 0
  %122 = vmatpush2.bf16.msra.mxu0 0
  %123 = vmatprep.subr.bf16.mxu0 0
  %124 = vmatpush2.bf16.msra.mxu0 0
  %125 = vmatprep.subr.bf16.mxu0 0
  %126 = vmatpush2.bf16.msra.mxu0 0
  %127 = vmatprep.mubr.bf16.mxu0 0
  %128 = vmatmul.mubr.bf16.gmra.mxu0 %v45
  %v129 = vpop.f32.mrf.mxu0
  %v130 = vadd.f32 0.0, %v129
  %v131 = vpop.f32.mrf.mxu0
  %v132 = vpop.f32.mrf.mxu0
  %v133 = vadd.f32 0.0, %v132
  %v134 = vpop.f32.mrf.mxu0
  %135 = vdwg.mxu0
  %v136 = vadd.f32 %v21, %v130
  %v137 = vadd.f32 %v22, %v133
  %138 = vst [vmem:[#allocation2] sm:$0xff] %v136
  %139 = vst [vmem:[#allocation2 + $0x8] sm:$0xff] %v137
  // Predicated region
  $region18: #{cnn_model_forward.15} parent=0 // pred_check
    %p140 = pneg %p15
  $region19: #{cnn_model_forward.15} parent=0 // pred_check_branch
    %142 = sbr.rel (%p140) target = $region21
  $region20: #{cnn_model_forward.15} parent=0 // pred_region
    %v143 = vld [vmem:[#allocation2] sm:$0xff]
    %v144 = vld [vmem:[#allocation2 + $0x8] sm:$0xff]
    %v145 = vld [vmem:[%s2] sm:$0x1]
    %v147 = vlaneseq
    %v148 = vshrl.u32 %v147, 7
    %v149 = vsub.s32 0, %v148
    %v150 = vrot.slane %v145, %v149
    %v152 = vadd.f32 %v143, %v150
    %v153 = vadd.f32 %v144, %v150
    %154 = vst [vmem:[%s3] sm:$0xff] %v152
    %155 = vst [vmem:[%s3 + $0x8] sm:$0xff] %v153
  $region21: #{cnn_model_forward.15} parent=0 // pred_fallthru
    _
  // Predicated region
  $region22: #{cnn_model_forward.15} parent=0 // pred_check
    _
  $region23: #{cnn_model_forward.15} parent=0 // pred_check_branch
    %157 = sbr.rel (0) target = $region25
  $region24: #{cnn_model_forward.15} parent=0 // pred_region
    _
  $region25: #{cnn_model_forward.15} parent=0 // pred_fallthru
    _
  // Predicated region
  $region26: #{cnn_model_forward.15} parent=0 // pred_check
    _
  $region27: #{cnn_model_forward.15} parent=0 // pred_check_branch
    %159 = sbr.rel (0) target = $region29
  $region28: #{cnn_model_forward.15} parent=0 // pred_region
    _
  $region29: #{cnn_model_forward.15} parent=0 // pred_fallthru
    _

</llo_original>
